<compile_context>
chip_gen: v7x
topology: tpu7x:2x2x1
jax: 0.10.0
libtpu: 0.0.40
codegen_flags: <defaults>
</compile_context>

<pallas_src>
import functools
import math

import numpy as np
import jax
import jax.numpy as jnp
from jax.experimental import pallas as pl
from jax.experimental.pallas import tpu as pltpu

_LN_EPS = 1e-5
# Conservative budget for v7x's 64 MiB physical VMEM (actual per-call usage
# here is <= ~3 MiB).
_VMEM_LIMIT = 48 * 1024 * 1024


# ---------------------------------------------------------------------------
# tiling helper
# ---------------------------------------------------------------------------

def _tile(dim, target, align):
    """Largest divisor of `dim` that is <= target and a multiple of `align`.

    Falls back to the full dimension (always a legal Pallas block) only when
    no aligned divisor exists (e.g. a 1960-wide lane dimension).
    """
    t = (min(dim, target) // align) * align
    while t >= align:
        if dim % t == 0:
            return t
        t -= align
    return dim


# ---------------------------------------------------------------------------
# Linear kernel: [fused LayerNorm | ReLU] -> matmul(+bias) -> [fused residual]
# ---------------------------------------------------------------------------

def _linear_kernel(*refs, has_ln, relu_in, has_residual, single_k, eps):
    i = 0
    x_ref, w_ref, b_ref = refs[0], refs[1], refs[2]
    i = 3
    if has_ln:
        g_ref, beta_ref = refs[i], refs[i + 1]
        i += 2
    if has_residual:
        res_ref = refs[i]
        i += 1
    o_ref = refs[i]
    acc_ref = None if single_k else refs[i + 1]

    x = x_ref[...].astype(jnp.float32)
    if has_ln:                          # fused LayerNorm prologue (tk == K)
        mu = jnp.mean(x, axis=-1, keepdims=True)
        xc = x - mu
        var = jnp.mean(xc * xc, axis=-1, keepdims=True)
        x = (xc * jax.lax.rsqrt(var + eps) * g_ref[...].astype(jnp.float32)
             + beta_ref[...].astype(jnp.float32))
    if relu_in:                         # fused ReLU prologue
        x = jnp.maximum(x, 0.0)

    w = w_ref[...]
    # bf16 MXU operands (when weights are stored bf16), f32 accumulation.
    part = jnp.dot(x.astype(w.dtype), w, preferred_element_type=jnp.float32)

    def _finish(acc):
        out = acc + b_ref[...].astype(jnp.float32)
        if has_residual:                # fused residual epilogue
            out = out + res_ref[...].astype(jnp.float32)
        o_ref[...] = out.astype(o_ref.dtype)

    if single_k:
        _finish(part)
    else:
        k = pl.program_id(2)

        @pl.when(k == 0)
        def _():
            acc_ref[...] = jnp.zeros_like(acc_ref)

        acc_ref[...] += part

        @pl.when(k == pl.num_programs(2) - 1)
        def _():
            _finish(acc_ref[...])


def linear(x2d, w, b, *, ln=None, relu_in=False, residual=None):
    m, kdim = x2d.shape
    k2, n = w.shape
    assert kdim == k2
    tm = _tile(m, 256, 8)
    tn = _tile(n, 512, 128)
    # Fused LayerNorm needs the whole feature row in one K step.
    tk = kdim if ln is not None else _tile(kdim, 512, 128)
    grid = (m // tm, n // tn, kdim // tk)
    single_k = grid[2] == 1
    assert ln is None or single_k

    in_specs = [
        pl.BlockSpec((tm, tk), lambda i, j, kk: (i, kk)),
        pl.BlockSpec((tk, tn), lambda i, j, kk: (kk, j)),
        pl.BlockSpec((1, tn), lambda i, j, kk: (0, j)),
    ]
    args = [x2d, w, b.reshape(1, n)]
    if ln is not None:
        g, beta = ln
        in_specs += [pl.BlockSpec((1, tk), lambda i, j, kk: (0, kk)),
                     pl.BlockSpec((1, tk), lambda i, j, kk: (0, kk))]
        args += [g.reshape(1, kdim), beta.reshape(1, kdim)]
    if residual is not None:
        assert residual.shape == (m, n)
        in_specs.append(pl.BlockSpec((tm, tn), lambda i, j, kk: (i, j)))
        args.append(residual)

    scratch = [] if single_k else [pltpu.VMEM((tm, tn), jnp.float32)]
    return pl.pallas_call(
        functools.partial(_linear_kernel, has_ln=ln is not None,
                          relu_in=relu_in, has_residual=residual is not None,
                          single_k=single_k, eps=_LN_EPS),
        out_shape=jax.ShapeDtypeStruct((m, n), x2d.dtype),
        grid_spec=pltpu.PrefetchScalarGridSpec(
            num_scalar_prefetch=0,
            grid=grid,
            in_specs=in_specs,
            out_specs=pl.BlockSpec((tm, tn), lambda i, j, kk: (i, j)),
            scratch_shapes=scratch,
        ),
        compiler_params=pltpu.CompilerParams(
            dimension_semantics=("parallel", "parallel", "arbitrary"),
            vmem_limit_bytes=_VMEM_LIMIT),
    )(*args)


# ---------------------------------------------------------------------------
# Attention kernel: all heads of one batch per grid step, lane-dense I/O
# ---------------------------------------------------------------------------

def _attention_kernel(qkv_ref, o_ref, *, head, scale):
    qkv = qkv_ref[...].astype(jnp.float32)            # (n, 3c)
    c = qkv.shape[-1] // 3
    dh = c // head
    outs = []
    for h in range(head):                             # all heads, one step
        q = qkv[:, h * dh:(h + 1) * dh] * scale       # scale folded into q
        k = qkv[:, c + h * dh:c + (h + 1) * dh]
        v = qkv[:, 2 * c + h * dh:2 * c + (h + 1) * dh]
        s = jax.lax.dot_general(q, k, (((1,), (1,)), ((), ())),
                                preferred_element_type=jnp.float32)
        s_max = jnp.max(s, axis=-1, keepdims=True)
        p = jnp.exp(s - s_max)
        inv = pl.reciprocal(jnp.sum(p, axis=-1, keepdims=True), approx=True)
        outs.append(jnp.dot(p * inv, v, preferred_element_type=jnp.float32))
    o_ref[...] = jnp.concatenate(outs, axis=-1).astype(o_ref.dtype)


def attention(qkv2d, *, head, seq):
    m, c3 = qkv2d.shape
    assert m % seq == 0 and c3 % 3 == 0
    c = c3 // 3
    nb = m // seq
    return pl.pallas_call(
        functools.partial(_attention_kernel, head=head,
                          scale=1.0 / math.sqrt(c // head)),
        out_shape=jax.ShapeDtypeStruct((m, c), qkv2d.dtype),
        grid_spec=pltpu.PrefetchScalarGridSpec(
            num_scalar_prefetch=0,
            grid=(nb,),
            in_specs=[pl.BlockSpec((seq, c3), lambda i: (i, 0))],
            out_specs=pl.BlockSpec((seq, c), lambda i: (i, 0)),
        ),
        compiler_params=pltpu.CompilerParams(
            dimension_semantics=("parallel",)),
    )(qkv2d)


# ---------------------------------------------------------------------------
# Fold/Unfold overlap-add normalization as a precomputed linear operator
# ---------------------------------------------------------------------------

def build_fold_operator(n_vecs, t2t_params):
    """784x784 operator A with Y[(l,p)] = sum_j A[(l,p),j] X[j] equal to
    unfold(fold(X)/fold(ones)) per (group, image-channel)."""
    kh, kw = t2t_params['kernel_size']
    sh, sw = t2t_params['stride']
    ph, pw = t2t_params['padding']
    H, W = t2t_params['output_size']
    Lh = (H + 2 * ph - kh) // sh + 1
    Lw = (W + 2 * pw - kw) // sw + 1
    assert Lh * Lw == n_vecs
    Wp = W + 2 * pw

    lh = np.arange(Lh)[:, None, None, None]
    lw = np.arange(Lw)[None, :, None, None]
    ki = np.arange(kh)[None, None, :, None]
    kj = np.arange(kw)[None, None, None, :]
    r = np.broadcast_to(lh * sh + ki, (Lh, Lw, kh, kw))
    c = np.broadcast_to(lw * sw + kj, (Lh, Lw, kh, kw))
    pos = (r * Wp + c).reshape(-1)                       # (L*kh*kw,)
    valid = ((r >= ph) & (r < ph + H) &
             (c >= pw) & (c < pw + W)).reshape(-1)       # unfold pads with 0

    same = (pos[:, None] == pos[None, :]).astype(np.float32)
    cnt = same.sum(axis=1, keepdims=True)                # overlap counts
    A = (same / cnt) * valid[:, None].astype(np.float32)
    return jnp.asarray(A)


def _fold_matmul_kernel(a_ref, x_ref, o_ref):
    a = a_ref[...]
    x = x_ref[...].astype(a.dtype)
    o_ref[...] = jnp.dot(a, x, preferred_element_type=jnp.float32).astype(
        o_ref.dtype)


def fold_normalize(A, x_groups, *, lp):
    """x_groups: (groups*lp, cimg) with rows ordered (group, l, p)."""
    gm, ci = x_groups.shape
    assert gm % lp == 0 and A.shape == (lp, lp)
    groups = gm // lp
    return pl.pallas_call(
        _fold_matmul_kernel,
        out_shape=jax.ShapeDtypeStruct((gm, ci), x_groups.dtype),
        grid_spec=pltpu.PrefetchScalarGridSpec(
            num_scalar_prefetch=0,
            grid=(groups,),
            in_specs=[pl.BlockSpec((lp, lp), lambda g: (0, 0)),
                      pl.BlockSpec((lp, ci), lambda g: (g, 0))],
            out_specs=pl.BlockSpec((lp, ci), lambda g: (g, 0)),
        ),
        compiler_params=pltpu.CompilerParams(
            dimension_semantics=("parallel",),
            vmem_limit_bytes=_VMEM_LIMIT),
    )(A, x_groups)


# ---------------------------------------------------------------------------
# Offline parameter preparation (bf16 weights, permutations, fold operator)
# ---------------------------------------------------------------------------

def prepare_params(raw, *, n_vecs, t2t_params, weight_dtype=jnp.bfloat16):
    kh, kw = t2t_params['kernel_size']
    patch = kh * kw
    hd = raw['w1'].shape[1]
    cimg = hd // patch
    # original column order: ci*patch + p  ->  new order: p*cimg + ci
    perm = np.arange(hd).reshape(cimg, patch).T.reshape(-1)

    p = dict(raw)
    p['w_qkv'] = raw['w_qkv'].astype(weight_dtype)
    p['w_o'] = raw['w_o'].astype(weight_dtype)
    p['w1p'] = raw['w1'][:, perm].astype(weight_dtype)
    p['b1p'] = raw['b1'][perm]
    p['w2p'] = raw['w2'][perm, :].astype(weight_dtype)
    p['fold_A'] = build_fold_operator(n_vecs, t2t_params).astype(weight_dtype)
    for k in ('w1', 'b1', 'w2'):
        p.pop(k)
    return p


# ---------------------------------------------------------------------------
# TransformerBlock forward (Pallas path)
# ---------------------------------------------------------------------------

def transformer_block(x, params, *, head, n_vecs):
    b, n, c = x.shape
    assert n % n_vecs == 0
    x2d = x.reshape(b * n, c)

    # --- attention sublayer (LayerNorm1 fused into the qkv matmul) ----------
    qkv = linear(x2d, params['w_qkv'], params['b_qkv'],
                 ln=(params['ln1_g'], params['ln1_b']))
    att = attention(qkv, head=head, seq=n)                          # (b*n, c)
    x2 = linear(att, params['w_o'], params['b_o'], residual=x2d)

    # --- feed-forward sublayer (LayerNorm2 fused into Linear1) --------------
    h = linear(x2, params['w1p'], params['b1p'],
               ln=(params['ln2_g'], params['ln2_b']))               # (b*n, hd)
    hd = h.shape[-1]
    lp = params['fold_A'].shape[0]
    patch = lp // n_vecs
    cimg = hd // patch
    # columns already (patch, channel)-ordered -> only free reshapes here
    hn = fold_normalize(params['fold_A'],
                        h.reshape(b * n * patch, cimg), lp=lp)
    # ReLU fused as matmul prologue, residual (x2) fused as epilogue
    out = linear(hn.reshape(b * n, hd), params['w2p'], params['b2'],
                 relu_in=True, residual=x2)
    return out.reshape(b, n, c)


# ---------------------------------------------------------------------------
# Pure-JAX reference (for correctness check)
# ---------------------------------------------------------------------------

def t2t_fold_unfold_normalize(x, n_vecs, t2t_params):
    kh, kw = t2t_params['kernel_size']
    sh, sw = t2t_params['stride']
    ph, pw = t2t_params['padding']
    H, W = t2t_params['output_size']
    b, n, c = x.shape
    Lh = (H + 2 * ph - kh) // sh + 1
    Lw = (W + 2 * pw - kw) // sw + 1
    L = Lh * Lw
    assert L == n_vecs and n % n_vecs == 0 and c % (kh * kw) == 0
    cimg = c // (kh * kw)
    B = b * (n // n_vecs)

    xp = x.reshape(B, Lh, Lw, cimg, kh, kw).transpose(0, 3, 4, 5, 1, 2)
    Hp, Wp = H + 2 * ph, W + 2 * pw
    img = jnp.zeros((B, cimg, Hp, Wp), x.dtype)
    cnt = jnp.zeros((Hp, Wp), x.dtype)
    ones = jnp.ones((Lh, Lw), x.dtype)
    for ki in range(kh):
        for kj in range(kw):
            rs = slice(ki, ki + (Lh - 1) * sh + 1, sh)
            cs = slice(kj, kj + (Lw - 1) * sw + 1, sw)
            img = img.at[:, :, rs, cs].add(xp[:, :, ki, kj])
            cnt = cnt.at[rs, cs].add(ones)

    img = img[:, :, ph:ph + H, pw:pw + W] / cnt[ph:ph + H, pw:pw + W]
    imgp = jnp.pad(img, ((0, 0), (0, 0), (ph, ph), (pw, pw)))

    patches = []
    for ki in range(kh):
        for kj in range(kw):
            rs = slice(ki, ki + (Lh - 1) * sh + 1, sh)
            cs = slice(kj, kj + (Lw - 1) * sw + 1, sw)
            patches.append(imgp[:, :, rs, cs])
    out = jnp.stack(patches, axis=2).reshape(B, cimg * kh * kw, L)
    return out.transpose(0, 2, 1).reshape(b, n, c)


def _ref_layernorm(x, g, b, eps=1e-5):
    mu = jnp.mean(x, axis=-1, keepdims=True)
    var = jnp.mean((x - mu) ** 2, axis=-1, keepdims=True)
    return (x - mu) / jnp.sqrt(var + eps) * g + b


def reference_block(x, params, *, head, n_vecs, t2t_params):
    hp = jax.lax.Precision.HIGHEST
    b, n, c = x.shape
    dh = c // head
    x1 = _ref_layernorm(x, params['ln1_g'], params['ln1_b'])
    qkv = jnp.einsum('bnc,cd->bnd', x1, params['w_qkv'], precision=hp) + params['b_qkv']
    q, k, v = jnp.split(qkv, 3, axis=-1)

    def heads(t):
        return t.reshape(b, n, head, dh).transpose(0, 2, 1, 3)

    q, k, v = heads(q), heads(k), heads(v)
    s = jnp.einsum('bhqd,bhkd->bhqk', q, k, precision=hp) / math.sqrt(dh)
    p = jax.nn.softmax(s, axis=-1)
    att = jnp.einsum('bhqk,bhkd->bhqd', p, v, precision=hp)
    att = att.transpose(0, 2, 1, 3).reshape(b, n, c)
    x2 = x + jnp.einsum('bnc,cd->bnd', att, params['w_o'], precision=hp) + params['b_o']
    y = _ref_layernorm(x2, params['ln2_g'], params['ln2_b'])
    h = jnp.einsum('bnc,cd->bnd', y, params['w1'], precision=hp) + params['b1']
    h = t2t_fold_unfold_normalize(h, n_vecs, t2t_params)
    out = x2 + jnp.einsum('bnc,cd->bnd', jax.nn.relu(h), params['w2'],
                          precision=hp) + params['b2']
    return out


# ---------------------------------------------------------------------------
# main
# ---------------------------------------------------------------------------

def init_params(key, hidden, hd):
    ks = jax.random.split(key, 6)

    def w(k, shp, scale):
        return scale * jax.random.normal(k, shp, dtype=jnp.float32)

    return dict(
        ln1_g=jnp.ones((hidden,), jnp.float32),
        ln1_b=jnp.zeros((hidden,), jnp.float32),
        ln2_g=jnp.ones((hidden,), jnp.float32),
        ln2_b=jnp.zeros((hidden,), jnp.float32),
        w_qkv=w(ks[0], (hidden, 3 * hidden), 1.0 / math.sqrt(hidden)),
        b_qkv=w(ks[1], (3 * hidden,), 0.02),
        w_o=w(ks[2], (hidden, hidden), 1.0 / math.sqrt(hidden)),
        b_o=jnp.zeros((hidden,), jnp.float32),
        w1=w(ks[3], (hidden, hd), 1.0 / math.sqrt(hidden)),
        b1=w(ks[4], (hd,), 0.02),
        w2=w(ks[5], (hd, hidden), 1.0 / math.sqrt(hd)),
        b2=jnp.zeros((hidden,), jnp.float32),
    )


if __name__ == "__main__":
    hidden, head = 128, 4
    hd = 1960  # FusionFeedForward intermediate dim (fixed in the PyTorch spec)
    t2t_params = dict(kernel_size=(7, 7), stride=(3, 3),
                      padding=(3, 3), output_size=(10, 10))
    n_vecs = 16                      # ((10+6-7)//3 + 1)^2 = 4*4 unfold positions
    b, frames = 1, 2
    n = frames * n_vecs              # 32 tokens total

    key = jax.random.PRNGKey(0)
    kx, kp = jax.random.split(key)
    x = jax.random.normal(kx, (b, n, hidden), dtype=jnp.float32)
    raw = init_params(kp, hidden, hd)
    params = prepare_params(raw, n_vecs=n_vecs, t2t_params=t2t_params)

    fwd = jax.jit(functools.partial(transformer_block, head=head, n_vecs=n_vecs))
    out = jax.block_until_ready(fwd(x, params))

    ref = reference_block(x, raw, head=head, n_vecs=n_vecs,
                          t2t_params=t2t_params)
    assert out.shape == (b, n, hidden)
    assert bool(jnp.all(jnp.isfinite(out)))
    max_err = float(jnp.max(jnp.abs(out - ref)))
    # bf16 single-pass MXU operands vs. an f32-HIGHEST reference: ~1e-2
    # absolute deviations are expected; 4e-2 still catches structural errors.
    assert bool(jnp.allclose(out, ref, atol=4e-2, rtol=4e-2)), max_err

    print("KERNEL_OK")
</pallas_src>

<mosaic_0001>
module attributes {stable_mosaic.version = 11 : i64} {
  func.func @_attention_kernel(%arg0: i32, %arg1: memref<32x384xf32, #tpu.memory_space<vmem>>, %arg2: memref<32x128xf32, #tpu.memory_space<vmem>>) attributes {dimension_semantics = [#tpu.dimension_semantics<parallel>], iteration_bounds = array<i64: 1>, scalar_prefetch = 0 : i64, scratch_operands = 0 : i64, tpu.core_type = #tpu.core_type<tc>, window_params = [{transform_indices = @transform_0, window_bounds = array<i64: 32, 384>}, {transform_indices = @transform_1, window_bounds = array<i64: 32, 128>}]} {
    %c0 = arith.constant 0 : index
    %c0_0 = arith.constant 0 : index
    %0 = vector.load %arg1[%c0, %c0_0] : memref<32x384xf32, #tpu.memory_space<vmem>>, vector<32x384xf32>
    %1 = vector.extract_strided_slice %0 {offsets = [0, 0], sizes = [32, 32], strides = [1, 1]} : vector<32x384xf32> to vector<32x32xf32>
    %cst = arith.constant 0.176776692 : f32
    %2 = vector.broadcast %cst : f32 to vector<32x32xf32>
    %3 = arith.mulf %1, %2 : vector<32x32xf32>
    %4 = vector.extract_strided_slice %0 {offsets = [0, 128], sizes = [32, 32], strides = [1, 1]} : vector<32x384xf32> to vector<32x32xf32>
    %5 = vector.extract_strided_slice %0 {offsets = [0, 256], sizes = [32, 32], strides = [1, 1]} : vector<32x384xf32> to vector<32x32xf32>
    %cst_1 = arith.constant dense<0.000000e+00> : vector<32x32xf32>
    %6 = tpu.matmul %3, %4, %cst_1 {dimension_numbers = #tpu.dot_dimension_numbers<[1], [1], [0], [0], [0, 0, 1, 0], [], []>} : vector<32x32xf32>, vector<32x32xf32>, vector<32x32xf32> -> vector<32x32xf32>
    %cst_2 = arith.constant dense<0xFF800000> : vector<32xf32>
    %7 = vector.multi_reduction <maximumf>, %6, %cst_2 [1] : vector<32x32xf32> to vector<32xf32>
    %8 = vector.shape_cast %7 : vector<32xf32> to vector<32x1xf32>
    %9 = vector.broadcast %8 : vector<32x1xf32> to vector<32x32xf32>
    %10 = arith.subf %6, %9 : vector<32x32xf32>
    %11 = math.exp %10 : vector<32x32xf32>
    %cst_3 = arith.constant dense<0.000000e+00> : vector<32xf32>
    %12 = vector.multi_reduction <add>, %11, %cst_3 [1] : vector<32x32xf32> to vector<32xf32>
    %13 = vector.shape_cast %12 : vector<32xf32> to vector<32x1xf32>
    %14 = tpu.reciprocal %13 {approx = true} : vector<32x1xf32> -> vector<32x1xf32>
    %15 = vector.broadcast %14 : vector<32x1xf32> to vector<32x32xf32>
    %16 = arith.mulf %11, %15 : vector<32x32xf32>
    %cst_4 = arith.constant dense<0.000000e+00> : vector<32x32xf32>
    %17 = tpu.matmul %16, %5, %cst_4 {dimension_numbers = #tpu.dot_dimension_numbers<[1], [0], [0], [1], [0, 0, 1, 1], [], []>} : vector<32x32xf32>, vector<32x32xf32>, vector<32x32xf32> -> vector<32x32xf32>
    %18 = vector.extract_strided_slice %0 {offsets = [0, 32], sizes = [32, 32], strides = [1, 1]} : vector<32x384xf32> to vector<32x32xf32>
    %cst_5 = arith.constant 0.176776692 : f32
    %19 = vector.broadcast %cst_5 : f32 to vector<32x32xf32>
    %20 = arith.mulf %18, %19 : vector<32x32xf32>
    %21 = vector.extract_strided_slice %0 {offsets = [0, 160], sizes = [32, 32], strides = [1, 1]} : vector<32x384xf32> to vector<32x32xf32>
    %22 = vector.extract_strided_slice %0 {offsets = [0, 288], sizes = [32, 32], strides = [1, 1]} : vector<32x384xf32> to vector<32x32xf32>
    %cst_6 = arith.constant dense<0.000000e+00> : vector<32x32xf32>
    %23 = tpu.matmul %20, %21, %cst_6 {dimension_numbers = #tpu.dot_dimension_numbers<[1], [1], [0], [0], [0, 0, 1, 0], [], []>} : vector<32x32xf32>, vector<32x32xf32>, vector<32x32xf32> -> vector<32x32xf32>
    %cst_7 = arith.constant dense<0xFF800000> : vector<32xf32>
    %24 = vector.multi_reduction <maximumf>, %23, %cst_7 [1] : vector<32x32xf32> to vector<32xf32>
    %25 = vector.shape_cast %24 : vector<32xf32> to vector<32x1xf32>
    %26 = vector.broadcast %25 : vector<32x1xf32> to vector<32x32xf32>
    %27 = arith.subf %23, %26 : vector<32x32xf32>
    %28 = math.exp %27 : vector<32x32xf32>
    %cst_8 = arith.constant dense<0.000000e+00> : vector<32xf32>
    %29 = vector.multi_reduction <add>, %28, %cst_8 [1] : vector<32x32xf32> to vector<32xf32>
    %30 = vector.shape_cast %29 : vector<32xf32> to vector<32x1xf32>
    %31 = tpu.reciprocal %30 {approx = true} : vector<32x1xf32> -> vector<32x1xf32>
    %32 = vector.broadcast %31 : vector<32x1xf32> to vector<32x32xf32>
    %33 = arith.mulf %28, %32 : vector<32x32xf32>
    %cst_9 = arith.constant dense<0.000000e+00> : vector<32x32xf32>
    %34 = tpu.matmul %33, %22, %cst_9 {dimension_numbers = #tpu.dot_dimension_numbers<[1], [0], [0], [1], [0, 0, 1, 1], [], []>} : vector<32x32xf32>, vector<32x32xf32>, vector<32x32xf32> -> vector<32x32xf32>
    %35 = vector.extract_strided_slice %0 {offsets = [0, 64], sizes = [32, 32], strides = [1, 1]} : vector<32x384xf32> to vector<32x32xf32>
    %cst_10 = arith.constant 0.176776692 : f32
    %36 = vector.broadcast %cst_10 : f32 to vector<32x32xf32>
    %37 = arith.mulf %35, %36 : vector<32x32xf32>
    %38 = vector.extract_strided_slice %0 {offsets = [0, 192], sizes = [32, 32], strides = [1, 1]} : vector<32x384xf32> to vector<32x32xf32>
    %39 = vector.extract_strided_slice %0 {offsets = [0, 320], sizes = [32, 32], strides = [1, 1]} : vector<32x384xf32> to vector<32x32xf32>
    %cst_11 = arith.constant dense<0.000000e+00> : vector<32x32xf32>
    %40 = tpu.matmul %37, %38, %cst_11 {dimension_numbers = #tpu.dot_dimension_numbers<[1], [1], [0], [0], [0, 0, 1, 0], [], []>} : vector<32x32xf32>, vector<32x32xf32>, vector<32x32xf32> -> vector<32x32xf32>
    %cst_12 = arith.constant dense<0xFF800000> : vector<32xf32>
    %41 = vector.multi_reduction <maximumf>, %40, %cst_12 [1] : vector<32x32xf32> to vector<32xf32>
    %42 = vector.shape_cast %41 : vector<32xf32> to vector<32x1xf32>
    %43 = vector.broadcast %42 : vector<32x1xf32> to vector<32x32xf32>
    %44 = arith.subf %40, %43 : vector<32x32xf32>
    %45 = math.exp %44 : vector<32x32xf32>
    %cst_13 = arith.constant dense<0.000000e+00> : vector<32xf32>
    %46 = vector.multi_reduction <add>, %45, %cst_13 [1] : vector<32x32xf32> to vector<32xf32>
    %47 = vector.shape_cast %46 : vector<32xf32> to vector<32x1xf32>
    %48 = tpu.reciprocal %47 {approx = true} : vector<32x1xf32> -> vector<32x1xf32>
    %49 = vector.broadcast %48 : vector<32x1xf32> to vector<32x32xf32>
    %50 = arith.mulf %45, %49 : vector<32x32xf32>
    %cst_14 = arith.constant dense<0.000000e+00> : vector<32x32xf32>
    %51 = tpu.matmul %50, %39, %cst_14 {dimension_numbers = #tpu.dot_dimension_numbers<[1], [0], [0], [1], [0, 0, 1, 1], [], []>} : vector<32x32xf32>, vector<32x32xf32>, vector<32x32xf32> -> vector<32x32xf32>
    %52 = vector.extract_strided_slice %0 {offsets = [0, 96], sizes = [32, 32], strides = [1, 1]} : vector<32x384xf32> to vector<32x32xf32>
    %cst_15 = arith.constant 0.176776692 : f32
    %53 = vector.broadcast %cst_15 : f32 to vector<32x32xf32>
    %54 = arith.mulf %52, %53 : vector<32x32xf32>
    %55 = vector.extract_strided_slice %0 {offsets = [0, 224], sizes = [32, 32], strides = [1, 1]} : vector<32x384xf32> to vector<32x32xf32>
    %56 = vector.extract_strided_slice %0 {offsets = [0, 352], sizes = [32, 32], strides = [1, 1]} : vector<32x384xf32> to vector<32x32xf32>
    %cst_16 = arith.constant dense<0.000000e+00> : vector<32x32xf32>
    %57 = tpu.matmul %54, %55, %cst_16 {dimension_numbers = #tpu.dot_dimension_numbers<[1], [1], [0], [0], [0, 0, 1, 0], [], []>} : vector<32x32xf32>, vector<32x32xf32>, vector<32x32xf32> -> vector<32x32xf32>
    %cst_17 = arith.constant dense<0xFF800000> : vector<32xf32>
    %58 = vector.multi_reduction <maximumf>, %57, %cst_17 [1] : vector<32x32xf32> to vector<32xf32>
    %59 = vector.shape_cast %58 : vector<32xf32> to vector<32x1xf32>
    %60 = vector.broadcast %59 : vector<32x1xf32> to vector<32x32xf32>
    %61 = arith.subf %57, %60 : vector<32x32xf32>
    %62 = math.exp %61 : vector<32x32xf32>
    %cst_18 = arith.constant dense<0.000000e+00> : vector<32xf32>
    %63 = vector.multi_reduction <add>, %62, %cst_18 [1] : vector<32x32xf32> to vector<32xf32>
    %64 = vector.shape_cast %63 : vector<32xf32> to vector<32x1xf32>
    %65 = tpu.reciprocal %64 {approx = true} : vector<32x1xf32> -> vector<32x1xf32>
    %66 = vector.broadcast %65 : vector<32x1xf32> to vector<32x32xf32>
    %67 = arith.mulf %62, %66 : vector<32x32xf32>
    %cst_19 = arith.constant dense<0.000000e+00> : vector<32x32xf32>
    %68 = tpu.matmul %67, %56, %cst_19 {dimension_numbers = #tpu.dot_dimension_numbers<[1], [0], [0], [1], [0, 0, 1, 1], [], []>} : vector<32x32xf32>, vector<32x32xf32>, vector<32x32xf32> -> vector<32x32xf32>
    %69 = tpu.concatenate %17, %34, %51, %68 in 1 : vector<32x32xf32>, vector<32x32xf32>, vector<32x32xf32>, vector<32x32xf32> -> vector<32x128xf32>
    %c0_20 = arith.constant 0 : index
    %c0_21 = arith.constant 0 : index
    %70 = vector.load %arg2[%c0_20, %c0_21] : memref<32x128xf32, #tpu.memory_space<vmem>>, vector<32x128xf32>
    tpu.vector_store %arg2[%c0_20, %c0_21], %69 {strides = array<i32>} : memref<32x128xf32, #tpu.memory_space<vmem>>, vector<32x128xf32>,
    return
  }
  func.func @transform_0(%arg0: i32) -> (i32, i32) {
    %c0_i32 = arith.constant 0 : i32
    %c0_i32_0 = arith.constant 0 : i32
    return %arg0, %c0_i32 : i32, i32
  }
  func.func @transform_1(%arg0: i32) -> (i32, i32) {
    %c0_i32 = arith.constant 0 : i32
    %c0_i32_0 = arith.constant 0 : i32
    return %arg0, %c0_i32 : i32, i32
  }
}

module attributes {stable_mosaic.version = 11 : i64} {
  func.func @_linear_kernel(%arg0: i32, %arg1: i32, %arg2: i32, %arg3: memref<32x128xf32, #tpu.memory_space<vmem>>, %arg4: memref<128x384xbf16, #tpu.memory_space<vmem>>, %arg5: memref<1x384xf32, #tpu.memory_space<vmem>>, %arg6: memref<1x128xf32, #tpu.memory_space<vmem>>, %arg7: memref<1x128xf32, #tpu.memory_space<vmem>>, %arg8: memref<32x384xf32, #tpu.memory_space<vmem>>) attributes {dimension_semantics = [#tpu.dimension_semantics<parallel>, #tpu.dimension_semantics<parallel>, #tpu.dimension_semantics<arbitrary>], iteration_bounds = array<i64: 1, 1, 1>, scalar_prefetch = 0 : i64, scratch_operands = 0 : i64, tpu.core_type = #tpu.core_type<tc>, window_params = [{transform_indices = @transform_0, window_bounds = array<i64: 32, 128>}, {transform_indices = @transform_1, window_bounds = array<i64: 128, 384>}, {transform_indices = @transform_2, window_bounds = array<i64: 1, 384>}, {transform_indices = @transform_3, window_bounds = array<i64: 1, 128>}, {transform_indices = @transform_4, window_bounds = array<i64: 1, 128>}, {transform_indices = @transform_5, window_bounds = array<i64: 32, 384>}]} {
    %c0 = arith.constant 0 : index
    %c0_0 = arith.constant 0 : index
    %0 = vector.load %arg3[%c0, %c0_0] : memref<32x128xf32, #tpu.memory_space<vmem>>, vector<32x128xf32>
    %cst = arith.constant dense<0.000000e+00> : vector<32xf32>
    %1 = vector.multi_reduction <add>, %0, %cst [1] : vector<32x128xf32> to vector<32xf32>
    %2 = vector.shape_cast %1 : vector<32xf32> to vector<32x1xf32>
    %cst_1 = arith.constant 1.280000e+02 : f32
    %3 = vector.broadcast %cst_1 : f32 to vector<32x1xf32>
    %4 = arith.divf %2, %3 : vector<32x1xf32>
    %5 = vector.broadcast %4 : vector<32x1xf32> to vector<32x128xf32>
    %6 = arith.subf %0, %5 : vector<32x128xf32>
    %7 = arith.mulf %6, %6 : vector<32x128xf32>
    %cst_2 = arith.constant dense<0.000000e+00> : vector<32xf32>
    %8 = vector.multi_reduction <add>, %7, %cst_2 [1] : vector<32x128xf32> to vector<32xf32>
    %9 = vector.shape_cast %8 : vector<32xf32> to vector<32x1xf32>
    %cst_3 = arith.constant 1.280000e+02 : f32
    %10 = vector.broadcast %cst_3 : f32 to vector<32x1xf32>
    %11 = arith.divf %9, %10 : vector<32x1xf32>
    %cst_4 = arith.constant 9.99999974E-6 : f32
    %12 = vector.broadcast %cst_4 : f32 to vector<32x1xf32>
    %13 = arith.addf %11, %12 : vector<32x1xf32>
    %14 = math.rsqrt %13 : vector<32x1xf32>
    %15 = vector.broadcast %14 : vector<32x1xf32> to vector<32x128xf32>
    %16 = arith.mulf %6, %15 : vector<32x128xf32>
    %c0_5 = arith.constant 0 : index
    %c0_6 = arith.constant 0 : index
    %17 = vector.load %arg6[%c0_5, %c0_6] : memref<1x128xf32, #tpu.memory_space<vmem>>, vector<1x128xf32>
    %18 = vector.broadcast %17 : vector<1x128xf32> to vector<32x128xf32>
    %19 = arith.mulf %16, %18 : vector<32x128xf32>
    %c0_7 = arith.constant 0 : index
    %c0_8 = arith.constant 0 : index
    %20 = vector.load %arg7[%c0_7, %c0_8] : memref<1x128xf32, #tpu.memory_space<vmem>>, vector<1x128xf32>
    %21 = vector.broadcast %20 : vector<1x128xf32> to vector<32x128xf32>
    %22 = arith.addf %19, %21 : vector<32x128xf32>
    %c0_9 = arith.constant 0 : index
    %c0_10 = arith.constant 0 : index
    %23 = vector.load %arg4[%c0_9, %c0_10] : memref<128x384xbf16, #tpu.memory_space<vmem>>, vector<128x384xbf16>
    %24 = arith.truncf %22 : vector<32x128xf32> to vector<32x128xbf16>
    %cst_11 = arith.constant dense<0.000000e+00> : vector<32x384xf32>
    %25 = tpu.matmul %24, %23, %cst_11 {dimension_numbers = #tpu.dot_dimension_numbers<[1], [0], [0], [1], [0, 0, 1, 1], [], []>} : vector<32x128xbf16>, vector<128x384xbf16>, vector<32x384xf32> -> vector<32x384xf32>
    %c0_12 = arith.constant 0 : index
    %c0_13 = arith.constant 0 : index
    %26 = vector.load %arg5[%c0_12, %c0_13] : memref<1x384xf32, #tpu.memory_space<vmem>>, vector<1x384xf32>
    %27 = vector.broadcast %26 : vector<1x384xf32> to vector<32x384xf32>
    %28 = arith.addf %25, %27 : vector<32x384xf32>
    %c0_14 = arith.constant 0 : index
    %c0_15 = arith.constant 0 : index
    %29 = vector.load %arg8[%c0_14, %c0_15] : memref<32x384xf32, #tpu.memory_space<vmem>>, vector<32x384xf32>
    tpu.vector_store %arg8[%c0_14, %c0_15], %28 {strides = array<i32>} : memref<32x384xf32, #tpu.memory_space<vmem>>, vector<32x384xf32>,
    return
  }
  func.func @transform_0(%arg0: i32, %arg1: i32, %arg2: i32) -> (i32, i32) {
    %c0_i32 = arith.constant 0 : i32
    return %arg0, %arg2 : i32, i32
  }
  func.func @transform_1(%arg0: i32, %arg1: i32, %arg2: i32) -> (i32, i32) {
    %c0_i32 = arith.constant 0 : i32
    return %arg2, %arg1 : i32, i32
  }
  func.func @transform_2(%arg0: i32, %arg1: i32, %arg2: i32) -> (i32, i32) {
    %c0_i32 = arith.constant 0 : i32
    %c0_i32_0 = arith.constant 0 : i32
    return %c0_i32, %arg1 : i32, i32
  }
  func.func @transform_3(%arg0: i32, %arg1: i32, %arg2: i32) -> (i32, i32) {
    %c0_i32 = arith.constant 0 : i32
    %c0_i32_0 = arith.constant 0 : i32
    return %c0_i32, %arg2 : i32, i32
  }
  func.func @transform_4(%arg0: i32, %arg1: i32, %arg2: i32) -> (i32, i32) {
    %c0_i32 = arith.constant 0 : i32
    %c0_i32_0 = arith.constant 0 : i32
    return %c0_i32, %arg2 : i32, i32
  }
  func.func @transform_5(%arg0: i32, %arg1: i32, %arg2: i32) -> (i32, i32) {
    %c0_i32 = arith.constant 0 : i32
    return %arg0, %arg1 : i32, i32
  }
}

module attributes {stable_mosaic.version = 11 : i64} {
  func.func @_linear_kernel(%arg0: i32, %arg1: i32, %arg2: i32, %arg3: memref<32x128xf32, #tpu.memory_space<vmem>>, %arg4: memref<128x128xbf16, #tpu.memory_space<vmem>>, %arg5: memref<1x128xf32, #tpu.memory_space<vmem>>, %arg6: memref<32x128xf32, #tpu.memory_space<vmem>>, %arg7: memref<32x128xf32, #tpu.memory_space<vmem>>) attributes {dimension_semantics = [#tpu.dimension_semantics<parallel>, #tpu.dimension_semantics<parallel>, #tpu.dimension_semantics<arbitrary>], iteration_bounds = array<i64: 1, 1, 1>, scalar_prefetch = 0 : i64, scratch_operands = 0 : i64, tpu.core_type = #tpu.core_type<tc>, window_params = [{transform_indices = @transform_0, window_bounds = array<i64: 32, 128>}, {transform_indices = @transform_1, window_bounds = array<i64: 128, 128>}, {transform_indices = @transform_2, window_bounds = array<i64: 1, 128>}, {transform_indices = @transform_3, window_bounds = array<i64: 32, 128>}, {transform_indices = @transform_4, window_bounds = array<i64: 32, 128>}]} {
    %c0 = arith.constant 0 : index
    %c0_0 = arith.constant 0 : index
    %0 = vector.load %arg3[%c0, %c0_0] : memref<32x128xf32, #tpu.memory_space<vmem>>, vector<32x128xf32>
    %c0_1 = arith.constant 0 : index
    %c0_2 = arith.constant 0 : index
    %1 = vector.load %arg4[%c0_1, %c0_2] : memref<128x128xbf16, #tpu.memory_space<vmem>>, vector<128x128xbf16>
    %2 = arith.truncf %0 : vector<32x128xf32> to vector<32x128xbf16>
    %cst = arith.constant dense<0.000000e+00> : vector<32x128xf32>
    %3 = tpu.matmul %2, %1, %cst {dimension_numbers = #tpu.dot_dimension_numbers<[1], [0], [0], [1], [0, 0, 1, 1], [], []>} : vector<32x128xbf16>, vector<128x128xbf16>, vector<32x128xf32> -> vector<32x128xf32>
    %c0_3 = arith.constant 0 : index
    %c0_4 = arith.constant 0 : index
    %4 = vector.load %arg5[%c0_3, %c0_4] : memref<1x128xf32, #tpu.memory_space<vmem>>, vector<1x128xf32>
    %5 = vector.broadcast %4 : vector<1x128xf32> to vector<32x128xf32>
    %6 = arith.addf %3, %5 : vector<32x128xf32>
    %c0_5 = arith.constant 0 : index
    %c0_6 = arith.constant 0 : index
    %7 = vector.load %arg6[%c0_5, %c0_6] : memref<32x128xf32, #tpu.memory_space<vmem>>, vector<32x128xf32>
    %8 = arith.addf %6, %7 : vector<32x128xf32>
    %c0_7 = arith.constant 0 : index
    %c0_8 = arith.constant 0 : index
    %9 = vector.load %arg7[%c0_7, %c0_8] : memref<32x128xf32, #tpu.memory_space<vmem>>, vector<32x128xf32>
    tpu.vector_store %arg7[%c0_7, %c0_8], %8 {strides = array<i32>} : memref<32x128xf32, #tpu.memory_space<vmem>>, vector<32x128xf32>,
    return
  }
  func.func @transform_0(%arg0: i32, %arg1: i32, %arg2: i32) -> (i32, i32) {
    %c0_i32 = arith.constant 0 : i32
    return %arg0, %arg2 : i32, i32
  }
  func.func @transform_1(%arg0: i32, %arg1: i32, %arg2: i32) -> (i32, i32) {
    %c0_i32 = arith.constant 0 : i32
    return %arg2, %arg1 : i32, i32
  }
  func.func @transform_2(%arg0: i32, %arg1: i32, %arg2: i32) -> (i32, i32) {
    %c0_i32 = arith.constant 0 : i32
    %c0_i32_0 = arith.constant 0 : i32
    return %c0_i32, %arg1 : i32, i32
  }
  func.func @transform_3(%arg0: i32, %arg1: i32, %arg2: i32) -> (i32, i32) {
    %c0_i32 = arith.constant 0 : i32
    return %arg0, %arg1 : i32, i32
  }
  func.func @transform_4(%arg0: i32, %arg1: i32, %arg2: i32) -> (i32, i32) {
    %c0_i32 = arith.constant 0 : i32
    return %arg0, %arg1 : i32, i32
  }
}

module attributes {stable_mosaic.version = 11 : i64} {
  func.func @_linear_kernel(%arg0: i32, %arg1: i32, %arg2: i32, %arg3: memref<32x128xf32, #tpu.memory_space<vmem>>, %arg4: memref<128x1960xbf16, #tpu.memory_space<vmem>>, %arg5: memref<1x1960xf32, #tpu.memory_space<vmem>>, %arg6: memref<1x128xf32, #tpu.memory_space<vmem>>, %arg7: memref<1x128xf32, #tpu.memory_space<vmem>>, %arg8: memref<32x1960xf32, #tpu.memory_space<vmem>>) attributes {dimension_semantics = [#tpu.dimension_semantics<parallel>, #tpu.dimension_semantics<parallel>, #tpu.dimension_semantics<arbitrary>], iteration_bounds = array<i64: 1, 1, 1>, scalar_prefetch = 0 : i64, scratch_operands = 0 : i64, tpu.core_type = #tpu.core_type<tc>, window_params = [{transform_indices = @transform_0, window_bounds = array<i64: 32, 128>}, {transform_indices = @transform_1, window_bounds = array<i64: 128, 1960>}, {transform_indices = @transform_2, window_bounds = array<i64: 1, 1960>}, {transform_indices = @transform_3, window_bounds = array<i64: 1, 128>}, {transform_indices = @transform_4, window_bounds = array<i64: 1, 128>}, {transform_indices = @transform_5, window_bounds = array<i64: 32, 1960>}]} {
    %c0 = arith.constant 0 : index
    %c0_0 = arith.constant 0 : index
    %0 = vector.load %arg3[%c0, %c0_0] : memref<32x128xf32, #tpu.memory_space<vmem>>, vector<32x128xf32>
    %cst = arith.constant dense<0.000000e+00> : vector<32xf32>
    %1 = vector.multi_reduction <add>, %0, %cst [1] : vector<32x128xf32> to vector<32xf32>
    %2 = vector.shape_cast %1 : vector<32xf32> to vector<32x1xf32>
    %cst_1 = arith.constant 1.280000e+02 : f32
    %3 = vector.broadcast %cst_1 : f32 to vector<32x1xf32>
    %4 = arith.divf %2, %3 : vector<32x1xf32>
    %5 = vector.broadcast %4 : vector<32x1xf32> to vector<32x128xf32>
    %6 = arith.subf %0, %5 : vector<32x128xf32>
    %7 = arith.mulf %6, %6 : vector<32x128xf32>
    %cst_2 = arith.constant dense<0.000000e+00> : vector<32xf32>
    %8 = vector.multi_reduction <add>, %7, %cst_2 [1] : vector<32x128xf32> to vector<32xf32>
    %9 = vector.shape_cast %8 : vector<32xf32> to vector<32x1xf32>
    %cst_3 = arith.constant 1.280000e+02 : f32
    %10 = vector.broadcast %cst_3 : f32 to vector<32x1xf32>
    %11 = arith.divf %9, %10 : vector<32x1xf32>
    %cst_4 = arith.constant 9.99999974E-6 : f32
    %12 = vector.broadcast %cst_4 : f32 to vector<32x1xf32>
    %13 = arith.addf %11, %12 : vector<32x1xf32>
    %14 = math.rsqrt %13 : vector<32x1xf32>
    %15 = vector.broadcast %14 : vector<32x1xf32> to vector<32x128xf32>
    %16 = arith.mulf %6, %15 : vector<32x128xf32>
    %c0_5 = arith.constant 0 : index
    %c0_6 = arith.constant 0 : index
    %17 = vector.load %arg6[%c0_5, %c0_6] : memref<1x128xf32, #tpu.memory_space<vmem>>, vector<1x128xf32>
    %18 = vector.broadcast %17 : vector<1x128xf32> to vector<32x128xf32>
    %19 = arith.mulf %16, %18 : vector<32x128xf32>
    %c0_7 = arith.constant 0 : index
    %c0_8 = arith.constant 0 : index
    %20 = vector.load %arg7[%c0_7, %c0_8] : memref<1x128xf32, #tpu.memory_space<vmem>>, vector<1x128xf32>
    %21 = vector.broadcast %20 : vector<1x128xf32> to vector<32x128xf32>
    %22 = arith.addf %19, %21 : vector<32x128xf32>
    %c0_9 = arith.constant 0 : index
    %c0_10 = arith.constant 0 : index
    %23 = vector.load %arg4[%c0_9, %c0_10] : memref<128x1960xbf16, #tpu.memory_space<vmem>>, vector<128x1960xbf16>
    %24 = arith.truncf %22 : vector<32x128xf32> to vector<32x128xbf16>
    %cst_11 = arith.constant dense<0.000000e+00> : vector<32x1960xf32>
    %25 = tpu.matmul %24, %23, %cst_11 {dimension_numbers = #tpu.dot_dimension_numbers<[1], [0], [0], [1], [0, 0, 1, 1], [], []>} : vector<32x128xbf16>, vector<128x1960xbf16>, vector<32x1960xf32> -> vector<32x1960xf32>
    %c0_12 = arith.constant 0 : index
    %c0_13 = arith.constant 0 : index
    %26 = vector.load %arg5[%c0_12, %c0_13] : memref<1x1960xf32, #tpu.memory_space<vmem>>, vector<1x1960xf32>
    %27 = vector.broadcast %26 : vector<1x1960xf32> to vector<32x1960xf32>
    %28 = arith.addf %25, %27 : vector<32x1960xf32>
    %c0_14 = arith.constant 0 : index
    %c0_15 = arith.constant 0 : index
    %29 = vector.load %arg8[%c0_14, %c0_15] : memref<32x1960xf32, #tpu.memory_space<vmem>>, vector<32x1960xf32>
    tpu.vector_store %arg8[%c0_14, %c0_15], %28 {strides = array<i32>} : memref<32x1960xf32, #tpu.memory_space<vmem>>, vector<32x1960xf32>,
    return
  }
  func.func @transform_0(%arg0: i32, %arg1: i32, %arg2: i32) -> (i32, i32) {
    %c0_i32 = arith.constant 0 : i32
    return %arg0, %arg2 : i32, i32
  }
  func.func @transform_1(%arg0: i32, %arg1: i32, %arg2: i32) -> (i32, i32) {
    %c0_i32 = arith.constant 0 : i32
    return %arg2, %arg1 : i32, i32
  }
  func.func @transform_2(%arg0: i32, %arg1: i32, %arg2: i32) -> (i32, i32) {
    %c0_i32 = arith.constant 0 : i32
    %c0_i32_0 = arith.constant 0 : i32
    return %c0_i32, %arg1 : i32, i32
  }
  func.func @transform_3(%arg0: i32, %arg1: i32, %arg2: i32) -> (i32, i32) {
    %c0_i32 = arith.constant 0 : i32
    %c0_i32_0 = arith.constant 0 : i32
    return %c0_i32, %arg2 : i32, i32
  }
  func.func @transform_4(%arg0: i32, %arg1: i32, %arg2: i32) -> (i32, i32) {
    %c0_i32 = arith.constant 0 : i32
    %c0_i32_0 = arith.constant 0 : i32
    return %c0_i32, %arg2 : i32, i32
  }
  func.func @transform_5(%arg0: i32, %arg1: i32, %arg2: i32) -> (i32, i32) {
    %c0_i32 = arith.constant 0 : i32
    return %arg0, %arg1 : i32, i32
  }
}

module attributes {stable_mosaic.version = 11 : i64} {
  func.func @_fold_matmul_kernel(%arg0: i32, %arg1: memref<784x784xbf16, #tpu.memory_space<vmem>>, %arg2: memref<784x40xf32, #tpu.memory_space<vmem>>, %arg3: memref<784x40xf32, #tpu.memory_space<vmem>>) attributes {dimension_semantics = [#tpu.dimension_semantics<parallel>], iteration_bounds = array<i64: 2>, scalar_prefetch = 0 : i64, scratch_operands = 0 : i64, tpu.core_type = #tpu.core_type<tc>, window_params = [{pipeline_mode = #tpu.pipeline_mode<synchronous>, transform_indices = @transform_0, window_bounds = array<i64: 784, 784>}, {transform_indices = @transform_1, window_bounds = array<i64: 784, 40>}, {transform_indices = @transform_2, window_bounds = array<i64: 784, 40>}]} {
    %c0 = arith.constant 0 : index
    %c0_0 = arith.constant 0 : index
    %0 = vector.load %arg1[%c0, %c0_0] : memref<784x784xbf16, #tpu.memory_space<vmem>>, vector<784x784xbf16>
    %c0_1 = arith.constant 0 : index
    %c0_2 = arith.constant 0 : index
    %1 = vector.load %arg2[%c0_1, %c0_2] : memref<784x40xf32, #tpu.memory_space<vmem>>, vector<784x40xf32>
    %2 = arith.truncf %1 : vector<784x40xf32> to vector<784x40xbf16>
    %cst = arith.constant dense<0.000000e+00> : vector<784x40xf32>
    %3 = tpu.matmul %0, %2, %cst {dimension_numbers = #tpu.dot_dimension_numbers<[1], [0], [0], [1], [0, 0, 1, 1], [], []>} : vector<784x784xbf16>, vector<784x40xbf16>, vector<784x40xf32> -> vector<784x40xf32>
    %c0_3 = arith.constant 0 : index
    %c0_4 = arith.constant 0 : index
    %4 = vector.load %arg3[%c0_3, %c0_4] : memref<784x40xf32, #tpu.memory_space<vmem>>, vector<784x40xf32>
    tpu.vector_store %arg3[%c0_3, %c0_4], %3 {strides = array<i32>} : memref<784x40xf32, #tpu.memory_space<vmem>>, vector<784x40xf32>,
    return
  }
  func.func @transform_0(%arg0: i32) -> (i32, i32) {
    %c0_i32 = arith.constant 0 : i32
    %c0_i32_0 = arith.constant 0 : i32
    %c0_i32_1 = arith.constant 0 : i32
    return %c0_i32, %c0_i32_0 : i32, i32
  }
  func.func @transform_1(%arg0: i32) -> (i32, i32) {
    %c0_i32 = arith.constant 0 : i32
    %c0_i32_0 = arith.constant 0 : i32
    return %arg0, %c0_i32 : i32, i32
  }
  func.func @transform_2(%arg0: i32) -> (i32, i32) {
    %c0_i32 = arith.constant 0 : i32
    %c0_i32_0 = arith.constant 0 : i32
    return %arg0, %c0_i32 : i32, i32
  }
}

module attributes {stable_mosaic.version = 11 : i64} {
  func.func @_linear_kernel(%arg0: i32, %arg1: i32, %arg2: i32, %arg3: memref<32x1960xf32, #tpu.memory_space<vmem>>, %arg4: memref<1960x128xbf16, #tpu.memory_space<vmem>>, %arg5: memref<1x128xf32, #tpu.memory_space<vmem>>, %arg6: memref<32x128xf32, #tpu.memory_space<vmem>>, %arg7: memref<32x128xf32, #tpu.memory_space<vmem>>) attributes {dimension_semantics = [#tpu.dimension_semantics<parallel>, #tpu.dimension_semantics<parallel>, #tpu.dimension_semantics<arbitrary>], iteration_bounds = array<i64: 1, 1, 1>, scalar_prefetch = 0 : i64, scratch_operands = 0 : i64, tpu.core_type = #tpu.core_type<tc>, window_params = [{transform_indices = @transform_0, window_bounds = array<i64: 32, 1960>}, {transform_indices = @transform_1, window_bounds = array<i64: 1960, 128>}, {transform_indices = @transform_2, window_bounds = array<i64: 1, 128>}, {transform_indices = @transform_3, window_bounds = array<i64: 32, 128>}, {transform_indices = @transform_4, window_bounds = array<i64: 32, 128>}]} {
    %c0 = arith.constant 0 : index
    %c0_0 = arith.constant 0 : index
    %0 = vector.load %arg3[%c0, %c0_0] : memref<32x1960xf32, #tpu.memory_space<vmem>>, vector<32x1960xf32>
    %cst = arith.constant 0.000000e+00 : f32
    %1 = vector.broadcast %cst : f32 to vector<32x1960xf32>
    %2 = arith.maximumf %0, %1 : vector<32x1960xf32>
    %c0_1 = arith.constant 0 : index
    %c0_2 = arith.constant 0 : index
    %3 = vector.load %arg4[%c0_1, %c0_2] : memref<1960x128xbf16, #tpu.memory_space<vmem>>, vector<1960x128xbf16>
    %4 = arith.truncf %2 : vector<32x1960xf32> to vector<32x1960xbf16>
    %cst_3 = arith.constant dense<0.000000e+00> : vector<32x128xf32>
    %5 = tpu.matmul %4, %3, %cst_3 {dimension_numbers = #tpu.dot_dimension_numbers<[1], [0], [0], [1], [0, 0, 1, 1], [], []>} : vector<32x1960xbf16>, vector<1960x128xbf16>, vector<32x128xf32> -> vector<32x128xf32>
    %c0_4 = arith.constant 0 : index
    %c0_5 = arith.constant 0 : index
    %6 = vector.load %arg5[%c0_4, %c0_5] : memref<1x128xf32, #tpu.memory_space<vmem>>, vector<1x128xf32>
    %7 = vector.broadcast %6 : vector<1x128xf32> to vector<32x128xf32>
    %8 = arith.addf %5, %7 : vector<32x128xf32>
    %c0_6 = arith.constant 0 : index
    %c0_7 = arith.constant 0 : index
    %9 = vector.load %arg6[%c0_6, %c0_7] : memref<32x128xf32, #tpu.memory_space<vmem>>, vector<32x128xf32>
    %10 = arith.addf %8, %9 : vector<32x128xf32>
    %c0_8 = arith.constant 0 : index
    %c0_9 = arith.constant 0 : index
    %11 = vector.load %arg7[%c0_8, %c0_9] : memref<32x128xf32, #tpu.memory_space<vmem>>, vector<32x128xf32>
    tpu.vector_store %arg7[%c0_8, %c0_9], %10 {strides = array<i32>} : memref<32x128xf32, #tpu.memory_space<vmem>>, vector<32x128xf32>,
    return
  }
  func.func @transform_0(%arg0: i32, %arg1: i32, %arg2: i32) -> (i32, i32) {
    %c0_i32 = arith.constant 0 : i32
    return %arg0, %arg2 : i32, i32
  }
  func.func @transform_1(%arg0: i32, %arg1: i32, %arg2: i32) -> (i32, i32) {
    %c0_i32 = arith.constant 0 : i32
    return %arg2, %arg1 : i32, i32
  }
  func.func @transform_2(%arg0: i32, %arg1: i32, %arg2: i32) -> (i32, i32) {
    %c0_i32 = arith.constant 0 : i32
    %c0_i32_0 = arith.constant 0 : i32
    return %c0_i32, %arg1 : i32, i32
  }
  func.func @transform_3(%arg0: i32, %arg1: i32, %arg2: i32) -> (i32, i32) {
    %c0_i32 = arith.constant 0 : i32
    return %arg0, %arg1 : i32, i32
  }
  func.func @transform_4(%arg0: i32, %arg1: i32, %arg2: i32) -> (i32, i32) {
    %c0_i32 = arith.constant 0 : i32
    return %arg0, %arg1 : i32, i32
  }
}

</mosaic_0001>

<llo_original>
// kernel: transformer_block.8
$region0: #{transformer_block.8}
  #allocation0 [shape = 'u32[]', space=smem, size = 0x4, offset = 0x4, fixed_abs, tag = 'smem constant byte address 0x4 - core index']
  #allocation1 [shape = 'u32[144,128]{1,0:T(1,128)}', space=vmem, size = 0x12000, scoped, tag = 'internal scratch']
  %s0 = inlined_call_operand.vmem [shape: f32[32,128], index: 0, kind: input, shape index: {}]
  %s1 = inlined_call_operand.hbm [shape: bf16[128,128], index: 1, kind: input, shape index: {}]
  %s2 = inlined_call_operand.hbm [shape: f32[1,128], index: 2, kind: input, shape index: {}]
  %s3 = inlined_call_operand.hbm [shape: f32[32,128], index: 3, kind: input, shape index: {}]
  %s4 = inlined_call_operand.vmem [shape: f32[32,128], index: 4, kind: output, shape index: {}]
  %s5 = sld [smem:[#allocation0]]
  $region38: #{transformer_block.8} parent=0
    _
  %s7 = ssub.s32 1, %s5
  %s8 = scalar_select 0, %s7, %s5
  $region1: #{transformer_block.8} parent=0
    #allocation2 [shape = 'u8[32768]{0}', space=vmem, size = 0x8000, scoped, tag = 'input window, operand 1, single buffered']
    #allocation3 [shape = 's32[1]{0}', space=sflag, size = 0x4, scoped, tag = 'scoped memory for transformer_block.8']
    #allocation4 [shape = 'u8[512]{0}', space=vmem, size = 0x400, scoped, tag = 'input window, operand 2, single buffered']
    #allocation5 [shape = 's32[1]{0}', space=sflag, size = 0x4, scoped, tag = 'scoped memory for transformer_block.8']
    #allocation6 [shape = 'u8[16384]{0}', space=vmem, size = 0x4000, scoped, tag = 'input window, operand 3, single buffered']
    %9 = vsyncpa [#allocation3], 0
    %10 = vsyncpa [#allocation5], 0
    // Predicated region
    $region2: #{transformer_block.8} parent=1 // pred_check
      _
    $region3: #{transformer_block.8} parent=1 // pred_check_branch
      %12 = sbr.rel (0) target = $region5
    $region4: #{transformer_block.8} parent=1 // pred_region
      _
    $region5: #{transformer_block.8} parent=1 // pred_fallthru
      _
    // Predicated region
    $region6: #{transformer_block.8} parent=1 // pred_check
      _
    $region7: #{transformer_block.8} parent=1 // pred_check_branch
      %14 = sbr.rel (0) target = $region9
    $region8: #{transformer_block.8} parent=1 // pred_region
      %s16 = ssub.s32 1024, 1024
      %17 = vsyncadd [#allocation3], %s16
      %s18 = sshll.u32 [#allocation2], 4
      %s19 = int_to_ptr.vmem [resolvable:$true] %s18
      %24 = dma.hbm_to_vmem [thread:$0]  %s1, 1024, %s19, [#allocation3], 64, 64, 4
    $region9: #{transformer_block.8} parent=1 // pred_fallthru
      _
    // Predicated region
    $region10: #{transformer_block.8} parent=1 // pred_check
      _
    $region11: #{transformer_block.8} parent=1 // pred_check_branch
      %26 = sbr.rel (0) target = $region13
    $region12: #{transformer_block.8} parent=1 // pred_region
      %s28 = ssub.s32 16, 16
      %29 = vsyncadd [#allocation5], %s28
      %s31 = sshll.u32 [#allocation4], 4
      %s32 = int_to_ptr.vmem [resolvable:$true] %s31
      %34 = dma.hbm_to_vmem [thread:$0]  %s2, 16, %s32, [#allocation5]
    $region13: #{transformer_block.8} parent=1 // pred_fallthru
      _
    // Predicated region
    $region14: #{transformer_block.8} parent=1 // pred_check
      _
    $region15: #{transformer_block.8} parent=1 // pred_check_branch
      %36 = sbr.rel (0) target = $region17
    $region16: #{transformer_block.8} parent=1 // pred_region
      %s38 = ssub.s32 512, 512
      %39 = vsyncadd [#allocation5], %s38
      %s40 = sshll.u32 [#allocation6], 4
      %s41 = int_to_ptr.vmem [resolvable:$true] %s40
      %46 = dma.hbm_to_vmem [thread:$0]  %s3, 512, %s41, [#allocation5], 128, 128, 8
    $region17: #{transformer_block.8} parent=1 // pred_fallthru
      _
    // Predicated region
    $region18: #{transformer_block.8} parent=1 // pred_check
      _
    $region19: #{transformer_block.8} parent=1 // pred_check_branch
      %48 = sbr.rel (0) target = $region21
    $region20: #{transformer_block.8} parent=1 // pred_region
      %49 = dma.done [#allocation3], 1024
    $region21: #{transformer_block.8} parent=1 // pred_fallthru
      _
    // Predicated region
    $region22: #{transformer_block.8} parent=1 // pred_check
      _
    $region23: #{transformer_block.8} parent=1 // pred_check_branch
      %51 = sbr.rel (0) target = $region25
    $region24: #{transformer_block.8} parent=1 // pred_region
      %52 = dma.done [#allocation5], 16
    $region25: #{transformer_block.8} parent=1 // pred_fallthru
      _
    // Predicated region
    $region26: #{transformer_block.8} parent=1 // pred_check
      _
    $region27: #{transformer_block.8} parent=1 // pred_check_branch
      %54 = sbr.rel (0) target = $region29
    $region28: #{transformer_block.8} parent=1 // pred_region
      %55 = dma.done [#allocation5], 512
    $region29: #{transformer_block.8} parent=1 // pred_fallthru
      _
    %v57 = vld [vmem:[%s0] sm:$0xff]
    %v58 = vld [vmem:[%s0 + $0x8] sm:$0xff]
    %v59 = vld [vmem:[%s0 + $0x10] sm:$0xff]
    %v60 = vld [vmem:[%s0 + $0x18] sm:$0xff]
    %v61 = vld [vmem:[#allocation2] sm:$0xf]
    %v62 = vld [vmem:[#allocation2 + $0x4] sm:$0xf]
    %v63 = vld [vmem:[#allocation2 + $0x8] sm:$0xf]
    %v64 = vld [vmem:[#allocation2 + $0xc] sm:$0xf]
    %v65 = vld [vmem:[#allocation2 + $0x10] sm:$0xf]
    %v66 = vld [vmem:[#allocation2 + $0x14] sm:$0xf]
    %v67 = vld [vmem:[#allocation2 + $0x18] sm:$0xf]
    %v68 = vld [vmem:[#allocation2 + $0x1c] sm:$0xf]
    %v69 = vld [vmem:[#allocation2 + $0x20] sm:$0xf]
    %v70 = vld [vmem:[#allocation2 + $0x24] sm:$0xf]
    %v71 = vld [vmem:[#allocation2 + $0x28] sm:$0xf]
    %v72 = vld [vmem:[#allocation2 + $0x2c] sm:$0xf]
    %v73 = vld [vmem:[#allocation2 + $0x30] sm:$0xf]
    %v74 = vld [vmem:[#allocation2 + $0x34] sm:$0xf]
    %v75 = vld [vmem:[#allocation2 + $0x38] sm:$0xf]
    %v76 = vld [vmem:[#allocation2 + $0x3c] sm:$0xf]
    %v77 = vpack.c.bf16 %v58, %v57
    %v78 = vpack.c.bf16 %v60, %v59
    %v79 = vld [vmem:[#allocation4] sm:$0x1]
    %v81 = vlaneseq
    %v82 = vshrl.u32 %v81, 7
    %v83 = vsub.s32 0, %v82
    %v84 = vrot.slane %v79, %v83
    %v102 = vunpack.c.l.b16 %v61
    %v103 = vunpack.c.l.b16 %v62
    %v104 = vunpack.c.l.b16 %v63
    %v105 = vunpack.c.l.b16 %v64
    %v106 = vunpack.c.l.b16 %v65
    %v107 = vunpack.c.l.b16 %v66
    %v108 = vunpack.c.l.b16 %v67
    %v109 = vunpack.c.l.b16 %v68
    %v110 = vunpack.c.l.b16 %v69
    %v111 = vunpack.c.l.b16 %v70
    %v112 = vunpack.c.l.b16 %v71
    %v113 = vunpack.c.l.b16 %v72
    %v114 = vunpack.c.l.b16 %v73
    %v115 = vunpack.c.l.b16 %v74
    %v116 = vunpack.c.l.b16 %v75
    %v117 = vunpack.c.l.b16 %v76
    %v118 = vpack.c.b16 %v103, %v102
    %v119 = vpack.c.b16 %v105, %v104
    %v120 = vpack.c.b16 %v107, %v106
    %v121 = vpack.c.b16 %v109, %v108
    %v122 = vpack.c.b16 %v111, %v110
    %v123 = vpack.c.b16 %v113, %v112
    %v124 = vpack.c.b16 %v115, %v114
    %v125 = vpack.c.b16 %v117, %v116
    %134 = vmatprep.subr.bf16.mxu0 0
    %135 = vmatpush1.bf16.msra.mxu0 %v118
    %136 = vmatprep.subr.bf16.mxu0 0
    %137 = vmatpush1.bf16.msra.mxu0 %v119
    %138 = vmatprep.subr.bf16.mxu0 0
    %139 = vmatpush1.bf16.msra.mxu0 %v120
    %140 = vmatprep.subr.bf16.mxu0 0
    %141 = vmatpush1.bf16.msra.mxu0 %v121
    %142 = vmatprep.subr.bf16.mxu0 0
    %143 = vmatpush1.bf16.msra.mxu0 %v122
    %144 = vmatprep.subr.bf16.mxu0 0
    %145 = vmatpush1.bf16.msra.mxu0 %v123
    %146 = vmatprep.subr.bf16.mxu0 0
    %147 = vmatpush1.bf16.msra.mxu0 %v124
    %148 = vmatprep.subr.bf16.mxu0 0
    %149 = vmatpush1.bf16.msra.mxu0 %v125
    %150 = vmatprep.subr.bf16.mxu0 0
    %151 = vmatpush1.bf16.msra.mxu0 0
    %152 = vmatprep.subr.bf16.mxu0 0
    %153 = vmatpush1.bf16.msra.mxu0 0
    %154 = vmatprep.subr.bf16.mxu0 0
    %155 = vmatpush1.bf16.msra.mxu0 0
    %156 = vmatprep.subr.bf16.mxu0 0
    %157 = vmatpush1.bf16.msra.mxu0 0
    %158 = vmatprep.subr.bf16.mxu0 0
    %159 = vmatpush1.bf16.msra.mxu0 0
    %160 = vmatprep.subr.bf16.mxu0 0
    %161 = vmatpush1.bf16.msra.mxu0 0
    %162 = vmatprep.subr.bf16.mxu0 0
    %163 = vmatpush1.bf16.msra.mxu0 0
    %164 = vmatprep.subr.bf16.mxu0 0
    %165 = vmatpush1.bf16.msra.mxu0 0
    %166 = vmatprep.mubr.bf16.mxu0 0
    %167 = vmatmul.mubr.bf16.gmra.mrb[0].mxu0 %v77
    %v168 = vpop.f32.mrb[0].mxu0
    %v169 = vadd.f32 %v84, %v168
    %v170 = vpop.f32.mrb[0].mxu0
    %v171 = vpop.f32.mrb[0].mxu0
    %v172 = vadd.f32 %v84, %v171
    %v173 = vpop.f32.mrb[0].mxu0
    %174 = vmatprep.mubr.bf16.mxu0 0
    %175 = vmatmul.mubr.bf16.gmra.mrb[0].mxu0 %v78
    %v176 = vpop.f32.mrb[0].mxu0
    %v177 = vadd.f32 %v84, %v176
    %v178 = vpop.f32.mrb[0].mxu0
    %v179 = vpop.f32.mrb[0].mxu0
    %v180 = vadd.f32 %v84, %v179
    %v181 = vpop.f32.mrb[0].mxu0
    %182 = vdwg.mxu0
    %v183 = vld [vmem:[#allocation6] sm:$0xff]
    %v184 = vld [vmem:[#allocation6 + $0x8] sm:$0xff]
    %v185 = vld [vmem:[#allocation6 + $0x10] sm:$0xff]
    %v186 = vld [vmem:[#allocation6 + $0x18] sm:$0xff]
    %v187 = vadd.f32 %v169, %v183
    %v188 = vadd.f32 %v172, %v184
    %v189 = vadd.f32 %v177, %v185
    %v190 = vadd.f32 %v180, %v186
    %191 = vst [vmem:[%s4] sm:$0xff] %v187
    %192 = vst [vmem:[%s4 + $0x8] sm:$0xff] %v188
    %193 = vst [vmem:[%s4 + $0x10] sm:$0xff] %v189
    %194 = vst [vmem:[%s4 + $0x18] sm:$0xff] %v190
    // Predicated region
    $region30: #{transformer_block.8} parent=1 // pred_check
      _
    $region31: #{transformer_block.8} parent=1 // pred_check_branch
      %196 = sbr.rel (0) target = $region33
    $region32: #{transformer_block.8} parent=1 // pred_region
      _
    $region33: #{transformer_block.8} parent=1 // pred_fallthru
      _
    // Predicated region
    $region34: #{transformer_block.8} parent=1 // pred_check
      _
    $region35: #{transformer_block.8} parent=1 // pred_check_branch
      %198 = sbr.rel (0) target = $region37
    $region36: #{transformer_block.8} parent=1 // pred_region
      _
    $region37: #{transformer_block.8} parent=1 // pred_fallthru
      _
    %199 = vsyncpa [#allocation3], 1
    %200 = vsyncpa [#allocation5], 1

// kernel: transformer_block.6
$region0: #{transformer_block.6}
  #allocation0 [shape = 'u32[]', space=smem, size = 0x4, offset = 0x4, fixed_abs, tag = 'smem constant byte address 0x4 - core index']
  #allocation1 [shape = 'u32[144,128]{1,0:T(1,128)}', space=vmem, size = 0x12000, scoped, tag = 'internal scratch']
  %s0 = inlined_call_operand.hbm [shape: f32[32,128], index: 0, kind: input, shape index: {}]
  %s1 = inlined_call_operand.hbm [shape: bf16[128,384], index: 1, kind: input, shape index: {}]
  %s2 = inlined_call_operand.vmem [shape: f32[1,384], index: 2, kind: input, shape index: {}]
  %s3 = inlined_call_operand.hbm [shape: f32[1,128], index: 3, kind: input, shape index: {}]
  %s4 = inlined_call_operand.hbm [shape: f32[1,128], index: 4, kind: input, shape index: {}]
  %s5 = inlined_call_operand.vmem [shape: f32[32,384], index: 5, kind: output, shape index: {}]
  %s6 = sld [smem:[#allocation0]]
  $region46: #{transformer_block.6} parent=0
    _
  %s8 = ssub.s32 1, %s6
  %s9 = scalar_select 0, %s8, %s6
  $region1: #{transformer_block.6} parent=0
    #allocation2 [shape = 'u8[16384]{0}', space=vmem, size = 0x4000, scoped, tag = 'input window, operand 0, single buffered']
    #allocation3 [shape = 's32[1]{0}', space=sflag, size = 0x4, scoped, tag = 'scoped memory for transformer_block.6']
    #allocation4 [shape = 'u8[98304]{0}', space=vmem, size = 0x18000, scoped, tag = 'input window, operand 1, single buffered']
    #allocation5 [shape = 's32[1]{0}', space=sflag, size = 0x4, scoped, tag = 'scoped memory for transformer_block.6']
    #allocation6 [shape = 'u8[512]{0}', space=vmem, size = 0x400, scoped, tag = 'input window, operand 3, single buffered']
    #allocation7 [shape = 'u8[512]{0}', space=vmem, size = 0x400, scoped, tag = 'input window, operand 4, single buffered']
    #allocation8 [shape = 's32[1]{0}', space=sflag, size = 0x4, scoped, tag = 'scoped memory for transformer_block.6']
    %10 = vsyncpa [#allocation3], 0
    %11 = vsyncpa [#allocation5], 0
    %12 = vsyncpa [#allocation8], 0
    // Predicated region
    $region2: #{transformer_block.6} parent=1 // pred_check
      _
    $region3: #{transformer_block.6} parent=1 // pred_check_branch
      %14 = sbr.rel (0) target = $region5
    $region4: #{transformer_block.6} parent=1 // pred_region
      %s16 = ssub.s32 512, 512
      %17 = vsyncadd [#allocation3], %s16
      %s18 = sshll.u32 [#allocation2], 4
      %s19 = int_to_ptr.vmem [resolvable:$true] %s18
      %24 = dma.hbm_to_vmem [thread:$0]  %s0, 512, %s19, [#allocation3], 128, 128, 8
    $region5: #{transformer_block.6} parent=1 // pred_fallthru
      _
    // Predicated region
    $region6: #{transformer_block.6} parent=1 // pred_check
      _
    $region7: #{transformer_block.6} parent=1 // pred_check_branch
      %26 = sbr.rel (0) target = $region9
    $region8: #{transformer_block.6} parent=1 // pred_region
      %s28 = ssub.s32 3072, 3072
      %29 = vsyncadd [#allocation5], %s28
      %s30 = sshll.u32 [#allocation4], 4
      %s31 = int_to_ptr.vmem [resolvable:$true] %s30
      %36 = dma.hbm_to_vmem [thread:$0]  %s1, 3072, %s31, [#allocation5], 192, 192, 12
    $region9: #{transformer_block.6} parent=1 // pred_fallthru
      _
    // Predicated region
    $region10: #{transformer_block.6} parent=1 // pred_check
      _
    $region11: #{transformer_block.6} parent=1 // pred_check_branch
      %38 = sbr.rel (0) target = $region13
    $region12: #{transformer_block.6} parent=1 // pred_region
      _
    $region13: #{transformer_block.6} parent=1 // pred_fallthru
      _
    // Predicated region
    $region14: #{transformer_block.6} parent=1 // pred_check
      _
    $region15: #{transformer_block.6} parent=1 // pred_check_branch
      %40 = sbr.rel (0) target = $region17
    $region16: #{transformer_block.6} parent=1 // pred_region
      %s42 = ssub.s32 16, 16
      %43 = vsyncadd [#allocation5], %s42
      %s45 = sshll.u32 [#allocation6], 4
      %s46 = int_to_ptr.vmem [resolvable:$true] %s45
      %48 = dma.hbm_to_vmem [thread:$0]  %s3, 16, %s46, [#allocation5]
    $region17: #{transformer_block.6} parent=1 // pred_fallthru
      _
    // Predicated region
    $region18: #{transformer_block.6} parent=1 // pred_check
      _
    $region19: #{transformer_block.6} parent=1 // pred_check_branch
      %50 = sbr.rel (0) target = $region21
    $region20: #{transformer_block.6} parent=1 // pred_region
      %s52 = ssub.s32 16, 16
      %53 = vsyncadd [#allocation8], %s52
      %s55 = sshll.u32 [#allocation7], 4
      %s56 = int_to_ptr.vmem [resolvable:$true] %s55
      %58 = dma.hbm_to_vmem [thread:$0]  %s4, 16, %s56, [#allocation8]
    $region21: #{transformer_block.6} parent=1 // pred_fallthru
      _
    // Predicated region
    $region22: #{transformer_block.6} parent=1 // pred_check
      _
    $region23: #{transformer_block.6} parent=1 // pred_check_branch
      %60 = sbr.rel (0) target = $region25
    $region24: #{transformer_block.6} parent=1 // pred_region
      %61 = dma.done [#allocation3], 512
    $region25: #{transformer_block.6} parent=1 // pred_fallthru
      _
    // Predicated region
    $region26: #{transformer_block.6} parent=1 // pred_check
      _
    $region27: #{transformer_block.6} parent=1 // pred_check_branch
      %63 = sbr.rel (0) target = $region29
    $region28: #{transformer_block.6} parent=1 // pred_region
      %64 = dma.done [#allocation5], 3072
    $region29: #{transformer_block.6} parent=1 // pred_fallthru
      _
    // Predicated region
    $region30: #{transformer_block.6} parent=1 // pred_check
      _
    $region31: #{transformer_block.6} parent=1 // pred_check_branch
      %66 = sbr.rel (0) target = $region33
    $region32: #{transformer_block.6} parent=1 // pred_region
      %67 = dma.done [#allocation5], 16
    $region33: #{transformer_block.6} parent=1 // pred_fallthru
      _
    // Predicated region
    $region34: #{transformer_block.6} parent=1 // pred_check
      _
    $region35: #{transformer_block.6} parent=1 // pred_check_branch
      %69 = sbr.rel (0) target = $region37
    $region36: #{transformer_block.6} parent=1 // pred_region
      %70 = dma.done [#allocation8], 16
    $region37: #{transformer_block.6} parent=1 // pred_fallthru
      _
    %v72 = vld [vmem:[#allocation2] sm:$0xff]
    %v73 = vld [vmem:[#allocation2 + $0x8] sm:$0xff]
    %v74 = vld [vmem:[#allocation2 + $0x10] sm:$0xff]
    %v75 = vld [vmem:[#allocation2 + $0x18] sm:$0xff]
    %76 = vadd.xlane.f32.xlu0 %v72
    %v77 = vpop.xlane.xlu0 %76
    %78 = vadd.xlane.f32.xlu0 %v73
    %v79 = vpop.xlane.xlu0 %78
    %80 = vadd.xlane.f32.xlu0 %v74
    %v81 = vpop.xlane.xlu0 %80
    %82 = vadd.xlane.f32.xlu0 %v75
    %v83 = vpop.xlane.xlu0 %82
    %v84 = vrcp.pop 128.0
    %v85 = vmul.f32 %v77, %v84
    %v86 = vmul.f32 %v79, %v84
    %v87 = vmul.f32 %v81, %v84
    %v88 = vmul.f32 %v83, %v84
    %v89 = vsub.f32 %v72, %v85
    %v90 = vsub.f32 %v73, %v86
    %v91 = vsub.f32 %v74, %v87
    %v92 = vsub.f32 %v75, %v88
    %v93 = vmul.f32 %v89, %v89
    %v94 = vmul.f32 %v90, %v90
    %v95 = vmul.f32 %v91, %v91
    %v96 = vmul.f32 %v92, %v92
    %97 = vadd.xlane.f32.xlu0 %v93
    %v98 = vpop.xlane.xlu0 %97
    %99 = vadd.xlane.f32.xlu0 %v94
    %v100 = vpop.xlane.xlu0 %99
    %101 = vadd.xlane.f32.xlu0 %v95
    %v102 = vpop.xlane.xlu0 %101
    %103 = vadd.xlane.f32.xlu0 %v96
    %v104 = vpop.xlane.xlu0 %103
    %v105 = vmul.f32 %v98, %v84
    %v106 = vmul.f32 %v100, %v84
    %v107 = vmul.f32 %v102, %v84
    %v108 = vmul.f32 %v104, %v84
    %v109 = vadd.f32 %v105, 1e-05
    %v110 = vadd.f32 %v106, 1e-05
    %v111 = vadd.f32 %v107, 1e-05
    %v112 = vadd.f32 %v108, 1e-05
    %v113 = vrsqrt.pop %v109
    %v114 = vrsqrt.pop %v110
    %v115 = vrsqrt.pop %v111
    %v116 = vrsqrt.pop %v112
    %v117 = vmul.f32 %v89, %v113
    %v118 = vmul.f32 %v90, %v114
    %v119 = vmul.f32 %v91, %v115
    %v120 = vmul.f32 %v92, %v116
    %v121 = vld [vmem:[#allocation6] sm:$0x1]
    %v123 = vlaneseq
    %v124 = vshrl.u32 %v123, 7
    %v125 = vsub.s32 0, %v124
    %v126 = vrot.slane %v121, %v125
    %v128 = vmul.f32 %v117, %v126
    %v129 = vmul.f32 %v118, %v126
    %v130 = vmul.f32 %v119, %v126
    %v131 = vmul.f32 %v120, %v126
    %v132 = vld [vmem:[#allocation7] sm:$0x1]
    %v134 = vlaneseq
    %v135 = vshrl.u32 %v134, 7
    %v136 = vsub.s32 0, %v135
    %v137 = vrot.slane %v132, %v136
    %v139 = vadd.f32 %v128, %v137
    %v140 = vadd.f32 %v129, %v137
    %v141 = vadd.f32 %v130, %v137
    %v142 = vadd.f32 %v131, %v137
    %v143 = vld [vmem:[#allocation4] sm:$0xff]
    %v144 = vld [vmem:[#allocation4 + $0x8] sm:$0xf]
    %v145 = vld [vmem:[#allocation4 + $0xc] sm:$0xff]
    %v146 = vld [vmem:[#allocation4 + $0x14] sm:$0xf]
    %v147 = vld [vmem:[#allocation4 + $0x18] sm:$0xff]
    %v148 = vld [vmem:[#allocation4 + $0x20] sm:$0xf]
    %v149 = vld [vmem:[#allocation4 + $0x24] sm:$0xff]
    %v150 = vld [vmem:[#allocation4 + $0x2c] sm:$0xf]
    %v151 = vld [vmem:[#allocation4 + $0x30] sm:$0xff]
    %v152 = vld [vmem:[#allocation4 + $0x38] sm:$0xf]
    %v153 = vld [vmem:[#allocation4 + $0x3c] sm:$0xff]
    %v154 = vld [vmem:[#allocation4 + $0x44] sm:$0xf]
    %v155 = vld [vmem:[#allocation4 + $0x48] sm:$0xff]
    %v156 = vld [vmem:[#allocation4 + $0x50] sm:$0xf]
    %v157 = vld [vmem:[#allocation4 + $0x54] sm:$0xff]
    %v158 = vld [vmem:[#allocation4 + $0x5c] sm:$0xf]
    %v159 = vld [vmem:[#allocation4 + $0x60] sm:$0xff]
    %v160 = vld [vmem:[#allocation4 + $0x68] sm:$0xf]
    %v161 = vld [vmem:[#allocation4 + $0x6c] sm:$0xff]
    %v162 = vld [vmem:[#allocation4 + $0x74] sm:$0xf]
    %v163 = vld [vmem:[#allocation4 + $0x78] sm:$0xff]
    %v164 = vld [vmem:[#allocation4 + $0x80] sm:$0xf]
    %v165 = vld [vmem:[#allocation4 + $0x84] sm:$0xff]
    %v166 = vld [vmem:[#allocation4 + $0x8c] sm:$0xf]
    %v167 = vld [vmem:[#allocation4 + $0x90] sm:$0xff]
    %v168 = vld [vmem:[#allocation4 + $0x98] sm:$0xf]
    %v169 = vld [vmem:[#allocation4 + $0x9c] sm:$0xff]
    %v170 = vld [vmem:[#allocation4 + $0xa4] sm:$0xf]
    %v171 = vld [vmem:[#allocation4 + $0xa8] sm:$0xff]
    %v172 = vld [vmem:[#allocation4 + $0xb0] sm:$0xf]
    %v173 = vld [vmem:[#allocation4 + $0xb4] sm:$0xff]
    %v174 = vld [vmem:[#allocation4 + $0xbc] sm:$0xf]
    %v175 = vpack.c.bf16 %v140, %v139
    %v176 = vpack.c.bf16 %v142, %v141
    %v177 = vld [vmem:[%s2] sm:$0x7]
    %v179 = vlaneseq
    %v180 = vshrl.u32 %v179, 7
    %v181 = vsub.s32 0, %v180
    %v182 = vrot.slane %v177, %v181
    %v183 = vlaneseq
    %v184 = vshrl.u32 %v183, 7
    %v185 = vsub.s32 1, %v184
    %v186 = vrot.slane %v177, %v185
    %v187 = vlaneseq
    %v188 = vshrl.u32 %v187, 7
    %v189 = vsub.s32 2, %v188
    %v190 = vrot.slane %v177, %v189
    %v226 = vunpack.c.l.b16 %v143
    %v227 = vunpack.c.h.b16 %v143
    %v228 = vunpack.c.l.b16 %v144
    %v229 = vunpack.c.l.b16 %v145
    %v230 = vunpack.c.h.b16 %v145
    %v231 = vunpack.c.l.b16 %v146
    %v232 = vunpack.c.l.b16 %v147
    %v233 = vunpack.c.h.b16 %v147
    %v234 = vunpack.c.l.b16 %v148
    %v235 = vunpack.c.l.b16 %v149
    %v236 = vunpack.c.h.b16 %v149
    %v237 = vunpack.c.l.b16 %v150
    %v238 = vunpack.c.l.b16 %v151
    %v239 = vunpack.c.h.b16 %v151
    %v240 = vunpack.c.l.b16 %v152
    %v241 = vunpack.c.l.b16 %v153
    %v242 = vunpack.c.h.b16 %v153
    %v243 = vunpack.c.l.b16 %v154
    %v244 = vunpack.c.l.b16 %v155
    %v245 = vunpack.c.h.b16 %v155
    %v246 = vunpack.c.l.b16 %v156
    %v247 = vunpack.c.l.b16 %v157
    %v248 = vunpack.c.h.b16 %v157
    %v249 = vunpack.c.l.b16 %v158
    %v250 = vunpack.c.l.b16 %v159
    %v251 = vunpack.c.h.b16 %v159
    %v252 = vunpack.c.l.b16 %v160
    %v253 = vunpack.c.l.b16 %v161
    %v254 = vunpack.c.h.b16 %v161
    %v255 = vunpack.c.l.b16 %v162
    %v256 = vunpack.c.l.b16 %v163
    %v257 = vunpack.c.h.b16 %v163
    %v258 = vunpack.c.l.b16 %v164
    %v259 = vunpack.c.l.b16 %v165
    %v260 = vunpack.c.h.b16 %v165
    %v261 = vunpack.c.l.b16 %v166
    %v262 = vunpack.c.l.b16 %v167
    %v263 = vunpack.c.h.b16 %v167
    %v264 = vunpack.c.l.b16 %v168
    %v265 = vunpack.c.l.b16 %v169
    %v266 = vunpack.c.h.b16 %v169
    %v267 = vunpack.c.l.b16 %v170
    %v268 = vunpack.c.l.b16 %v171
    %v269 = vunpack.c.h.b16 %v171
    %v270 = vunpack.c.l.b16 %v172
    %v271 = vunpack.c.l.b16 %v173
    %v272 = vunpack.c.h.b16 %v173
    %v273 = vunpack.c.l.b16 %v174
    %v274 = vpack.c.b16 %v229, %v226
    %v275 = vpack.c.b16 %v230, %v227
    %v276 = vpack.c.b16 %v231, %v228
    %v277 = vpack.c.b16 %v235, %v232
    %v278 = vpack.c.b16 %v236, %v233
    %v279 = vpack.c.b16 %v237, %v234
    %v280 = vpack.c.b16 %v241, %v238
    %v281 = vpack.c.b16 %v242, %v239
    %v282 = vpack.c.b16 %v243, %v240
    %v283 = vpack.c.b16 %v247, %v244
    %v284 = vpack.c.b16 %v248, %v245
    %v285 = vpack.c.b16 %v249, %v246
    %v286 = vpack.c.b16 %v253, %v250
    %v287 = vpack.c.b16 %v254, %v251
    %v288 = vpack.c.b16 %v255, %v252
    %v289 = vpack.c.b16 %v259, %v256
    %v290 = vpack.c.b16 %v260, %v257
    %v291 = vpack.c.b16 %v261, %v258
    %v292 = vpack.c.b16 %v265, %v262
    %v293 = vpack.c.b16 %v266, %v263
    %v294 = vpack.c.b16 %v267, %v264
    %v295 = vpack.c.b16 %v271, %v268
    %v296 = vpack.c.b16 %v272, %v269
    %v297 = vpack.c.b16 %v273, %v270
    %322 = vmatprep.subr.bf16.mxu0 %v275
    %323 = vmatpush1.bf16.msra.mxu0 %v274
    %324 = vmatprep.subr.bf16.mxu0 %v278
    %325 = vmatpush1.bf16.msra.mxu0 %v277
    %326 = vmatprep.subr.bf16.mxu0 %v281
    %327 = vmatpush1.bf16.msra.mxu0 %v280
    %328 = vmatprep.subr.bf16.mxu0 %v284
    %329 = vmatpush1.bf16.msra.mxu0 %v283
    %330 = vmatprep.subr.bf16.mxu0 %v287
    %331 = vmatpush1.bf16.msra.mxu0 %v286
    %332 = vmatprep.subr.bf16.mxu0 %v290
    %333 = vmatpush1.bf16.msra.mxu0 %v289
    %334 = vmatprep.subr.bf16.mxu0 %v293
    %335 = vmatpush1.bf16.msra.mxu0 %v292
    %336 = vmatprep.subr.bf16.mxu0 %v296
    %337 = vmatpush1.bf16.msra.mxu0 %v295
    %338 = vmatprep.subr.bf16.mxu0 0
    %339 = vmatpush1.bf16.msra.mxu0 0
    %340 = vmatprep.subr.bf16.mxu0 0
    %341 = vmatpush1.bf16.msra.mxu0 0
    %342 = vmatprep.subr.bf16.mxu0 0
    %343 = vmatpush1.bf16.msra.mxu0 0
    %344 = vmatprep.subr.bf16.mxu0 0
    %345 = vmatpush1.bf16.msra.mxu0 0
    %346 = vmatprep.subr.bf16.mxu0 0
    %347 = vmatpush1.bf16.msra.mxu0 0
    %348 = vmatprep.subr.bf16.mxu0 0
    %349 = vmatpush1.bf16.msra.mxu0 0
    %350 = vmatprep.subr.bf16.mxu0 0
    %351 = vmatpush1.bf16.msra.mxu0 0
    %352 = vmatprep.subr.bf16.mxu0 0
    %353 = vmatpush1.bf16.msra.mxu0 0
    %354 = vmatprep.mubr.bf16.mxu0 0
    %355 = vmatmul.mubr.bf16.gmra.mrb[0].mxu0 %v175
    %v356 = vpop.f32.mrb[0].mxu0
    %v357 = vadd.f32 %v182, %v356
    %v358 = vpop.f32.mrb[0].mxu0
    %v359 = vadd.f32 %v186, %v358
    %v360 = vpop.f32.mrb[0].mxu0
    %v361 = vadd.f32 %v182, %v360
    %v362 = vpop.f32.mrb[0].mxu0
    %v363 = vadd.f32 %v186, %v362
    %364 = vmatprep.mubr.bf16.mxu0 0
    %365 = vmatmul.mubr.bf16.gmra.mrb[0].mxu0 %v176
    %v366 = vpop.f32.mrb[0].mxu0
    %v367 = vadd.f32 %v182, %v366
    %v368 = vpop.f32.mrb[0].mxu0
    %v369 = vadd.f32 %v186, %v368
    %v370 = vpop.f32.mrb[0].mxu0
    %v371 = vadd.f32 %v182, %v370
    %v372 = vpop.f32.mrb[0].mxu0
    %v373 = vadd.f32 %v186, %v372
    %374 = vdwg.mxu0
    %375 = vmatprep.subr.bf16.mxu0 0
    %376 = vmatpush1.bf16.msra.mxu0 %v276
    %377 = vmatprep.subr.bf16.mxu0 0
    %378 = vmatpush1.bf16.msra.mxu0 %v279
    %379 = vmatprep.subr.bf16.mxu0 0
    %380 = vmatpush1.bf16.msra.mxu0 %v282
    %381 = vmatprep.subr.bf16.mxu0 0
    %382 = vmatpush1.bf16.msra.mxu0 %v285
    %383 = vmatprep.subr.bf16.mxu0 0
    %384 = vmatpush1.bf16.msra.mxu0 %v288
    %385 = vmatprep.subr.bf16.mxu0 0
    %386 = vmatpush1.bf16.msra.mxu0 %v291
    %387 = vmatprep.subr.bf16.mxu0 0
    %388 = vmatpush1.bf16.msra.mxu0 %v294
    %389 = vmatprep.subr.bf16.mxu0 0
    %390 = vmatpush1.bf16.msra.mxu0 %v297
    %391 = vmatprep.subr.bf16.mxu0 0
    %392 = vmatpush1.bf16.msra.mxu0 0
    %393 = vmatprep.subr.bf16.mxu0 0
    %394 = vmatpush1.bf16.msra.mxu0 0
    %395 = vmatprep.subr.bf16.mxu0 0
    %396 = vmatpush1.bf16.msra.mxu0 0
    %397 = vmatprep.subr.bf16.mxu0 0
    %398 = vmatpush1.bf16.msra.mxu0 0
    %399 = vmatprep.subr.bf16.mxu0 0
    %400 = vmatpush1.bf16.msra.mxu0 0
    %401 = vmatprep.subr.bf16.mxu0 0
    %402 = vmatpush1.bf16.msra.mxu0 0
    %403 = vmatprep.subr.bf16.mxu0 0
    %404 = vmatpush1.bf16.msra.mxu0 0
    %405 = vmatprep.subr.bf16.mxu0 0
    %406 = vmatpush1.bf16.msra.mxu0 0
    %407 = vmatprep.mubr.bf16.mxu0 0
    %408 = vmatmul.mubr.bf16.gmra.mrb[0].mxu0 %v175
    %v409 = vpop.f32.mrb[0].mxu0
    %v410 = vadd.f32 %v190, %v409
    %v411 = vpop.f32.mrb[0].mxu0
    %v412 = vpop.f32.mrb[0].mxu0
    %v413 = vadd.f32 %v190, %v412
    %v414 = vpop.f32.mrb[0].mxu0
    %415 = vmatprep.mubr.bf16.mxu0 0
    %416 = vmatmul.mubr.bf16.gmra.mrb[0].mxu0 %v176
    %v417 = vpop.f32.mrb[0].mxu0
    %v418 = vadd.f32 %v190, %v417
    %v419 = vpop.f32.mrb[0].mxu0
    %v420 = vpop.f32.mrb[0].mxu0
    %v421 = vadd.f32 %v190, %v420
    %v422 = vpop.f32.mrb[0].mxu0
    %423 = vdwg.mxu0
    %424 = vst [vmem:[%s5] sm:$0xff] %v357
    %425 = vst [vmem:[%s5 + $0x8] sm:$0xff] %v359
    %426 = vst [vmem:[%s5 + $0x10] sm:$0xff] %v410
    %427 = vst [vmem:[%s5 + $0x18] sm:$0xff] %v361
    %428 = vst [vmem:[%s5 + $0x20] sm:$0xff] %v363
    %429 = vst [vmem:[%s5 + $0x28] sm:$0xff] %v413
    %430 = vst [vmem:[%s5 + $0x30] sm:$0xff] %v367
    %431 = vst [vmem:[%s5 + $0x38] sm:$0xff] %v369
    %432 = vst [vmem:[%s5 + $0x40] sm:$0xff] %v418
    %433 = vst [vmem:[%s5 + $0x48] sm:$0xff] %v371
    %434 = vst [vmem:[%s5 + $0x50] sm:$0xff] %v373
    %435 = vst [vmem:[%s5 + $0x58] sm:$0xff] %v421
    // Predicated region
    $region38: #{transformer_block.6} parent=1 // pred_check
      _
    $region39: #{transformer_block.6} parent=1 // pred_check_branch
      %437 = sbr.rel (0) target = $region41
    $region40: #{transformer_block.6} parent=1 // pred_region
      _
    $region41: #{transformer_block.6} parent=1 // pred_fallthru
      _
    // Predicated region
    $region42: #{transformer_block.6} parent=1 // pred_check
      _
    $region43: #{transformer_block.6} parent=1 // pred_check_branch
      %439 = sbr.rel (0) target = $region45
    $region44: #{transformer_block.6} parent=1 // pred_region
      _
    $region45: #{transformer_block.6} parent=1 // pred_fallthru
      _
    %440 = vsyncpa [#allocation3], 1
    %441 = vsyncpa [#allocation5], 1
    %442 = vsyncpa [#allocation8], 1

// kernel: transformer_block.7
$region0: #{transformer_block.7}
  #allocation0 [shape = 'u32[]', space=smem, size = 0x4, offset = 0x4, fixed_abs, tag = 'smem constant byte address 0x4 - core index']
  #allocation1 [shape = 'u32[144,128]{1,0:T(1,128)}', space=vmem, size = 0x12000, scoped, tag = 'internal scratch']
  %s0 = inlined_call_operand.vmem [shape: f32[32,384], index: 0, kind: input, shape index: {}]
  %s1 = inlined_call_operand.vmem [shape: f32[32,128], index: 1, kind: output, shape index: {}]
  %s2 = sld [smem:[#allocation0]]
  $region14: #{transformer_block.7} parent=0
    _
  %s4 = ssub.s32 1, %s2
  %s5 = scalar_select 0, %s4, %s2
  // Predicated region
  $region2: #{transformer_block.7} parent=0 // pred_check
    _
  $region3: #{transformer_block.7} parent=0 // pred_check_branch
    %7 = sbr.rel (0) target = $region5
  $region4: #{transformer_block.7} parent=0 // pred_region
    _
  $region5: #{transformer_block.7} parent=0 // pred_fallthru
    _
  %v8 = vld [vmem:[%s0] sm:$0xff]
  %v9 = vld [vmem:[%s0 + $0x8] sm:$0xff]
  %v10 = vld [vmem:[%s0 + $0x10] sm:$0xff]
  %v11 = vld [vmem:[%s0 + $0x18] sm:$0xff]
  %v12 = vld [vmem:[%s0 + $0x20] sm:$0xff]
  %v13 = vld [vmem:[%s0 + $0x28] sm:$0xff]
  %v14 = vld [vmem:[%s0 + $0x30] sm:$0xff]
  %v15 = vld [vmem:[%s0 + $0x38] sm:$0xff]
  %v16 = vld [vmem:[%s0 + $0x40] sm:$0xff]
  %v17 = vld [vmem:[%s0 + $0x48] sm:$0xff]
  %v18 = vld [vmem:[%s0 + $0x50] sm:$0xff]
  %v19 = vld [vmem:[%s0 + $0x58] sm:$0xff]
  %v20 = vmul.f32 %v8, 0.17677669
  %v21 = vmul.f32 %v11, 0.17677669
  %v22 = vmul.f32 %v14, 0.17677669
  %v23 = vmul.f32 %v17, 0.17677669
  %vm24 = vcmask 261120
  %v26 = vsel %vm24, %v20, 0
  %v29 = vsel %vm24, %v21, 0
  %v32 = vsel %vm24, %v22, 0
  %v35 = vsel %vm24, %v23, 0
  %v38 = vsel %vm24, %v9, 0
  %v41 = vsel %vm24, %v12, 0
  %v44 = vsel %vm24, %v15, 0
  %v47 = vsel %vm24, %v18, 0
  %49 = vmatprep.subr.mxu0 0.0
  %50 = vmatpush1.xpose.msra.mxu0 %v38
  %51 = vmatprep.subr.mxu0 0.0
  %52 = vmatpush1.xpose.msra.mxu0 %v41
  %53 = vmatprep.subr.mxu0 0.0
  %54 = vmatpush1.xpose.msra.mxu0 %v44
  %55 = vmatprep.subr.mxu0 0.0
  %56 = vmatpush1.xpose.msra.mxu0 %v47
  %57 = vmatprep.subr.mxu0 0.0
  %58 = vmatpush1.xpose.msra.mxu0 0.0
  %59 = vmatprep.subr.mxu0 0.0
  %60 = vmatpush1.xpose.msra.mxu0 0.0
  %61 = vmatprep.subr.mxu0 0.0
  %62 = vmatpush1.xpose.msra.mxu0 0.0
  %63 = vmatprep.subr.mxu0 0.0
  %64 = vmatpush1.xpose.msra.mxu0 0.0
  %65 = vmatprep.subr.mxu0 0.0
  %66 = vmatpush1.xpose.msra.mxu0 0.0
  %67 = vmatprep.subr.mxu0 0.0
  %68 = vmatpush1.xpose.msra.mxu0 0.0
  %69 = vmatprep.subr.mxu0 0.0
  %70 = vmatpush1.xpose.msra.mxu0 0.0
  %71 = vmatprep.subr.mxu0 0.0
  %72 = vmatpush1.xpose.msra.mxu0 0.0
  %73 = vmatprep.subr.mxu0 0.0
  %74 = vmatpush1.xpose.msra.mxu0 0.0
  %75 = vmatprep.subr.mxu0 0.0
  %76 = vmatpush1.xpose.msra.mxu0 0.0
  %77 = vmatprep.subr.mxu0 0.0
  %78 = vmatpush1.xpose.msra.mxu0 0.0
  %79 = vmatprep.subr.mxu0 0.0
  %80 = vmatpush1.xpose.msra.mxu0 0.0
  %81 = vmatprep.subr.mxu0 0.0
  %82 = vmatpush1.xpose.msra.mxu0 0.0
  %83 = vmatprep.subr.mxu0 0.0
  %84 = vmatpush1.xpose.msra.mxu0 0.0
  %85 = vmatprep.subr.mxu0 0.0
  %86 = vmatpush1.xpose.msra.mxu0 0.0
  %87 = vmatprep.subr.mxu0 0.0
  %88 = vmatpush1.xpose.msra.mxu0 0.0
  %89 = vmatprep.subr.mxu0 0.0
  %90 = vmatpush1.xpose.msra.mxu0 0.0
  %91 = vmatprep.subr.mxu0 0.0
  %92 = vmatpush1.xpose.msra.mxu0 0.0
  %93 = vmatprep.subr.mxu0 0.0
  %94 = vmatpush1.xpose.msra.mxu0 0.0
  %95 = vmatprep.subr.mxu0 0.0
  %96 = vmatpush1.xpose.msra.mxu0 0.0
  %97 = vmatprep.subr.mxu0 0.0
  %98 = vmatpush1.xpose.msra.mxu0 0.0
  %99 = vmatprep.subr.mxu0 0.0
  %100 = vmatpush1.xpose.msra.mxu0 0.0
  %101 = vmatprep.subr.mxu0 0.0
  %102 = vmatpush1.xpose.msra.mxu0 0.0
  %103 = vmatprep.subr.mxu0 0.0
  %104 = vmatpush1.xpose.msra.mxu0 0.0
  %105 = vmatprep.subr.mxu0 0.0
  %106 = vmatpush1.xpose.msra.mxu0 0.0
  %107 = vmatprep.subr.mxu0 0.0
  %108 = vmatpush1.xpose.msra.mxu0 0.0
  %109 = vmatprep.subr.mxu0 0.0
  %110 = vmatpush1.xpose.msra.mxu0 0.0
  %111 = vmatprep.subr.mxu0 0.0
  %112 = vmatpush1.xpose.msra.mxu0 0.0
  %113 = vmatprep.mubr.f32.mxu0 0.0
  %114 = vmatmul.mubr.f32.gmra.mrb[0].mxu0 %v26
  %v115 = vpop.f32.mrb[0].mxu0
  %v116 = vadd.f32 0.0, %v115
  %v117 = vpop.f32.mrb[0].mxu0
  %118 = vmatprep.mubr.f32.mxu0 0.0
  %119 = vmatmul.mubr.f32.gmra.mrb[0].mxu0 %v29
  %v120 = vpop.f32.mrb[0].mxu0
  %v121 = vadd.f32 0.0, %v120
  %v122 = vpop.f32.mrb[0].mxu0
  %123 = vmatprep.mubr.f32.mxu0 0.0
  %124 = vmatmul.mubr.f32.gmra.mrb[0].mxu0 %v32
  %v125 = vpop.f32.mrb[0].mxu0
  %v126 = vadd.f32 0.0, %v125
  %v127 = vpop.f32.mrb[0].mxu0
  %128 = vmatprep.mubr.f32.mxu0 0.0
  %129 = vmatmul.mubr.f32.gmra.mrb[0].mxu0 %v35
  %v130 = vpop.f32.mrb[0].mxu0
  %v131 = vadd.f32 0.0, %v130
  %v132 = vpop.f32.mrb[0].mxu0
  %133 = vdwg.mxu0
  %v134 = vsel %vm24, %v116, -inf
  %135 = vmax.xlane.f32.xlu0 %v134
  %v136 = vpop.xlane.xlu0 %135
  %v137 = vsel %vm24, %v121, -inf
  %138 = vmax.xlane.f32.xlu0 %v137
  %v139 = vpop.xlane.xlu0 %138
  %v140 = vsel %vm24, %v126, -inf
  %141 = vmax.xlane.f32.xlu0 %v140
  %v142 = vpop.xlane.xlu0 %141
  %v143 = vsel %vm24, %v131, -inf
  %144 = vmax.xlane.f32.xlu0 %v143
  %v145 = vpop.xlane.xlu0 %144
  %v146 = vsub.f32 %v116, %v136
  %v147 = vsub.f32 %v121, %v139
  %v148 = vsub.f32 %v126, %v142
  %v149 = vsub.f32 %v131, %v145
  %v150 = vmul.f32 %v146, 1.442695
  %v151 = vpow.pop %v150
  %v152 = vmul.f32 %v147, 1.442695
  %v153 = vpow.pop %v152
  %v154 = vmul.f32 %v148, 1.442695
  %v155 = vpow.pop %v154
  %v156 = vmul.f32 %v149, 1.442695
  %v157 = vpow.pop %v156
  %v158 = vsel %vm24, %v151, 0.0
  %159 = vadd.xlane.f32.xlu0 %v158
  %v160 = vpop.xlane.xlu0 %159
  %v161 = vsel %vm24, %v153, 0.0
  %162 = vadd.xlane.f32.xlu0 %v161
  %v163 = vpop.xlane.xlu0 %162
  %v164 = vsel %vm24, %v155, 0.0
  %165 = vadd.xlane.f32.xlu0 %v164
  %v166 = vpop.xlane.xlu0 %165
  %v167 = vsel %vm24, %v157, 0.0
  %168 = vadd.xlane.f32.xlu0 %v167
  %v169 = vpop.xlane.xlu0 %168
  %v170 = vrcp.pop %v160
  %v171 = vrcp.pop %v163
  %v172 = vrcp.pop %v166
  %v173 = vrcp.pop %v169
  %v174 = vmul.f32 %v151, %v170
  %v175 = vmul.f32 %v153, %v171
  %v176 = vmul.f32 %v155, %v172
  %v177 = vmul.f32 %v157, %v173
  %v179 = vsel %vm24, %v174, 0
  %v182 = vsel %vm24, %v175, 0
  %v185 = vsel %vm24, %v176, 0
  %v188 = vsel %vm24, %v177, 0
  %190 = vmatprep.subr.mxu0 0.0
  %191 = vmatpush1.msra.mxu0 %v10
  %192 = vmatprep.subr.mxu0 0.0
  %193 = vmatpush1.msra.mxu0 %v13
  %194 = vmatprep.subr.mxu0 0.0
  %195 = vmatpush1.msra.mxu0 %v16
  %196 = vmatprep.subr.mxu0 0.0
  %197 = vmatpush1.msra.mxu0 %v19
  %198 = vmatprep.subr.mxu0 0.0
  %199 = vmatpush1.msra.mxu0 0.0
  %200 = vmatprep.subr.mxu0 0.0
  %201 = vmatpush1.msra.mxu0 0.0
  %202 = vmatprep.subr.mxu0 0.0
  %203 = vmatpush1.msra.mxu0 0.0
  %204 = vmatprep.subr.mxu0 0.0
  %205 = vmatpush1.msra.mxu0 0.0
  %206 = vmatprep.subr.mxu0 0.0
  %207 = vmatpush1.msra.mxu0 0.0
  %208 = vmatprep.subr.mxu0 0.0
  %209 = vmatpush1.msra.mxu0 0.0
  %210 = vmatprep.subr.mxu0 0.0
  %211 = vmatpush1.msra.mxu0 0.0
  %212 = vmatprep.subr.mxu0 0.0
  %213 = vmatpush1.msra.mxu0 0.0
  %214 = vmatprep.subr.mxu0 0.0
  %215 = vmatpush1.msra.mxu0 0.0
  %216 = vmatprep.subr.mxu0 0.0
  %217 = vmatpush1.msra.mxu0 0.0
  %218 = vmatprep.subr.mxu0 0.0
  %219 = vmatpush1.msra.mxu0 0.0
  %220 = vmatprep.subr.mxu0 0.0
  %221 = vmatpush1.msra.mxu0 0.0
  %222 = vmatprep.subr.mxu0 0.0
  %223 = vmatpush1.msra.mxu0 0.0
  %224 = vmatprep.subr.mxu0 0.0
  %225 = vmatpush1.msra.mxu0 0.0
  %226 = vmatprep.subr.mxu0 0.0
  %227 = vmatpush1.msra.mxu0 0.0
  %228 = vmatprep.subr.mxu0 0.0
  %229 = vmatpush1.msra.mxu0 0.0
  %230 = vmatprep.subr.mxu0 0.0
  %231 = vmatpush1.msra.mxu0 0.0
  %232 = vmatprep.subr.mxu0 0.0
  %233 = vmatpush1.msra.mxu0 0.0
  %234 = vmatprep.subr.mxu0 0.0
  %235 = vmatpush1.msra.mxu0 0.0
  %236 = vmatprep.subr.mxu0 0.0
  %237 = vmatpush1.msra.mxu0 0.0
  %238 = vmatprep.subr.mxu0 0.0
  %239 = vmatpush1.msra.mxu0 0.0
  %240 = vmatprep.subr.mxu0 0.0
  %241 = vmatpush1.msra.mxu0 0.0
  %242 = vmatprep.subr.mxu0 0.0
  %243 = vmatpush1.msra.mxu0 0.0
  %244 = vmatprep.subr.mxu0 0.0
  %245 = vmatpush1.msra.mxu0 0.0
  %246 = vmatprep.subr.mxu0 0.0
  %247 = vmatpush1.msra.mxu0 0.0
  %248 = vmatprep.subr.mxu0 0.0
  %249 = vmatpush1.msra.mxu0 0.0
  %250 = vmatprep.subr.mxu0 0.0
  %251 = vmatpush1.msra.mxu0 0.0
  %252 = vmatprep.subr.mxu0 0.0
  %253 = vmatpush1.msra.mxu0 0.0
  %254 = vmatprep.mubr.f32.mxu0 0.0
  %255 = vmatmul.mubr.f32.gmra.mrb[0].mxu0 %v179
  %v256 = vpop.f32.mrb[0].mxu0
  %v257 = vadd.f32 0.0, %v256
  %v258 = vpop.f32.mrb[0].mxu0
  %259 = vmatprep.mubr.f32.mxu0 0.0
  %260 = vmatmul.mubr.f32.gmra.mrb[0].mxu0 %v182
  %v261 = vpop.f32.mrb[0].mxu0
  %v262 = vadd.f32 0.0, %v261
  %v263 = vpop.f32.mrb[0].mxu0
  %264 = vmatprep.mubr.f32.mxu0 0.0
  %265 = vmatmul.mubr.f32.gmra.mrb[0].mxu0 %v185
  %v266 = vpop.f32.mrb[0].mxu0
  %v267 = vadd.f32 0.0, %v266
  %v268 = vpop.f32.mrb[0].mxu0
  %269 = vmatprep.mubr.f32.mxu0 0.0
  %270 = vmatmul.mubr.f32.gmra.mrb[0].mxu0 %v188
  %v271 = vpop.f32.mrb[0].mxu0
  %v272 = vadd.f32 0.0, %v271
  %v273 = vpop.f32.mrb[0].mxu0
  %274 = vdwg.mxu0
  %275 = vrot.lane.b32.xlu0 %v20, 96
  %v276 = vpop.permute.xlu0 %275
  %277 = vrot.lane.b32.xlu0 %v21, 96
  %v278 = vpop.permute.xlu0 %277
  %279 = vrot.lane.b32.xlu0 %v22, 96
  %v280 = vpop.permute.xlu0 %279
  %281 = vrot.lane.b32.xlu0 %v23, 96
  %v282 = vpop.permute.xlu0 %281
  %283 = vrot.lane.b32.xlu0 %v9, 96
  %v284 = vpop.permute.xlu0 %283
  %285 = vrot.lane.b32.xlu0 %v12, 96
  %v286 = vpop.permute.xlu0 %285
  %287 = vrot.lane.b32.xlu0 %v15, 96
  %v288 = vpop.permute.xlu0 %287
  %289 = vrot.lane.b32.xlu0 %v18, 96
  %v290 = vpop.permute.xlu0 %289
  %v291 = vsel %vm24, %v276, 0
  %v293 = vsel %vm24, %v278, 0
  %v295 = vsel %vm24, %v280, 0
  %v297 = vsel %vm24, %v282, 0
  %v299 = vsel %vm24, %v284, 0
  %v301 = vsel %vm24, %v286, 0
  %v303 = vsel %vm24, %v288, 0
  %v305 = vsel %vm24, %v290, 0
  %307 = vmatprep.subr.mxu0 0.0
  %308 = vmatpush1.xpose.msra.mxu0 %v299
  %309 = vmatprep.subr.mxu0 0.0
  %310 = vmatpush1.xpose.msra.mxu0 %v301
  %311 = vmatprep.subr.mxu0 0.0
  %312 = vmatpush1.xpose.msra.mxu0 %v303
  %313 = vmatprep.subr.mxu0 0.0
  %314 = vmatpush1.xpose.msra.mxu0 %v305
  %315 = vmatprep.subr.mxu0 0.0
  %316 = vmatpush1.xpose.msra.mxu0 0.0
  %317 = vmatprep.subr.mxu0 0.0
  %318 = vmatpush1.xpose.msra.mxu0 0.0
  %319 = vmatprep.subr.mxu0 0.0
  %320 = vmatpush1.xpose.msra.mxu0 0.0
  %321 = vmatprep.subr.mxu0 0.0
  %322 = vmatpush1.xpose.msra.mxu0 0.0
  %323 = vmatprep.subr.mxu0 0.0
  %324 = vmatpush1.xpose.msra.mxu0 0.0
  %325 = vmatprep.subr.mxu0 0.0
  %326 = vmatpush1.xpose.msra.mxu0 0.0
  %327 = vmatprep.subr.mxu0 0.0
  %328 = vmatpush1.xpose.msra.mxu0 0.0
  %329 = vmatprep.subr.mxu0 0.0
  %330 = vmatpush1.xpose.msra.mxu0 0.0
  %331 = vmatprep.subr.mxu0 0.0
  %332 = vmatpush1.xpose.msra.mxu0 0.0
  %333 = vmatprep.subr.mxu0 0.0
  %334 = vmatpush1.xpose.msra.mxu0 0.0
  %335 = vmatprep.subr.mxu0 0.0
  %336 = vmatpush1.xpose.msra.mxu0 0.0
  %337 = vmatprep.subr.mxu0 0.0
  %338 = vmatpush1.xpose.msra.mxu0 0.0
  %339 = vmatprep.subr.mxu0 0.0
  %340 = vmatpush1.xpose.msra.mxu0 0.0
  %341 = vmatprep.subr.mxu0 0.0
  %342 = vmatpush1.xpose.msra.mxu0 0.0
  %343 = vmatprep.subr.mxu0 0.0
  %344 = vmatpush1.xpose.msra.mxu0 0.0
  %345 = vmatprep.subr.mxu0 0.0
  %346 = vmatpush1.xpose.msra.mxu0 0.0
  %347 = vmatprep.subr.mxu0 0.0
  %348 = vmatpush1.xpose.msra.mxu0 0.0
  %349 = vmatprep.subr.mxu0 0.0
  %350 = vmatpush1.xpose.msra.mxu0 0.0
  %351 = vmatprep.subr.mxu0 0.0
  %352 = vmatpush1.xpose.msra.mxu0 0.0
  %353 = vmatprep.subr.mxu0 0.0
  %354 = vmatpush1.xpose.msra.mxu0 0.0
  %355 = vmatprep.subr.mxu0 0.0
  %356 = vmatpush1.xpose.msra.mxu0 0.0
  %357 = vmatprep.subr.mxu0 0.0
  %358 = vmatpush1.xpose.msra.mxu0 0.0
  %359 = vmatprep.subr.mxu0 0.0
  %360 = vmatpush1.xpose.msra.mxu0 0.0
  %361 = vmatprep.subr.mxu0 0.0
  %362 = vmatpush1.xpose.msra.mxu0 0.0
  %363 = vmatprep.subr.mxu0 0.0
  %364 = vmatpush1.xpose.msra.mxu0 0.0
  %365 = vmatprep.subr.mxu0 0.0
  %366 = vmatpush1.xpose.msra.mxu0 0.0
  %367 = vmatprep.subr.mxu0 0.0
  %368 = vmatpush1.xpose.msra.mxu0 0.0
  %369 = vmatprep.subr.mxu0 0.0
  %370 = vmatpush1.xpose.msra.mxu0 0.0
  %371 = vmatprep.mubr.f32.mxu0 0.0
  %372 = vmatmul.mubr.f32.gmra.mrb[0].mxu0 %v291
  %v373 = vpop.f32.mrb[0].mxu0
  %v374 = vadd.f32 0.0, %v373
  %v375 = vpop.f32.mrb[0].mxu0
  %376 = vmatprep.mubr.f32.mxu0 0.0
  %377 = vmatmul.mubr.f32.gmra.mrb[0].mxu0 %v293
  %v378 = vpop.f32.mrb[0].mxu0
  %v379 = vadd.f32 0.0, %v378
  %v380 = vpop.f32.mrb[0].mxu0
  %381 = vmatprep.mubr.f32.mxu0 0.0
  %382 = vmatmul.mubr.f32.gmra.mrb[0].mxu0 %v295
  %v383 = vpop.f32.mrb[0].mxu0
  %v384 = vadd.f32 0.0, %v383
  %v385 = vpop.f32.mrb[0].mxu0
  %386 = vmatprep.mubr.f32.mxu0 0.0
  %387 = vmatmul.mubr.f32.gmra.mrb[0].mxu0 %v297
  %v388 = vpop.f32.mrb[0].mxu0
  %v389 = vadd.f32 0.0, %v388
  %v390 = vpop.f32.mrb[0].mxu0
  %391 = vdwg.mxu0
  %v392 = vsel %vm24, %v374, -inf
  %393 = vmax.xlane.f32.xlu0 %v392
  %v394 = vpop.xlane.xlu0 %393
  %v395 = vsel %vm24, %v379, -inf
  %396 = vmax.xlane.f32.xlu0 %v395
  %v397 = vpop.xlane.xlu0 %396
  %v398 = vsel %vm24, %v384, -inf
  %399 = vmax.xlane.f32.xlu0 %v398
  %v400 = vpop.xlane.xlu0 %399
  %v401 = vsel %vm24, %v389, -inf
  %402 = vmax.xlane.f32.xlu0 %v401
  %v403 = vpop.xlane.xlu0 %402
  %v404 = vsub.f32 %v374, %v394
  %v405 = vsub.f32 %v379, %v397
  %v406 = vsub.f32 %v384, %v400
  %v407 = vsub.f32 %v389, %v403
  %v408 = vmul.f32 %v404, 1.442695
  %v409 = vpow.pop %v408
  %v410 = vmul.f32 %v405, 1.442695
  %v411 = vpow.pop %v410
  %v412 = vmul.f32 %v406, 1.442695
  %v413 = vpow.pop %v412
  %v414 = vmul.f32 %v407, 1.442695
  %v415 = vpow.pop %v414
  %v416 = vsel %vm24, %v409, 0.0
  %417 = vadd.xlane.f32.xlu0 %v416
  %v418 = vpop.xlane.xlu0 %417
  %v419 = vsel %vm24, %v411, 0.0
  %420 = vadd.xlane.f32.xlu0 %v419
  %v421 = vpop.xlane.xlu0 %420
  %v422 = vsel %vm24, %v413, 0.0
  %423 = vadd.xlane.f32.xlu0 %v422
  %v424 = vpop.xlane.xlu0 %423
  %v425 = vsel %vm24, %v415, 0.0
  %426 = vadd.xlane.f32.xlu0 %v425
  %v427 = vpop.xlane.xlu0 %426
  %v428 = vrcp.pop %v418
  %v429 = vrcp.pop %v421
  %v430 = vrcp.pop %v424
  %v431 = vrcp.pop %v427
  %v432 = vmul.f32 %v409, %v428
  %v433 = vmul.f32 %v411, %v429
  %v434 = vmul.f32 %v413, %v430
  %v435 = vmul.f32 %v415, %v431
  %440 = vrot.lane.b32.xlu0 %v10, 96
  %v441 = vpop.permute.xlu0 %440
  %442 = vrot.lane.b32.xlu0 %v13, 96
  %v443 = vpop.permute.xlu0 %442
  %444 = vrot.lane.b32.xlu0 %v16, 96
  %v445 = vpop.permute.xlu0 %444
  %446 = vrot.lane.b32.xlu0 %v19, 96
  %v447 = vpop.permute.xlu0 %446
  %v453 = vsel %vm24, %v432, 0
  %v456 = vsel %vm24, %v433, 0
  %v459 = vsel %vm24, %v434, 0
  %v462 = vsel %vm24, %v435, 0
  %464 = vmatprep.subr.mxu0 0.0
  %465 = vmatpush1.msra.mxu0 %v441
  %466 = vmatprep.subr.mxu0 0.0
  %467 = vmatpush1.msra.mxu0 %v443
  %468 = vmatprep.subr.mxu0 0.0
  %469 = vmatpush1.msra.mxu0 %v445
  %470 = vmatprep.subr.mxu0 0.0
  %471 = vmatpush1.msra.mxu0 %v447
  %472 = vmatprep.subr.mxu0 0.0
  %473 = vmatpush1.msra.mxu0 0.0
  %474 = vmatprep.subr.mxu0 0.0
  %475 = vmatpush1.msra.mxu0 0.0
  %476 = vmatprep.subr.mxu0 0.0
  %477 = vmatpush1.msra.mxu0 0.0
  %478 = vmatprep.subr.mxu0 0.0
  %479 = vmatpush1.msra.mxu0 0.0
  %480 = vmatprep.subr.mxu0 0.0
  %481 = vmatpush1.msra.mxu0 0.0
  %482 = vmatprep.subr.mxu0 0.0
  %483 = vmatpush1.msra.mxu0 0.0
  %484 = vmatprep.subr.mxu0 0.0
  %485 = vmatpush1.msra.mxu0 0.0
  %486 = vmatprep.subr.mxu0 0.0
  %487 = vmatpush1.msra.mxu0 0.0
  %488 = vmatprep.subr.mxu0 0.0
  %489 = vmatpush1.msra.mxu0 0.0
  %490 = vmatprep.subr.mxu0 0.0
  %491 = vmatpush1.msra.mxu0 0.0
  %492 = vmatprep.subr.mxu0 0.0
  %493 = vmatpush1.msra.mxu0 0.0
  %494 = vmatprep.subr.mxu0 0.0
  %495 = vmatpush1.msra.mxu0 0.0
  %496 = vmatprep.subr.mxu0 0.0
  %497 = vmatpush1.msra.mxu0 0.0
  %498 = vmatprep.subr.mxu0 0.0
  %499 = vmatpush1.msra.mxu0 0.0
  %500 = vmatprep.subr.mxu0 0.0
  %501 = vmatpush1.msra.mxu0 0.0
  %502 = vmatprep.subr.mxu0 0.0
  %503 = vmatpush1.msra.mxu0 0.0
  %504 = vmatprep.subr.mxu0 0.0
  %505 = vmatpush1.msra.mxu0 0.0
  %506 = vmatprep.subr.mxu0 0.0
  %507 = vmatpush1.msra.mxu0 0.0
  %508 = vmatprep.subr.mxu0 0.0
  %509 = vmatpush1.msra.mxu0 0.0
  %510 = vmatprep.subr.mxu0 0.0
  %511 = vmatpush1.msra.mxu0 0.0
  %512 = vmatprep.subr.mxu0 0.0
  %513 = vmatpush1.msra.mxu0 0.0
  %514 = vmatprep.subr.mxu0 0.0
  %515 = vmatpush1.msra.mxu0 0.0
  %516 = vmatprep.subr.mxu0 0.0
  %517 = vmatpush1.msra.mxu0 0.0
  %518 = vmatprep.subr.mxu0 0.0
  %519 = vmatpush1.msra.mxu0 0.0
  %520 = vmatprep.subr.mxu0 0.0
  %521 = vmatpush1.msra.mxu0 0.0
  %522 = vmatprep.subr.mxu0 0.0
  %523 = vmatpush1.msra.mxu0 0.0
  %524 = vmatprep.subr.mxu0 0.0
  %525 = vmatpush1.msra.mxu0 0.0
  %526 = vmatprep.subr.mxu0 0.0
  %527 = vmatpush1.msra.mxu0 0.0
  %528 = vmatprep.mubr.f32.mxu0 0.0
  %529 = vmatmul.mubr.f32.gmra.mrb[0].mxu0 %v453
  %v530 = vpop.f32.mrb[0].mxu0
  %v531 = vadd.f32 0.0, %v530
  %v532 = vpop.f32.mrb[0].mxu0
  %533 = vmatprep.mubr.f32.mxu0 0.0
  %534 = vmatmul.mubr.f32.gmra.mrb[0].mxu0 %v456
  %v535 = vpop.f32.mrb[0].mxu0
  %v536 = vadd.f32 0.0, %v535
  %v537 = vpop.f32.mrb[0].mxu0
  %538 = vmatprep.mubr.f32.mxu0 0.0
  %539 = vmatmul.mubr.f32.gmra.mrb[0].mxu0 %v459
  %v540 = vpop.f32.mrb[0].mxu0
  %v541 = vadd.f32 0.0, %v540
  %v542 = vpop.f32.mrb[0].mxu0
  %543 = vmatprep.mubr.f32.mxu0 0.0
  %544 = vmatmul.mubr.f32.gmra.mrb[0].mxu0 %v462
  %v545 = vpop.f32.mrb[0].mxu0
  %v546 = vadd.f32 0.0, %v545
  %v547 = vpop.f32.mrb[0].mxu0
  %548 = vdwg.mxu0
  %549 = vrot.lane.b32.xlu0 %v20, 64
  %v550 = vpop.permute.xlu0 %549
  %551 = vrot.lane.b32.xlu0 %v21, 64
  %v552 = vpop.permute.xlu0 %551
  %553 = vrot.lane.b32.xlu0 %v22, 64
  %v554 = vpop.permute.xlu0 %553
  %555 = vrot.lane.b32.xlu0 %v23, 64
  %v556 = vpop.permute.xlu0 %555
  %557 = vrot.lane.b32.xlu0 %v9, 64
  %v558 = vpop.permute.xlu0 %557
  %559 = vrot.lane.b32.xlu0 %v12, 64
  %v560 = vpop.permute.xlu0 %559
  %561 = vrot.lane.b32.xlu0 %v15, 64
  %v562 = vpop.permute.xlu0 %561
  %563 = vrot.lane.b32.xlu0 %v18, 64
  %v564 = vpop.permute.xlu0 %563
  %v565 = vsel %vm24, %v550, 0
  %v567 = vsel %vm24, %v552, 0
  %v569 = vsel %vm24, %v554, 0
  %v571 = vsel %vm24, %v556, 0
  %v573 = vsel %vm24, %v558, 0
  %v575 = vsel %vm24, %v560, 0
  %v577 = vsel %vm24, %v562, 0
  %v579 = vsel %vm24, %v564, 0
  %581 = vmatprep.subr.mxu0 0.0
  %582 = vmatpush1.xpose.msra.mxu0 %v573
  %583 = vmatprep.subr.mxu0 0.0
  %584 = vmatpush1.xpose.msra.mxu0 %v575
  %585 = vmatprep.subr.mxu0 0.0
  %586 = vmatpush1.xpose.msra.mxu0 %v577
  %587 = vmatprep.subr.mxu0 0.0
  %588 = vmatpush1.xpose.msra.mxu0 %v579
  %589 = vmatprep.subr.mxu0 0.0
  %590 = vmatpush1.xpose.msra.mxu0 0.0
  %591 = vmatprep.subr.mxu0 0.0
  %592 = vmatpush1.xpose.msra.mxu0 0.0
  %593 = vmatprep.subr.mxu0 0.0
  %594 = vmatpush1.xpose.msra.mxu0 0.0
  %595 = vmatprep.subr.mxu0 0.0
  %596 = vmatpush1.xpose.msra.mxu0 0.0
  %597 = vmatprep.subr.mxu0 0.0
  %598 = vmatpush1.xpose.msra.mxu0 0.0
  %599 = vmatprep.subr.mxu0 0.0
  %600 = vmatpush1.xpose.msra.mxu0 0.0
  %601 = vmatprep.subr.mxu0 0.0
  %602 = vmatpush1.xpose.msra.mxu0 0.0
  %603 = vmatprep.subr.mxu0 0.0
  %604 = vmatpush1.xpose.msra.mxu0 0.0
  %605 = vmatprep.subr.mxu0 0.0
  %606 = vmatpush1.xpose.msra.mxu0 0.0
  %607 = vmatprep.subr.mxu0 0.0
  %608 = vmatpush1.xpose.msra.mxu0 0.0
  %609 = vmatprep.subr.mxu0 0.0
  %610 = vmatpush1.xpose.msra.mxu0 0.0
  %611 = vmatprep.subr.mxu0 0.0
  %612 = vmatpush1.xpose.msra.mxu0 0.0
  %613 = vmatprep.subr.mxu0 0.0
  %614 = vmatpush1.xpose.msra.mxu0 0.0
  %615 = vmatprep.subr.mxu0 0.0
  %616 = vmatpush1.xpose.msra.mxu0 0.0
  %617 = vmatprep.subr.mxu0 0.0
  %618 = vmatpush1.xpose.msra.mxu0 0.0
  %619 = vmatprep.subr.mxu0 0.0
  %620 = vmatpush1.xpose.msra.mxu0 0.0
  %621 = vmatprep.subr.mxu0 0.0
  %622 = vmatpush1.xpose.msra.mxu0 0.0
  %623 = vmatprep.subr.mxu0 0.0
  %624 = vmatpush1.xpose.msra.mxu0 0.0
  %625 = vmatprep.subr.mxu0 0.0
  %626 = vmatpush1.xpose.msra.mxu0 0.0
  %627 = vmatprep.subr.mxu0 0.0
  %628 = vmatpush1.xpose.msra.mxu0 0.0
  %629 = vmatprep.subr.mxu0 0.0
  %630 = vmatpush1.xpose.msra.mxu0 0.0
  %631 = vmatprep.subr.mxu0 0.0
  %632 = vmatpush1.xpose.msra.mxu0 0.0
  %633 = vmatprep.subr.mxu0 0.0
  %634 = vmatpush1.xpose.msra.mxu0 0.0
  %635 = vmatprep.subr.mxu0 0.0
  %636 = vmatpush1.xpose.msra.mxu0 0.0
  %637 = vmatprep.subr.mxu0 0.0
  %638 = vmatpush1.xpose.msra.mxu0 0.0
  %639 = vmatprep.subr.mxu0 0.0
  %640 = vmatpush1.xpose.msra.mxu0 0.0
  %641 = vmatprep.subr.mxu0 0.0
  %642 = vmatpush1.xpose.msra.mxu0 0.0
  %643 = vmatprep.subr.mxu0 0.0
  %644 = vmatpush1.xpose.msra.mxu0 0.0
  %645 = vmatprep.mubr.f32.mxu0 0.0
  %646 = vmatmul.mubr.f32.gmra.mrb[0].mxu0 %v565
  %v647 = vpop.f32.mrb[0].mxu0
  %v648 = vadd.f32 0.0, %v647
  %v649 = vpop.f32.mrb[0].mxu0
  %650 = vmatprep.mubr.f32.mxu0 0.0
  %651 = vmatmul.mubr.f32.gmra.mrb[0].mxu0 %v567
  %v652 = vpop.f32.mrb[0].mxu0
  %v653 = vadd.f32 0.0, %v652
  %v654 = vpop.f32.mrb[0].mxu0
  %655 = vmatprep.mubr.f32.mxu0 0.0
  %656 = vmatmul.mubr.f32.gmra.mrb[0].mxu0 %v569
  %v657 = vpop.f32.mrb[0].mxu0
  %v658 = vadd.f32 0.0, %v657
  %v659 = vpop.f32.mrb[0].mxu0
  %660 = vmatprep.mubr.f32.mxu0 0.0
  %661 = vmatmul.mubr.f32.gmra.mrb[0].mxu0 %v571
  %v662 = vpop.f32.mrb[0].mxu0
  %v663 = vadd.f32 0.0, %v662
  %v664 = vpop.f32.mrb[0].mxu0
  %665 = vdwg.mxu0
  %v666 = vsel %vm24, %v648, -inf
  %667 = vmax.xlane.f32.xlu0 %v666
  %v668 = vpop.xlane.xlu0 %667
  %v669 = vsel %vm24, %v653, -inf
  %670 = vmax.xlane.f32.xlu0 %v669
  %v671 = vpop.xlane.xlu0 %670
  %v672 = vsel %vm24, %v658, -inf
  %673 = vmax.xlane.f32.xlu0 %v672
  %v674 = vpop.xlane.xlu0 %673
  %v675 = vsel %vm24, %v663, -inf
  %676 = vmax.xlane.f32.xlu0 %v675
  %v677 = vpop.xlane.xlu0 %676
  %v678 = vsub.f32 %v648, %v668
  %v679 = vsub.f32 %v653, %v671
  %v680 = vsub.f32 %v658, %v674
  %v681 = vsub.f32 %v663, %v677
  %v682 = vmul.f32 %v678, 1.442695
  %v683 = vpow.pop %v682
  %v684 = vmul.f32 %v679, 1.442695
  %v685 = vpow.pop %v684
  %v686 = vmul.f32 %v680, 1.442695
  %v687 = vpow.pop %v686
  %v688 = vmul.f32 %v681, 1.442695
  %v689 = vpow.pop %v688
  %v690 = vsel %vm24, %v683, 0.0
  %691 = vadd.xlane.f32.xlu0 %v690
  %v692 = vpop.xlane.xlu0 %691
  %v693 = vsel %vm24, %v685, 0.0
  %694 = vadd.xlane.f32.xlu0 %v693
  %v695 = vpop.xlane.xlu0 %694
  %v696 = vsel %vm24, %v687, 0.0
  %697 = vadd.xlane.f32.xlu0 %v696
  %v698 = vpop.xlane.xlu0 %697
  %v699 = vsel %vm24, %v689, 0.0
  %700 = vadd.xlane.f32.xlu0 %v699
  %v701 = vpop.xlane.xlu0 %700
  %v702 = vrcp.pop %v692
  %v703 = vrcp.pop %v695
  %v704 = vrcp.pop %v698
  %v705 = vrcp.pop %v701
  %v706 = vmul.f32 %v683, %v702
  %v707 = vmul.f32 %v685, %v703
  %v708 = vmul.f32 %v687, %v704
  %v709 = vmul.f32 %v689, %v705
  %710 = vrot.lane.b32.xlu0 %v10, 64
  %v711 = vpop.permute.xlu0 %710
  %712 = vrot.lane.b32.xlu0 %v13, 64
  %v713 = vpop.permute.xlu0 %712
  %714 = vrot.lane.b32.xlu0 %v16, 64
  %v715 = vpop.permute.xlu0 %714
  %716 = vrot.lane.b32.xlu0 %v19, 64
  %v717 = vpop.permute.xlu0 %716
  %v723 = vsel %vm24, %v706, 0
  %v726 = vsel %vm24, %v707, 0
  %v729 = vsel %vm24, %v708, 0
  %v732 = vsel %vm24, %v709, 0
  %734 = vmatprep.subr.mxu0 0.0
  %735 = vmatpush1.msra.mxu0 %v711
  %736 = vmatprep.subr.mxu0 0.0
  %737 = vmatpush1.msra.mxu0 %v713
  %738 = vmatprep.subr.mxu0 0.0
  %739 = vmatpush1.msra.mxu0 %v715
  %740 = vmatprep.subr.mxu0 0.0
  %741 = vmatpush1.msra.mxu0 %v717
  %742 = vmatprep.subr.mxu0 0.0
  %743 = vmatpush1.msra.mxu0 0.0
  %744 = vmatprep.subr.mxu0 0.0
  %745 = vmatpush1.msra.mxu0 0.0
  %746 = vmatprep.subr.mxu0 0.0
  %747 = vmatpush1.msra.mxu0 0.0
  %748 = vmatprep.subr.mxu0 0.0
  %749 = vmatpush1.msra.mxu0 0.0
  %750 = vmatprep.subr.mxu0 0.0
  %751 = vmatpush1.msra.mxu0 0.0
  %752 = vmatprep.subr.mxu0 0.0
  %753 = vmatpush1.msra.mxu0 0.0
  %754 = vmatprep.subr.mxu0 0.0
  %755 = vmatpush1.msra.mxu0 0.0
  %756 = vmatprep.subr.mxu0 0.0
  %757 = vmatpush1.msra.mxu0 0.0
  %758 = vmatprep.subr.mxu0 0.0
  %759 = vmatpush1.msra.mxu0 0.0
  %760 = vmatprep.subr.mxu0 0.0
  %761 = vmatpush1.msra.mxu0 0.0
  %762 = vmatprep.subr.mxu0 0.0
  %763 = vmatpush1.msra.mxu0 0.0
  %764 = vmatprep.subr.mxu0 0.0
  %765 = vmatpush1.msra.mxu0 0.0
  %766 = vmatprep.subr.mxu0 0.0
  %767 = vmatpush1.msra.mxu0 0.0
  %768 = vmatprep.subr.mxu0 0.0
  %769 = vmatpush1.msra.mxu0 0.0
  %770 = vmatprep.subr.mxu0 0.0
  %771 = vmatpush1.msra.mxu0 0.0
  %772 = vmatprep.subr.mxu0 0.0
  %773 = vmatpush1.msra.mxu0 0.0
  %774 = vmatprep.subr.mxu0 0.0
  %775 = vmatpush1.msra.mxu0 0.0
  %776 = vmatprep.subr.mxu0 0.0
  %777 = vmatpush1.msra.mxu0 0.0
  %778 = vmatprep.subr.mxu0 0.0
  %779 = vmatpush1.msra.mxu0 0.0
  %780 = vmatprep.subr.mxu0 0.0
  %781 = vmatpush1.msra.mxu0 0.0
  %782 = vmatprep.subr.mxu0 0.0
  %783 = vmatpush1.msra.mxu0 0.0
  %784 = vmatprep.subr.mxu0 0.0
  %785 = vmatpush1.msra.mxu0 0.0
  %786 = vmatprep.subr.mxu0 0.0
  %787 = vmatpush1.msra.mxu0 0.0
  %788 = vmatprep.subr.mxu0 0.0
  %789 = vmatpush1.msra.mxu0 0.0
  %790 = vmatprep.subr.mxu0 0.0
  %791 = vmatpush1.msra.mxu0 0.0
  %792 = vmatprep.subr.mxu0 0.0
  %793 = vmatpush1.msra.mxu0 0.0
  %794 = vmatprep.subr.mxu0 0.0
  %795 = vmatpush1.msra.mxu0 0.0
  %796 = vmatprep.subr.mxu0 0.0
  %797 = vmatpush1.msra.mxu0 0.0
  %798 = vmatprep.mubr.f32.mxu0 0.0
  %799 = vmatmul.mubr.f32.gmra.mrb[0].mxu0 %v723
  %v800 = vpop.f32.mrb[0].mxu0
  %v801 = vadd.f32 0.0, %v800
  %v802 = vpop.f32.mrb[0].mxu0
  %803 = vmatprep.mubr.f32.mxu0 0.0
  %804 = vmatmul.mubr.f32.gmra.mrb[0].mxu0 %v726
  %v805 = vpop.f32.mrb[0].mxu0
  %v806 = vadd.f32 0.0, %v805
  %v807 = vpop.f32.mrb[0].mxu0
  %808 = vmatprep.mubr.f32.mxu0 0.0
  %809 = vmatmul.mubr.f32.gmra.mrb[0].mxu0 %v729
  %v810 = vpop.f32.mrb[0].mxu0
  %v811 = vadd.f32 0.0, %v810
  %v812 = vpop.f32.mrb[0].mxu0
  %813 = vmatprep.mubr.f32.mxu0 0.0
  %814 = vmatmul.mubr.f32.gmra.mrb[0].mxu0 %v732
  %v815 = vpop.f32.mrb[0].mxu0
  %v816 = vadd.f32 0.0, %v815
  %v817 = vpop.f32.mrb[0].mxu0
  %818 = vdwg.mxu0
  %819 = vrot.lane.b32.xlu0 %v20, 32
  %v820 = vpop.permute.xlu0 %819
  %821 = vrot.lane.b32.xlu0 %v21, 32
  %v822 = vpop.permute.xlu0 %821
  %823 = vrot.lane.b32.xlu0 %v22, 32
  %v824 = vpop.permute.xlu0 %823
  %825 = vrot.lane.b32.xlu0 %v23, 32
  %v826 = vpop.permute.xlu0 %825
  %827 = vrot.lane.b32.xlu0 %v9, 32
  %v828 = vpop.permute.xlu0 %827
  %829 = vrot.lane.b32.xlu0 %v12, 32
  %v830 = vpop.permute.xlu0 %829
  %831 = vrot.lane.b32.xlu0 %v15, 32
  %v832 = vpop.permute.xlu0 %831
  %833 = vrot.lane.b32.xlu0 %v18, 32
  %v834 = vpop.permute.xlu0 %833
  %v835 = vsel %vm24, %v820, 0
  %v837 = vsel %vm24, %v822, 0
  %v839 = vsel %vm24, %v824, 0
  %v841 = vsel %vm24, %v826, 0
  %v843 = vsel %vm24, %v828, 0
  %v845 = vsel %vm24, %v830, 0
  %v847 = vsel %vm24, %v832, 0
  %v849 = vsel %vm24, %v834, 0
  %851 = vmatprep.subr.mxu0 0.0
  %852 = vmatpush1.xpose.msra.mxu0 %v843
  %853 = vmatprep.subr.mxu0 0.0
  %854 = vmatpush1.xpose.msra.mxu0 %v845
  %855 = vmatprep.subr.mxu0 0.0
  %856 = vmatpush1.xpose.msra.mxu0 %v847
  %857 = vmatprep.subr.mxu0 0.0
  %858 = vmatpush1.xpose.msra.mxu0 %v849
  %859 = vmatprep.subr.mxu0 0.0
  %860 = vmatpush1.xpose.msra.mxu0 0.0
  %861 = vmatprep.subr.mxu0 0.0
  %862 = vmatpush1.xpose.msra.mxu0 0.0
  %863 = vmatprep.subr.mxu0 0.0
  %864 = vmatpush1.xpose.msra.mxu0 0.0
  %865 = vmatprep.subr.mxu0 0.0
  %866 = vmatpush1.xpose.msra.mxu0 0.0
  %867 = vmatprep.subr.mxu0 0.0
  %868 = vmatpush1.xpose.msra.mxu0 0.0
  %869 = vmatprep.subr.mxu0 0.0
  %870 = vmatpush1.xpose.msra.mxu0 0.0
  %871 = vmatprep.subr.mxu0 0.0
  %872 = vmatpush1.xpose.msra.mxu0 0.0
  %873 = vmatprep.subr.mxu0 0.0
  %874 = vmatpush1.xpose.msra.mxu0 0.0
  %875 = vmatprep.subr.mxu0 0.0
  %876 = vmatpush1.xpose.msra.mxu0 0.0
  %877 = vmatprep.subr.mxu0 0.0
  %878 = vmatpush1.xpose.msra.mxu0 0.0
  %879 = vmatprep.subr.mxu0 0.0
  %880 = vmatpush1.xpose.msra.mxu0 0.0
  %881 = vmatprep.subr.mxu0 0.0
  %882 = vmatpush1.xpose.msra.mxu0 0.0
  %883 = vmatprep.subr.mxu0 0.0
  %884 = vmatpush1.xpose.msra.mxu0 0.0
  %885 = vmatprep.subr.mxu0 0.0
  %886 = vmatpush1.xpose.msra.mxu0 0.0
  %887 = vmatprep.subr.mxu0 0.0
  %888 = vmatpush1.xpose.msra.mxu0 0.0
  %889 = vmatprep.subr.mxu0 0.0
  %890 = vmatpush1.xpose.msra.mxu0 0.0
  %891 = vmatprep.subr.mxu0 0.0
  %892 = vmatpush1.xpose.msra.mxu0 0.0
  %893 = vmatprep.subr.mxu0 0.0
  %894 = vmatpush1.xpose.msra.mxu0 0.0
  %895 = vmatprep.subr.mxu0 0.0
  %896 = vmatpush1.xpose.msra.mxu0 0.0
  %897 = vmatprep.subr.mxu0 0.0
  %898 = vmatpush1.xpose.msra.mxu0 0.0
  %899 = vmatprep.subr.mxu0 0.0
  %900 = vmatpush1.xpose.msra.mxu0 0.0
  %901 = vmatprep.subr.mxu0 0.0
  %902 = vmatpush1.xpose.msra.mxu0 0.0
  %903 = vmatprep.subr.mxu0 0.0
  %904 = vmatpush1.xpose.msra.mxu0 0.0
  %905 = vmatprep.subr.mxu0 0.0
  %906 = vmatpush1.xpose.msra.mxu0 0.0
  %907 = vmatprep.subr.mxu0 0.0
  %908 = vmatpush1.xpose.msra.mxu0 0.0
  %909 = vmatprep.subr.mxu0 0.0
  %910 = vmatpush1.xpose.msra.mxu0 0.0
  %911 = vmatprep.subr.mxu0 0.0
  %912 = vmatpush1.xpose.msra.mxu0 0.0
  %913 = vmatprep.subr.mxu0 0.0
  %914 = vmatpush1.xpose.msra.mxu0 0.0
  %915 = vmatprep.mubr.f32.mxu0 0.0
  %916 = vmatmul.mubr.f32.gmra.mrb[0].mxu0 %v835
  %v917 = vpop.f32.mrb[0].mxu0
  %v918 = vadd.f32 0.0, %v917
  %v919 = vpop.f32.mrb[0].mxu0
  %920 = vmatprep.mubr.f32.mxu0 0.0
  %921 = vmatmul.mubr.f32.gmra.mrb[0].mxu0 %v837
  %v922 = vpop.f32.mrb[0].mxu0
  %v923 = vadd.f32 0.0, %v922
  %v924 = vpop.f32.mrb[0].mxu0
  %925 = vmatprep.mubr.f32.mxu0 0.0
  %926 = vmatmul.mubr.f32.gmra.mrb[0].mxu0 %v839
  %v927 = vpop.f32.mrb[0].mxu0
  %v928 = vadd.f32 0.0, %v927
  %v929 = vpop.f32.mrb[0].mxu0
  %930 = vmatprep.mubr.f32.mxu0 0.0
  %931 = vmatmul.mubr.f32.gmra.mrb[0].mxu0 %v841
  %v932 = vpop.f32.mrb[0].mxu0
  %v933 = vadd.f32 0.0, %v932
  %v934 = vpop.f32.mrb[0].mxu0
  %935 = vdwg.mxu0
  %v936 = vsel %vm24, %v918, -inf
  %937 = vmax.xlane.f32.xlu0 %v936
  %v938 = vpop.xlane.xlu0 %937
  %v939 = vsel %vm24, %v923, -inf
  %940 = vmax.xlane.f32.xlu0 %v939
  %v941 = vpop.xlane.xlu0 %940
  %v942 = vsel %vm24, %v928, -inf
  %943 = vmax.xlane.f32.xlu0 %v942
  %v944 = vpop.xlane.xlu0 %943
  %v945 = vsel %vm24, %v933, -inf
  %946 = vmax.xlane.f32.xlu0 %v945
  %v947 = vpop.xlane.xlu0 %946
  %v948 = vsub.f32 %v918, %v938
  %v949 = vsub.f32 %v923, %v941
  %v950 = vsub.f32 %v928, %v944
  %v951 = vsub.f32 %v933, %v947
  %v952 = vmul.f32 %v948, 1.442695
  %v953 = vpow.pop %v952
  %v954 = vmul.f32 %v949, 1.442695
  %v955 = vpow.pop %v954
  %v956 = vmul.f32 %v950, 1.442695
  %v957 = vpow.pop %v956
  %v958 = vmul.f32 %v951, 1.442695
  %v959 = vpow.pop %v958
  %v960 = vsel %vm24, %v953, 0.0
  %961 = vadd.xlane.f32.xlu0 %v960
  %v962 = vpop.xlane.xlu0 %961
  %v963 = vsel %vm24, %v955, 0.0
  %964 = vadd.xlane.f32.xlu0 %v963
  %v965 = vpop.xlane.xlu0 %964
  %v966 = vsel %vm24, %v957, 0.0
  %967 = vadd.xlane.f32.xlu0 %v966
  %v968 = vpop.xlane.xlu0 %967
  %v969 = vsel %vm24, %v959, 0.0
  %970 = vadd.xlane.f32.xlu0 %v969
  %v971 = vpop.xlane.xlu0 %970
  %v972 = vrcp.pop %v962
  %v973 = vrcp.pop %v965
  %v974 = vrcp.pop %v968
  %v975 = vrcp.pop %v971
  %v976 = vmul.f32 %v953, %v972
  %v977 = vmul.f32 %v955, %v973
  %v978 = vmul.f32 %v957, %v974
  %v979 = vmul.f32 %v959, %v975
  %980 = vrot.lane.b32.xlu0 %v10, 32
  %v981 = vpop.permute.xlu0 %980
  %982 = vrot.lane.b32.xlu0 %v13, 32
  %v983 = vpop.permute.xlu0 %982
  %984 = vrot.lane.b32.xlu0 %v16, 32
  %v985 = vpop.permute.xlu0 %984
  %986 = vrot.lane.b32.xlu0 %v19, 32
  %v987 = vpop.permute.xlu0 %986
  %v993 = vsel %vm24, %v976, 0
  %v996 = vsel %vm24, %v977, 0
  %v999 = vsel %vm24, %v978, 0
  %v1002 = vsel %vm24, %v979, 0
  %1004 = vmatprep.subr.mxu0 0.0
  %1005 = vmatpush1.msra.mxu0 %v981
  %1006 = vmatprep.subr.mxu0 0.0
  %1007 = vmatpush1.msra.mxu0 %v983
  %1008 = vmatprep.subr.mxu0 0.0
  %1009 = vmatpush1.msra.mxu0 %v985
  %1010 = vmatprep.subr.mxu0 0.0
  %1011 = vmatpush1.msra.mxu0 %v987
  %1012 = vmatprep.subr.mxu0 0.0
  %1013 = vmatpush1.msra.mxu0 0.0
  %1014 = vmatprep.subr.mxu0 0.0
  %1015 = vmatpush1.msra.mxu0 0.0
  %1016 = vmatprep.subr.mxu0 0.0
  %1017 = vmatpush1.msra.mxu0 0.0
  %1018 = vmatprep.subr.mxu0 0.0
  %1019 = vmatpush1.msra.mxu0 0.0
  %1020 = vmatprep.subr.mxu0 0.0
  %1021 = vmatpush1.msra.mxu0 0.0
  %1022 = vmatprep.subr.mxu0 0.0
  %1023 = vmatpush1.msra.mxu0 0.0
  %1024 = vmatprep.subr.mxu0 0.0
  %1025 = vmatpush1.msra.mxu0 0.0
  %1026 = vmatprep.subr.mxu0 0.0
  %1027 = vmatpush1.msra.mxu0 0.0
  %1028 = vmatprep.subr.mxu0 0.0
  %1029 = vmatpush1.msra.mxu0 0.0
  %1030 = vmatprep.subr.mxu0 0.0
  %1031 = vmatpush1.msra.mxu0 0.0
  %1032 = vmatprep.subr.mxu0 0.0
  %1033 = vmatpush1.msra.mxu0 0.0
  %1034 = vmatprep.subr.mxu0 0.0
  %1035 = vmatpush1.msra.mxu0 0.0
  %1036 = vmatprep.subr.mxu0 0.0
  %1037 = vmatpush1.msra.mxu0 0.0
  %1038 = vmatprep.subr.mxu0 0.0
  %1039 = vmatpush1.msra.mxu0 0.0
  %1040 = vmatprep.subr.mxu0 0.0
  %1041 = vmatpush1.msra.mxu0 0.0
  %1042 = vmatprep.subr.mxu0 0.0
  %1043 = vmatpush1.msra.mxu0 0.0
  %1044 = vmatprep.subr.mxu0 0.0
  %1045 = vmatpush1.msra.mxu0 0.0
  %1046 = vmatprep.subr.mxu0 0.0
  %1047 = vmatpush1.msra.mxu0 0.0
  %1048 = vmatprep.subr.mxu0 0.0
  %1049 = vmatpush1.msra.mxu0 0.0
  %1050 = vmatprep.subr.mxu0 0.0
  %1051 = vmatpush1.msra.mxu0 0.0
  %1052 = vmatprep.subr.mxu0 0.0
  %1053 = vmatpush1.msra.mxu0 0.0
  %1054 = vmatprep.subr.mxu0 0.0
  %1055 = vmatpush1.msra.mxu0 0.0
  %1056 = vmatprep.subr.mxu0 0.0
  %1057 = vmatpush1.msra.mxu0 0.0
  %1058 = vmatprep.subr.mxu0 0.0
  %1059 = vmatpush1.msra.mxu0 0.0
  %1060 = vmatprep.subr.mxu0 0.0
  %1061 = vmatpush1.msra.mxu0 0.0
  %1062 = vmatprep.subr.mxu0 0.0
  %1063 = vmatpush1.msra.mxu0 0.0
  %1064 = vmatprep.subr.mxu0 0.0
  %1065 = vmatpush1.msra.mxu0 0.0
  %1066 = vmatprep.subr.mxu0 0.0
  %1067 = vmatpush1.msra.mxu0 0.0
  %1068 = vmatprep.mubr.f32.mxu0 0.0
  %1069 = vmatmul.mubr.f32.gmra.mrb[0].mxu0 %v993
  %v1070 = vpop.f32.mrb[0].mxu0
  %v1071 = vadd.f32 0.0, %v1070
  %v1072 = vpop.f32.mrb[0].mxu0
  %1073 = vmatprep.mubr.f32.mxu0 0.0
  %1074 = vmatmul.mubr.f32.gmra.mrb[0].mxu0 %v996
  %v1075 = vpop.f32.mrb[0].mxu0
  %v1076 = vadd.f32 0.0, %v1075
  %v1077 = vpop.f32.mrb[0].mxu0
  %1078 = vmatprep.mubr.f32.mxu0 0.0
  %1079 = vmatmul.mubr.f32.gmra.mrb[0].mxu0 %v999
  %v1080 = vpop.f32.mrb[0].mxu0
  %v1081 = vadd.f32 0.0, %v1080
  %v1082 = vpop.f32.mrb[0].mxu0
  %1083 = vmatprep.mubr.f32.mxu0 0.0
  %1084 = vmatmul.mubr.f32.gmra.mrb[0].mxu0 %v1002
  %v1085 = vpop.f32.mrb[0].mxu0
  %v1086 = vadd.f32 0.0, %v1085
  %v1087 = vpop.f32.mrb[0].mxu0
  %1088 = vdwg.mxu0
  %1093 = vrot.lane.b32.xlu0 %v531, 32
  %v1094 = vpop.permute.xlu0 %1093
  %1095 = vrot.lane.b32.xlu0 %v536, 32
  %v1096 = vpop.permute.xlu0 %1095
  %1097 = vrot.lane.b32.xlu0 %v541, 32
  %v1098 = vpop.permute.xlu0 %1097
  %1099 = vrot.lane.b32.xlu0 %v546, 32
  %v1100 = vpop.permute.xlu0 %1099
  %1109 = vrot.lane.b32.xlu0 %v801, 64
  %v1110 = vpop.permute.xlu0 %1109
  %1111 = vrot.lane.b32.xlu0 %v806, 64
  %v1112 = vpop.permute.xlu0 %1111
  %1113 = vrot.lane.b32.xlu0 %v811, 64
  %v1114 = vpop.permute.xlu0 %1113
  %1115 = vrot.lane.b32.xlu0 %v816, 64
  %v1116 = vpop.permute.xlu0 %1115
  %1125 = vrot.lane.b32.xlu0 %v1071, 96
  %v1126 = vpop.permute.xlu0 %1125
  %1127 = vrot.lane.b32.xlu0 %v1076, 96
  %v1128 = vpop.permute.xlu0 %1127
  %1129 = vrot.lane.b32.xlu0 %v1081, 96
  %v1130 = vpop.permute.xlu0 %1129
  %1131 = vrot.lane.b32.xlu0 %v1086, 96
  %v1132 = vpop.permute.xlu0 %1131
  %v1137 = vsel %vm24, %v257, %v1094
  %v1138 = vsel %vm24, %v262, %v1096
  %v1139 = vsel %vm24, %v267, %v1098
  %v1140 = vsel %vm24, %v272, %v1100
  %vm1141 = vcmask 523264
  %v1142 = vsel %vm1141, %v1137, %v1110
  %v1143 = vsel %vm1141, %v1138, %v1112
  %v1144 = vsel %vm1141, %v1139, %v1114
  %v1145 = vsel %vm1141, %v1140, %v1116
  %vm1146 = vcmask 785408
  %v1147 = vsel %vm1146, %v1142, %v1126
  %v1148 = vsel %vm1146, %v1143, %v1128
  %v1149 = vsel %vm1146, %v1144, %v1130
  %v1150 = vsel %vm1146, %v1145, %v1132
  %1151 = vst [vmem:[%s1] sm:$0xff] %v1147
  %1152 = vst [vmem:[%s1 + $0x8] sm:$0xff] %v1148
  %1153 = vst [vmem:[%s1 + $0x10] sm:$0xff] %v1149
  %1154 = vst [vmem:[%s1 + $0x18] sm:$0xff] %v1150
  // Predicated region
  $region6: #{transformer_block.7} parent=0 // pred_check
    _
  $region7: #{transformer_block.7} parent=0 // pred_check_branch
    %1156 = sbr.rel (0) target = $region9
  $region8: #{transformer_block.7} parent=0 // pred_region
    _
  $region9: #{transformer_block.7} parent=0 // pred_fallthru
    _
  // Predicated region
  $region10: #{transformer_block.7} parent=0 // pred_check
    _
  $region11: #{transformer_block.7} parent=0 // pred_check_branch
    %1158 = sbr.rel (0) target = $region13
  $region12: #{transformer_block.7} parent=0 // pred_region
    _
  $region13: #{transformer_block.7} parent=0 // pred_fallthru
    _

// kernel: transformer_block.9
$region0: #{transformer_block.9}
  #allocation0 [shape = 'u32[]', space=smem, size = 0x4, offset = 0x4, fixed_abs, tag = 'smem constant byte address 0x4 - core index']
  #allocation1 [shape = 'u32[144,128]{1,0:T(1,128)}', space=vmem, size = 0x12000, scoped, tag = 'internal scratch']
  %s0 = inlined_call_operand.vmem [shape: f32[32,128], index: 0, kind: input, shape index: {}]
  %s1 = inlined_call_operand.vmem [shape: bf16[128,1960], index: 1, kind: input, shape index: {}]
  %s2 = inlined_call_operand.hbm [shape: f32[1,1960], index: 2, kind: input, shape index: {}]
  %s3 = inlined_call_operand.hbm [shape: f32[1,128], index: 3, kind: input, shape index: {}]
  %s4 = inlined_call_operand.hbm [shape: f32[1,128], index: 4, kind: input, shape index: {}]
  %s5 = inlined_call_operand.vmem [shape: f32[32,1960], index: 5, kind: output, shape index: {}]
  %s6 = sld [smem:[#allocation0]]
  $region42: #{transformer_block.9} parent=0
    _
  %s8 = ssub.s32 1, %s6
  %s9 = scalar_select 0, %s8, %s6
  $region1: #{transformer_block.9} parent=0
    #allocation2 [shape = 'u8[8192]{0}', space=vmem, size = 0x2000, scoped, tag = 'input window, operand 2, single buffered']
    #allocation3 [shape = 's32[1]{0}', space=sflag, size = 0x4, scoped, tag = 'scoped memory for transformer_block.9']
    #allocation4 [shape = 'u8[512]{0}', space=vmem, size = 0x400, scoped, tag = 'input window, operand 3, single buffered']
    #allocation5 [shape = 's32[1]{0}', space=sflag, size = 0x4, scoped, tag = 'scoped memory for transformer_block.9']
    #allocation6 [shape = 'u8[512]{0}', space=vmem, size = 0x400, scoped, tag = 'input window, operand 4, single buffered']
    %10 = vsyncpa [#allocation3], 0
    %11 = vsyncpa [#allocation5], 0
    // Predicated region
    $region2: #{transformer_block.9} parent=1 // pred_check
      _
    $region3: #{transformer_block.9} parent=1 // pred_check_branch
      %13 = sbr.rel (0) target = $region5
    $region4: #{transformer_block.9} parent=1 // pred_region
      _
    $region5: #{transformer_block.9} parent=1 // pred_fallthru
      _
    // Predicated region
    $region6: #{transformer_block.9} parent=1 // pred_check
      _
    $region7: #{transformer_block.9} parent=1 // pred_check_branch
      %15 = sbr.rel (0) target = $region9
    $region8: #{transformer_block.9} parent=1 // pred_region
      _
    $region9: #{transformer_block.9} parent=1 // pred_fallthru
      _
    // Predicated region
    $region10: #{transformer_block.9} parent=1 // pred_check
      _
    $region11: #{transformer_block.9} parent=1 // pred_check_branch
      %17 = sbr.rel (0) target = $region13
    $region12: #{transformer_block.9} parent=1 // pred_region
      %s19 = ssub.s32 256, 256
      %20 = vsyncadd [#allocation3], %s19
      %s22 = sshll.u32 [#allocation2], 4
      %s23 = int_to_ptr.vmem [resolvable:$true] %s22
      %25 = dma.hbm_to_vmem [thread:$0]  %s2, 256, %s23, [#allocation3]
    $region13: #{transformer_block.9} parent=1 // pred_fallthru
      _
    // Predicated region
    $region14: #{transformer_block.9} parent=1 // pred_check
      _
    $region15: #{transformer_block.9} parent=1 // pred_check_branch
      %27 = sbr.rel (0) target = $region17
    $region16: #{transformer_block.9} parent=1 // pred_region
      %s29 = ssub.s32 16, 16
      %30 = vsyncadd [#allocation5], %s29
      %s32 = sshll.u32 [#allocation4], 4
      %s33 = int_to_ptr.vmem [resolvable:$true] %s32
      %35 = dma.hbm_to_vmem [thread:$0]  %s3, 16, %s33, [#allocation5]
    $region17: #{transformer_block.9} parent=1 // pred_fallthru
      _
    // Predicated region
    $region18: #{transformer_block.9} parent=1 // pred_check
      _
    $region19: #{transformer_block.9} parent=1 // pred_check_branch
      %37 = sbr.rel (0) target = $region21
    $region20: #{transformer_block.9} parent=1 // pred_region
      %s39 = ssub.s32 16, 16
      %40 = vsyncadd [#allocation5], %s39
      %s42 = sshll.u32 [#allocation6], 4
      %s43 = int_to_ptr.vmem [resolvable:$true] %s42
      %45 = dma.hbm_to_vmem [thread:$0]  %s4, 16, %s43, [#allocation5]
    $region21: #{transformer_block.9} parent=1 // pred_fallthru
      _
    // Predicated region
    $region22: #{transformer_block.9} parent=1 // pred_check
      _
    $region23: #{transformer_block.9} parent=1 // pred_check_branch
      %47 = sbr.rel (0) target = $region25
    $region24: #{transformer_block.9} parent=1 // pred_region
      %48 = dma.done [#allocation3], 256
    $region25: #{transformer_block.9} parent=1 // pred_fallthru
      _
    // Predicated region
    $region26: #{transformer_block.9} parent=1 // pred_check
      _
    $region27: #{transformer_block.9} parent=1 // pred_check_branch
      %50 = sbr.rel (0) target = $region29
    $region28: #{transformer_block.9} parent=1 // pred_region
      %51 = dma.done [#allocation5], 16
    $region29: #{transformer_block.9} parent=1 // pred_fallthru
      _
    // Predicated region
    $region30: #{transformer_block.9} parent=1 // pred_check
      _
    $region31: #{transformer_block.9} parent=1 // pred_check_branch
      %53 = sbr.rel (0) target = $region33
    $region32: #{transformer_block.9} parent=1 // pred_region
      %54 = dma.done [#allocation5], 16
    $region33: #{transformer_block.9} parent=1 // pred_fallthru
      _
    %v56 = vld [vmem:[%s0] sm:$0xff]
    %v57 = vld [vmem:[%s0 + $0x8] sm:$0xff]
    %v58 = vld [vmem:[%s0 + $0x10] sm:$0xff]
    %v59 = vld [vmem:[%s0 + $0x18] sm:$0xff]
    %60 = vadd.xlane.f32.xlu0 %v56
    %v61 = vpop.xlane.xlu0 %60
    %62 = vadd.xlane.f32.xlu0 %v57
    %v63 = vpop.xlane.xlu0 %62
    %64 = vadd.xlane.f32.xlu0 %v58
    %v65 = vpop.xlane.xlu0 %64
    %66 = vadd.xlane.f32.xlu0 %v59
    %v67 = vpop.xlane.xlu0 %66
    %v68 = vrcp.pop 128.0
    %v69 = vmul.f32 %v61, %v68
    %v70 = vmul.f32 %v63, %v68
    %v71 = vmul.f32 %v65, %v68
    %v72 = vmul.f32 %v67, %v68
    %v73 = vsub.f32 %v56, %v69
    %v74 = vsub.f32 %v57, %v70
    %v75 = vsub.f32 %v58, %v71
    %v76 = vsub.f32 %v59, %v72
    %v77 = vmul.f32 %v73, %v73
    %v78 = vmul.f32 %v74, %v74
    %v79 = vmul.f32 %v75, %v75
    %v80 = vmul.f32 %v76, %v76
    %81 = vadd.xlane.f32.xlu0 %v77
    %v82 = vpop.xlane.xlu0 %81
    %83 = vadd.xlane.f32.xlu0 %v78
    %v84 = vpop.xlane.xlu0 %83
    %85 = vadd.xlane.f32.xlu0 %v79
    %v86 = vpop.xlane.xlu0 %85
    %87 = vadd.xlane.f32.xlu0 %v80
    %v88 = vpop.xlane.xlu0 %87
    %v89 = vmul.f32 %v82, %v68
    %v90 = vmul.f32 %v84, %v68
    %v91 = vmul.f32 %v86, %v68
    %v92 = vmul.f32 %v88, %v68
    %v93 = vadd.f32 %v89, 1e-05
    %v94 = vadd.f32 %v90, 1e-05
    %v95 = vadd.f32 %v91, 1e-05
    %v96 = vadd.f32 %v92, 1e-05
    %v97 = vrsqrt.pop %v93
    %v98 = vrsqrt.pop %v94
    %v99 = vrsqrt.pop %v95
    %v100 = vrsqrt.pop %v96
    %v101 = vmul.f32 %v73, %v97
    %v102 = vmul.f32 %v74, %v98
    %v103 = vmul.f32 %v75, %v99
    %v104 = vmul.f32 %v76, %v100
    %v105 = vld [vmem:[#allocation4] sm:$0x1]
    %v107 = vlaneseq
    %v108 = vshrl.u32 %v107, 7
    %v109 = vsub.s32 0, %v108
    %v110 = vrot.slane %v105, %v109
    %v112 = vmul.f32 %v101, %v110
    %v113 = vmul.f32 %v102, %v110
    %v114 = vmul.f32 %v103, %v110
    %v115 = vmul.f32 %v104, %v110
    %v116 = vld [vmem:[#allocation6] sm:$0x1]
    %v118 = vlaneseq
    %v119 = vshrl.u32 %v118, 7
    %v120 = vsub.s32 0, %v119
    %v121 = vrot.slane %v116, %v120
    %v123 = vadd.f32 %v112, %v121
    %v124 = vadd.f32 %v113, %v121
    %v125 = vadd.f32 %v114, %v121
    %v126 = vadd.f32 %v115, %v121
    %v127 = vld [vmem:[%s1] sm:$0xff]
    %v128 = vld [vmem:[%s1 + $0x8] sm:$0xff]
    %v129 = vld [vmem:[%s1 + $0x10] sm:$0xff]
    %v130 = vld [vmem:[%s1 + $0x18] sm:$0xff]
    %v131 = vld [vmem:[%s1 + $0x20] sm:$0xff]
    %v132 = vld [vmem:[%s1 + $0x28] sm:$0xff]
    %v133 = vld [vmem:[%s1 + $0x30] sm:$0xff]
    %v134 = vld [vmem:[%s1 + $0x38] sm:$0xff]
    %v135 = vld [vmem:[%s1 + $0x40] sm:$0xff]
    %v136 = vld [vmem:[%s1 + $0x48] sm:$0xff]
    %v137 = vld [vmem:[%s1 + $0x50] sm:$0xff]
    %v138 = vld [vmem:[%s1 + $0x58] sm:$0xff]
    %v139 = vld [vmem:[%s1 + $0x60] sm:$0xff]
    %v140 = vld [vmem:[%s1 + $0x68] sm:$0xff]
    %v141 = vld [vmem:[%s1 + $0x70] sm:$0xff]
    %v142 = vld [vmem:[%s1 + $0x78] sm:$0xff]
    %v143 = vld [vmem:[%s1 + $0x80] sm:$0xff]
    %v144 = vld [vmem:[%s1 + $0x88] sm:$0xff]
    %v145 = vld [vmem:[%s1 + $0x90] sm:$0xff]
    %v146 = vld [vmem:[%s1 + $0x98] sm:$0xff]
    %v147 = vld [vmem:[%s1 + $0xa0] sm:$0xff]
    %v148 = vld [vmem:[%s1 + $0xa8] sm:$0xff]
    %v149 = vld [vmem:[%s1 + $0xb0] sm:$0xff]
    %v150 = vld [vmem:[%s1 + $0xb8] sm:$0xff]
    %v151 = vld [vmem:[%s1 + $0xc0] sm:$0xff]
    %v152 = vld [vmem:[%s1 + $0xc8] sm:$0xff]
    %v153 = vld [vmem:[%s1 + $0xd0] sm:$0xff]
    %v154 = vld [vmem:[%s1 + $0xd8] sm:$0xff]
    %v155 = vld [vmem:[%s1 + $0xe0] sm:$0xff]
    %v156 = vld [vmem:[%s1 + $0xe8] sm:$0xff]
    %v157 = vld [vmem:[%s1 + $0xf0] sm:$0xff]
    %v158 = vld [vmem:[%s1 + $0xf8] sm:$0xff]
    %v159 = vld [vmem:[%s1 + $0x100] sm:$0xff]
    %v160 = vld [vmem:[%s1 + $0x108] sm:$0xff]
    %v161 = vld [vmem:[%s1 + $0x110] sm:$0xff]
    %v162 = vld [vmem:[%s1 + $0x118] sm:$0xff]
    %v163 = vld [vmem:[%s1 + $0x120] sm:$0xff]
    %v164 = vld [vmem:[%s1 + $0x128] sm:$0xff]
    %v165 = vld [vmem:[%s1 + $0x130] sm:$0xff]
    %v166 = vld [vmem:[%s1 + $0x138] sm:$0xff]
    %v167 = vld [vmem:[%s1 + $0x140] sm:$0xff]
    %v168 = vld [vmem:[%s1 + $0x148] sm:$0xff]
    %v169 = vld [vmem:[%s1 + $0x150] sm:$0xff]
    %v170 = vld [vmem:[%s1 + $0x158] sm:$0xff]
    %v171 = vld [vmem:[%s1 + $0x160] sm:$0xff]
    %v172 = vld [vmem:[%s1 + $0x168] sm:$0xff]
    %v173 = vld [vmem:[%s1 + $0x170] sm:$0xff]
    %v174 = vld [vmem:[%s1 + $0x178] sm:$0xff]
    %v175 = vld [vmem:[%s1 + $0x180] sm:$0xff]
    %v176 = vld [vmem:[%s1 + $0x188] sm:$0xff]
    %v177 = vld [vmem:[%s1 + $0x190] sm:$0xff]
    %v178 = vld [vmem:[%s1 + $0x198] sm:$0xff]
    %v179 = vld [vmem:[%s1 + $0x1a0] sm:$0xff]
    %v180 = vld [vmem:[%s1 + $0x1a8] sm:$0xff]
    %v181 = vld [vmem:[%s1 + $0x1b0] sm:$0xff]
    %v182 = vld [vmem:[%s1 + $0x1b8] sm:$0xff]
    %v183 = vld [vmem:[%s1 + $0x1c0] sm:$0xff]
    %v184 = vld [vmem:[%s1 + $0x1c8] sm:$0xff]
    %v185 = vld [vmem:[%s1 + $0x1d0] sm:$0xff]
    %v186 = vld [vmem:[%s1 + $0x1d8] sm:$0xff]
    %v187 = vld [vmem:[%s1 + $0x1e0] sm:$0xff]
    %v188 = vld [vmem:[%s1 + $0x1e8] sm:$0xff]
    %v189 = vld [vmem:[%s1 + $0x1f0] sm:$0xff]
    %v190 = vld [vmem:[%s1 + $0x1f8] sm:$0xff]
    %v191 = vld [vmem:[%s1 + $0x200] sm:$0xff]
    %v192 = vld [vmem:[%s1 + $0x208] sm:$0xff]
    %v193 = vld [vmem:[%s1 + $0x210] sm:$0xff]
    %v194 = vld [vmem:[%s1 + $0x218] sm:$0xff]
    %v195 = vld [vmem:[%s1 + $0x220] sm:$0xff]
    %v196 = vld [vmem:[%s1 + $0x228] sm:$0xff]
    %v197 = vld [vmem:[%s1 + $0x230] sm:$0xff]
    %v198 = vld [vmem:[%s1 + $0x238] sm:$0xff]
    %v199 = vld [vmem:[%s1 + $0x240] sm:$0xff]
    %v200 = vld [vmem:[%s1 + $0x248] sm:$0xff]
    %v201 = vld [vmem:[%s1 + $0x250] sm:$0xff]
    %v202 = vld [vmem:[%s1 + $0x258] sm:$0xff]
    %v203 = vld [vmem:[%s1 + $0x260] sm:$0xff]
    %v204 = vld [vmem:[%s1 + $0x268] sm:$0xff]
    %v205 = vld [vmem:[%s1 + $0x270] sm:$0xff]
    %v206 = vld [vmem:[%s1 + $0x278] sm:$0xff]
    %v207 = vld [vmem:[%s1 + $0x280] sm:$0xff]
    %v208 = vld [vmem:[%s1 + $0x288] sm:$0xff]
    %v209 = vld [vmem:[%s1 + $0x290] sm:$0xff]
    %v210 = vld [vmem:[%s1 + $0x298] sm:$0xff]
    %v211 = vld [vmem:[%s1 + $0x2a0] sm:$0xff]
    %v212 = vld [vmem:[%s1 + $0x2a8] sm:$0xff]
    %v213 = vld [vmem:[%s1 + $0x2b0] sm:$0xff]
    %v214 = vld [vmem:[%s1 + $0x2b8] sm:$0xff]
    %v215 = vld [vmem:[%s1 + $0x2c0] sm:$0xff]
    %v216 = vld [vmem:[%s1 + $0x2c8] sm:$0xff]
    %v217 = vld [vmem:[%s1 + $0x2d0] sm:$0xff]
    %v218 = vld [vmem:[%s1 + $0x2d8] sm:$0xff]
    %v219 = vld [vmem:[%s1 + $0x2e0] sm:$0xff]
    %v220 = vld [vmem:[%s1 + $0x2e8] sm:$0xff]
    %v221 = vld [vmem:[%s1 + $0x2f0] sm:$0xff]
    %v222 = vld [vmem:[%s1 + $0x2f8] sm:$0xff]
    %v223 = vld [vmem:[%s1 + $0x300] sm:$0xff]
    %v224 = vld [vmem:[%s1 + $0x308] sm:$0xff]
    %v225 = vld [vmem:[%s1 + $0x310] sm:$0xff]
    %v226 = vld [vmem:[%s1 + $0x318] sm:$0xff]
    %v227 = vld [vmem:[%s1 + $0x320] sm:$0xff]
    %v228 = vld [vmem:[%s1 + $0x328] sm:$0xff]
    %v229 = vld [vmem:[%s1 + $0x330] sm:$0xff]
    %v230 = vld [vmem:[%s1 + $0x338] sm:$0xff]
    %v231 = vld [vmem:[%s1 + $0x340] sm:$0xff]
    %v232 = vld [vmem:[%s1 + $0x348] sm:$0xff]
    %v233 = vld [vmem:[%s1 + $0x350] sm:$0xff]
    %v234 = vld [vmem:[%s1 + $0x358] sm:$0xff]
    %v235 = vld [vmem:[%s1 + $0x360] sm:$0xff]
    %v236 = vld [vmem:[%s1 + $0x368] sm:$0xff]
    %v237 = vld [vmem:[%s1 + $0x370] sm:$0xff]
    %v238 = vld [vmem:[%s1 + $0x378] sm:$0xff]
    %v239 = vld [vmem:[%s1 + $0x380] sm:$0xff]
    %v240 = vld [vmem:[%s1 + $0x388] sm:$0xff]
    %v241 = vld [vmem:[%s1 + $0x390] sm:$0xff]
    %v242 = vld [vmem:[%s1 + $0x398] sm:$0xff]
    %v243 = vld [vmem:[%s1 + $0x3a0] sm:$0xff]
    %v244 = vld [vmem:[%s1 + $0x3a8] sm:$0xff]
    %v245 = vld [vmem:[%s1 + $0x3b0] sm:$0xff]
    %v246 = vld [vmem:[%s1 + $0x3b8] sm:$0xff]
    %v247 = vld [vmem:[%s1 + $0x3c0] sm:$0xff]
    %v248 = vld [vmem:[%s1 + $0x3c8] sm:$0xff]
    %v249 = vld [vmem:[%s1 + $0x3d0] sm:$0xff]
    %v250 = vld [vmem:[%s1 + $0x3d8] sm:$0xff]
    %v251 = vld [vmem:[%s1 + $0x3e0] sm:$0xff]
    %v252 = vld [vmem:[%s1 + $0x3e8] sm:$0xff]
    %v253 = vld [vmem:[%s1 + $0x3f0] sm:$0xff]
    %v254 = vld [vmem:[%s1 + $0x3f8] sm:$0xff]
    %v255 = vpack.c.bf16 %v124, %v123
    %v256 = vpack.c.bf16 %v126, %v125
    %v257 = vld [vmem:[#allocation2] sm:$0xff]
    %v258 = vld [vmem:[#allocation2 + $0x8] sm:$0xff]
    %v261 = vlaneseq
    %v262 = vshrl.u32 %v261, 7
    %v263 = vsub.s32 0, %v262
    %v264 = vrot.slane %v257, %v263
    %v265 = vlaneseq
    %v266 = vshrl.u32 %v265, 7
    %v267 = vsub.s32 1, %v266
    %v268 = vrot.slane %v257, %v267
    %v269 = vlaneseq
    %v270 = vshrl.u32 %v269, 7
    %v271 = vsub.s32 2, %v270
    %v272 = vrot.slane %v257, %v271
    %v273 = vlaneseq
    %v274 = vshrl.u32 %v273, 7
    %v275 = vsub.s32 3, %v274
    %v276 = vrot.slane %v257, %v275
    %v277 = vlaneseq
    %v278 = vshrl.u32 %v277, 7
    %v279 = vsub.s32 4, %v278
    %v280 = vrot.slane %v257, %v279
    %v281 = vlaneseq
    %v282 = vshrl.u32 %v281, 7
    %v283 = vsub.s32 5, %v282
    %v284 = vrot.slane %v257, %v283
    %v285 = vlaneseq
    %v286 = vshrl.u32 %v285, 7
    %v287 = vsub.s32 6, %v286
    %v288 = vrot.slane %v257, %v287
    %v289 = vlaneseq
    %v290 = vshrl.u32 %v289, 7
    %v291 = vsub.s32 7, %v290
    %v292 = vrot.slane %v257, %v291
    %v293 = vlaneseq
    %v294 = vshrl.u32 %v293, 7
    %v295 = vsub.s32 0, %v294
    %v296 = vrot.slane %v258, %v295
    %v297 = vlaneseq
    %v298 = vshrl.u32 %v297, 7
    %v299 = vsub.s32 1, %v298
    %v300 = vrot.slane %v258, %v299
    %v301 = vlaneseq
    %v302 = vshrl.u32 %v301, 7
    %v303 = vsub.s32 2, %v302
    %v304 = vrot.slane %v258, %v303
    %v305 = vlaneseq
    %v306 = vshrl.u32 %v305, 7
    %v307 = vsub.s32 3, %v306
    %v308 = vrot.slane %v258, %v307
    %v309 = vlaneseq
    %v310 = vshrl.u32 %v309, 7
    %v311 = vsub.s32 4, %v310
    %v312 = vrot.slane %v258, %v311
    %v313 = vlaneseq
    %v314 = vshrl.u32 %v313, 7
    %v315 = vsub.s32 5, %v314
    %v316 = vrot.slane %v258, %v315
    %v317 = vlaneseq
    %v318 = vshrl.u32 %v317, 7
    %v319 = vsub.s32 6, %v318
    %v320 = vrot.slane %v258, %v319
    %v321 = vlaneseq
    %v322 = vshrl.u32 %v321, 7
    %v323 = vsub.s32 7, %v322
    %v324 = vrot.slane %v258, %v323
    %v469 = vunpack.c.l.b16 %v127
    %v470 = vunpack.c.h.b16 %v127
    %v471 = vunpack.c.l.b16 %v128
    %v472 = vunpack.c.h.b16 %v128
    %v473 = vunpack.c.l.b16 %v129
    %v474 = vunpack.c.h.b16 %v129
    %v475 = vunpack.c.l.b16 %v130
    %v476 = vunpack.c.h.b16 %v130
    %v477 = vunpack.c.l.b16 %v131
    %v478 = vunpack.c.h.b16 %v131
    %v479 = vunpack.c.l.b16 %v132
    %v480 = vunpack.c.h.b16 %v132
    %v481 = vunpack.c.l.b16 %v133
    %v482 = vunpack.c.h.b16 %v133
    %v483 = vunpack.c.l.b16 %v134
    %v484 = vunpack.c.h.b16 %v134
    %v485 = vunpack.c.l.b16 %v135
    %v486 = vunpack.c.h.b16 %v135
    %v487 = vunpack.c.l.b16 %v136
    %v488 = vunpack.c.h.b16 %v136
    %v489 = vunpack.c.l.b16 %v137
    %v490 = vunpack.c.h.b16 %v137
    %v491 = vunpack.c.l.b16 %v138
    %v492 = vunpack.c.h.b16 %v138
    %v493 = vunpack.c.l.b16 %v139
    %v494 = vunpack.c.h.b16 %v139
    %v495 = vunpack.c.l.b16 %v140
    %v496 = vunpack.c.h.b16 %v140
    %v497 = vunpack.c.l.b16 %v141
    %v498 = vunpack.c.h.b16 %v141
    %v499 = vunpack.c.l.b16 %v142
    %v500 = vunpack.c.h.b16 %v142
    %v501 = vunpack.c.l.b16 %v143
    %v502 = vunpack.c.h.b16 %v143
    %v503 = vunpack.c.l.b16 %v144
    %v504 = vunpack.c.h.b16 %v144
    %v505 = vunpack.c.l.b16 %v145
    %v506 = vunpack.c.h.b16 %v145
    %v507 = vunpack.c.l.b16 %v146
    %v508 = vunpack.c.h.b16 %v146
    %v509 = vunpack.c.l.b16 %v147
    %v510 = vunpack.c.h.b16 %v147
    %v511 = vunpack.c.l.b16 %v148
    %v512 = vunpack.c.h.b16 %v148
    %v513 = vunpack.c.l.b16 %v149
    %v514 = vunpack.c.h.b16 %v149
    %v515 = vunpack.c.l.b16 %v150
    %v516 = vunpack.c.h.b16 %v150
    %v517 = vunpack.c.l.b16 %v151
    %v518 = vunpack.c.h.b16 %v151
    %v519 = vunpack.c.l.b16 %v152
    %v520 = vunpack.c.h.b16 %v152
    %v521 = vunpack.c.l.b16 %v153
    %v522 = vunpack.c.h.b16 %v153
    %v523 = vunpack.c.l.b16 %v154
    %v524 = vunpack.c.h.b16 %v154
    %v525 = vunpack.c.l.b16 %v155
    %v526 = vunpack.c.h.b16 %v155
    %v527 = vunpack.c.l.b16 %v156
    %v528 = vunpack.c.h.b16 %v156
    %v529 = vunpack.c.l.b16 %v157
    %v530 = vunpack.c.h.b16 %v157
    %v531 = vunpack.c.l.b16 %v158
    %v532 = vunpack.c.h.b16 %v158
    %v533 = vunpack.c.l.b16 %v159
    %v534 = vunpack.c.h.b16 %v159
    %v535 = vunpack.c.l.b16 %v160
    %v536 = vunpack.c.h.b16 %v160
    %v537 = vunpack.c.l.b16 %v161
    %v538 = vunpack.c.h.b16 %v161
    %v539 = vunpack.c.l.b16 %v162
    %v540 = vunpack.c.h.b16 %v162
    %v541 = vunpack.c.l.b16 %v163
    %v542 = vunpack.c.h.b16 %v163
    %v543 = vunpack.c.l.b16 %v164
    %v544 = vunpack.c.h.b16 %v164
    %v545 = vunpack.c.l.b16 %v165
    %v546 = vunpack.c.h.b16 %v165
    %v547 = vunpack.c.l.b16 %v166
    %v548 = vunpack.c.h.b16 %v166
    %v549 = vunpack.c.l.b16 %v167
    %v550 = vunpack.c.h.b16 %v167
    %v551 = vunpack.c.l.b16 %v168
    %v552 = vunpack.c.h.b16 %v168
    %v553 = vunpack.c.l.b16 %v169
    %v554 = vunpack.c.h.b16 %v169
    %v555 = vunpack.c.l.b16 %v170
    %v556 = vunpack.c.h.b16 %v170
    %v557 = vunpack.c.l.b16 %v171
    %v558 = vunpack.c.h.b16 %v171
    %v559 = vunpack.c.l.b16 %v172
    %v560 = vunpack.c.h.b16 %v172
    %v561 = vunpack.c.l.b16 %v173
    %v562 = vunpack.c.h.b16 %v173
    %v563 = vunpack.c.l.b16 %v174
    %v564 = vunpack.c.h.b16 %v174
    %v565 = vunpack.c.l.b16 %v175
    %v566 = vunpack.c.h.b16 %v175
    %v567 = vunpack.c.l.b16 %v176
    %v568 = vunpack.c.h.b16 %v176
    %v569 = vunpack.c.l.b16 %v177
    %v570 = vunpack.c.h.b16 %v177
    %v571 = vunpack.c.l.b16 %v178
    %v572 = vunpack.c.h.b16 %v178
    %v573 = vunpack.c.l.b16 %v179
    %v574 = vunpack.c.h.b16 %v179
    %v575 = vunpack.c.l.b16 %v180
    %v576 = vunpack.c.h.b16 %v180
    %v577 = vunpack.c.l.b16 %v181
    %v578 = vunpack.c.h.b16 %v181
    %v579 = vunpack.c.l.b16 %v182
    %v580 = vunpack.c.h.b16 %v182
    %v581 = vunpack.c.l.b16 %v183
    %v582 = vunpack.c.h.b16 %v183
    %v583 = vunpack.c.l.b16 %v184
    %v584 = vunpack.c.h.b16 %v184
    %v585 = vunpack.c.l.b16 %v185
    %v586 = vunpack.c.h.b16 %v185
    %v587 = vunpack.c.l.b16 %v186
    %v588 = vunpack.c.h.b16 %v186
    %v589 = vunpack.c.l.b16 %v187
    %v590 = vunpack.c.h.b16 %v187
    %v591 = vunpack.c.l.b16 %v188
    %v592 = vunpack.c.h.b16 %v188
    %v593 = vunpack.c.l.b16 %v189
    %v594 = vunpack.c.h.b16 %v189
    %v595 = vunpack.c.l.b16 %v190
    %v596 = vunpack.c.h.b16 %v190
    %v597 = vunpack.c.l.b16 %v191
    %v598 = vunpack.c.h.b16 %v191
    %v599 = vunpack.c.l.b16 %v192
    %v600 = vunpack.c.h.b16 %v192
    %v601 = vunpack.c.l.b16 %v193
    %v602 = vunpack.c.h.b16 %v193
    %v603 = vunpack.c.l.b16 %v194
    %v604 = vunpack.c.h.b16 %v194
    %v605 = vunpack.c.l.b16 %v195
    %v606 = vunpack.c.h.b16 %v195
    %v607 = vunpack.c.l.b16 %v196
    %v608 = vunpack.c.h.b16 %v196
    %v609 = vunpack.c.l.b16 %v197
    %v610 = vunpack.c.h.b16 %v197
    %v611 = vunpack.c.l.b16 %v198
    %v612 = vunpack.c.h.b16 %v198
    %v613 = vunpack.c.l.b16 %v199
    %v614 = vunpack.c.h.b16 %v199
    %v615 = vunpack.c.l.b16 %v200
    %v616 = vunpack.c.h.b16 %v200
    %v617 = vunpack.c.l.b16 %v201
    %v618 = vunpack.c.h.b16 %v201
    %v619 = vunpack.c.l.b16 %v202
    %v620 = vunpack.c.h.b16 %v202
    %v621 = vunpack.c.l.b16 %v203
    %v622 = vunpack.c.h.b16 %v203
    %v623 = vunpack.c.l.b16 %v204
    %v624 = vunpack.c.h.b16 %v204
    %v625 = vunpack.c.l.b16 %v205
    %v626 = vunpack.c.h.b16 %v205
    %v627 = vunpack.c.l.b16 %v206
    %v628 = vunpack.c.h.b16 %v206
    %v629 = vunpack.c.l.b16 %v207
    %v630 = vunpack.c.h.b16 %v207
    %v631 = vunpack.c.l.b16 %v208
    %v632 = vunpack.c.h.b16 %v208
    %v633 = vunpack.c.l.b16 %v209
    %v634 = vunpack.c.h.b16 %v209
    %v635 = vunpack.c.l.b16 %v210
    %v636 = vunpack.c.h.b16 %v210
    %v637 = vunpack.c.l.b16 %v211
    %v638 = vunpack.c.h.b16 %v211
    %v639 = vunpack.c.l.b16 %v212
    %v640 = vunpack.c.h.b16 %v212
    %v641 = vunpack.c.l.b16 %v213
    %v642 = vunpack.c.h.b16 %v213
    %v643 = vunpack.c.l.b16 %v214
    %v644 = vunpack.c.h.b16 %v214
    %v645 = vunpack.c.l.b16 %v215
    %v646 = vunpack.c.h.b16 %v215
    %v647 = vunpack.c.l.b16 %v216
    %v648 = vunpack.c.h.b16 %v216
    %v649 = vunpack.c.l.b16 %v217
    %v650 = vunpack.c.h.b16 %v217
    %v651 = vunpack.c.l.b16 %v218
    %v652 = vunpack.c.h.b16 %v218
    %v653 = vunpack.c.l.b16 %v219
    %v654 = vunpack.c.h.b16 %v219
    %v655 = vunpack.c.l.b16 %v220
    %v656 = vunpack.c.h.b16 %v220
    %v657 = vunpack.c.l.b16 %v221
    %v658 = vunpack.c.h.b16 %v221
    %v659 = vunpack.c.l.b16 %v222
    %v660 = vunpack.c.h.b16 %v222
    %v661 = vunpack.c.l.b16 %v223
    %v662 = vunpack.c.h.b16 %v223
    %v663 = vunpack.c.l.b16 %v224
    %v664 = vunpack.c.h.b16 %v224
    %v665 = vunpack.c.l.b16 %v225
    %v666 = vunpack.c.h.b16 %v225
    %v667 = vunpack.c.l.b16 %v226
    %v668 = vunpack.c.h.b16 %v226
    %v669 = vunpack.c.l.b16 %v227
    %v670 = vunpack.c.h.b16 %v227
    %v671 = vunpack.c.l.b16 %v228
    %v672 = vunpack.c.h.b16 %v228
    %v673 = vunpack.c.l.b16 %v229
    %v674 = vunpack.c.h.b16 %v229
    %v675 = vunpack.c.l.b16 %v230
    %v676 = vunpack.c.h.b16 %v230
    %v677 = vunpack.c.l.b16 %v231
    %v678 = vunpack.c.h.b16 %v231
    %v679 = vunpack.c.l.b16 %v232
    %v680 = vunpack.c.h.b16 %v232
    %v681 = vunpack.c.l.b16 %v233
    %v682 = vunpack.c.h.b16 %v233
    %v683 = vunpack.c.l.b16 %v234
    %v684 = vunpack.c.h.b16 %v234
    %v685 = vunpack.c.l.b16 %v235
    %v686 = vunpack.c.h.b16 %v235
    %v687 = vunpack.c.l.b16 %v236
    %v688 = vunpack.c.h.b16 %v236
    %v689 = vunpack.c.l.b16 %v237
    %v690 = vunpack.c.h.b16 %v237
    %v691 = vunpack.c.l.b16 %v238
    %v692 = vunpack.c.h.b16 %v238
    %v693 = vunpack.c.l.b16 %v239
    %v694 = vunpack.c.h.b16 %v239
    %v695 = vunpack.c.l.b16 %v240
    %v696 = vunpack.c.h.b16 %v240
    %v697 = vunpack.c.l.b16 %v241
    %v698 = vunpack.c.h.b16 %v241
    %v699 = vunpack.c.l.b16 %v242
    %v700 = vunpack.c.h.b16 %v242
    %v701 = vunpack.c.l.b16 %v243
    %v702 = vunpack.c.h.b16 %v243
    %v703 = vunpack.c.l.b16 %v244
    %v704 = vunpack.c.h.b16 %v244
    %v705 = vunpack.c.l.b16 %v245
    %v706 = vunpack.c.h.b16 %v245
    %v707 = vunpack.c.l.b16 %v246
    %v708 = vunpack.c.h.b16 %v246
    %v709 = vunpack.c.l.b16 %v247
    %v710 = vunpack.c.h.b16 %v247
    %v711 = vunpack.c.l.b16 %v248
    %v712 = vunpack.c.h.b16 %v248
    %v713 = vunpack.c.l.b16 %v249
    %v714 = vunpack.c.h.b16 %v249
    %v715 = vunpack.c.l.b16 %v250
    %v716 = vunpack.c.h.b16 %v250
    %v717 = vunpack.c.l.b16 %v251
    %v718 = vunpack.c.h.b16 %v251
    %v719 = vunpack.c.l.b16 %v252
    %v720 = vunpack.c.h.b16 %v252
    %v721 = vunpack.c.l.b16 %v253
    %v722 = vunpack.c.h.b16 %v253
    %v723 = vunpack.c.l.b16 %v254
    %v724 = vunpack.c.h.b16 %v254
    %v725 = vpack.c.b16 %v485, %v469
    %v726 = vpack.c.b16 %v486, %v470
    %v727 = vpack.c.b16 %v487, %v471
    %v728 = vpack.c.b16 %v488, %v472
    %v729 = vpack.c.b16 %v489, %v473
    %v730 = vpack.c.b16 %v490, %v474
    %v731 = vpack.c.b16 %v491, %v475
    %v732 = vpack.c.b16 %v492, %v476
    %v733 = vpack.c.b16 %v493, %v477
    %v734 = vpack.c.b16 %v494, %v478
    %v735 = vpack.c.b16 %v495, %v479
    %v736 = vpack.c.b16 %v496, %v480
    %v737 = vpack.c.b16 %v497, %v481
    %v738 = vpack.c.b16 %v498, %v482
    %v739 = vpack.c.b16 %v499, %v483
    %v740 = vpack.c.b16 %v500, %v484
    %v741 = vpack.c.b16 %v517, %v501
    %v742 = vpack.c.b16 %v518, %v502
    %v743 = vpack.c.b16 %v519, %v503
    %v744 = vpack.c.b16 %v520, %v504
    %v745 = vpack.c.b16 %v521, %v505
    %v746 = vpack.c.b16 %v522, %v506
    %v747 = vpack.c.b16 %v523, %v507
    %v748 = vpack.c.b16 %v524, %v508
    %v749 = vpack.c.b16 %v525, %v509
    %v750 = vpack.c.b16 %v526, %v510
    %v751 = vpack.c.b16 %v527, %v511
    %v752 = vpack.c.b16 %v528, %v512
    %v753 = vpack.c.b16 %v529, %v513
    %v754 = vpack.c.b16 %v530, %v514
    %v755 = vpack.c.b16 %v531, %v515
    %v756 = vpack.c.b16 %v532, %v516
    %v757 = vpack.c.b16 %v549, %v533
    %v758 = vpack.c.b16 %v550, %v534
    %v759 = vpack.c.b16 %v551, %v535
    %v760 = vpack.c.b16 %v552, %v536
    %v761 = vpack.c.b16 %v553, %v537
    %v762 = vpack.c.b16 %v554, %v538
    %v763 = vpack.c.b16 %v555, %v539
    %v764 = vpack.c.b16 %v556, %v540
    %v765 = vpack.c.b16 %v557, %v541
    %v766 = vpack.c.b16 %v558, %v542
    %v767 = vpack.c.b16 %v559, %v543
    %v768 = vpack.c.b16 %v560, %v544
    %v769 = vpack.c.b16 %v561, %v545
    %v770 = vpack.c.b16 %v562, %v546
    %v771 = vpack.c.b16 %v563, %v547
    %v772 = vpack.c.b16 %v564, %v548
    %v773 = vpack.c.b16 %v581, %v565
    %v774 = vpack.c.b16 %v582, %v566
    %v775 = vpack.c.b16 %v583, %v567
    %v776 = vpack.c.b16 %v584, %v568
    %v777 = vpack.c.b16 %v585, %v569
    %v778 = vpack.c.b16 %v586, %v570
    %v779 = vpack.c.b16 %v587, %v571
    %v780 = vpack.c.b16 %v588, %v572
    %v781 = vpack.c.b16 %v589, %v573
    %v782 = vpack.c.b16 %v590, %v574
    %v783 = vpack.c.b16 %v591, %v575
    %v784 = vpack.c.b16 %v592, %v576
    %v785 = vpack.c.b16 %v593, %v577
    %v786 = vpack.c.b16 %v594, %v578
    %v787 = vpack.c.b16 %v595, %v579
    %v788 = vpack.c.b16 %v596, %v580
    %v789 = vpack.c.b16 %v613, %v597
    %v790 = vpack.c.b16 %v614, %v598
    %v791 = vpack.c.b16 %v615, %v599
    %v792 = vpack.c.b16 %v616, %v600
    %v793 = vpack.c.b16 %v617, %v601
    %v794 = vpack.c.b16 %v618, %v602
    %v795 = vpack.c.b16 %v619, %v603
    %v796 = vpack.c.b16 %v620, %v604
    %v797 = vpack.c.b16 %v621, %v605
    %v798 = vpack.c.b16 %v622, %v606
    %v799 = vpack.c.b16 %v623, %v607
    %v800 = vpack.c.b16 %v624, %v608
    %v801 = vpack.c.b16 %v625, %v609
    %v802 = vpack.c.b16 %v626, %v610
    %v803 = vpack.c.b16 %v627, %v611
    %v804 = vpack.c.b16 %v628, %v612
    %v805 = vpack.c.b16 %v645, %v629
    %v806 = vpack.c.b16 %v646, %v630
    %v807 = vpack.c.b16 %v647, %v631
    %v808 = vpack.c.b16 %v648, %v632
    %v809 = vpack.c.b16 %v649, %v633
    %v810 = vpack.c.b16 %v650, %v634
    %v811 = vpack.c.b16 %v651, %v635
    %v812 = vpack.c.b16 %v652, %v636
    %v813 = vpack.c.b16 %v653, %v637
    %v814 = vpack.c.b16 %v654, %v638
    %v815 = vpack.c.b16 %v655, %v639
    %v816 = vpack.c.b16 %v656, %v640
    %v817 = vpack.c.b16 %v657, %v641
    %v818 = vpack.c.b16 %v658, %v642
    %v819 = vpack.c.b16 %v659, %v643
    %v820 = vpack.c.b16 %v660, %v644
    %v821 = vpack.c.b16 %v677, %v661
    %v822 = vpack.c.b16 %v678, %v662
    %v823 = vpack.c.b16 %v679, %v663
    %v824 = vpack.c.b16 %v680, %v664
    %v825 = vpack.c.b16 %v681, %v665
    %v826 = vpack.c.b16 %v682, %v666
    %v827 = vpack.c.b16 %v683, %v667
    %v828 = vpack.c.b16 %v684, %v668
    %v829 = vpack.c.b16 %v685, %v669
    %v830 = vpack.c.b16 %v686, %v670
    %v831 = vpack.c.b16 %v687, %v671
    %v832 = vpack.c.b16 %v688, %v672
    %v833 = vpack.c.b16 %v689, %v673
    %v834 = vpack.c.b16 %v690, %v674
    %v835 = vpack.c.b16 %v691, %v675
    %v836 = vpack.c.b16 %v692, %v676
    %v837 = vpack.c.b16 %v709, %v693
    %v838 = vpack.c.b16 %v710, %v694
    %v839 = vpack.c.b16 %v711, %v695
    %v840 = vpack.c.b16 %v712, %v696
    %v841 = vpack.c.b16 %v713, %v697
    %v842 = vpack.c.b16 %v714, %v698
    %v843 = vpack.c.b16 %v715, %v699
    %v844 = vpack.c.b16 %v716, %v700
    %v845 = vpack.c.b16 %v717, %v701
    %v846 = vpack.c.b16 %v718, %v702
    %v847 = vpack.c.b16 %v719, %v703
    %v848 = vpack.c.b16 %v720, %v704
    %v849 = vpack.c.b16 %v721, %v705
    %v850 = vpack.c.b16 %v722, %v706
    %v851 = vpack.c.b16 %v723, %v707
    %v852 = vpack.c.b16 %v724, %v708
    %981 = vmatprep.subr.bf16.mxu0 %v726
    %982 = vmatpush1.bf16.msra.mxu0 %v725
    %983 = vmatprep.subr.bf16.mxu0 %v742
    %984 = vmatpush1.bf16.msra.mxu0 %v741
    %985 = vmatprep.subr.bf16.mxu0 %v758
    %986 = vmatpush1.bf16.msra.mxu0 %v757
    %987 = vmatprep.subr.bf16.mxu0 %v774
    %988 = vmatpush1.bf16.msra.mxu0 %v773
    %989 = vmatprep.subr.bf16.mxu0 %v790
    %990 = vmatpush1.bf16.msra.mxu0 %v789
    %991 = vmatprep.subr.bf16.mxu0 %v806
    %992 = vmatpush1.bf16.msra.mxu0 %v805
    %993 = vmatprep.subr.bf16.mxu0 %v822
    %994 = vmatpush1.bf16.msra.mxu0 %v821
    %995 = vmatprep.subr.bf16.mxu0 %v838
    %996 = vmatpush1.bf16.msra.mxu0 %v837
    %997 = vmatprep.subr.bf16.mxu0 0
    %998 = vmatpush1.bf16.msra.mxu0 0
    %999 = vmatprep.subr.bf16.mxu0 0
    %1000 = vmatpush1.bf16.msra.mxu0 0
    %1001 = vmatprep.subr.bf16.mxu0 0
    %1002 = vmatpush1.bf16.msra.mxu0 0
    %1003 = vmatprep.subr.bf16.mxu0 0
    %1004 = vmatpush1.bf16.msra.mxu0 0
    %1005 = vmatprep.subr.bf16.mxu0 0
    %1006 = vmatpush1.bf16.msra.mxu0 0
    %1007 = vmatprep.subr.bf16.mxu0 0
    %1008 = vmatpush1.bf16.msra.mxu0 0
    %1009 = vmatprep.subr.bf16.mxu0 0
    %1010 = vmatpush1.bf16.msra.mxu0 0
    %1011 = vmatprep.subr.bf16.mxu0 0
    %1012 = vmatpush1.bf16.msra.mxu0 0
    %1013 = vmatprep.mubr.bf16.mxu0 0
    %1014 = vmatmul.mubr.bf16.gmra.mrb[0].mxu0 %v255
    %v1015 = vpop.f32.mrb[0].mxu0
    %v1016 = vadd.f32 %v264, %v1015
    %v1017 = vpop.f32.mrb[0].mxu0
    %v1018 = vadd.f32 %v268, %v1017
    %v1019 = vpop.f32.mrb[0].mxu0
    %v1020 = vadd.f32 %v264, %v1019
    %v1021 = vpop.f32.mrb[0].mxu0
    %v1022 = vadd.f32 %v268, %v1021
    %1023 = vmatprep.mubr.bf16.mxu0 0
    %1024 = vmatmul.mubr.bf16.gmra.mrb[0].mxu0 %v256
    %v1025 = vpop.f32.mrb[0].mxu0
    %v1026 = vadd.f32 %v264, %v1025
    %v1027 = vpop.f32.mrb[0].mxu0
    %v1028 = vadd.f32 %v268, %v1027
    %v1029 = vpop.f32.mrb[0].mxu0
    %v1030 = vadd.f32 %v264, %v1029
    %v1031 = vpop.f32.mrb[0].mxu0
    %v1032 = vadd.f32 %v268, %v1031
    %1033 = vdwg.mxu0
    %1034 = vmatprep.subr.bf16.mxu0 %v728
    %1035 = vmatpush1.bf16.msra.mxu0 %v727
    %1036 = vmatprep.subr.bf16.mxu0 %v744
    %1037 = vmatpush1.bf16.msra.mxu0 %v743
    %1038 = vmatprep.subr.bf16.mxu0 %v760
    %1039 = vmatpush1.bf16.msra.mxu0 %v759
    %1040 = vmatprep.subr.bf16.mxu0 %v776
    %1041 = vmatpush1.bf16.msra.mxu0 %v775
    %1042 = vmatprep.subr.bf16.mxu0 %v792
    %1043 = vmatpush1.bf16.msra.mxu0 %v791
    %1044 = vmatprep.subr.bf16.mxu0 %v808
    %1045 = vmatpush1.bf16.msra.mxu0 %v807
    %1046 = vmatprep.subr.bf16.mxu0 %v824
    %1047 = vmatpush1.bf16.msra.mxu0 %v823
    %1048 = vmatprep.subr.bf16.mxu0 %v840
    %1049 = vmatpush1.bf16.msra.mxu0 %v839
    %1050 = vmatprep.subr.bf16.mxu0 0
    %1051 = vmatpush1.bf16.msra.mxu0 0
    %1052 = vmatprep.subr.bf16.mxu0 0
    %1053 = vmatpush1.bf16.msra.mxu0 0
    %1054 = vmatprep.subr.bf16.mxu0 0
    %1055 = vmatpush1.bf16.msra.mxu0 0
    %1056 = vmatprep.subr.bf16.mxu0 0
    %1057 = vmatpush1.bf16.msra.mxu0 0
    %1058 = vmatprep.subr.bf16.mxu0 0
    %1059 = vmatpush1.bf16.msra.mxu0 0
    %1060 = vmatprep.subr.bf16.mxu0 0
    %1061 = vmatpush1.bf16.msra.mxu0 0
    %1062 = vmatprep.subr.bf16.mxu0 0
    %1063 = vmatpush1.bf16.msra.mxu0 0
    %1064 = vmatprep.subr.bf16.mxu0 0
    %1065 = vmatpush1.bf16.msra.mxu0 0
    %1066 = vmatprep.mubr.bf16.mxu0 0
    %1067 = vmatmul.mubr.bf16.gmra.mrb[0].mxu0 %v255
    %v1068 = vpop.f32.mrb[0].mxu0
    %v1069 = vadd.f32 %v272, %v1068
    %v1070 = vpop.f32.mrb[0].mxu0
    %v1071 = vadd.f32 %v276, %v1070
    %v1072 = vpop.f32.mrb[0].mxu0
    %v1073 = vadd.f32 %v272, %v1072
    %v1074 = vpop.f32.mrb[0].mxu0
    %v1075 = vadd.f32 %v276, %v1074
    %1076 = vmatprep.mubr.bf16.mxu0 0
    %1077 = vmatmul.mubr.bf16.gmra.mrb[0].mxu0 %v256
    %v1078 = vpop.f32.mrb[0].mxu0
    %v1079 = vadd.f32 %v272, %v1078
    %v1080 = vpop.f32.mrb[0].mxu0
    %v1081 = vadd.f32 %v276, %v1080
    %v1082 = vpop.f32.mrb[0].mxu0
    %v1083 = vadd.f32 %v272, %v1082
    %v1084 = vpop.f32.mrb[0].mxu0
    %v1085 = vadd.f32 %v276, %v1084
    %1086 = vdwg.mxu0
    %1087 = vmatprep.subr.bf16.mxu0 %v730
    %1088 = vmatpush1.bf16.msra.mxu0 %v729
    %1089 = vmatprep.subr.bf16.mxu0 %v746
    %1090 = vmatpush1.bf16.msra.mxu0 %v745
    %1091 = vmatprep.subr.bf16.mxu0 %v762
    %1092 = vmatpush1.bf16.msra.mxu0 %v761
    %1093 = vmatprep.subr.bf16.mxu0 %v778
    %1094 = vmatpush1.bf16.msra.mxu0 %v777
    %1095 = vmatprep.subr.bf16.mxu0 %v794
    %1096 = vmatpush1.bf16.msra.mxu0 %v793
    %1097 = vmatprep.subr.bf16.mxu0 %v810
    %1098 = vmatpush1.bf16.msra.mxu0 %v809
    %1099 = vmatprep.subr.bf16.mxu0 %v826
    %1100 = vmatpush1.bf16.msra.mxu0 %v825
    %1101 = vmatprep.subr.bf16.mxu0 %v842
    %1102 = vmatpush1.bf16.msra.mxu0 %v841
    %1103 = vmatprep.subr.bf16.mxu0 0
    %1104 = vmatpush1.bf16.msra.mxu0 0
    %1105 = vmatprep.subr.bf16.mxu0 0
    %1106 = vmatpush1.bf16.msra.mxu0 0
    %1107 = vmatprep.subr.bf16.mxu0 0
    %1108 = vmatpush1.bf16.msra.mxu0 0
    %1109 = vmatprep.subr.bf16.mxu0 0
    %1110 = vmatpush1.bf16.msra.mxu0 0
    %1111 = vmatprep.subr.bf16.mxu0 0
    %1112 = vmatpush1.bf16.msra.mxu0 0
    %1113 = vmatprep.subr.bf16.mxu0 0
    %1114 = vmatpush1.bf16.msra.mxu0 0
    %1115 = vmatprep.subr.bf16.mxu0 0
    %1116 = vmatpush1.bf16.msra.mxu0 0
    %1117 = vmatprep.subr.bf16.mxu0 0
    %1118 = vmatpush1.bf16.msra.mxu0 0
    %1119 = vmatprep.mubr.bf16.mxu0 0
    %1120 = vmatmul.mubr.bf16.gmra.mrb[0].mxu0 %v255
    %v1121 = vpop.f32.mrb[0].mxu0
    %v1122 = vadd.f32 %v280, %v1121
    %v1123 = vpop.f32.mrb[0].mxu0
    %v1124 = vadd.f32 %v284, %v1123
    %v1125 = vpop.f32.mrb[0].mxu0
    %v1126 = vadd.f32 %v280, %v1125
    %v1127 = vpop.f32.mrb[0].mxu0
    %v1128 = vadd.f32 %v284, %v1127
    %1129 = vmatprep.mubr.bf16.mxu0 0
    %1130 = vmatmul.mubr.bf16.gmra.mrb[0].mxu0 %v256
    %v1131 = vpop.f32.mrb[0].mxu0
    %v1132 = vadd.f32 %v280, %v1131
    %v1133 = vpop.f32.mrb[0].mxu0
    %v1134 = vadd.f32 %v284, %v1133
    %v1135 = vpop.f32.mrb[0].mxu0
    %v1136 = vadd.f32 %v280, %v1135
    %v1137 = vpop.f32.mrb[0].mxu0
    %v1138 = vadd.f32 %v284, %v1137
    %1139 = vdwg.mxu0
    %1140 = vmatprep.subr.bf16.mxu0 %v732
    %1141 = vmatpush1.bf16.msra.mxu0 %v731
    %1142 = vmatprep.subr.bf16.mxu0 %v748
    %1143 = vmatpush1.bf16.msra.mxu0 %v747
    %1144 = vmatprep.subr.bf16.mxu0 %v764
    %1145 = vmatpush1.bf16.msra.mxu0 %v763
    %1146 = vmatprep.subr.bf16.mxu0 %v780
    %1147 = vmatpush1.bf16.msra.mxu0 %v779
    %1148 = vmatprep.subr.bf16.mxu0 %v796
    %1149 = vmatpush1.bf16.msra.mxu0 %v795
    %1150 = vmatprep.subr.bf16.mxu0 %v812
    %1151 = vmatpush1.bf16.msra.mxu0 %v811
    %1152 = vmatprep.subr.bf16.mxu0 %v828
    %1153 = vmatpush1.bf16.msra.mxu0 %v827
    %1154 = vmatprep.subr.bf16.mxu0 %v844
    %1155 = vmatpush1.bf16.msra.mxu0 %v843
    %1156 = vmatprep.subr.bf16.mxu0 0
    %1157 = vmatpush1.bf16.msra.mxu0 0
    %1158 = vmatprep.subr.bf16.mxu0 0
    %1159 = vmatpush1.bf16.msra.mxu0 0
    %1160 = vmatprep.subr.bf16.mxu0 0
    %1161 = vmatpush1.bf16.msra.mxu0 0
    %1162 = vmatprep.subr.bf16.mxu0 0
    %1163 = vmatpush1.bf16.msra.mxu0 0
    %1164 = vmatprep.subr.bf16.mxu0 0
    %1165 = vmatpush1.bf16.msra.mxu0 0
    %1166 = vmatprep.subr.bf16.mxu0 0
    %1167 = vmatpush1.bf16.msra.mxu0 0
    %1168 = vmatprep.subr.bf16.mxu0 0
    %1169 = vmatpush1.bf16.msra.mxu0 0
    %1170 = vmatprep.subr.bf16.mxu0 0
    %1171 = vmatpush1.bf16.msra.mxu0 0
    %1172 = vmatprep.mubr.bf16.mxu0 0
    %1173 = vmatmul.mubr.bf16.gmra.mrb[0].mxu0 %v255
    %v1174 = vpop.f32.mrb[0].mxu0
    %v1175 = vadd.f32 %v288, %v1174
    %v1176 = vpop.f32.mrb[0].mxu0
    %v1177 = vadd.f32 %v292, %v1176
    %v1178 = vpop.f32.mrb[0].mxu0
    %v1179 = vadd.f32 %v288, %v1178
    %v1180 = vpop.f32.mrb[0].mxu0
    %v1181 = vadd.f32 %v292, %v1180
    %1182 = vmatprep.mubr.bf16.mxu0 0
    %1183 = vmatmul.mubr.bf16.gmra.mrb[0].mxu0 %v256
    %v1184 = vpop.f32.mrb[0].mxu0
    %v1185 = vadd.f32 %v288, %v1184
    %v1186 = vpop.f32.mrb[0].mxu0
    %v1187 = vadd.f32 %v292, %v1186
    %v1188 = vpop.f32.mrb[0].mxu0
    %v1189 = vadd.f32 %v288, %v1188
    %v1190 = vpop.f32.mrb[0].mxu0
    %v1191 = vadd.f32 %v292, %v1190
    %1192 = vdwg.mxu0
    %1193 = vmatprep.subr.bf16.mxu0 %v734
    %1194 = vmatpush1.bf16.msra.mxu0 %v733
    %1195 = vmatprep.subr.bf16.mxu0 %v750
    %1196 = vmatpush1.bf16.msra.mxu0 %v749
    %1197 = vmatprep.subr.bf16.mxu0 %v766
    %1198 = vmatpush1.bf16.msra.mxu0 %v765
    %1199 = vmatprep.subr.bf16.mxu0 %v782
    %1200 = vmatpush1.bf16.msra.mxu0 %v781
    %1201 = vmatprep.subr.bf16.mxu0 %v798
    %1202 = vmatpush1.bf16.msra.mxu0 %v797
    %1203 = vmatprep.subr.bf16.mxu0 %v814
    %1204 = vmatpush1.bf16.msra.mxu0 %v813
    %1205 = vmatprep.subr.bf16.mxu0 %v830
    %1206 = vmatpush1.bf16.msra.mxu0 %v829
    %1207 = vmatprep.subr.bf16.mxu0 %v846
    %1208 = vmatpush1.bf16.msra.mxu0 %v845
    %1209 = vmatprep.subr.bf16.mxu0 0
    %1210 = vmatpush1.bf16.msra.mxu0 0
    %1211 = vmatprep.subr.bf16.mxu0 0
    %1212 = vmatpush1.bf16.msra.mxu0 0
    %1213 = vmatprep.subr.bf16.mxu0 0
    %1214 = vmatpush1.bf16.msra.mxu0 0
    %1215 = vmatprep.subr.bf16.mxu0 0
    %1216 = vmatpush1.bf16.msra.mxu0 0
    %1217 = vmatprep.subr.bf16.mxu0 0
    %1218 = vmatpush1.bf16.msra.mxu0 0
    %1219 = vmatprep.subr.bf16.mxu0 0
    %1220 = vmatpush1.bf16.msra.mxu0 0
    %1221 = vmatprep.subr.bf16.mxu0 0
    %1222 = vmatpush1.bf16.msra.mxu0 0
    %1223 = vmatprep.subr.bf16.mxu0 0
    %1224 = vmatpush1.bf16.msra.mxu0 0
    %1225 = vmatprep.mubr.bf16.mxu0 0
    %1226 = vmatmul.mubr.bf16.gmra.mrb[0].mxu0 %v255
    %v1227 = vpop.f32.mrb[0].mxu0
    %v1228 = vadd.f32 %v296, %v1227
    %v1229 = vpop.f32.mrb[0].mxu0
    %v1230 = vadd.f32 %v300, %v1229
    %v1231 = vpop.f32.mrb[0].mxu0
    %v1232 = vadd.f32 %v296, %v1231
    %v1233 = vpop.f32.mrb[0].mxu0
    %v1234 = vadd.f32 %v300, %v1233
    %1235 = vmatprep.mubr.bf16.mxu0 0
    %1236 = vmatmul.mubr.bf16.gmra.mrb[0].mxu0 %v256
    %v1237 = vpop.f32.mrb[0].mxu0
    %v1238 = vadd.f32 %v296, %v1237
    %v1239 = vpop.f32.mrb[0].mxu0
    %v1240 = vadd.f32 %v300, %v1239
    %v1241 = vpop.f32.mrb[0].mxu0
    %v1242 = vadd.f32 %v296, %v1241
    %v1243 = vpop.f32.mrb[0].mxu0
    %v1244 = vadd.f32 %v300, %v1243
    %1245 = vdwg.mxu0
    %1246 = vmatprep.subr.bf16.mxu0 %v736
    %1247 = vmatpush1.bf16.msra.mxu0 %v735
    %1248 = vmatprep.subr.bf16.mxu0 %v752
    %1249 = vmatpush1.bf16.msra.mxu0 %v751
    %1250 = vmatprep.subr.bf16.mxu0 %v768
    %1251 = vmatpush1.bf16.msra.mxu0 %v767
    %1252 = vmatprep.subr.bf16.mxu0 %v784
    %1253 = vmatpush1.bf16.msra.mxu0 %v783
    %1254 = vmatprep.subr.bf16.mxu0 %v800
    %1255 = vmatpush1.bf16.msra.mxu0 %v799
    %1256 = vmatprep.subr.bf16.mxu0 %v816
    %1257 = vmatpush1.bf16.msra.mxu0 %v815
    %1258 = vmatprep.subr.bf16.mxu0 %v832
    %1259 = vmatpush1.bf16.msra.mxu0 %v831
    %1260 = vmatprep.subr.bf16.mxu0 %v848
    %1261 = vmatpush1.bf16.msra.mxu0 %v847
    %1262 = vmatprep.subr.bf16.mxu0 0
    %1263 = vmatpush1.bf16.msra.mxu0 0
    %1264 = vmatprep.subr.bf16.mxu0 0
    %1265 = vmatpush1.bf16.msra.mxu0 0
    %1266 = vmatprep.subr.bf16.mxu0 0
    %1267 = vmatpush1.bf16.msra.mxu0 0
    %1268 = vmatprep.subr.bf16.mxu0 0
    %1269 = vmatpush1.bf16.msra.mxu0 0
    %1270 = vmatprep.subr.bf16.mxu0 0
    %1271 = vmatpush1.bf16.msra.mxu0 0
    %1272 = vmatprep.subr.bf16.mxu0 0
    %1273 = vmatpush1.bf16.msra.mxu0 0
    %1274 = vmatprep.subr.bf16.mxu0 0
    %1275 = vmatpush1.bf16.msra.mxu0 0
    %1276 = vmatprep.subr.bf16.mxu0 0
    %1277 = vmatpush1.bf16.msra.mxu0 0
    %1278 = vmatprep.mubr.bf16.mxu0 0
    %1279 = vmatmul.mubr.bf16.gmra.mrb[0].mxu0 %v255
    %v1280 = vpop.f32.mrb[0].mxu0
    %v1281 = vadd.f32 %v304, %v1280
    %v1282 = vpop.f32.mrb[0].mxu0
    %v1283 = vadd.f32 %v308, %v1282
    %v1284 = vpop.f32.mrb[0].mxu0
    %v1285 = vadd.f32 %v304, %v1284
    %v1286 = vpop.f32.mrb[0].mxu0
    %v1287 = vadd.f32 %v308, %v1286
    %1288 = vmatprep.mubr.bf16.mxu0 0
    %1289 = vmatmul.mubr.bf16.gmra.mrb[0].mxu0 %v256
    %v1290 = vpop.f32.mrb[0].mxu0
    %v1291 = vadd.f32 %v304, %v1290
    %v1292 = vpop.f32.mrb[0].mxu0
    %v1293 = vadd.f32 %v308, %v1292
    %v1294 = vpop.f32.mrb[0].mxu0
    %v1295 = vadd.f32 %v304, %v1294
    %v1296 = vpop.f32.mrb[0].mxu0
    %v1297 = vadd.f32 %v308, %v1296
    %1298 = vdwg.mxu0
    %1299 = vmatprep.subr.bf16.mxu0 %v738
    %1300 = vmatpush1.bf16.msra.mxu0 %v737
    %1301 = vmatprep.subr.bf16.mxu0 %v754
    %1302 = vmatpush1.bf16.msra.mxu0 %v753
    %1303 = vmatprep.subr.bf16.mxu0 %v770
    %1304 = vmatpush1.bf16.msra.mxu0 %v769
    %1305 = vmatprep.subr.bf16.mxu0 %v786
    %1306 = vmatpush1.bf16.msra.mxu0 %v785
    %1307 = vmatprep.subr.bf16.mxu0 %v802
    %1308 = vmatpush1.bf16.msra.mxu0 %v801
    %1309 = vmatprep.subr.bf16.mxu0 %v818
    %1310 = vmatpush1.bf16.msra.mxu0 %v817
    %1311 = vmatprep.subr.bf16.mxu0 %v834
    %1312 = vmatpush1.bf16.msra.mxu0 %v833
    %1313 = vmatprep.subr.bf16.mxu0 %v850
    %1314 = vmatpush1.bf16.msra.mxu0 %v849
    %1315 = vmatprep.subr.bf16.mxu0 0
    %1316 = vmatpush1.bf16.msra.mxu0 0
    %1317 = vmatprep.subr.bf16.mxu0 0
    %1318 = vmatpush1.bf16.msra.mxu0 0
    %1319 = vmatprep.subr.bf16.mxu0 0
    %1320 = vmatpush1.bf16.msra.mxu0 0
    %1321 = vmatprep.subr.bf16.mxu0 0
    %1322 = vmatpush1.bf16.msra.mxu0 0
    %1323 = vmatprep.subr.bf16.mxu0 0
    %1324 = vmatpush1.bf16.msra.mxu0 0
    %1325 = vmatprep.subr.bf16.mxu0 0
    %1326 = vmatpush1.bf16.msra.mxu0 0
    %1327 = vmatprep.subr.bf16.mxu0 0
    %1328 = vmatpush1.bf16.msra.mxu0 0
    %1329 = vmatprep.subr.bf16.mxu0 0
    %1330 = vmatpush1.bf16.msra.mxu0 0
    %1331 = vmatprep.mubr.bf16.mxu0 0
    %1332 = vmatmul.mubr.bf16.gmra.mrb[0].mxu0 %v255
    %v1333 = vpop.f32.mrb[0].mxu0
    %v1334 = vadd.f32 %v312, %v1333
    %v1335 = vpop.f32.mrb[0].mxu0
    %v1336 = vadd.f32 %v316, %v1335
    %v1337 = vpop.f32.mrb[0].mxu0
    %v1338 = vadd.f32 %v312, %v1337
    %v1339 = vpop.f32.mrb[0].mxu0
    %v1340 = vadd.f32 %v316, %v1339
    %1341 = vmatprep.mubr.bf16.mxu0 0
    %1342 = vmatmul.mubr.bf16.gmra.mrb[0].mxu0 %v256
    %v1343 = vpop.f32.mrb[0].mxu0
    %v1344 = vadd.f32 %v312, %v1343
    %v1345 = vpop.f32.mrb[0].mxu0
    %v1346 = vadd.f32 %v316, %v1345
    %v1347 = vpop.f32.mrb[0].mxu0
    %v1348 = vadd.f32 %v312, %v1347
    %v1349 = vpop.f32.mrb[0].mxu0
    %v1350 = vadd.f32 %v316, %v1349
    %1351 = vdwg.mxu0
    %1352 = vmatprep.subr.bf16.mxu0 %v740
    %1353 = vmatpush1.bf16.msra.mxu0 %v739
    %1354 = vmatprep.subr.bf16.mxu0 %v756
    %1355 = vmatpush1.bf16.msra.mxu0 %v755
    %1356 = vmatprep.subr.bf16.mxu0 %v772
    %1357 = vmatpush1.bf16.msra.mxu0 %v771
    %1358 = vmatprep.subr.bf16.mxu0 %v788
    %1359 = vmatpush1.bf16.msra.mxu0 %v787
    %1360 = vmatprep.subr.bf16.mxu0 %v804
    %1361 = vmatpush1.bf16.msra.mxu0 %v803
    %1362 = vmatprep.subr.bf16.mxu0 %v820
    %1363 = vmatpush1.bf16.msra.mxu0 %v819
    %1364 = vmatprep.subr.bf16.mxu0 %v836
    %1365 = vmatpush1.bf16.msra.mxu0 %v835
    %1366 = vmatprep.subr.bf16.mxu0 %v852
    %1367 = vmatpush1.bf16.msra.mxu0 %v851
    %1368 = vmatprep.subr.bf16.mxu0 0
    %1369 = vmatpush1.bf16.msra.mxu0 0
    %1370 = vmatprep.subr.bf16.mxu0 0
    %1371 = vmatpush1.bf16.msra.mxu0 0
    %1372 = vmatprep.subr.bf16.mxu0 0
    %1373 = vmatpush1.bf16.msra.mxu0 0
    %1374 = vmatprep.subr.bf16.mxu0 0
    %1375 = vmatpush1.bf16.msra.mxu0 0
    %1376 = vmatprep.subr.bf16.mxu0 0
    %1377 = vmatpush1.bf16.msra.mxu0 0
    %1378 = vmatprep.subr.bf16.mxu0 0
    %1379 = vmatpush1.bf16.msra.mxu0 0
    %1380 = vmatprep.subr.bf16.mxu0 0
    %1381 = vmatpush1.bf16.msra.mxu0 0
    %1382 = vmatprep.subr.bf16.mxu0 0
    %1383 = vmatpush1.bf16.msra.mxu0 0
    %1384 = vmatprep.mubr.bf16.mxu0 0
    %1385 = vmatmul.mubr.bf16.gmra.mrb[0].mxu0 %v255
    %v1386 = vpop.f32.mrb[0].mxu0
    %v1387 = vadd.f32 %v320, %v1386
    %v1388 = vpop.f32.mrb[0].mxu0
    %v1389 = vadd.f32 %v324, %v1388
    %v1390 = vpop.f32.mrb[0].mxu0
    %v1391 = vadd.f32 %v320, %v1390
    %v1392 = vpop.f32.mrb[0].mxu0
    %v1393 = vadd.f32 %v324, %v1392
    %1394 = vmatprep.mubr.bf16.mxu0 0
    %1395 = vmatmul.mubr.bf16.gmra.mrb[0].mxu0 %v256
    %v1396 = vpop.f32.mrb[0].mxu0
    %v1397 = vadd.f32 %v320, %v1396
    %v1398 = vpop.f32.mrb[0].mxu0
    %v1399 = vadd.f32 %v324, %v1398
    %v1400 = vpop.f32.mrb[0].mxu0
    %v1401 = vadd.f32 %v320, %v1400
    %v1402 = vpop.f32.mrb[0].mxu0
    %v1403 = vadd.f32 %v324, %v1402
    %1404 = vdwg.mxu0
    %1405 = vst [vmem:[%s5] sm:$0xff] %v1016
    %1406 = vst [vmem:[%s5 + $0x8] sm:$0xff] %v1018
    %1407 = vst [vmem:[%s5 + $0x10] sm:$0xff] %v1069
    %1408 = vst [vmem:[%s5 + $0x18] sm:$0xff] %v1071
    %1409 = vst [vmem:[%s5 + $0x20] sm:$0xff] %v1122
    %1410 = vst [vmem:[%s5 + $0x28] sm:$0xff] %v1124
    %1411 = vst [vmem:[%s5 + $0x30] sm:$0xff] %v1175
    %1412 = vst [vmem:[%s5 + $0x38] sm:$0xff] %v1177
    %1413 = vst [vmem:[%s5 + $0x40] sm:$0xff] %v1228
    %1414 = vst [vmem:[%s5 + $0x48] sm:$0xff] %v1230
    %1415 = vst [vmem:[%s5 + $0x50] sm:$0xff] %v1281
    %1416 = vst [vmem:[%s5 + $0x58] sm:$0xff] %v1283
    %1417 = vst [vmem:[%s5 + $0x60] sm:$0xff] %v1334
    %1418 = vst [vmem:[%s5 + $0x68] sm:$0xff] %v1336
    %1419 = vst [vmem:[%s5 + $0x70] sm:$0xff] %v1387
    %vm1420 = vcmask 326656
    %1421 = vst.msk [vmem:[%s5 + $0x78] sm:$0xff] %vm1420, %v1389
    %1422 = vst [vmem:[%s5 + $0x80] sm:$0xff] %v1020
    %1423 = vst [vmem:[%s5 + $0x88] sm:$0xff] %v1022
    %1424 = vst [vmem:[%s5 + $0x90] sm:$0xff] %v1073
    %1425 = vst [vmem:[%s5 + $0x98] sm:$0xff] %v1075
    %1426 = vst [vmem:[%s5 + $0xa0] sm:$0xff] %v1126
    %1427 = vst [vmem:[%s5 + $0xa8] sm:$0xff] %v1128
    %1428 = vst [vmem:[%s5 + $0xb0] sm:$0xff] %v1179
    %1429 = vst [vmem:[%s5 + $0xb8] sm:$0xff] %v1181
    %1430 = vst [vmem:[%s5 + $0xc0] sm:$0xff] %v1232
    %1431 = vst [vmem:[%s5 + $0xc8] sm:$0xff] %v1234
    %1432 = vst [vmem:[%s5 + $0xd0] sm:$0xff] %v1285
    %1433 = vst [vmem:[%s5 + $0xd8] sm:$0xff] %v1287
    %1434 = vst [vmem:[%s5 + $0xe0] sm:$0xff] %v1338
    %1435 = vst [vmem:[%s5 + $0xe8] sm:$0xff] %v1340
    %1436 = vst [vmem:[%s5 + $0xf0] sm:$0xff] %v1391
    %1437 = vst.msk [vmem:[%s5 + $0xf8] sm:$0xff] %vm1420, %v1393
    %1438 = vst [vmem:[%s5 + $0x100] sm:$0xff] %v1026
    %1439 = vst [vmem:[%s5 + $0x108] sm:$0xff] %v1028
    %1440 = vst [vmem:[%s5 + $0x110] sm:$0xff] %v1079
    %1441 = vst [vmem:[%s5 + $0x118] sm:$0xff] %v1081
    %1442 = vst [vmem:[%s5 + $0x120] sm:$0xff] %v1132
    %1443 = vst [vmem:[%s5 + $0x128] sm:$0xff] %v1134
    %1444 = vst [vmem:[%s5 + $0x130] sm:$0xff] %v1185
    %1445 = vst [vmem:[%s5 + $0x138] sm:$0xff] %v1187
    %1446 = vst [vmem:[%s5 + $0x140] sm:$0xff] %v1238
    %1447 = vst [vmem:[%s5 + $0x148] sm:$0xff] %v1240
    %1448 = vst [vmem:[%s5 + $0x150] sm:$0xff] %v1291
    %1449 = vst [vmem:[%s5 + $0x158] sm:$0xff] %v1293
    %1450 = vst [vmem:[%s5 + $0x160] sm:$0xff] %v1344
    %1451 = vst [vmem:[%s5 + $0x168] sm:$0xff] %v1346
    %1452 = vst [vmem:[%s5 + $0x170] sm:$0xff] %v1397
    %1453 = vst.msk [vmem:[%s5 + $0x178] sm:$0xff] %vm1420, %v1399
    %1454 = vst [vmem:[%s5 + $0x180] sm:$0xff] %v1030
    %1455 = vst [vmem:[%s5 + $0x188] sm:$0xff] %v1032
    %1456 = vst [vmem:[%s5 + $0x190] sm:$0xff] %v1083
    %1457 = vst [vmem:[%s5 + $0x198] sm:$0xff] %v1085
    %1458 = vst [vmem:[%s5 + $0x1a0] sm:$0xff] %v1136
    %1459 = vst [vmem:[%s5 + $0x1a8] sm:$0xff] %v1138
    %1460 = vst [vmem:[%s5 + $0x1b0] sm:$0xff] %v1189
    %1461 = vst [vmem:[%s5 + $0x1b8] sm:$0xff] %v1191
    %1462 = vst [vmem:[%s5 + $0x1c0] sm:$0xff] %v1242
    %1463 = vst [vmem:[%s5 + $0x1c8] sm:$0xff] %v1244
    %1464 = vst [vmem:[%s5 + $0x1d0] sm:$0xff] %v1295
    %1465 = vst [vmem:[%s5 + $0x1d8] sm:$0xff] %v1297
    %1466 = vst [vmem:[%s5 + $0x1e0] sm:$0xff] %v1348
    %1467 = vst [vmem:[%s5 + $0x1e8] sm:$0xff] %v1350
    %1468 = vst [vmem:[%s5 + $0x1f0] sm:$0xff] %v1401
    %1469 = vst.msk [vmem:[%s5 + $0x1f8] sm:$0xff] %vm1420, %v1403
    // Predicated region
    $region34: #{transformer_block.9} parent=1 // pred_check
      _
    $region35: #{transformer_block.9} parent=1 // pred_check_branch
      %1471 = sbr.rel (0) target = $region37
    $region36: #{transformer_block.9} parent=1 // pred_region
      _
    $region37: #{transformer_block.9} parent=1 // pred_fallthru
      _
    // Predicated region
    $region38: #{transformer_block.9} parent=1 // pred_check
      _
    $region39: #{transformer_block.9} parent=1 // pred_check_branch
      %1473 = sbr.rel (0) target = $region41
    $region40: #{transformer_block.9} parent=1 // pred_region
      _
    $region41: #{transformer_block.9} parent=1 // pred_fallthru
      _
    %1474 = vsyncpa [#allocation3], 1
    %1475 = vsyncpa [#allocation5], 1

// kernel: transformer_block.10
$region0: #{transformer_block.10}
  #allocation0 [shape = 'u32[]', space=smem, size = 0x4, offset = 0x4, fixed_abs, tag = 'smem constant byte address 0x4 - core index']
  #allocation1 [shape = 'u32[144,128]{1,0:T(1,128)}', space=vmem, size = 0x12000, scoped, tag = 'internal scratch']
  %s0 = inlined_call_operand.vmem [shape: bf16[784,784], index: 0, kind: input, shape index: {}]
  %s1 = inlined_call_operand.vmem [shape: f32[1568,40], index: 1, kind: input, shape index: {}]
  %s2 = inlined_call_operand.vmem [shape: f32[1568,40], index: 2, kind: output, shape index: {}]
  %s3 = sld [smem:[#allocation0]]
  $region41: #{transformer_block.10} parent=0
    _
  %s5 = ssub.s32 1, %s3
  %s6 = scalar_select 0, %s5, %s3
  loop: start=0, step=1, limit=4
  $region2: #{transformer_block.10} parent=0 // loop_pre_header
    _
  $region3: #{transformer_block.10} parent=0 // loop_header
    %s8 = sphi 0, %s12
    %p9 = scmp.ge.s32.totalorder %s8, 4
    %s16 = sphi 0, %s16
    %s18 = sphi 0, %s16
    %s19 = sphi 0, %s18
    %s33 = sphi 0, %s19
    %s39 = sphi 0, %s41
    %s42 = sphi 0, %s39
    %s43 = sphi 0, %s42
    %s59 = sphi 0, %s43
    %s65 = sphi 0, %s67
    %s68 = sphi 0, %s65
    %s69 = sphi 0, %s68
    %s85 = sphi 0, %s69
  $region4: #{transformer_block.10} parent=0 // loop_header_branch
    %11 = sbr.rel (%p9) target = $region8
  $region5: #{transformer_block.10} parent=0 // loop_body
    %s13 = ssub.s32 %s8, 1
    %s14 = ssub.s32 %s8, 2
    %s15 = sadd.s32 %s8, 1
    %s17 = sadd.s32 %s16, 1
    %p20 = scmp.eq.s32.totalorder %s8, 1
    %p21 = scmp.ne.s32.totalorder %s16, %s18
    %p22 = scmp.eq.s32.totalorder %s8, 0
    %p23 = por %p21, %p22
    %p24 = scmp.ne.s32.totalorder %s16, %s18
    %p25 = scmp.eq.s32.totalorder %s13, 1
    %p26 = por %p24, %p25
    %p27 = scmp.ne.s32.totalorder %s18, %s19
    %p28 = scmp.eq.s32.totalorder %s13, 0
    %p29 = por %p27, %p28
    %p30 = scmp.ne.s32.totalorder %s18, %s19
    %p31 = scmp.eq.s32.totalorder %s14, 1
    %p32 = por %p30, %p31
    %p34 = scmp.ne.s32.totalorder %s19, %s33
    %p35 = scmp.eq.s32.totalorder %s14, 0
    %p36 = por %p34, %p35
    %s37 = ssub.s32 %s8, %s15
    %p38 = scmp.eq.s32.totalorder %s37, 0
    %s40 = sadd.s32 %s39, 1
    %s41 = scalar_select %p38, %s39, %s40
    %p44 = pneg %p38
    %p45 = scmp.eq.s32.totalorder %s8, 1
    %p46 = por %p44, %p45
    %p47 = scmp.ne.s32.totalorder %s39, %s42
    %p48 = scmp.eq.s32.totalorder %s8, 0
    %p49 = por %p47, %p48
    %p50 = scmp.ne.s32.totalorder %s39, %s42
    %p51 = scmp.eq.s32.totalorder %s13, 1
    %p52 = por %p50, %p51
    %p53 = scmp.ne.s32.totalorder %s42, %s43
    %p54 = scmp.eq.s32.totalorder %s13, 0
    %p55 = por %p53, %p54
    %p56 = scmp.ne.s32.totalorder %s42, %s43
    %p57 = scmp.eq.s32.totalorder %s14, 1
    %p58 = por %p56, %p57
    %p60 = scmp.ne.s32.totalorder %s43, %s59
    %p61 = scmp.eq.s32.totalorder %s14, 0
    %p62 = por %p60, %p61
    %s63 = ssub.s32 %s8, %s15
    %p64 = scmp.eq.s32.totalorder %s63, 0
    %s66 = sadd.s32 %s65, 1
    %s67 = scalar_select %p64, %s65, %s66
    %p70 = pneg %p64
    %p71 = scmp.eq.s32.totalorder %s8, 1
    %p72 = por %p70, %p71
    %p73 = scmp.ne.s32.totalorder %s65, %s68
    %p74 = scmp.eq.s32.totalorder %s8, 0
    %p75 = por %p73, %p74
    %p76 = scmp.ne.s32.totalorder %s65, %s68
    %p77 = scmp.eq.s32.totalorder %s13, 1
    %p78 = por %p76, %p77
    %p79 = scmp.ne.s32.totalorder %s68, %s69
    %p80 = scmp.eq.s32.totalorder %s13, 0
    %p81 = por %p79, %p80
    %p82 = scmp.ne.s32.totalorder %s68, %s69
    %p83 = scmp.eq.s32.totalorder %s14, 1
    %p84 = por %p82, %p83
    %p86 = scmp.ne.s32.totalorder %s69, %s85
    %p87 = scmp.eq.s32.totalorder %s14, 0
    %p88 = por %p86, %p87
    %p89 = scmp.le.s32.totalorder 1, %s8
    %p90 = scmp.lt.s32.totalorder %s8, 3
    %p91 = pnand %p89, %p90
    %p92 = pneg %p91
    // Predicated region
    $region9: #{transformer_block.10} parent=5 // pred_check
      _
    $region10: #{transformer_block.10} parent=5 // pred_check_branch
      %94 = sbr.rel (%p91) target = $region12
    $region11: #{transformer_block.10} parent=5 // pred_region
      %s95 = ssub.s32 %s8, 1
      // Predicated region
      $region13: #{transformer_block.10} parent=11 // pred_check
        %p96 = pneg %p29
      $region14: #{transformer_block.10} parent=11 // pred_check_branch
        %98 = sbr.rel (%p96) target = $region16
      $region15: #{transformer_block.10} parent=11 // pred_region
        _
      $region16: #{transformer_block.10} parent=11 // pred_fallthru
        _
    $region12: #{transformer_block.10} parent=5 // pred_fallthru
      _
    %p99 = scmp.lt.s32.totalorder %s8, 2
    // Predicated region
    $region17: #{transformer_block.10} parent=5 // pred_check
      %p100 = pneg %p99
    $region18: #{transformer_block.10} parent=5 // pred_check_branch
      %102 = sbr.rel (%p100) target = $region20
    $region19: #{transformer_block.10} parent=5 // pred_region
      // Predicated region
      $region21: #{transformer_block.10} parent=19 // pred_check
        %p103 = pneg %p49
      $region22: #{transformer_block.10} parent=19 // pred_check_branch
        %105 = sbr.rel (%p103) target = $region24
      $region23: #{transformer_block.10} parent=19 // pred_region
        %s106 = smul.u32 98, %s8
        %p107 = scmp.lt.s32.totalorder %s106, 195
        %s108 = scalar_select %p107, %s106, 195
        %s109 = smul.addr %s108, 8
        %s110 = scalar_lea.vmem %s1, %s109
        %s111 = smul.u32 98, %s8
      $region24: #{transformer_block.10} parent=19 // pred_fallthru
        _
    $region20: #{transformer_block.10} parent=5 // pred_fallthru
      _
    %p112 = scmp.le.s32.totalorder 1, %s8
    %p113 = scmp.lt.s32.totalorder %s8, 3
    %p114 = pnand %p112, %p113
    %p115 = pneg %p114
    // Predicated region
    $region25: #{transformer_block.10} parent=5 // pred_check
      _
    $region26: #{transformer_block.10} parent=5 // pred_check_branch
      %117 = sbr.rel (%p114) target = $region28
    $region27: #{transformer_block.10} parent=5 // pred_region
      %s118 = ssub.s32 %s8, 1
      %p119 = pneg %p29
      %p120 = pneg %p26
      %s121 = smul.u32 98, %s13
      %p122 = scmp.lt.s32.totalorder %s121, 195
      %s123 = scalar_select %p122, %s121, 195
      %s124 = smul.addr %s123, 8
      %s125 = scalar_lea.vmem %s1, %s124
      %p126 = pneg %p55
      %p127 = pneg %p52
      %p128 = pneg %p81
      %p129 = pneg %p78
      %s130 = smul.u32 98, %s13
      %p131 = scmp.lt.s32.totalorder %s130, 195
      %s132 = scalar_select %p131, %s130, 195
      %s133 = smul.addr %s132, 8
      %s134 = scalar_lea.vmem %s2, %s133
      %s135 = smul.u32 98, %s13
      %p136 = scmp.lt.s32.totalorder %s135, 195
      %s137 = scalar_select %p136, %s135, 195
      %s138 = smul.addr %s137, 8
      %s139 = scalar_lea.vmem %s1, %s138
      %s140 = smul.u32 98, %s13
      %s141 = smul.u32 98, %s13
      %p142 = scmp.lt.s32.totalorder %s141, 195
      %s143 = scalar_select %p142, %s141, 195
      %s144 = smul.addr %s143, 8
      %s145 = scalar_lea.vmem %s2, %s144
      %s146 = smul.u32 98, %s13
      %v148 = vld [vmem:[%s0] sm:$0xff]
      %v149 = vld [vmem:[%s0 + $0x8] sm:$0xff]
      %v150 = vld [vmem:[%s0 + $0x10] sm:$0xff]
      %v151 = vld [vmem:[%s0 + $0x18] sm:$0xf]
      %v152 = vld [vmem:[%s0 + $0x1c] sm:$0xff]
      %v153 = vld [vmem:[%s0 + $0x24] sm:$0xff]
      %v154 = vld [vmem:[%s0 + $0x2c] sm:$0xff]
      %v155 = vld [vmem:[%s0 + $0x34] sm:$0xf]
      %v156 = vld [vmem:[%s0 + $0x38] sm:$0xff]
      %v157 = vld [vmem:[%s0 + $0x40] sm:$0xff]
      %v158 = vld [vmem:[%s0 + $0x48] sm:$0xff]
      %v159 = vld [vmem:[%s0 + $0x50] sm:$0xf]
      %v160 = vld [vmem:[%s0 + $0x54] sm:$0xff]
      %v161 = vld [vmem:[%s0 + $0x5c] sm:$0xff]
      %v162 = vld [vmem:[%s0 + $0x64] sm:$0xff]
      %v163 = vld [vmem:[%s0 + $0x6c] sm:$0xf]
      %v164 = vld [vmem:[%s0 + $0x70] sm:$0xff]
      %v165 = vld [vmem:[%s0 + $0x78] sm:$0xff]
      %v166 = vld [vmem:[%s0 + $0x80] sm:$0xff]
      %v167 = vld [vmem:[%s0 + $0x88] sm:$0xf]
      %v168 = vld [vmem:[%s0 + $0x8c] sm:$0xff]
      %v169 = vld [vmem:[%s0 + $0x94] sm:$0xff]
      %v170 = vld [vmem:[%s0 + $0x9c] sm:$0xff]
      %v171 = vld [vmem:[%s0 + $0xa4] sm:$0xf]
      %v172 = vld [vmem:[%s0 + $0xa8] sm:$0xff]
      %v173 = vld [vmem:[%s0 + $0xb0] sm:$0xff]
      %v174 = vld [vmem:[%s0 + $0xb8] sm:$0xff]
      %v175 = vld [vmem:[%s0 + $0xc0] sm:$0xf]
      %v176 = vld [vmem:[%s0 + $0xc4] sm:$0xff]
      %v177 = vld [vmem:[%s0 + $0xcc] sm:$0xff]
      %v178 = vld [vmem:[%s0 + $0xd4] sm:$0xff]
      %v179 = vld [vmem:[%s0 + $0xdc] sm:$0xf]
      %v180 = vld [vmem:[%s0 + $0xe0] sm:$0xff]
      %v181 = vld [vmem:[%s0 + $0xe8] sm:$0xff]
      %v182 = vld [vmem:[%s0 + $0xf0] sm:$0xff]
      %v183 = vld [vmem:[%s0 + $0xf8] sm:$0xf]
      %v184 = vld [vmem:[%s0 + $0xfc] sm:$0xff]
      %v185 = vld [vmem:[%s0 + $0x104] sm:$0xff]
      %v186 = vld [vmem:[%s0 + $0x10c] sm:$0xff]
      %v187 = vld [vmem:[%s0 + $0x114] sm:$0xf]
      %v188 = vld [vmem:[%s0 + $0x118] sm:$0xff]
      %v189 = vld [vmem:[%s0 + $0x120] sm:$0xff]
      %v190 = vld [vmem:[%s0 + $0x128] sm:$0xff]
      %v191 = vld [vmem:[%s0 + $0x130] sm:$0xf]
      %v192 = vld [vmem:[%s0 + $0x134] sm:$0xff]
      %v193 = vld [vmem:[%s0 + $0x13c] sm:$0xff]
      %v194 = vld [vmem:[%s0 + $0x144] sm:$0xff]
      %v195 = vld [vmem:[%s0 + $0x14c] sm:$0xf]
      %v196 = vld [vmem:[%s0 + $0x150] sm:$0xff]
      %v197 = vld [vmem:[%s0 + $0x158] sm:$0xff]
      %v198 = vld [vmem:[%s0 + $0x160] sm:$0xff]
      %v199 = vld [vmem:[%s0 + $0x168] sm:$0xf]
      %v200 = vld [vmem:[%s0 + $0x16c] sm:$0xff]
      %v201 = vld [vmem:[%s0 + $0x174] sm:$0xff]
      %v202 = vld [vmem:[%s0 + $0x17c] sm:$0xff]
      %v203 = vld [vmem:[%s0 + $0x184] sm:$0xf]
      %v204 = vld [vmem:[%s0 + $0x188] sm:$0xff]
      %v205 = vld [vmem:[%s0 + $0x190] sm:$0xff]
      %v206 = vld [vmem:[%s0 + $0x198] sm:$0xff]
      %v207 = vld [vmem:[%s0 + $0x1a0] sm:$0xf]
      %v208 = vld [vmem:[%s0 + $0x1a4] sm:$0xff]
      %v209 = vld [vmem:[%s0 + $0x1ac] sm:$0xff]
      %v210 = vld [vmem:[%s0 + $0x1b4] sm:$0xff]
      %v211 = vld [vmem:[%s0 + $0x1bc] sm:$0xf]
      %v212 = vld [vmem:[%s0 + $0x1c0] sm:$0xff]
      %v213 = vld [vmem:[%s0 + $0x1c8] sm:$0xff]
      %v214 = vld [vmem:[%s0 + $0x1d0] sm:$0xff]
      %v215 = vld [vmem:[%s0 + $0x1d8] sm:$0xf]
      %v216 = vld [vmem:[%s0 + $0x1dc] sm:$0xff]
      %v217 = vld [vmem:[%s0 + $0x1e4] sm:$0xff]
      %v218 = vld [vmem:[%s0 + $0x1ec] sm:$0xff]
      %v219 = vld [vmem:[%s0 + $0x1f4] sm:$0xf]
      %v220 = vld [vmem:[%s0 + $0x1f8] sm:$0xff]
      %v221 = vld [vmem:[%s0 + $0x200] sm:$0xff]
      %v222 = vld [vmem:[%s0 + $0x208] sm:$0xff]
      %v223 = vld [vmem:[%s0 + $0x210] sm:$0xf]
      %v224 = vld [vmem:[%s0 + $0x214] sm:$0xff]
      %v225 = vld [vmem:[%s0 + $0x21c] sm:$0xff]
      %v226 = vld [vmem:[%s0 + $0x224] sm:$0xff]
      %v227 = vld [vmem:[%s0 + $0x22c] sm:$0xf]
      %v228 = vld [vmem:[%s0 + $0x230] sm:$0xff]
      %v229 = vld [vmem:[%s0 + $0x238] sm:$0xff]
      %v230 = vld [vmem:[%s0 + $0x240] sm:$0xff]
      %v231 = vld [vmem:[%s0 + $0x248] sm:$0xf]
      %v232 = vld [vmem:[%s0 + $0x24c] sm:$0xff]
      %v233 = vld [vmem:[%s0 + $0x254] sm:$0xff]
      %v234 = vld [vmem:[%s0 + $0x25c] sm:$0xff]
      %v235 = vld [vmem:[%s0 + $0x264] sm:$0xf]
      %v236 = vld [vmem:[%s0 + $0x268] sm:$0xff]
      %v237 = vld [vmem:[%s0 + $0x270] sm:$0xff]
      %v238 = vld [vmem:[%s0 + $0x278] sm:$0xff]
      %v239 = vld [vmem:[%s0 + $0x280] sm:$0xf]
      %v240 = vld [vmem:[%s0 + $0x284] sm:$0xff]
      %v241 = vld [vmem:[%s0 + $0x28c] sm:$0xff]
      %v242 = vld [vmem:[%s0 + $0x294] sm:$0xff]
      %v243 = vld [vmem:[%s0 + $0x29c] sm:$0xf]
      %v244 = vld [vmem:[%s0 + $0x2a0] sm:$0xff]
      %v245 = vld [vmem:[%s0 + $0x2a8] sm:$0xff]
      %v246 = vld [vmem:[%s0 + $0x2b0] sm:$0xff]
      %v247 = vld [vmem:[%s0 + $0x2b8] sm:$0xf]
      %v248 = vld [vmem:[%s0 + $0x2bc] sm:$0xff]
      %v249 = vld [vmem:[%s0 + $0x2c4] sm:$0xff]
      %v250 = vld [vmem:[%s0 + $0x2cc] sm:$0xff]
      %v251 = vld [vmem:[%s0 + $0x2d4] sm:$0xf]
      %v252 = vld [vmem:[%s0 + $0x2d8] sm:$0xff]
      %v253 = vld [vmem:[%s0 + $0x2e0] sm:$0xff]
      %v254 = vld [vmem:[%s0 + $0x2e8] sm:$0xff]
      %v255 = vld [vmem:[%s0 + $0x2f0] sm:$0xf]
      %v256 = vld [vmem:[%s0 + $0x2f4] sm:$0xff]
      %v257 = vld [vmem:[%s0 + $0x2fc] sm:$0xff]
      %v258 = vld [vmem:[%s0 + $0x304] sm:$0xff]
      %v259 = vld [vmem:[%s0 + $0x30c] sm:$0xf]
      %v260 = vld [vmem:[%s0 + $0x310] sm:$0xff]
      %v261 = vld [vmem:[%s0 + $0x318] sm:$0xff]
      %v262 = vld [vmem:[%s0 + $0x320] sm:$0xff]
      %v263 = vld [vmem:[%s0 + $0x328] sm:$0xf]
      %v264 = vld [vmem:[%s0 + $0x32c] sm:$0xff]
      %v265 = vld [vmem:[%s0 + $0x334] sm:$0xff]
      %v266 = vld [vmem:[%s0 + $0x33c] sm:$0xff]
      %v267 = vld [vmem:[%s0 + $0x344] sm:$0xf]
      %v268 = vld [vmem:[%s0 + $0x348] sm:$0xff]
      %v269 = vld [vmem:[%s0 + $0x350] sm:$0xff]
      %v270 = vld [vmem:[%s0 + $0x358] sm:$0xff]
      %v271 = vld [vmem:[%s0 + $0x360] sm:$0xf]
      %v272 = vld [vmem:[%s0 + $0x364] sm:$0xff]
      %v273 = vld [vmem:[%s0 + $0x36c] sm:$0xff]
      %v274 = vld [vmem:[%s0 + $0x374] sm:$0xff]
      %v275 = vld [vmem:[%s0 + $0x37c] sm:$0xf]
      %v276 = vld [vmem:[%s0 + $0x380] sm:$0xff]
      %v277 = vld [vmem:[%s0 + $0x388] sm:$0xff]
      %v278 = vld [vmem:[%s0 + $0x390] sm:$0xff]
      %v279 = vld [vmem:[%s0 + $0x398] sm:$0xf]
      %v280 = vld [vmem:[%s0 + $0x39c] sm:$0xff]
      %v281 = vld [vmem:[%s0 + $0x3a4] sm:$0xff]
      %v282 = vld [vmem:[%s0 + $0x3ac] sm:$0xff]
      %v283 = vld [vmem:[%s0 + $0x3b4] sm:$0xf]
      %v284 = vld [vmem:[%s0 + $0x3b8] sm:$0xff]
      %v285 = vld [vmem:[%s0 + $0x3c0] sm:$0xff]
      %v286 = vld [vmem:[%s0 + $0x3c8] sm:$0xff]
      %v287 = vld [vmem:[%s0 + $0x3d0] sm:$0xf]
      %v288 = vld [vmem:[%s0 + $0x3d4] sm:$0xff]
      %v289 = vld [vmem:[%s0 + $0x3dc] sm:$0xff]
      %v290 = vld [vmem:[%s0 + $0x3e4] sm:$0xff]
      %v291 = vld [vmem:[%s0 + $0x3ec] sm:$0xf]
      %v292 = vld [vmem:[%s0 + $0x3f0] sm:$0xff]
      %v293 = vld [vmem:[%s0 + $0x3f8] sm:$0xff]
      %v294 = vld [vmem:[%s0 + $0x400] sm:$0xff]
      %v295 = vld [vmem:[%s0 + $0x408] sm:$0xf]
      %v296 = vld [vmem:[%s0 + $0x40c] sm:$0xff]
      %v297 = vld [vmem:[%s0 + $0x414] sm:$0xff]
      %v298 = vld [vmem:[%s0 + $0x41c] sm:$0xff]
      %v299 = vld [vmem:[%s0 + $0x424] sm:$0xf]
      %v300 = vld [vmem:[%s0 + $0x428] sm:$0xff]
      %v301 = vld [vmem:[%s0 + $0x430] sm:$0xff]
      %v302 = vld [vmem:[%s0 + $0x438] sm:$0xff]
      %v303 = vld [vmem:[%s0 + $0x440] sm:$0xf]
      %v304 = vld [vmem:[%s0 + $0x444] sm:$0xff]
      %v305 = vld [vmem:[%s0 + $0x44c] sm:$0xff]
      %v306 = vld [vmem:[%s0 + $0x454] sm:$0xff]
      %v307 = vld [vmem:[%s0 + $0x45c] sm:$0xf]
      %v308 = vld [vmem:[%s0 + $0x460] sm:$0xff]
      %v309 = vld [vmem:[%s0 + $0x468] sm:$0xff]
      %v310 = vld [vmem:[%s0 + $0x470] sm:$0xff]
      %v311 = vld [vmem:[%s0 + $0x478] sm:$0xf]
      %v312 = vld [vmem:[%s0 + $0x47c] sm:$0xff]
      %v313 = vld [vmem:[%s0 + $0x484] sm:$0xff]
      %v314 = vld [vmem:[%s0 + $0x48c] sm:$0xff]
      %v315 = vld [vmem:[%s0 + $0x494] sm:$0xf]
      %v316 = vld [vmem:[%s0 + $0x498] sm:$0xff]
      %v317 = vld [vmem:[%s0 + $0x4a0] sm:$0xff]
      %v318 = vld [vmem:[%s0 + $0x4a8] sm:$0xff]
      %v319 = vld [vmem:[%s0 + $0x4b0] sm:$0xf]
      %v320 = vld [vmem:[%s0 + $0x4b4] sm:$0xff]
      %v321 = vld [vmem:[%s0 + $0x4bc] sm:$0xff]
      %v322 = vld [vmem:[%s0 + $0x4c4] sm:$0xff]
      %v323 = vld [vmem:[%s0 + $0x4cc] sm:$0xf]
      %v324 = vld [vmem:[%s0 + $0x4d0] sm:$0xff]
      %v325 = vld [vmem:[%s0 + $0x4d8] sm:$0xff]
      %v326 = vld [vmem:[%s0 + $0x4e0] sm:$0xff]
      %v327 = vld [vmem:[%s0 + $0x4e8] sm:$0xf]
      %v328 = vld [vmem:[%s0 + $0x4ec] sm:$0xff]
      %v329 = vld [vmem:[%s0 + $0x4f4] sm:$0xff]
      %v330 = vld [vmem:[%s0 + $0x4fc] sm:$0xff]
      %v331 = vld [vmem:[%s0 + $0x504] sm:$0xf]
      %v332 = vld [vmem:[%s0 + $0x508] sm:$0xff]
      %v333 = vld [vmem:[%s0 + $0x510] sm:$0xff]
      %v334 = vld [vmem:[%s0 + $0x518] sm:$0xff]
      %v335 = vld [vmem:[%s0 + $0x520] sm:$0xf]
      %v336 = vld [vmem:[%s0 + $0x524] sm:$0xff]
      %v337 = vld [vmem:[%s0 + $0x52c] sm:$0xff]
      %v338 = vld [vmem:[%s0 + $0x534] sm:$0xff]
      %v339 = vld [vmem:[%s0 + $0x53c] sm:$0xf]
      %v340 = vld [vmem:[%s0 + $0x540] sm:$0xff]
      %v341 = vld [vmem:[%s0 + $0x548] sm:$0xff]
      %v342 = vld [vmem:[%s0 + $0x550] sm:$0xff]
      %v343 = vld [vmem:[%s0 + $0x558] sm:$0xf]
      %v344 = vld [vmem:[%s0 + $0x55c] sm:$0xff]
      %v345 = vld [vmem:[%s0 + $0x564] sm:$0xff]
      %v346 = vld [vmem:[%s0 + $0x56c] sm:$0xff]
      %v347 = vld [vmem:[%s0 + $0x574] sm:$0xf]
      %v348 = vld [vmem:[%s0 + $0x578] sm:$0xff]
      %v349 = vld [vmem:[%s0 + $0x580] sm:$0xff]
      %v350 = vld [vmem:[%s0 + $0x588] sm:$0xff]
      %v351 = vld [vmem:[%s0 + $0x590] sm:$0xf]
      %v352 = vld [vmem:[%s0 + $0x594] sm:$0xff]
      %v353 = vld [vmem:[%s0 + $0x59c] sm:$0xff]
      %v354 = vld [vmem:[%s0 + $0x5a4] sm:$0xff]
      %v355 = vld [vmem:[%s0 + $0x5ac] sm:$0xf]
      %v356 = vld [vmem:[%s0 + $0x5b0] sm:$0xff]
      %v357 = vld [vmem:[%s0 + $0x5b8] sm:$0xff]
      %v358 = vld [vmem:[%s0 + $0x5c0] sm:$0xff]
      %v359 = vld [vmem:[%s0 + $0x5c8] sm:$0xf]
      %v360 = vld [vmem:[%s0 + $0x5cc] sm:$0xff]
      %v361 = vld [vmem:[%s0 + $0x5d4] sm:$0xff]
      %v362 = vld [vmem:[%s0 + $0x5dc] sm:$0xff]
      %v363 = vld [vmem:[%s0 + $0x5e4] sm:$0xf]
      %v364 = vld [vmem:[%s0 + $0x5e8] sm:$0xff]
      %v365 = vld [vmem:[%s0 + $0x5f0] sm:$0xff]
      %v366 = vld [vmem:[%s0 + $0x5f8] sm:$0xff]
      %v367 = vld [vmem:[%s0 + $0x600] sm:$0xf]
      %v368 = vld [vmem:[%s0 + $0x604] sm:$0xff]
      %v369 = vld [vmem:[%s0 + $0x60c] sm:$0xff]
      %v370 = vld [vmem:[%s0 + $0x614] sm:$0xff]
      %v371 = vld [vmem:[%s0 + $0x61c] sm:$0xf]
      %v372 = vld [vmem:[%s0 + $0x620] sm:$0xff]
      %v373 = vld [vmem:[%s0 + $0x628] sm:$0xff]
      %v374 = vld [vmem:[%s0 + $0x630] sm:$0xff]
      %v375 = vld [vmem:[%s0 + $0x638] sm:$0xf]
      %v376 = vld [vmem:[%s0 + $0x63c] sm:$0xff]
      %v377 = vld [vmem:[%s0 + $0x644] sm:$0xff]
      %v378 = vld [vmem:[%s0 + $0x64c] sm:$0xff]
      %v379 = vld [vmem:[%s0 + $0x654] sm:$0xf]
      %v380 = vld [vmem:[%s0 + $0x658] sm:$0xff]
      %v381 = vld [vmem:[%s0 + $0x660] sm:$0xff]
      %v382 = vld [vmem:[%s0 + $0x668] sm:$0xff]
      %v383 = vld [vmem:[%s0 + $0x670] sm:$0xf]
      %v384 = vld [vmem:[%s0 + $0x674] sm:$0xff]
      %v385 = vld [vmem:[%s0 + $0x67c] sm:$0xff]
      %v386 = vld [vmem:[%s0 + $0x684] sm:$0xff]
      %v387 = vld [vmem:[%s0 + $0x68c] sm:$0xf]
      %v388 = vld [vmem:[%s0 + $0x690] sm:$0xff]
      %v389 = vld [vmem:[%s0 + $0x698] sm:$0xff]
      %v390 = vld [vmem:[%s0 + $0x6a0] sm:$0xff]
      %v391 = vld [vmem:[%s0 + $0x6a8] sm:$0xf]
      %v392 = vld [vmem:[%s0 + $0x6ac] sm:$0xff]
      %v393 = vld [vmem:[%s0 + $0x6b4] sm:$0xff]
      %v394 = vld [vmem:[%s0 + $0x6bc] sm:$0xff]
      %v395 = vld [vmem:[%s0 + $0x6c4] sm:$0xf]
      %v396 = vld [vmem:[%s0 + $0x6c8] sm:$0xff]
      %v397 = vld [vmem:[%s0 + $0x6d0] sm:$0xff]
      %v398 = vld [vmem:[%s0 + $0x6d8] sm:$0xff]
      %v399 = vld [vmem:[%s0 + $0x6e0] sm:$0xf]
      %v400 = vld [vmem:[%s0 + $0x6e4] sm:$0xff]
      %v401 = vld [vmem:[%s0 + $0x6ec] sm:$0xff]
      %v402 = vld [vmem:[%s0 + $0x6f4] sm:$0xff]
      %v403 = vld [vmem:[%s0 + $0x6fc] sm:$0xf]
      %v404 = vld [vmem:[%s0 + $0x700] sm:$0xff]
      %v405 = vld [vmem:[%s0 + $0x708] sm:$0xff]
      %v406 = vld [vmem:[%s0 + $0x710] sm:$0xff]
      %v407 = vld [vmem:[%s0 + $0x718] sm:$0xf]
      %v408 = vld [vmem:[%s0 + $0x71c] sm:$0xff]
      %v409 = vld [vmem:[%s0 + $0x724] sm:$0xff]
      %v410 = vld [vmem:[%s0 + $0x72c] sm:$0xff]
      %v411 = vld [vmem:[%s0 + $0x734] sm:$0xf]
      %v412 = vld [vmem:[%s0 + $0x738] sm:$0xff]
      %v413 = vld [vmem:[%s0 + $0x740] sm:$0xff]
      %v414 = vld [vmem:[%s0 + $0x748] sm:$0xff]
      %v415 = vld [vmem:[%s0 + $0x750] sm:$0xf]
      %v416 = vld [vmem:[%s0 + $0x754] sm:$0xff]
      %v417 = vld [vmem:[%s0 + $0x75c] sm:$0xff]
      %v418 = vld [vmem:[%s0 + $0x764] sm:$0xff]
      %v419 = vld [vmem:[%s0 + $0x76c] sm:$0xf]
      %v420 = vld [vmem:[%s0 + $0x770] sm:$0xff]
      %v421 = vld [vmem:[%s0 + $0x778] sm:$0xff]
      %v422 = vld [vmem:[%s0 + $0x780] sm:$0xff]
      %v423 = vld [vmem:[%s0 + $0x788] sm:$0xf]
      %v424 = vld [vmem:[%s0 + $0x78c] sm:$0xff]
      %v425 = vld [vmem:[%s0 + $0x794] sm:$0xff]
      %v426 = vld [vmem:[%s0 + $0x79c] sm:$0xff]
      %v427 = vld [vmem:[%s0 + $0x7a4] sm:$0xf]
      %v428 = vld [vmem:[%s0 + $0x7a8] sm:$0xff]
      %v429 = vld [vmem:[%s0 + $0x7b0] sm:$0xff]
      %v430 = vld [vmem:[%s0 + $0x7b8] sm:$0xff]
      %v431 = vld [vmem:[%s0 + $0x7c0] sm:$0xf]
      %v432 = vld [vmem:[%s0 + $0x7c4] sm:$0xff]
      %v433 = vld [vmem:[%s0 + $0x7cc] sm:$0xff]
      %v434 = vld [vmem:[%s0 + $0x7d4] sm:$0xff]
      %v435 = vld [vmem:[%s0 + $0x7dc] sm:$0xf]
      %v436 = vld [vmem:[%s0 + $0x7e0] sm:$0xff]
      %v437 = vld [vmem:[%s0 + $0x7e8] sm:$0xff]
      %v438 = vld [vmem:[%s0 + $0x7f0] sm:$0xff]
      %v439 = vld [vmem:[%s0 + $0x7f8] sm:$0xf]
      %v440 = vld [vmem:[%s0 + $0x7fc] sm:$0xff]
      %v441 = vld [vmem:[%s0 + $0x804] sm:$0xff]
      %v442 = vld [vmem:[%s0 + $0x80c] sm:$0xff]
      %v443 = vld [vmem:[%s0 + $0x814] sm:$0xf]
      %v444 = vld [vmem:[%s0 + $0x818] sm:$0xff]
      %v445 = vld [vmem:[%s0 + $0x820] sm:$0xff]
      %v446 = vld [vmem:[%s0 + $0x828] sm:$0xff]
      %v447 = vld [vmem:[%s0 + $0x830] sm:$0xf]
      %v448 = vld [vmem:[%s0 + $0x834] sm:$0xff]
      %v449 = vld [vmem:[%s0 + $0x83c] sm:$0xff]
      %v450 = vld [vmem:[%s0 + $0x844] sm:$0xff]
      %v451 = vld [vmem:[%s0 + $0x84c] sm:$0xf]
      %v452 = vld [vmem:[%s0 + $0x850] sm:$0xff]
      %v453 = vld [vmem:[%s0 + $0x858] sm:$0xff]
      %v454 = vld [vmem:[%s0 + $0x860] sm:$0xff]
      %v455 = vld [vmem:[%s0 + $0x868] sm:$0xf]
      %v456 = vld [vmem:[%s0 + $0x86c] sm:$0xff]
      %v457 = vld [vmem:[%s0 + $0x874] sm:$0xff]
      %v458 = vld [vmem:[%s0 + $0x87c] sm:$0xff]
      %v459 = vld [vmem:[%s0 + $0x884] sm:$0xf]
      %v460 = vld [vmem:[%s0 + $0x888] sm:$0xff]
      %v461 = vld [vmem:[%s0 + $0x890] sm:$0xff]
      %v462 = vld [vmem:[%s0 + $0x898] sm:$0xff]
      %v463 = vld [vmem:[%s0 + $0x8a0] sm:$0xf]
      %v464 = vld [vmem:[%s0 + $0x8a4] sm:$0xff]
      %v465 = vld [vmem:[%s0 + $0x8ac] sm:$0xff]
      %v466 = vld [vmem:[%s0 + $0x8b4] sm:$0xff]
      %v467 = vld [vmem:[%s0 + $0x8bc] sm:$0xf]
      %v468 = vld [vmem:[%s0 + $0x8c0] sm:$0xff]
      %v469 = vld [vmem:[%s0 + $0x8c8] sm:$0xff]
      %v470 = vld [vmem:[%s0 + $0x8d0] sm:$0xff]
      %v471 = vld [vmem:[%s0 + $0x8d8] sm:$0xf]
      %v472 = vld [vmem:[%s0 + $0x8dc] sm:$0xff]
      %v473 = vld [vmem:[%s0 + $0x8e4] sm:$0xff]
      %v474 = vld [vmem:[%s0 + $0x8ec] sm:$0xff]
      %v475 = vld [vmem:[%s0 + $0x8f4] sm:$0xf]
      %v476 = vld [vmem:[%s0 + $0x8f8] sm:$0xff]
      %v477 = vld [vmem:[%s0 + $0x900] sm:$0xff]
      %v478 = vld [vmem:[%s0 + $0x908] sm:$0xff]
      %v479 = vld [vmem:[%s0 + $0x910] sm:$0xf]
      %v480 = vld [vmem:[%s0 + $0x914] sm:$0xff]
      %v481 = vld [vmem:[%s0 + $0x91c] sm:$0xff]
      %v482 = vld [vmem:[%s0 + $0x924] sm:$0xff]
      %v483 = vld [vmem:[%s0 + $0x92c] sm:$0xf]
      %v484 = vld [vmem:[%s0 + $0x930] sm:$0xff]
      %v485 = vld [vmem:[%s0 + $0x938] sm:$0xff]
      %v486 = vld [vmem:[%s0 + $0x940] sm:$0xff]
      %v487 = vld [vmem:[%s0 + $0x948] sm:$0xf]
      %v488 = vld [vmem:[%s0 + $0x94c] sm:$0xff]
      %v489 = vld [vmem:[%s0 + $0x954] sm:$0xff]
      %v490 = vld [vmem:[%s0 + $0x95c] sm:$0xff]
      %v491 = vld [vmem:[%s0 + $0x964] sm:$0xf]
      %v492 = vld [vmem:[%s0 + $0x968] sm:$0xff]
      %v493 = vld [vmem:[%s0 + $0x970] sm:$0xff]
      %v494 = vld [vmem:[%s0 + $0x978] sm:$0xff]
      %v495 = vld [vmem:[%s0 + $0x980] sm:$0xf]
      %v496 = vld [vmem:[%s0 + $0x984] sm:$0xff]
      %v497 = vld [vmem:[%s0 + $0x98c] sm:$0xff]
      %v498 = vld [vmem:[%s0 + $0x994] sm:$0xff]
      %v499 = vld [vmem:[%s0 + $0x99c] sm:$0xf]
      %v500 = vld [vmem:[%s0 + $0x9a0] sm:$0xff]
      %v501 = vld [vmem:[%s0 + $0x9a8] sm:$0xff]
      %v502 = vld [vmem:[%s0 + $0x9b0] sm:$0xff]
      %v503 = vld [vmem:[%s0 + $0x9b8] sm:$0xf]
      %v504 = vld [vmem:[%s0 + $0x9bc] sm:$0xff]
      %v505 = vld [vmem:[%s0 + $0x9c4] sm:$0xff]
      %v506 = vld [vmem:[%s0 + $0x9cc] sm:$0xff]
      %v507 = vld [vmem:[%s0 + $0x9d4] sm:$0xf]
      %v508 = vld [vmem:[%s0 + $0x9d8] sm:$0xff]
      %v509 = vld [vmem:[%s0 + $0x9e0] sm:$0xff]
      %v510 = vld [vmem:[%s0 + $0x9e8] sm:$0xff]
      %v511 = vld [vmem:[%s0 + $0x9f0] sm:$0xf]
      %v512 = vld [vmem:[%s0 + $0x9f4] sm:$0xff]
      %v513 = vld [vmem:[%s0 + $0x9fc] sm:$0xff]
      %v514 = vld [vmem:[%s0 + $0xa04] sm:$0xff]
      %v515 = vld [vmem:[%s0 + $0xa0c] sm:$0xf]
      %v516 = vld [vmem:[%s0 + $0xa10] sm:$0xff]
      %v517 = vld [vmem:[%s0 + $0xa18] sm:$0xff]
      %v518 = vld [vmem:[%s0 + $0xa20] sm:$0xff]
      %v519 = vld [vmem:[%s0 + $0xa28] sm:$0xf]
      %v520 = vld [vmem:[%s0 + $0xa2c] sm:$0xff]
      %v521 = vld [vmem:[%s0 + $0xa34] sm:$0xff]
      %v522 = vld [vmem:[%s0 + $0xa3c] sm:$0xff]
      %v523 = vld [vmem:[%s0 + $0xa44] sm:$0xf]
      %v524 = vld [vmem:[%s0 + $0xa48] sm:$0xff]
      %v525 = vld [vmem:[%s0 + $0xa50] sm:$0xff]
      %v526 = vld [vmem:[%s0 + $0xa58] sm:$0xff]
      %v527 = vld [vmem:[%s0 + $0xa60] sm:$0xf]
      %v528 = vld [vmem:[%s0 + $0xa64] sm:$0xff]
      %v529 = vld [vmem:[%s0 + $0xa6c] sm:$0xff]
      %v530 = vld [vmem:[%s0 + $0xa74] sm:$0xff]
      %v531 = vld [vmem:[%s0 + $0xa7c] sm:$0xf]
      %v532 = vld [vmem:[%s0 + $0xa80] sm:$0xff]
      %v533 = vld [vmem:[%s0 + $0xa88] sm:$0xff]
      %v534 = vld [vmem:[%s0 + $0xa90] sm:$0xff]
      %v535 = vld [vmem:[%s0 + $0xa98] sm:$0xf]
      %v536 = vld [vmem:[%s0 + $0xa9c] sm:$0xff]
      %v537 = vld [vmem:[%s0 + $0xaa4] sm:$0xff]
      %v538 = vld [vmem:[%s0 + $0xaac] sm:$0xff]
      %v539 = vld [vmem:[%s0 + $0xab4] sm:$0xf]
      %v540 = vld [vmem:[%s139] sm:$0xff]
      %v541 = vld [vmem:[%s139 + $0x8] sm:$0xff]
      %v542 = vld [vmem:[%s139 + $0x10] sm:$0xff]
      %v543 = vld [vmem:[%s139 + $0x18] sm:$0xff]
      %v544 = vld [vmem:[%s139 + $0x20] sm:$0xff]
      %v545 = vld [vmem:[%s139 + $0x28] sm:$0xff]
      %v546 = vld [vmem:[%s139 + $0x30] sm:$0xff]
      %v547 = vld [vmem:[%s139 + $0x38] sm:$0xff]
      %v548 = vld [vmem:[%s139 + $0x40] sm:$0xff]
      %v549 = vld [vmem:[%s139 + $0x48] sm:$0xff]
      %v550 = vld [vmem:[%s139 + $0x50] sm:$0xff]
      %v551 = vld [vmem:[%s139 + $0x58] sm:$0xff]
      %v552 = vld [vmem:[%s139 + $0x60] sm:$0xff]
      %v553 = vld [vmem:[%s139 + $0x68] sm:$0xff]
      %v554 = vld [vmem:[%s139 + $0x70] sm:$0xff]
      %v555 = vld [vmem:[%s139 + $0x78] sm:$0xff]
      %v556 = vld [vmem:[%s139 + $0x80] sm:$0xff]
      %v557 = vld [vmem:[%s139 + $0x88] sm:$0xff]
      %v558 = vld [vmem:[%s139 + $0x90] sm:$0xff]
      %v559 = vld [vmem:[%s139 + $0x98] sm:$0xff]
      %v560 = vld [vmem:[%s139 + $0xa0] sm:$0xff]
      %v561 = vld [vmem:[%s139 + $0xa8] sm:$0xff]
      %v562 = vld [vmem:[%s139 + $0xb0] sm:$0xff]
      %v563 = vld [vmem:[%s139 + $0xb8] sm:$0xff]
      %v564 = vld [vmem:[%s139 + $0xc0] sm:$0xff]
      %v565 = vld [vmem:[%s139 + $0xc8] sm:$0xff]
      %v566 = vld [vmem:[%s139 + $0xd0] sm:$0xff]
      %v567 = vld [vmem:[%s139 + $0xd8] sm:$0xff]
      %v568 = vld [vmem:[%s139 + $0xe0] sm:$0xff]
      %v569 = vld [vmem:[%s139 + $0xe8] sm:$0xff]
      %v570 = vld [vmem:[%s139 + $0xf0] sm:$0xff]
      %v571 = vld [vmem:[%s139 + $0xf8] sm:$0xff]
      %v572 = vld [vmem:[%s139 + $0x100] sm:$0xff]
      %v573 = vld [vmem:[%s139 + $0x108] sm:$0xff]
      %v574 = vld [vmem:[%s139 + $0x110] sm:$0xff]
      %v575 = vld [vmem:[%s139 + $0x118] sm:$0xff]
      %v576 = vld [vmem:[%s139 + $0x120] sm:$0xff]
      %v577 = vld [vmem:[%s139 + $0x128] sm:$0xff]
      %v578 = vld [vmem:[%s139 + $0x130] sm:$0xff]
      %v579 = vld [vmem:[%s139 + $0x138] sm:$0xff]
      %v580 = vld [vmem:[%s139 + $0x140] sm:$0xff]
      %v581 = vld [vmem:[%s139 + $0x148] sm:$0xff]
      %v582 = vld [vmem:[%s139 + $0x150] sm:$0xff]
      %v583 = vld [vmem:[%s139 + $0x158] sm:$0xff]
      %v584 = vld [vmem:[%s139 + $0x160] sm:$0xff]
      %v585 = vld [vmem:[%s139 + $0x168] sm:$0xff]
      %v586 = vld [vmem:[%s139 + $0x170] sm:$0xff]
      %v587 = vld [vmem:[%s139 + $0x178] sm:$0xff]
      %v588 = vld [vmem:[%s139 + $0x180] sm:$0xff]
      %v589 = vld [vmem:[%s139 + $0x188] sm:$0xff]
      %v590 = vld [vmem:[%s139 + $0x190] sm:$0xff]
      %v591 = vld [vmem:[%s139 + $0x198] sm:$0xff]
      %v592 = vld [vmem:[%s139 + $0x1a0] sm:$0xff]
      %v593 = vld [vmem:[%s139 + $0x1a8] sm:$0xff]
      %v594 = vld [vmem:[%s139 + $0x1b0] sm:$0xff]
      %v595 = vld [vmem:[%s139 + $0x1b8] sm:$0xff]
      %v596 = vld [vmem:[%s139 + $0x1c0] sm:$0xff]
      %v597 = vld [vmem:[%s139 + $0x1c8] sm:$0xff]
      %v598 = vld [vmem:[%s139 + $0x1d0] sm:$0xff]
      %v599 = vld [vmem:[%s139 + $0x1d8] sm:$0xff]
      %v600 = vld [vmem:[%s139 + $0x1e0] sm:$0xff]
      %v601 = vld [vmem:[%s139 + $0x1e8] sm:$0xff]
      %v602 = vld [vmem:[%s139 + $0x1f0] sm:$0xff]
      %v603 = vld [vmem:[%s139 + $0x1f8] sm:$0xff]
      %v604 = vld [vmem:[%s139 + $0x200] sm:$0xff]
      %v605 = vld [vmem:[%s139 + $0x208] sm:$0xff]
      %v606 = vld [vmem:[%s139 + $0x210] sm:$0xff]
      %v607 = vld [vmem:[%s139 + $0x218] sm:$0xff]
      %v608 = vld [vmem:[%s139 + $0x220] sm:$0xff]
      %v609 = vld [vmem:[%s139 + $0x228] sm:$0xff]
      %v610 = vld [vmem:[%s139 + $0x230] sm:$0xff]
      %v611 = vld [vmem:[%s139 + $0x238] sm:$0xff]
      %v612 = vld [vmem:[%s139 + $0x240] sm:$0xff]
      %v613 = vld [vmem:[%s139 + $0x248] sm:$0xff]
      %v614 = vld [vmem:[%s139 + $0x250] sm:$0xff]
      %v615 = vld [vmem:[%s139 + $0x258] sm:$0xff]
      %v616 = vld [vmem:[%s139 + $0x260] sm:$0xff]
      %v617 = vld [vmem:[%s139 + $0x268] sm:$0xff]
      %v618 = vld [vmem:[%s139 + $0x270] sm:$0xff]
      %v619 = vld [vmem:[%s139 + $0x278] sm:$0xff]
      %v620 = vld [vmem:[%s139 + $0x280] sm:$0xff]
      %v621 = vld [vmem:[%s139 + $0x288] sm:$0xff]
      %v622 = vld [vmem:[%s139 + $0x290] sm:$0xff]
      %v623 = vld [vmem:[%s139 + $0x298] sm:$0xff]
      %v624 = vld [vmem:[%s139 + $0x2a0] sm:$0xff]
      %v625 = vld [vmem:[%s139 + $0x2a8] sm:$0xff]
      %v626 = vld [vmem:[%s139 + $0x2b0] sm:$0xff]
      %v627 = vld [vmem:[%s139 + $0x2b8] sm:$0xff]
      %v628 = vld [vmem:[%s139 + $0x2c0] sm:$0xff]
      %v629 = vld [vmem:[%s139 + $0x2c8] sm:$0xff]
      %v630 = vld [vmem:[%s139 + $0x2d0] sm:$0xff]
      %v631 = vld [vmem:[%s139 + $0x2d8] sm:$0xff]
      %v632 = vld [vmem:[%s139 + $0x2e0] sm:$0xff]
      %v633 = vld [vmem:[%s139 + $0x2e8] sm:$0xff]
      %v634 = vld [vmem:[%s139 + $0x2f0] sm:$0xff]
      %v635 = vld [vmem:[%s139 + $0x2f8] sm:$0xff]
      %v636 = vld [vmem:[%s139 + $0x300] sm:$0xff]
      %v637 = vld [vmem:[%s139 + $0x308] sm:$0xff]
      %v638 = vpack.c.bf16 %v541, %v540
      %v639 = vpack.c.bf16 %v543, %v542
      %v640 = vpack.c.bf16 %v545, %v544
      %v641 = vpack.c.bf16 %v547, %v546
      %v642 = vpack.c.bf16 %v549, %v548
      %v643 = vpack.c.bf16 %v551, %v550
      %v644 = vpack.c.bf16 %v553, %v552
      %v645 = vpack.c.bf16 %v555, %v554
      %v646 = vpack.c.bf16 %v557, %v556
      %v647 = vpack.c.bf16 %v559, %v558
      %v648 = vpack.c.bf16 %v561, %v560
      %v649 = vpack.c.bf16 %v563, %v562
      %v650 = vpack.c.bf16 %v565, %v564
      %v651 = vpack.c.bf16 %v567, %v566
      %v652 = vpack.c.bf16 %v569, %v568
      %v653 = vpack.c.bf16 %v571, %v570
      %v654 = vpack.c.bf16 %v573, %v572
      %v655 = vpack.c.bf16 %v575, %v574
      %v656 = vpack.c.bf16 %v577, %v576
      %v657 = vpack.c.bf16 %v579, %v578
      %v658 = vpack.c.bf16 %v581, %v580
      %v659 = vpack.c.bf16 %v583, %v582
      %v660 = vpack.c.bf16 %v585, %v584
      %v661 = vpack.c.bf16 %v587, %v586
      %v662 = vpack.c.bf16 %v589, %v588
      %v663 = vpack.c.bf16 %v591, %v590
      %v664 = vpack.c.bf16 %v593, %v592
      %v665 = vpack.c.bf16 %v595, %v594
      %v666 = vpack.c.bf16 %v597, %v596
      %v667 = vpack.c.bf16 %v599, %v598
      %v668 = vpack.c.bf16 %v601, %v600
      %v669 = vpack.c.bf16 %v603, %v602
      %v670 = vpack.c.bf16 %v605, %v604
      %v671 = vpack.c.bf16 %v607, %v606
      %v672 = vpack.c.bf16 %v609, %v608
      %v673 = vpack.c.bf16 %v611, %v610
      %v674 = vpack.c.bf16 %v613, %v612
      %v675 = vpack.c.bf16 %v615, %v614
      %v676 = vpack.c.bf16 %v617, %v616
      %v677 = vpack.c.bf16 %v619, %v618
      %v678 = vpack.c.bf16 %v621, %v620
      %v679 = vpack.c.bf16 %v623, %v622
      %v680 = vpack.c.bf16 %v625, %v624
      %v681 = vpack.c.bf16 %v627, %v626
      %v682 = vpack.c.bf16 %v629, %v628
      %v683 = vpack.c.bf16 %v631, %v630
      %v684 = vpack.c.bf16 %v633, %v632
      %v685 = vpack.c.bf16 %v635, %v634
      %v686 = vpack.c.bf16 %v637, %v636
      %v1079 = vunpack.c.l.b16 %v148
      %v1080 = vunpack.c.h.b16 %v148
      %v1081 = vunpack.c.l.b16 %v149
      %v1082 = vunpack.c.h.b16 %v149
      %v1083 = vunpack.c.l.b16 %v150
      %v1084 = vunpack.c.h.b16 %v150
      %v1085 = vunpack.c.l.b16 %v151
      %v1086 = vunpack.c.l.b16 %v152
      %v1087 = vunpack.c.h.b16 %v152
      %v1088 = vunpack.c.l.b16 %v153
      %v1089 = vunpack.c.h.b16 %v153
      %v1090 = vunpack.c.l.b16 %v154
      %v1091 = vunpack.c.h.b16 %v154
      %v1092 = vunpack.c.l.b16 %v155
      %v1093 = vunpack.c.l.b16 %v156
      %v1094 = vunpack.c.h.b16 %v156
      %v1095 = vunpack.c.l.b16 %v157
      %v1096 = vunpack.c.h.b16 %v157
      %v1097 = vunpack.c.l.b16 %v158
      %v1098 = vunpack.c.h.b16 %v158
      %v1099 = vunpack.c.l.b16 %v159
      %v1100 = vunpack.c.l.b16 %v160
      %v1101 = vunpack.c.h.b16 %v160
      %v1102 = vunpack.c.l.b16 %v161
      %v1103 = vunpack.c.h.b16 %v161
      %v1104 = vunpack.c.l.b16 %v162
      %v1105 = vunpack.c.h.b16 %v162
      %v1106 = vunpack.c.l.b16 %v163
      %v1107 = vunpack.c.l.b16 %v164
      %v1108 = vunpack.c.h.b16 %v164
      %v1109 = vunpack.c.l.b16 %v165
      %v1110 = vunpack.c.h.b16 %v165
      %v1111 = vunpack.c.l.b16 %v166
      %v1112 = vunpack.c.h.b16 %v166
      %v1113 = vunpack.c.l.b16 %v167
      %v1114 = vunpack.c.l.b16 %v168
      %v1115 = vunpack.c.h.b16 %v168
      %v1116 = vunpack.c.l.b16 %v169
      %v1117 = vunpack.c.h.b16 %v169
      %v1118 = vunpack.c.l.b16 %v170
      %v1119 = vunpack.c.h.b16 %v170
      %v1120 = vunpack.c.l.b16 %v171
      %v1121 = vunpack.c.l.b16 %v172
      %v1122 = vunpack.c.h.b16 %v172
      %v1123 = vunpack.c.l.b16 %v173
      %v1124 = vunpack.c.h.b16 %v173
      %v1125 = vunpack.c.l.b16 %v174
      %v1126 = vunpack.c.h.b16 %v174
      %v1127 = vunpack.c.l.b16 %v175
      %v1128 = vunpack.c.l.b16 %v176
      %v1129 = vunpack.c.h.b16 %v176
      %v1130 = vunpack.c.l.b16 %v177
      %v1131 = vunpack.c.h.b16 %v177
      %v1132 = vunpack.c.l.b16 %v178
      %v1133 = vunpack.c.h.b16 %v178
      %v1134 = vunpack.c.l.b16 %v179
      %v1135 = vunpack.c.l.b16 %v180
      %v1136 = vunpack.c.h.b16 %v180
      %v1137 = vunpack.c.l.b16 %v181
      %v1138 = vunpack.c.h.b16 %v181
      %v1139 = vunpack.c.l.b16 %v182
      %v1140 = vunpack.c.h.b16 %v182
      %v1141 = vunpack.c.l.b16 %v183
      %v1142 = vunpack.c.l.b16 %v184
      %v1143 = vunpack.c.h.b16 %v184
      %v1144 = vunpack.c.l.b16 %v185
      %v1145 = vunpack.c.h.b16 %v185
      %v1146 = vunpack.c.l.b16 %v186
      %v1147 = vunpack.c.h.b16 %v186
      %v1148 = vunpack.c.l.b16 %v187
      %v1149 = vunpack.c.l.b16 %v188
      %v1150 = vunpack.c.h.b16 %v188
      %v1151 = vunpack.c.l.b16 %v189
      %v1152 = vunpack.c.h.b16 %v189
      %v1153 = vunpack.c.l.b16 %v190
      %v1154 = vunpack.c.h.b16 %v190
      %v1155 = vunpack.c.l.b16 %v191
      %v1156 = vunpack.c.l.b16 %v192
      %v1157 = vunpack.c.h.b16 %v192
      %v1158 = vunpack.c.l.b16 %v193
      %v1159 = vunpack.c.h.b16 %v193
      %v1160 = vunpack.c.l.b16 %v194
      %v1161 = vunpack.c.h.b16 %v194
      %v1162 = vunpack.c.l.b16 %v195
      %v1163 = vunpack.c.l.b16 %v196
      %v1164 = vunpack.c.h.b16 %v196
      %v1165 = vunpack.c.l.b16 %v197
      %v1166 = vunpack.c.h.b16 %v197
      %v1167 = vunpack.c.l.b16 %v198
      %v1168 = vunpack.c.h.b16 %v198
      %v1169 = vunpack.c.l.b16 %v199
      %v1170 = vunpack.c.l.b16 %v200
      %v1171 = vunpack.c.h.b16 %v200
      %v1172 = vunpack.c.l.b16 %v201
      %v1173 = vunpack.c.h.b16 %v201
      %v1174 = vunpack.c.l.b16 %v202
      %v1175 = vunpack.c.h.b16 %v202
      %v1176 = vunpack.c.l.b16 %v203
      %v1177 = vunpack.c.l.b16 %v204
      %v1178 = vunpack.c.h.b16 %v204
      %v1179 = vunpack.c.l.b16 %v205
      %v1180 = vunpack.c.h.b16 %v205
      %v1181 = vunpack.c.l.b16 %v206
      %v1182 = vunpack.c.h.b16 %v206
      %v1183 = vunpack.c.l.b16 %v207
      %v1184 = vunpack.c.l.b16 %v208
      %v1185 = vunpack.c.h.b16 %v208
      %v1186 = vunpack.c.l.b16 %v209
      %v1187 = vunpack.c.h.b16 %v209
      %v1188 = vunpack.c.l.b16 %v210
      %v1189 = vunpack.c.h.b16 %v210
      %v1190 = vunpack.c.l.b16 %v211
      %v1191 = vunpack.c.l.b16 %v212
      %v1192 = vunpack.c.h.b16 %v212
      %v1193 = vunpack.c.l.b16 %v213
      %v1194 = vunpack.c.h.b16 %v213
      %v1195 = vunpack.c.l.b16 %v214
      %v1196 = vunpack.c.h.b16 %v214
      %v1197 = vunpack.c.l.b16 %v215
      %v1198 = vunpack.c.l.b16 %v216
      %v1199 = vunpack.c.h.b16 %v216
      %v1200 = vunpack.c.l.b16 %v217
      %v1201 = vunpack.c.h.b16 %v217
      %v1202 = vunpack.c.l.b16 %v218
      %v1203 = vunpack.c.h.b16 %v218
      %v1204 = vunpack.c.l.b16 %v219
      %v1205 = vunpack.c.l.b16 %v220
      %v1206 = vunpack.c.h.b16 %v220
      %v1207 = vunpack.c.l.b16 %v221
      %v1208 = vunpack.c.h.b16 %v221
      %v1209 = vunpack.c.l.b16 %v222
      %v1210 = vunpack.c.h.b16 %v222
      %v1211 = vunpack.c.l.b16 %v223
      %v1212 = vunpack.c.l.b16 %v224
      %v1213 = vunpack.c.h.b16 %v224
      %v1214 = vunpack.c.l.b16 %v225
      %v1215 = vunpack.c.h.b16 %v225
      %v1216 = vunpack.c.l.b16 %v226
      %v1217 = vunpack.c.h.b16 %v226
      %v1218 = vunpack.c.l.b16 %v227
      %v1219 = vunpack.c.l.b16 %v228
      %v1220 = vunpack.c.h.b16 %v228
      %v1221 = vunpack.c.l.b16 %v229
      %v1222 = vunpack.c.h.b16 %v229
      %v1223 = vunpack.c.l.b16 %v230
      %v1224 = vunpack.c.h.b16 %v230
      %v1225 = vunpack.c.l.b16 %v231
      %v1226 = vunpack.c.l.b16 %v232
      %v1227 = vunpack.c.h.b16 %v232
      %v1228 = vunpack.c.l.b16 %v233
      %v1229 = vunpack.c.h.b16 %v233
      %v1230 = vunpack.c.l.b16 %v234
      %v1231 = vunpack.c.h.b16 %v234
      %v1232 = vunpack.c.l.b16 %v235
      %v1233 = vunpack.c.l.b16 %v236
      %v1234 = vunpack.c.h.b16 %v236
      %v1235 = vunpack.c.l.b16 %v237
      %v1236 = vunpack.c.h.b16 %v237
      %v1237 = vunpack.c.l.b16 %v238
      %v1238 = vunpack.c.h.b16 %v238
      %v1239 = vunpack.c.l.b16 %v239
      %v1240 = vunpack.c.l.b16 %v240
      %v1241 = vunpack.c.h.b16 %v240
      %v1242 = vunpack.c.l.b16 %v241
      %v1243 = vunpack.c.h.b16 %v241
      %v1244 = vunpack.c.l.b16 %v242
      %v1245 = vunpack.c.h.b16 %v242
      %v1246 = vunpack.c.l.b16 %v243
      %v1247 = vunpack.c.l.b16 %v244
      %v1248 = vunpack.c.h.b16 %v244
      %v1249 = vunpack.c.l.b16 %v245
      %v1250 = vunpack.c.h.b16 %v245
      %v1251 = vunpack.c.l.b16 %v246
      %v1252 = vunpack.c.h.b16 %v246
      %v1253 = vunpack.c.l.b16 %v247
      %v1254 = vunpack.c.l.b16 %v248
      %v1255 = vunpack.c.h.b16 %v248
      %v1256 = vunpack.c.l.b16 %v249
      %v1257 = vunpack.c.h.b16 %v249
      %v1258 = vunpack.c.l.b16 %v250
      %v1259 = vunpack.c.h.b16 %v250
      %v1260 = vunpack.c.l.b16 %v251
      %v1261 = vunpack.c.l.b16 %v252
      %v1262 = vunpack.c.h.b16 %v252
      %v1263 = vunpack.c.l.b16 %v253
      %v1264 = vunpack.c.h.b16 %v253
      %v1265 = vunpack.c.l.b16 %v254
      %v1266 = vunpack.c.h.b16 %v254
      %v1267 = vunpack.c.l.b16 %v255
      %v1268 = vunpack.c.l.b16 %v256
      %v1269 = vunpack.c.h.b16 %v256
      %v1270 = vunpack.c.l.b16 %v257
      %v1271 = vunpack.c.h.b16 %v257
      %v1272 = vunpack.c.l.b16 %v258
      %v1273 = vunpack.c.h.b16 %v258
      %v1274 = vunpack.c.l.b16 %v259
      %v1275 = vunpack.c.l.b16 %v260
      %v1276 = vunpack.c.h.b16 %v260
      %v1277 = vunpack.c.l.b16 %v261
      %v1278 = vunpack.c.h.b16 %v261
      %v1279 = vunpack.c.l.b16 %v262
      %v1280 = vunpack.c.h.b16 %v262
      %v1281 = vunpack.c.l.b16 %v263
      %v1282 = vunpack.c.l.b16 %v264
      %v1283 = vunpack.c.h.b16 %v264
      %v1284 = vunpack.c.l.b16 %v265
      %v1285 = vunpack.c.h.b16 %v265
      %v1286 = vunpack.c.l.b16 %v266
      %v1287 = vunpack.c.h.b16 %v266
      %v1288 = vunpack.c.l.b16 %v267
      %v1289 = vunpack.c.l.b16 %v268
      %v1290 = vunpack.c.h.b16 %v268
      %v1291 = vunpack.c.l.b16 %v269
      %v1292 = vunpack.c.h.b16 %v269
      %v1293 = vunpack.c.l.b16 %v270
      %v1294 = vunpack.c.h.b16 %v270
      %v1295 = vunpack.c.l.b16 %v271
      %v1296 = vunpack.c.l.b16 %v272
      %v1297 = vunpack.c.h.b16 %v272
      %v1298 = vunpack.c.l.b16 %v273
      %v1299 = vunpack.c.h.b16 %v273
      %v1300 = vunpack.c.l.b16 %v274
      %v1301 = vunpack.c.h.b16 %v274
      %v1302 = vunpack.c.l.b16 %v275
      %v1303 = vunpack.c.l.b16 %v276
      %v1304 = vunpack.c.h.b16 %v276
      %v1305 = vunpack.c.l.b16 %v277
      %v1306 = vunpack.c.h.b16 %v277
      %v1307 = vunpack.c.l.b16 %v278
      %v1308 = vunpack.c.h.b16 %v278
      %v1309 = vunpack.c.l.b16 %v279
      %v1310 = vunpack.c.l.b16 %v280
      %v1311 = vunpack.c.h.b16 %v280
      %v1312 = vunpack.c.l.b16 %v281
      %v1313 = vunpack.c.h.b16 %v281
      %v1314 = vunpack.c.l.b16 %v282
      %v1315 = vunpack.c.h.b16 %v282
      %v1316 = vunpack.c.l.b16 %v283
      %v1317 = vunpack.c.l.b16 %v284
      %v1318 = vunpack.c.h.b16 %v284
      %v1319 = vunpack.c.l.b16 %v285
      %v1320 = vunpack.c.h.b16 %v285
      %v1321 = vunpack.c.l.b16 %v286
      %v1322 = vunpack.c.h.b16 %v286
      %v1323 = vunpack.c.l.b16 %v287
      %v1324 = vunpack.c.l.b16 %v288
      %v1325 = vunpack.c.h.b16 %v288
      %v1326 = vunpack.c.l.b16 %v289
      %v1327 = vunpack.c.h.b16 %v289
      %v1328 = vunpack.c.l.b16 %v290
      %v1329 = vunpack.c.h.b16 %v290
      %v1330 = vunpack.c.l.b16 %v291
      %v1331 = vunpack.c.l.b16 %v292
      %v1332 = vunpack.c.h.b16 %v292
      %v1333 = vunpack.c.l.b16 %v293
      %v1334 = vunpack.c.h.b16 %v293
      %v1335 = vunpack.c.l.b16 %v294
      %v1336 = vunpack.c.h.b16 %v294
      %v1337 = vunpack.c.l.b16 %v295
      %v1338 = vunpack.c.l.b16 %v296
      %v1339 = vunpack.c.h.b16 %v296
      %v1340 = vunpack.c.l.b16 %v297
      %v1341 = vunpack.c.h.b16 %v297
      %v1342 = vunpack.c.l.b16 %v298
      %v1343 = vunpack.c.h.b16 %v298
      %v1344 = vunpack.c.l.b16 %v299
      %v1345 = vunpack.c.l.b16 %v300
      %v1346 = vunpack.c.h.b16 %v300
      %v1347 = vunpack.c.l.b16 %v301
      %v1348 = vunpack.c.h.b16 %v301
      %v1349 = vunpack.c.l.b16 %v302
      %v1350 = vunpack.c.h.b16 %v302
      %v1351 = vunpack.c.l.b16 %v303
      %v1352 = vunpack.c.l.b16 %v304
      %v1353 = vunpack.c.h.b16 %v304
      %v1354 = vunpack.c.l.b16 %v305
      %v1355 = vunpack.c.h.b16 %v305
      %v1356 = vunpack.c.l.b16 %v306
      %v1357 = vunpack.c.h.b16 %v306
      %v1358 = vunpack.c.l.b16 %v307
      %v1359 = vunpack.c.l.b16 %v308
      %v1360 = vunpack.c.h.b16 %v308
      %v1361 = vunpack.c.l.b16 %v309
      %v1362 = vunpack.c.h.b16 %v309
      %v1363 = vunpack.c.l.b16 %v310
      %v1364 = vunpack.c.h.b16 %v310
      %v1365 = vunpack.c.l.b16 %v311
      %v1366 = vunpack.c.l.b16 %v312
      %v1367 = vunpack.c.h.b16 %v312
      %v1368 = vunpack.c.l.b16 %v313
      %v1369 = vunpack.c.h.b16 %v313
      %v1370 = vunpack.c.l.b16 %v314
      %v1371 = vunpack.c.h.b16 %v314
      %v1372 = vunpack.c.l.b16 %v315
      %v1373 = vunpack.c.l.b16 %v316
      %v1374 = vunpack.c.h.b16 %v316
      %v1375 = vunpack.c.l.b16 %v317
      %v1376 = vunpack.c.h.b16 %v317
      %v1377 = vunpack.c.l.b16 %v318
      %v1378 = vunpack.c.h.b16 %v318
      %v1379 = vunpack.c.l.b16 %v319
      %v1380 = vunpack.c.l.b16 %v320
      %v1381 = vunpack.c.h.b16 %v320
      %v1382 = vunpack.c.l.b16 %v321
      %v1383 = vunpack.c.h.b16 %v321
      %v1384 = vunpack.c.l.b16 %v322
      %v1385 = vunpack.c.h.b16 %v322
      %v1386 = vunpack.c.l.b16 %v323
      %v1387 = vunpack.c.l.b16 %v324
      %v1388 = vunpack.c.h.b16 %v324
      %v1389 = vunpack.c.l.b16 %v325
      %v1390 = vunpack.c.h.b16 %v325
      %v1391 = vunpack.c.l.b16 %v326
      %v1392 = vunpack.c.h.b16 %v326
      %v1393 = vunpack.c.l.b16 %v327
      %v1394 = vunpack.c.l.b16 %v328
      %v1395 = vunpack.c.h.b16 %v328
      %v1396 = vunpack.c.l.b16 %v329
      %v1397 = vunpack.c.h.b16 %v329
      %v1398 = vunpack.c.l.b16 %v330
      %v1399 = vunpack.c.h.b16 %v330
      %v1400 = vunpack.c.l.b16 %v331
      %v1401 = vunpack.c.l.b16 %v332
      %v1402 = vunpack.c.h.b16 %v332
      %v1403 = vunpack.c.l.b16 %v333
      %v1404 = vunpack.c.h.b16 %v333
      %v1405 = vunpack.c.l.b16 %v334
      %v1406 = vunpack.c.h.b16 %v334
      %v1407 = vunpack.c.l.b16 %v335
      %v1408 = vunpack.c.l.b16 %v336
      %v1409 = vunpack.c.h.b16 %v336
      %v1410 = vunpack.c.l.b16 %v337
      %v1411 = vunpack.c.h.b16 %v337
      %v1412 = vunpack.c.l.b16 %v338
      %v1413 = vunpack.c.h.b16 %v338
      %v1414 = vunpack.c.l.b16 %v339
      %v1415 = vunpack.c.l.b16 %v340
      %v1416 = vunpack.c.h.b16 %v340
      %v1417 = vunpack.c.l.b16 %v341
      %v1418 = vunpack.c.h.b16 %v341
      %v1419 = vunpack.c.l.b16 %v342
      %v1420 = vunpack.c.h.b16 %v342
      %v1421 = vunpack.c.l.b16 %v343
      %v1422 = vunpack.c.l.b16 %v344
      %v1423 = vunpack.c.h.b16 %v344
      %v1424 = vunpack.c.l.b16 %v345
      %v1425 = vunpack.c.h.b16 %v345
      %v1426 = vunpack.c.l.b16 %v346
      %v1427 = vunpack.c.h.b16 %v346
      %v1428 = vunpack.c.l.b16 %v347
      %v1429 = vunpack.c.l.b16 %v348
      %v1430 = vunpack.c.h.b16 %v348
      %v1431 = vunpack.c.l.b16 %v349
      %v1432 = vunpack.c.h.b16 %v349
      %v1433 = vunpack.c.l.b16 %v350
      %v1434 = vunpack.c.h.b16 %v350
      %v1435 = vunpack.c.l.b16 %v351
      %v1436 = vunpack.c.l.b16 %v352
      %v1437 = vunpack.c.h.b16 %v352
      %v1438 = vunpack.c.l.b16 %v353
      %v1439 = vunpack.c.h.b16 %v353
      %v1440 = vunpack.c.l.b16 %v354
      %v1441 = vunpack.c.h.b16 %v354
      %v1442 = vunpack.c.l.b16 %v355
      %v1443 = vunpack.c.l.b16 %v356
      %v1444 = vunpack.c.h.b16 %v356
      %v1445 = vunpack.c.l.b16 %v357
      %v1446 = vunpack.c.h.b16 %v357
      %v1447 = vunpack.c.l.b16 %v358
      %v1448 = vunpack.c.h.b16 %v358
      %v1449 = vunpack.c.l.b16 %v359
      %v1450 = vunpack.c.l.b16 %v360
      %v1451 = vunpack.c.h.b16 %v360
      %v1452 = vunpack.c.l.b16 %v361
      %v1453 = vunpack.c.h.b16 %v361
      %v1454 = vunpack.c.l.b16 %v362
      %v1455 = vunpack.c.h.b16 %v362
      %v1456 = vunpack.c.l.b16 %v363
      %v1457 = vunpack.c.l.b16 %v364
      %v1458 = vunpack.c.h.b16 %v364
      %v1459 = vunpack.c.l.b16 %v365
      %v1460 = vunpack.c.h.b16 %v365
      %v1461 = vunpack.c.l.b16 %v366
      %v1462 = vunpack.c.h.b16 %v366
      %v1463 = vunpack.c.l.b16 %v367
      %v1464 = vunpack.c.l.b16 %v368
      %v1465 = vunpack.c.h.b16 %v368
      %v1466 = vunpack.c.l.b16 %v369
      %v1467 = vunpack.c.h.b16 %v369
      %v1468 = vunpack.c.l.b16 %v370
      %v1469 = vunpack.c.h.b16 %v370
      %v1470 = vunpack.c.l.b16 %v371
      %v1471 = vunpack.c.l.b16 %v372
      %v1472 = vunpack.c.h.b16 %v372
      %v1473 = vunpack.c.l.b16 %v373
      %v1474 = vunpack.c.h.b16 %v373
      %v1475 = vunpack.c.l.b16 %v374
      %v1476 = vunpack.c.h.b16 %v374
      %v1477 = vunpack.c.l.b16 %v375
      %v1478 = vunpack.c.l.b16 %v376
      %v1479 = vunpack.c.h.b16 %v376
      %v1480 = vunpack.c.l.b16 %v377
      %v1481 = vunpack.c.h.b16 %v377
      %v1482 = vunpack.c.l.b16 %v378
      %v1483 = vunpack.c.h.b16 %v378
      %v1484 = vunpack.c.l.b16 %v379
      %v1485 = vunpack.c.l.b16 %v380
      %v1486 = vunpack.c.h.b16 %v380
      %v1487 = vunpack.c.l.b16 %v381
      %v1488 = vunpack.c.h.b16 %v381
      %v1489 = vunpack.c.l.b16 %v382
      %v1490 = vunpack.c.h.b16 %v382
      %v1491 = vunpack.c.l.b16 %v383
      %v1492 = vunpack.c.l.b16 %v384
      %v1493 = vunpack.c.h.b16 %v384
      %v1494 = vunpack.c.l.b16 %v385
      %v1495 = vunpack.c.h.b16 %v385
      %v1496 = vunpack.c.l.b16 %v386
      %v1497 = vunpack.c.h.b16 %v386
      %v1498 = vunpack.c.l.b16 %v387
      %v1499 = vunpack.c.l.b16 %v388
      %v1500 = vunpack.c.h.b16 %v388
      %v1501 = vunpack.c.l.b16 %v389
      %v1502 = vunpack.c.h.b16 %v389
      %v1503 = vunpack.c.l.b16 %v390
      %v1504 = vunpack.c.h.b16 %v390
      %v1505 = vunpack.c.l.b16 %v391
      %v1506 = vunpack.c.l.b16 %v392
      %v1507 = vunpack.c.h.b16 %v392
      %v1508 = vunpack.c.l.b16 %v393
      %v1509 = vunpack.c.h.b16 %v393
      %v1510 = vunpack.c.l.b16 %v394
      %v1511 = vunpack.c.h.b16 %v394
      %v1512 = vunpack.c.l.b16 %v395
      %v1513 = vunpack.c.l.b16 %v396
      %v1514 = vunpack.c.h.b16 %v396
      %v1515 = vunpack.c.l.b16 %v397
      %v1516 = vunpack.c.h.b16 %v397
      %v1517 = vunpack.c.l.b16 %v398
      %v1518 = vunpack.c.h.b16 %v398
      %v1519 = vunpack.c.l.b16 %v399
      %v1520 = vunpack.c.l.b16 %v400
      %v1521 = vunpack.c.h.b16 %v400
      %v1522 = vunpack.c.l.b16 %v401
      %v1523 = vunpack.c.h.b16 %v401
      %v1524 = vunpack.c.l.b16 %v402
      %v1525 = vunpack.c.h.b16 %v402
      %v1526 = vunpack.c.l.b16 %v403
      %v1527 = vunpack.c.l.b16 %v404
      %v1528 = vunpack.c.h.b16 %v404
      %v1529 = vunpack.c.l.b16 %v405
      %v1530 = vunpack.c.h.b16 %v405
      %v1531 = vunpack.c.l.b16 %v406
      %v1532 = vunpack.c.h.b16 %v406
      %v1533 = vunpack.c.l.b16 %v407
      %v1534 = vunpack.c.l.b16 %v408
      %v1535 = vunpack.c.h.b16 %v408
      %v1536 = vunpack.c.l.b16 %v409
      %v1537 = vunpack.c.h.b16 %v409
      %v1538 = vunpack.c.l.b16 %v410
      %v1539 = vunpack.c.h.b16 %v410
      %v1540 = vunpack.c.l.b16 %v411
      %v1541 = vunpack.c.l.b16 %v412
      %v1542 = vunpack.c.h.b16 %v412
      %v1543 = vunpack.c.l.b16 %v413
      %v1544 = vunpack.c.h.b16 %v413
      %v1545 = vunpack.c.l.b16 %v414
      %v1546 = vunpack.c.h.b16 %v414
      %v1547 = vunpack.c.l.b16 %v415
      %v1548 = vunpack.c.l.b16 %v416
      %v1549 = vunpack.c.h.b16 %v416
      %v1550 = vunpack.c.l.b16 %v417
      %v1551 = vunpack.c.h.b16 %v417
      %v1552 = vunpack.c.l.b16 %v418
      %v1553 = vunpack.c.h.b16 %v418
      %v1554 = vunpack.c.l.b16 %v419
      %v1555 = vunpack.c.l.b16 %v420
      %v1556 = vunpack.c.h.b16 %v420
      %v1557 = vunpack.c.l.b16 %v421
      %v1558 = vunpack.c.h.b16 %v421
      %v1559 = vunpack.c.l.b16 %v422
      %v1560 = vunpack.c.h.b16 %v422
      %v1561 = vunpack.c.l.b16 %v423
      %v1562 = vunpack.c.l.b16 %v424
      %v1563 = vunpack.c.h.b16 %v424
      %v1564 = vunpack.c.l.b16 %v425
      %v1565 = vunpack.c.h.b16 %v425
      %v1566 = vunpack.c.l.b16 %v426
      %v1567 = vunpack.c.h.b16 %v426
      %v1568 = vunpack.c.l.b16 %v427
      %v1569 = vunpack.c.l.b16 %v428
      %v1570 = vunpack.c.h.b16 %v428
      %v1571 = vunpack.c.l.b16 %v429
      %v1572 = vunpack.c.h.b16 %v429
      %v1573 = vunpack.c.l.b16 %v430
      %v1574 = vunpack.c.h.b16 %v430
      %v1575 = vunpack.c.l.b16 %v431
      %v1576 = vunpack.c.l.b16 %v432
      %v1577 = vunpack.c.h.b16 %v432
      %v1578 = vunpack.c.l.b16 %v433
      %v1579 = vunpack.c.h.b16 %v433
      %v1580 = vunpack.c.l.b16 %v434
      %v1581 = vunpack.c.h.b16 %v434
      %v1582 = vunpack.c.l.b16 %v435
      %v1583 = vunpack.c.l.b16 %v436
      %v1584 = vunpack.c.h.b16 %v436
      %v1585 = vunpack.c.l.b16 %v437
      %v1586 = vunpack.c.h.b16 %v437
      %v1587 = vunpack.c.l.b16 %v438
      %v1588 = vunpack.c.h.b16 %v438
      %v1589 = vunpack.c.l.b16 %v439
      %v1590 = vunpack.c.l.b16 %v440
      %v1591 = vunpack.c.h.b16 %v440
      %v1592 = vunpack.c.l.b16 %v441
      %v1593 = vunpack.c.h.b16 %v441
      %v1594 = vunpack.c.l.b16 %v442
      %v1595 = vunpack.c.h.b16 %v442
      %v1596 = vunpack.c.l.b16 %v443
      %v1597 = vunpack.c.l.b16 %v444
      %v1598 = vunpack.c.h.b16 %v444
      %v1599 = vunpack.c.l.b16 %v445
      %v1600 = vunpack.c.h.b16 %v445
      %v1601 = vunpack.c.l.b16 %v446
      %v1602 = vunpack.c.h.b16 %v446
      %v1603 = vunpack.c.l.b16 %v447
      %v1604 = vunpack.c.l.b16 %v448
      %v1605 = vunpack.c.h.b16 %v448
      %v1606 = vunpack.c.l.b16 %v449
      %v1607 = vunpack.c.h.b16 %v449
      %v1608 = vunpack.c.l.b16 %v450
      %v1609 = vunpack.c.h.b16 %v450
      %v1610 = vunpack.c.l.b16 %v451
      %v1611 = vunpack.c.l.b16 %v452
      %v1612 = vunpack.c.h.b16 %v452
      %v1613 = vunpack.c.l.b16 %v453
      %v1614 = vunpack.c.h.b16 %v453
      %v1615 = vunpack.c.l.b16 %v454
      %v1616 = vunpack.c.h.b16 %v454
      %v1617 = vunpack.c.l.b16 %v455
      %v1618 = vunpack.c.l.b16 %v456
      %v1619 = vunpack.c.h.b16 %v456
      %v1620 = vunpack.c.l.b16 %v457
      %v1621 = vunpack.c.h.b16 %v457
      %v1622 = vunpack.c.l.b16 %v458
      %v1623 = vunpack.c.h.b16 %v458
      %v1624 = vunpack.c.l.b16 %v459
      %v1625 = vunpack.c.l.b16 %v460
      %v1626 = vunpack.c.h.b16 %v460
      %v1627 = vunpack.c.l.b16 %v461
      %v1628 = vunpack.c.h.b16 %v461
      %v1629 = vunpack.c.l.b16 %v462
      %v1630 = vunpack.c.h.b16 %v462
      %v1631 = vunpack.c.l.b16 %v463
      %v1632 = vunpack.c.l.b16 %v464
      %v1633 = vunpack.c.h.b16 %v464
      %v1634 = vunpack.c.l.b16 %v465
      %v1635 = vunpack.c.h.b16 %v465
      %v1636 = vunpack.c.l.b16 %v466
      %v1637 = vunpack.c.h.b16 %v466
      %v1638 = vunpack.c.l.b16 %v467
      %v1639 = vunpack.c.l.b16 %v468
      %v1640 = vunpack.c.h.b16 %v468
      %v1641 = vunpack.c.l.b16 %v469
      %v1642 = vunpack.c.h.b16 %v469
      %v1643 = vunpack.c.l.b16 %v470
      %v1644 = vunpack.c.h.b16 %v470
      %v1645 = vunpack.c.l.b16 %v471
      %v1646 = vunpack.c.l.b16 %v472
      %v1647 = vunpack.c.h.b16 %v472
      %v1648 = vunpack.c.l.b16 %v473
      %v1649 = vunpack.c.h.b16 %v473
      %v1650 = vunpack.c.l.b16 %v474
      %v1651 = vunpack.c.h.b16 %v474
      %v1652 = vunpack.c.l.b16 %v475
      %v1653 = vunpack.c.l.b16 %v476
      %v1654 = vunpack.c.h.b16 %v476
      %v1655 = vunpack.c.l.b16 %v477
      %v1656 = vunpack.c.h.b16 %v477
      %v1657 = vunpack.c.l.b16 %v478
      %v1658 = vunpack.c.h.b16 %v478
      %v1659 = vunpack.c.l.b16 %v479
      %v1660 = vunpack.c.l.b16 %v480
      %v1661 = vunpack.c.h.b16 %v480
      %v1662 = vunpack.c.l.b16 %v481
      %v1663 = vunpack.c.h.b16 %v481
      %v1664 = vunpack.c.l.b16 %v482
      %v1665 = vunpack.c.h.b16 %v482
      %v1666 = vunpack.c.l.b16 %v483
      %v1667 = vunpack.c.l.b16 %v484
      %v1668 = vunpack.c.h.b16 %v484
      %v1669 = vunpack.c.l.b16 %v485
      %v1670 = vunpack.c.h.b16 %v485
      %v1671 = vunpack.c.l.b16 %v486
      %v1672 = vunpack.c.h.b16 %v486
      %v1673 = vunpack.c.l.b16 %v487
      %v1674 = vunpack.c.l.b16 %v488
      %v1675 = vunpack.c.h.b16 %v488
      %v1676 = vunpack.c.l.b16 %v489
      %v1677 = vunpack.c.h.b16 %v489
      %v1678 = vunpack.c.l.b16 %v490
      %v1679 = vunpack.c.h.b16 %v490
      %v1680 = vunpack.c.l.b16 %v491
      %v1681 = vunpack.c.l.b16 %v492
      %v1682 = vunpack.c.h.b16 %v492
      %v1683 = vunpack.c.l.b16 %v493
      %v1684 = vunpack.c.h.b16 %v493
      %v1685 = vunpack.c.l.b16 %v494
      %v1686 = vunpack.c.h.b16 %v494
      %v1687 = vunpack.c.l.b16 %v495
      %v1688 = vunpack.c.l.b16 %v496
      %v1689 = vunpack.c.h.b16 %v496
      %v1690 = vunpack.c.l.b16 %v497
      %v1691 = vunpack.c.h.b16 %v497
      %v1692 = vunpack.c.l.b16 %v498
      %v1693 = vunpack.c.h.b16 %v498
      %v1694 = vunpack.c.l.b16 %v499
      %v1695 = vunpack.c.l.b16 %v500
      %v1696 = vunpack.c.h.b16 %v500
      %v1697 = vunpack.c.l.b16 %v501
      %v1698 = vunpack.c.h.b16 %v501
      %v1699 = vunpack.c.l.b16 %v502
      %v1700 = vunpack.c.h.b16 %v502
      %v1701 = vunpack.c.l.b16 %v503
      %v1702 = vunpack.c.l.b16 %v504
      %v1703 = vunpack.c.h.b16 %v504
      %v1704 = vunpack.c.l.b16 %v505
      %v1705 = vunpack.c.h.b16 %v505
      %v1706 = vunpack.c.l.b16 %v506
      %v1707 = vunpack.c.h.b16 %v506
      %v1708 = vunpack.c.l.b16 %v507
      %v1709 = vunpack.c.l.b16 %v508
      %v1710 = vunpack.c.h.b16 %v508
      %v1711 = vunpack.c.l.b16 %v509
      %v1712 = vunpack.c.h.b16 %v509
      %v1713 = vunpack.c.l.b16 %v510
      %v1714 = vunpack.c.h.b16 %v510
      %v1715 = vunpack.c.l.b16 %v511
      %v1716 = vunpack.c.l.b16 %v512
      %v1717 = vunpack.c.h.b16 %v512
      %v1718 = vunpack.c.l.b16 %v513
      %v1719 = vunpack.c.h.b16 %v513
      %v1720 = vunpack.c.l.b16 %v514
      %v1721 = vunpack.c.h.b16 %v514
      %v1722 = vunpack.c.l.b16 %v515
      %v1723 = vunpack.c.l.b16 %v516
      %v1724 = vunpack.c.h.b16 %v516
      %v1725 = vunpack.c.l.b16 %v517
      %v1726 = vunpack.c.h.b16 %v517
      %v1727 = vunpack.c.l.b16 %v518
      %v1728 = vunpack.c.h.b16 %v518
      %v1729 = vunpack.c.l.b16 %v519
      %v1730 = vunpack.c.l.b16 %v520
      %v1731 = vunpack.c.h.b16 %v520
      %v1732 = vunpack.c.l.b16 %v521
      %v1733 = vunpack.c.h.b16 %v521
      %v1734 = vunpack.c.l.b16 %v522
      %v1735 = vunpack.c.h.b16 %v522
      %v1736 = vunpack.c.l.b16 %v523
      %v1737 = vunpack.c.l.b16 %v524
      %v1738 = vunpack.c.h.b16 %v524
      %v1739 = vunpack.c.l.b16 %v525
      %v1740 = vunpack.c.h.b16 %v525
      %v1741 = vunpack.c.l.b16 %v526
      %v1742 = vunpack.c.h.b16 %v526
      %v1743 = vunpack.c.l.b16 %v527
      %v1744 = vunpack.c.l.b16 %v528
      %v1745 = vunpack.c.h.b16 %v528
      %v1746 = vunpack.c.l.b16 %v529
      %v1747 = vunpack.c.h.b16 %v529
      %v1748 = vunpack.c.l.b16 %v530
      %v1749 = vunpack.c.h.b16 %v530
      %v1750 = vunpack.c.l.b16 %v531
      %v1751 = vunpack.c.l.b16 %v532
      %v1752 = vunpack.c.h.b16 %v532
      %v1753 = vunpack.c.l.b16 %v533
      %v1754 = vunpack.c.h.b16 %v533
      %v1755 = vunpack.c.l.b16 %v534
      %v1756 = vunpack.c.h.b16 %v534
      %v1757 = vunpack.c.l.b16 %v535
      %v1758 = vunpack.c.l.b16 %v536
      %v1759 = vunpack.c.h.b16 %v536
      %v1760 = vunpack.c.l.b16 %v537
      %v1761 = vunpack.c.h.b16 %v537
      %v1762 = vunpack.c.l.b16 %v538
      %v1763 = vunpack.c.h.b16 %v538
      %v1764 = vunpack.c.l.b16 %v539
      %v1765 = vpack.c.b16 %v1086, %v1079
      %v1766 = vpack.c.b16 %v1087, %v1080
      %v1767 = vpack.c.b16 %v1088, %v1081
      %v1768 = vpack.c.b16 %v1089, %v1082
      %v1769 = vpack.c.b16 %v1090, %v1083
      %v1770 = vpack.c.b16 %v1091, %v1084
      %v1771 = vpack.c.b16 %v1092, %v1085
      %v1772 = vpack.c.b16 %v1100, %v1093
      %v1773 = vpack.c.b16 %v1101, %v1094
      %v1774 = vpack.c.b16 %v1102, %v1095
      %v1775 = vpack.c.b16 %v1103, %v1096
      %v1776 = vpack.c.b16 %v1104, %v1097
      %v1777 = vpack.c.b16 %v1105, %v1098
      %v1778 = vpack.c.b16 %v1106, %v1099
      %v1779 = vpack.c.b16 %v1114, %v1107
      %v1780 = vpack.c.b16 %v1115, %v1108
      %v1781 = vpack.c.b16 %v1116, %v1109
      %v1782 = vpack.c.b16 %v1117, %v1110
      %v1783 = vpack.c.b16 %v1118, %v1111
      %v1784 = vpack.c.b16 %v1119, %v1112
      %v1785 = vpack.c.b16 %v1120, %v1113
      %v1786 = vpack.c.b16 %v1128, %v1121
      %v1787 = vpack.c.b16 %v1129, %v1122
      %v1788 = vpack.c.b16 %v1130, %v1123
      %v1789 = vpack.c.b16 %v1131, %v1124
      %v1790 = vpack.c.b16 %v1132, %v1125
      %v1791 = vpack.c.b16 %v1133, %v1126
      %v1792 = vpack.c.b16 %v1134, %v1127
      %v1793 = vpack.c.b16 %v1142, %v1135
      %v1794 = vpack.c.b16 %v1143, %v1136
      %v1795 = vpack.c.b16 %v1144, %v1137
      %v1796 = vpack.c.b16 %v1145, %v1138
      %v1797 = vpack.c.b16 %v1146, %v1139
      %v1798 = vpack.c.b16 %v1147, %v1140
      %v1799 = vpack.c.b16 %v1148, %v1141
      %v1800 = vpack.c.b16 %v1156, %v1149
      %v1801 = vpack.c.b16 %v1157, %v1150
      %v1802 = vpack.c.b16 %v1158, %v1151
      %v1803 = vpack.c.b16 %v1159, %v1152
      %v1804 = vpack.c.b16 %v1160, %v1153
      %v1805 = vpack.c.b16 %v1161, %v1154
      %v1806 = vpack.c.b16 %v1162, %v1155
      %v1807 = vpack.c.b16 %v1170, %v1163
      %v1808 = vpack.c.b16 %v1171, %v1164
      %v1809 = vpack.c.b16 %v1172, %v1165
      %v1810 = vpack.c.b16 %v1173, %v1166
      %v1811 = vpack.c.b16 %v1174, %v1167
      %v1812 = vpack.c.b16 %v1175, %v1168
      %v1813 = vpack.c.b16 %v1176, %v1169
      %v1814 = vpack.c.b16 %v1184, %v1177
      %v1815 = vpack.c.b16 %v1185, %v1178
      %v1816 = vpack.c.b16 %v1186, %v1179
      %v1817 = vpack.c.b16 %v1187, %v1180
      %v1818 = vpack.c.b16 %v1188, %v1181
      %v1819 = vpack.c.b16 %v1189, %v1182
      %v1820 = vpack.c.b16 %v1190, %v1183
      %v1821 = vpack.c.b16 %v1198, %v1191
      %v1822 = vpack.c.b16 %v1199, %v1192
      %v1823 = vpack.c.b16 %v1200, %v1193
      %v1824 = vpack.c.b16 %v1201, %v1194
      %v1825 = vpack.c.b16 %v1202, %v1195
      %v1826 = vpack.c.b16 %v1203, %v1196
      %v1827 = vpack.c.b16 %v1204, %v1197
      %v1828 = vpack.c.b16 %v1212, %v1205
      %v1829 = vpack.c.b16 %v1213, %v1206
      %v1830 = vpack.c.b16 %v1214, %v1207
      %v1831 = vpack.c.b16 %v1215, %v1208
      %v1832 = vpack.c.b16 %v1216, %v1209
      %v1833 = vpack.c.b16 %v1217, %v1210
      %v1834 = vpack.c.b16 %v1218, %v1211
      %v1835 = vpack.c.b16 %v1226, %v1219
      %v1836 = vpack.c.b16 %v1227, %v1220
      %v1837 = vpack.c.b16 %v1228, %v1221
      %v1838 = vpack.c.b16 %v1229, %v1222
      %v1839 = vpack.c.b16 %v1230, %v1223
      %v1840 = vpack.c.b16 %v1231, %v1224
      %v1841 = vpack.c.b16 %v1232, %v1225
      %v1842 = vpack.c.b16 %v1240, %v1233
      %v1843 = vpack.c.b16 %v1241, %v1234
      %v1844 = vpack.c.b16 %v1242, %v1235
      %v1845 = vpack.c.b16 %v1243, %v1236
      %v1846 = vpack.c.b16 %v1244, %v1237
      %v1847 = vpack.c.b16 %v1245, %v1238
      %v1848 = vpack.c.b16 %v1246, %v1239
      %v1849 = vpack.c.b16 %v1254, %v1247
      %v1850 = vpack.c.b16 %v1255, %v1248
      %v1851 = vpack.c.b16 %v1256, %v1249
      %v1852 = vpack.c.b16 %v1257, %v1250
      %v1853 = vpack.c.b16 %v1258, %v1251
      %v1854 = vpack.c.b16 %v1259, %v1252
      %v1855 = vpack.c.b16 %v1260, %v1253
      %v1856 = vpack.c.b16 %v1268, %v1261
      %v1857 = vpack.c.b16 %v1269, %v1262
      %v1858 = vpack.c.b16 %v1270, %v1263
      %v1859 = vpack.c.b16 %v1271, %v1264
      %v1860 = vpack.c.b16 %v1272, %v1265
      %v1861 = vpack.c.b16 %v1273, %v1266
      %v1862 = vpack.c.b16 %v1274, %v1267
      %v1863 = vpack.c.b16 %v1282, %v1275
      %v1864 = vpack.c.b16 %v1283, %v1276
      %v1865 = vpack.c.b16 %v1284, %v1277
      %v1866 = vpack.c.b16 %v1285, %v1278
      %v1867 = vpack.c.b16 %v1286, %v1279
      %v1868 = vpack.c.b16 %v1287, %v1280
      %v1869 = vpack.c.b16 %v1288, %v1281
      %v1870 = vpack.c.b16 %v1296, %v1289
      %v1871 = vpack.c.b16 %v1297, %v1290
      %v1872 = vpack.c.b16 %v1298, %v1291
      %v1873 = vpack.c.b16 %v1299, %v1292
      %v1874 = vpack.c.b16 %v1300, %v1293
      %v1875 = vpack.c.b16 %v1301, %v1294
      %v1876 = vpack.c.b16 %v1302, %v1295
      %v1877 = vpack.c.b16 %v1310, %v1303
      %v1878 = vpack.c.b16 %v1311, %v1304
      %v1879 = vpack.c.b16 %v1312, %v1305
      %v1880 = vpack.c.b16 %v1313, %v1306
      %v1881 = vpack.c.b16 %v1314, %v1307
      %v1882 = vpack.c.b16 %v1315, %v1308
      %v1883 = vpack.c.b16 %v1316, %v1309
      %v1884 = vpack.c.b16 %v1324, %v1317
      %v1885 = vpack.c.b16 %v1325, %v1318
      %v1886 = vpack.c.b16 %v1326, %v1319
      %v1887 = vpack.c.b16 %v1327, %v1320
      %v1888 = vpack.c.b16 %v1328, %v1321
      %v1889 = vpack.c.b16 %v1329, %v1322
      %v1890 = vpack.c.b16 %v1330, %v1323
      %v1891 = vpack.c.b16 %v1338, %v1331
      %v1892 = vpack.c.b16 %v1339, %v1332
      %v1893 = vpack.c.b16 %v1340, %v1333
      %v1894 = vpack.c.b16 %v1341, %v1334
      %v1895 = vpack.c.b16 %v1342, %v1335
      %v1896 = vpack.c.b16 %v1343, %v1336
      %v1897 = vpack.c.b16 %v1344, %v1337
      %v1898 = vpack.c.b16 %v1352, %v1345
      %v1899 = vpack.c.b16 %v1353, %v1346
      %v1900 = vpack.c.b16 %v1354, %v1347
      %v1901 = vpack.c.b16 %v1355, %v1348
      %v1902 = vpack.c.b16 %v1356, %v1349
      %v1903 = vpack.c.b16 %v1357, %v1350
      %v1904 = vpack.c.b16 %v1358, %v1351
      %v1905 = vpack.c.b16 %v1366, %v1359
      %v1906 = vpack.c.b16 %v1367, %v1360
      %v1907 = vpack.c.b16 %v1368, %v1361
      %v1908 = vpack.c.b16 %v1369, %v1362
      %v1909 = vpack.c.b16 %v1370, %v1363
      %v1910 = vpack.c.b16 %v1371, %v1364
      %v1911 = vpack.c.b16 %v1372, %v1365
      %v1912 = vpack.c.b16 %v1380, %v1373
      %v1913 = vpack.c.b16 %v1381, %v1374
      %v1914 = vpack.c.b16 %v1382, %v1375
      %v1915 = vpack.c.b16 %v1383, %v1376
      %v1916 = vpack.c.b16 %v1384, %v1377
      %v1917 = vpack.c.b16 %v1385, %v1378
      %v1918 = vpack.c.b16 %v1386, %v1379
      %v1919 = vpack.c.b16 %v1394, %v1387
      %v1920 = vpack.c.b16 %v1395, %v1388
      %v1921 = vpack.c.b16 %v1396, %v1389
      %v1922 = vpack.c.b16 %v1397, %v1390
      %v1923 = vpack.c.b16 %v1398, %v1391
      %v1924 = vpack.c.b16 %v1399, %v1392
      %v1925 = vpack.c.b16 %v1400, %v1393
      %v1926 = vpack.c.b16 %v1408, %v1401
      %v1927 = vpack.c.b16 %v1409, %v1402
      %v1928 = vpack.c.b16 %v1410, %v1403
      %v1929 = vpack.c.b16 %v1411, %v1404
      %v1930 = vpack.c.b16 %v1412, %v1405
      %v1931 = vpack.c.b16 %v1413, %v1406
      %v1932 = vpack.c.b16 %v1414, %v1407
      %v1933 = vpack.c.b16 %v1422, %v1415
      %v1934 = vpack.c.b16 %v1423, %v1416
      %v1935 = vpack.c.b16 %v1424, %v1417
      %v1936 = vpack.c.b16 %v1425, %v1418
      %v1937 = vpack.c.b16 %v1426, %v1419
      %v1938 = vpack.c.b16 %v1427, %v1420
      %v1939 = vpack.c.b16 %v1428, %v1421
      %v1940 = vpack.c.b16 %v1436, %v1429
      %v1941 = vpack.c.b16 %v1437, %v1430
      %v1942 = vpack.c.b16 %v1438, %v1431
      %v1943 = vpack.c.b16 %v1439, %v1432
      %v1944 = vpack.c.b16 %v1440, %v1433
      %v1945 = vpack.c.b16 %v1441, %v1434
      %v1946 = vpack.c.b16 %v1442, %v1435
      %v1947 = vpack.c.b16 %v1450, %v1443
      %v1948 = vpack.c.b16 %v1451, %v1444
      %v1949 = vpack.c.b16 %v1452, %v1445
      %v1950 = vpack.c.b16 %v1453, %v1446
      %v1951 = vpack.c.b16 %v1454, %v1447
      %v1952 = vpack.c.b16 %v1455, %v1448
      %v1953 = vpack.c.b16 %v1456, %v1449
      %v1954 = vpack.c.b16 %v1464, %v1457
      %v1955 = vpack.c.b16 %v1465, %v1458
      %v1956 = vpack.c.b16 %v1466, %v1459
      %v1957 = vpack.c.b16 %v1467, %v1460
      %v1958 = vpack.c.b16 %v1468, %v1461
      %v1959 = vpack.c.b16 %v1469, %v1462
      %v1960 = vpack.c.b16 %v1470, %v1463
      %v1961 = vpack.c.b16 %v1478, %v1471
      %v1962 = vpack.c.b16 %v1479, %v1472
      %v1963 = vpack.c.b16 %v1480, %v1473
      %v1964 = vpack.c.b16 %v1481, %v1474
      %v1965 = vpack.c.b16 %v1482, %v1475
      %v1966 = vpack.c.b16 %v1483, %v1476
      %v1967 = vpack.c.b16 %v1484, %v1477
      %v1968 = vpack.c.b16 %v1492, %v1485
      %v1969 = vpack.c.b16 %v1493, %v1486
      %v1970 = vpack.c.b16 %v1494, %v1487
      %v1971 = vpack.c.b16 %v1495, %v1488
      %v1972 = vpack.c.b16 %v1496, %v1489
      %v1973 = vpack.c.b16 %v1497, %v1490
      %v1974 = vpack.c.b16 %v1498, %v1491
      %v1975 = vpack.c.b16 %v1506, %v1499
      %v1976 = vpack.c.b16 %v1507, %v1500
      %v1977 = vpack.c.b16 %v1508, %v1501
      %v1978 = vpack.c.b16 %v1509, %v1502
      %v1979 = vpack.c.b16 %v1510, %v1503
      %v1980 = vpack.c.b16 %v1511, %v1504
      %v1981 = vpack.c.b16 %v1512, %v1505
      %v1982 = vpack.c.b16 %v1520, %v1513
      %v1983 = vpack.c.b16 %v1521, %v1514
      %v1984 = vpack.c.b16 %v1522, %v1515
      %v1985 = vpack.c.b16 %v1523, %v1516
      %v1986 = vpack.c.b16 %v1524, %v1517
      %v1987 = vpack.c.b16 %v1525, %v1518
      %v1988 = vpack.c.b16 %v1526, %v1519
      %v1989 = vpack.c.b16 %v1534, %v1527
      %v1990 = vpack.c.b16 %v1535, %v1528
      %v1991 = vpack.c.b16 %v1536, %v1529
      %v1992 = vpack.c.b16 %v1537, %v1530
      %v1993 = vpack.c.b16 %v1538, %v1531
      %v1994 = vpack.c.b16 %v1539, %v1532
      %v1995 = vpack.c.b16 %v1540, %v1533
      %v1996 = vpack.c.b16 %v1548, %v1541
      %v1997 = vpack.c.b16 %v1549, %v1542
      %v1998 = vpack.c.b16 %v1550, %v1543
      %v1999 = vpack.c.b16 %v1551, %v1544
      %v2000 = vpack.c.b16 %v1552, %v1545
      %v2001 = vpack.c.b16 %v1553, %v1546
      %v2002 = vpack.c.b16 %v1554, %v1547
      %v2003 = vpack.c.b16 %v1562, %v1555
      %v2004 = vpack.c.b16 %v1563, %v1556
      %v2005 = vpack.c.b16 %v1564, %v1557
      %v2006 = vpack.c.b16 %v1565, %v1558
      %v2007 = vpack.c.b16 %v1566, %v1559
      %v2008 = vpack.c.b16 %v1567, %v1560
      %v2009 = vpack.c.b16 %v1568, %v1561
      %v2010 = vpack.c.b16 %v1576, %v1569
      %v2011 = vpack.c.b16 %v1577, %v1570
      %v2012 = vpack.c.b16 %v1578, %v1571
      %v2013 = vpack.c.b16 %v1579, %v1572
      %v2014 = vpack.c.b16 %v1580, %v1573
      %v2015 = vpack.c.b16 %v1581, %v1574
      %v2016 = vpack.c.b16 %v1582, %v1575
      %v2017 = vpack.c.b16 %v1590, %v1583
      %v2018 = vpack.c.b16 %v1591, %v1584
      %v2019 = vpack.c.b16 %v1592, %v1585
      %v2020 = vpack.c.b16 %v1593, %v1586
      %v2021 = vpack.c.b16 %v1594, %v1587
      %v2022 = vpack.c.b16 %v1595, %v1588
      %v2023 = vpack.c.b16 %v1596, %v1589
      %v2024 = vpack.c.b16 %v1604, %v1597
      %v2025 = vpack.c.b16 %v1605, %v1598
      %v2026 = vpack.c.b16 %v1606, %v1599
      %v2027 = vpack.c.b16 %v1607, %v1600
      %v2028 = vpack.c.b16 %v1608, %v1601
      %v2029 = vpack.c.b16 %v1609, %v1602
      %v2030 = vpack.c.b16 %v1610, %v1603
      %v2031 = vpack.c.b16 %v1618, %v1611
      %v2032 = vpack.c.b16 %v1619, %v1612
      %v2033 = vpack.c.b16 %v1620, %v1613
      %v2034 = vpack.c.b16 %v1621, %v1614
      %v2035 = vpack.c.b16 %v1622, %v1615
      %v2036 = vpack.c.b16 %v1623, %v1616
      %v2037 = vpack.c.b16 %v1624, %v1617
      %v2038 = vpack.c.b16 %v1632, %v1625
      %v2039 = vpack.c.b16 %v1633, %v1626
      %v2040 = vpack.c.b16 %v1634, %v1627
      %v2041 = vpack.c.b16 %v1635, %v1628
      %v2042 = vpack.c.b16 %v1636, %v1629
      %v2043 = vpack.c.b16 %v1637, %v1630
      %v2044 = vpack.c.b16 %v1638, %v1631
      %v2045 = vpack.c.b16 %v1646, %v1639
      %v2046 = vpack.c.b16 %v1647, %v1640
      %v2047 = vpack.c.b16 %v1648, %v1641
      %v2048 = vpack.c.b16 %v1649, %v1642
      %v2049 = vpack.c.b16 %v1650, %v1643
      %v2050 = vpack.c.b16 %v1651, %v1644
      %v2051 = vpack.c.b16 %v1652, %v1645
      %v2052 = vpack.c.b16 %v1660, %v1653
      %v2053 = vpack.c.b16 %v1661, %v1654
      %v2054 = vpack.c.b16 %v1662, %v1655
      %v2055 = vpack.c.b16 %v1663, %v1656
      %v2056 = vpack.c.b16 %v1664, %v1657
      %v2057 = vpack.c.b16 %v1665, %v1658
      %v2058 = vpack.c.b16 %v1666, %v1659
      %v2059 = vpack.c.b16 %v1674, %v1667
      %v2060 = vpack.c.b16 %v1675, %v1668
      %v2061 = vpack.c.b16 %v1676, %v1669
      %v2062 = vpack.c.b16 %v1677, %v1670
      %v2063 = vpack.c.b16 %v1678, %v1671
      %v2064 = vpack.c.b16 %v1679, %v1672
      %v2065 = vpack.c.b16 %v1680, %v1673
      %v2066 = vpack.c.b16 %v1688, %v1681
      %v2067 = vpack.c.b16 %v1689, %v1682
      %v2068 = vpack.c.b16 %v1690, %v1683
      %v2069 = vpack.c.b16 %v1691, %v1684
      %v2070 = vpack.c.b16 %v1692, %v1685
      %v2071 = vpack.c.b16 %v1693, %v1686
      %v2072 = vpack.c.b16 %v1694, %v1687
      %v2073 = vpack.c.b16 %v1702, %v1695
      %v2074 = vpack.c.b16 %v1703, %v1696
      %v2075 = vpack.c.b16 %v1704, %v1697
      %v2076 = vpack.c.b16 %v1705, %v1698
      %v2077 = vpack.c.b16 %v1706, %v1699
      %v2078 = vpack.c.b16 %v1707, %v1700
      %v2079 = vpack.c.b16 %v1708, %v1701
      %v2080 = vpack.c.b16 %v1716, %v1709
      %v2081 = vpack.c.b16 %v1717, %v1710
      %v2082 = vpack.c.b16 %v1718, %v1711
      %v2083 = vpack.c.b16 %v1719, %v1712
      %v2084 = vpack.c.b16 %v1720, %v1713
      %v2085 = vpack.c.b16 %v1721, %v1714
      %v2086 = vpack.c.b16 %v1722, %v1715
      %v2087 = vpack.c.b16 %v1730, %v1723
      %v2088 = vpack.c.b16 %v1731, %v1724
      %v2089 = vpack.c.b16 %v1732, %v1725
      %v2090 = vpack.c.b16 %v1733, %v1726
      %v2091 = vpack.c.b16 %v1734, %v1727
      %v2092 = vpack.c.b16 %v1735, %v1728
      %v2093 = vpack.c.b16 %v1736, %v1729
      %v2094 = vpack.c.b16 %v1744, %v1737
      %v2095 = vpack.c.b16 %v1745, %v1738
      %v2096 = vpack.c.b16 %v1746, %v1739
      %v2097 = vpack.c.b16 %v1747, %v1740
      %v2098 = vpack.c.b16 %v1748, %v1741
      %v2099 = vpack.c.b16 %v1749, %v1742
      %v2100 = vpack.c.b16 %v1750, %v1743
      %v2101 = vpack.c.b16 %v1758, %v1751
      %v2102 = vpack.c.b16 %v1759, %v1752
      %v2103 = vpack.c.b16 %v1760, %v1753
      %v2104 = vpack.c.b16 %v1761, %v1754
      %v2105 = vpack.c.b16 %v1762, %v1755
      %v2106 = vpack.c.b16 %v1763, %v1756
      %v2107 = vpack.c.b16 %v1764, %v1757
      %vm2402 = vcmask 130048
      %v2404 = vsel %vm2402, %v1771, 0
      %v2407 = vsel %vm2402, %v1778, 0
      %v2410 = vsel %vm2402, %v1785, 0
      %v2413 = vsel %vm2402, %v1792, 0
      %v2416 = vsel %vm2402, %v1799, 0
      %v2419 = vsel %vm2402, %v1806, 0
      %v2422 = vsel %vm2402, %v1813, 0
      %v2425 = vsel %vm2402, %v1820, 0
      %v2428 = vsel %vm2402, %v1827, 0
      %v2431 = vsel %vm2402, %v1834, 0
      %v2434 = vsel %vm2402, %v1841, 0
      %v2437 = vsel %vm2402, %v1848, 0
      %v2440 = vsel %vm2402, %v1855, 0
      %v2443 = vsel %vm2402, %v1862, 0
      %v2446 = vsel %vm2402, %v1869, 0
      %v2449 = vsel %vm2402, %v1876, 0
      %v2452 = vsel %vm2402, %v1883, 0
      %v2455 = vsel %vm2402, %v1890, 0
      %v2458 = vsel %vm2402, %v1897, 0
      %v2461 = vsel %vm2402, %v1904, 0
      %v2464 = vsel %vm2402, %v1911, 0
      %v2467 = vsel %vm2402, %v1918, 0
      %v2470 = vsel %vm2402, %v1925, 0
      %v2473 = vsel %vm2402, %v1932, 0
      %v2476 = vsel %vm2402, %v1939, 0
      %v2479 = vsel %vm2402, %v1946, 0
      %v2482 = vsel %vm2402, %v1953, 0
      %v2485 = vsel %vm2402, %v1960, 0
      %v2488 = vsel %vm2402, %v1967, 0
      %v2491 = vsel %vm2402, %v1974, 0
      %v2494 = vsel %vm2402, %v1981, 0
      %v2497 = vsel %vm2402, %v1988, 0
      %v2500 = vsel %vm2402, %v1995, 0
      %v2503 = vsel %vm2402, %v2002, 0
      %v2506 = vsel %vm2402, %v2009, 0
      %v2509 = vsel %vm2402, %v2016, 0
      %v2512 = vsel %vm2402, %v2023, 0
      %v2515 = vsel %vm2402, %v2030, 0
      %v2518 = vsel %vm2402, %v2037, 0
      %v2521 = vsel %vm2402, %v2044, 0
      %v2524 = vsel %vm2402, %v2051, 0
      %v2527 = vsel %vm2402, %v2058, 0
      %v2530 = vsel %vm2402, %v2065, 0
      %v2533 = vsel %vm2402, %v2072, 0
      %v2536 = vsel %vm2402, %v2079, 0
      %v2539 = vsel %vm2402, %v2086, 0
      %v2542 = vsel %vm2402, %v2093, 0
      %v2545 = vsel %vm2402, %v2100, 0
      %v2548 = vsel %vm2402, %v2107, 0
      %2550 = vmatprep.subr.bf16.mxu0 0
      %2551 = vmatpush1.bf16.msra.mxu0 %v638
      %2552 = vmatprep.subr.bf16.mxu0 0
      %2553 = vmatpush1.bf16.msra.mxu0 %v639
      %2554 = vmatprep.subr.bf16.mxu0 0
      %2555 = vmatpush1.bf16.msra.mxu0 %v640
      %2556 = vmatprep.subr.bf16.mxu0 0
      %2557 = vmatpush1.bf16.msra.mxu0 %v641
      %2558 = vmatprep.subr.bf16.mxu0 0
      %2559 = vmatpush1.bf16.msra.mxu0 %v642
      %2560 = vmatprep.subr.bf16.mxu0 0
      %2561 = vmatpush1.bf16.msra.mxu0 %v643
      %2562 = vmatprep.subr.bf16.mxu0 0
      %2563 = vmatpush1.bf16.msra.mxu0 %v644
      %2564 = vmatprep.subr.bf16.mxu0 0
      %2565 = vmatpush1.bf16.msra.mxu0 %v645
      %2566 = vmatprep.subr.bf16.mxu0 0
      %2567 = vmatpush1.bf16.msra.mxu0 %v646
      %2568 = vmatprep.subr.bf16.mxu0 0
      %2569 = vmatpush1.bf16.msra.mxu0 %v647
      %2570 = vmatprep.subr.bf16.mxu0 0
      %2571 = vmatpush1.bf16.msra.mxu0 %v648
      %2572 = vmatprep.subr.bf16.mxu0 0
      %2573 = vmatpush1.bf16.msra.mxu0 %v649
      %2574 = vmatprep.subr.bf16.mxu0 0
      %2575 = vmatpush1.bf16.msra.mxu0 %v650
      %2576 = vmatprep.subr.bf16.mxu0 0
      %2577 = vmatpush1.bf16.msra.mxu0 %v651
      %2578 = vmatprep.subr.bf16.mxu0 0
      %2579 = vmatpush1.bf16.msra.mxu0 %v652
      %2580 = vmatprep.subr.bf16.mxu0 0
      %2581 = vmatpush1.bf16.msra.mxu0 %v653
      %2582 = vmatprep.mubr.bf16.mxu0 %v1766
      %2583 = vmatmul.mubr.bf16.gmra.mrb[0].mxu0 %v1765
      %v2584 = vpop.f32.mrb[0].mxu0
      %v2585 = vadd.f32 0.0, %v2584
      %v2586 = vpop.f32.mrb[0].mxu0
      %v2587 = vpop.f32.mrb[0].mxu0
      %v2588 = vadd.f32 0.0, %v2587
      %v2589 = vpop.f32.mrb[0].mxu0
      %2590 = vmatprep.mubr.bf16.mxu0 %v1773
      %2591 = vmatmul.mubr.bf16.gmra.mrb[0].mxu0 %v1772
      %v2592 = vpop.f32.mrb[0].mxu0
      %v2593 = vadd.f32 0.0, %v2592
      %v2594 = vpop.f32.mrb[0].mxu0
      %v2595 = vpop.f32.mrb[0].mxu0
      %v2596 = vadd.f32 0.0, %v2595
      %v2597 = vpop.f32.mrb[0].mxu0
      %2598 = vmatprep.mubr.bf16.mxu0 %v1780
      %2599 = vmatmul.mubr.bf16.gmra.mrb[0].mxu0 %v1779
      %v2600 = vpop.f32.mrb[0].mxu0
      %v2601 = vadd.f32 0.0, %v2600
      %v2602 = vpop.f32.mrb[0].mxu0
      %v2603 = vpop.f32.mrb[0].mxu0
      %v2604 = vadd.f32 0.0, %v2603
      %v2605 = vpop.f32.mrb[0].mxu0
      %2606 = vmatprep.mubr.bf16.mxu0 %v1787
      %2607 = vmatmul.mubr.bf16.gmra.mrb[0].mxu0 %v1786
      %v2608 = vpop.f32.mrb[0].mxu0
      %v2609 = vadd.f32 0.0, %v2608
      %v2610 = vpop.f32.mrb[0].mxu0
      %v2611 = vpop.f32.mrb[0].mxu0
      %v2612 = vadd.f32 0.0, %v2611
      %v2613 = vpop.f32.mrb[0].mxu0
      %2614 = vmatprep.mubr.bf16.mxu0 %v1794
      %2615 = vmatmul.mubr.bf16.gmra.mrb[0].mxu0 %v1793
      %v2616 = vpop.f32.mrb[0].mxu0
      %v2617 = vadd.f32 0.0, %v2616
      %v2618 = vpop.f32.mrb[0].mxu0
      %v2619 = vpop.f32.mrb[0].mxu0
      %v2620 = vadd.f32 0.0, %v2619
      %v2621 = vpop.f32.mrb[0].mxu0
      %2622 = vmatprep.mubr.bf16.mxu0 %v1801
      %2623 = vmatmul.mubr.bf16.gmra.mrb[0].mxu0 %v1800
      %v2624 = vpop.f32.mrb[0].mxu0
      %v2625 = vadd.f32 0.0, %v2624
      %v2626 = vpop.f32.mrb[0].mxu0
      %v2627 = vpop.f32.mrb[0].mxu0
      %v2628 = vadd.f32 0.0, %v2627
      %v2629 = vpop.f32.mrb[0].mxu0
      %2630 = vmatprep.mubr.bf16.mxu0 %v1808
      %2631 = vmatmul.mubr.bf16.gmra.mrb[0].mxu0 %v1807
      %v2632 = vpop.f32.mrb[0].mxu0
      %v2633 = vadd.f32 0.0, %v2632
      %v2634 = vpop.f32.mrb[0].mxu0
      %v2635 = vpop.f32.mrb[0].mxu0
      %v2636 = vadd.f32 0.0, %v2635
      %v2637 = vpop.f32.mrb[0].mxu0
      %2638 = vmatprep.mubr.bf16.mxu0 %v1815
      %2639 = vmatmul.mubr.bf16.gmra.mrb[0].mxu0 %v1814
      %v2640 = vpop.f32.mrb[0].mxu0
      %v2641 = vadd.f32 0.0, %v2640
      %v2642 = vpop.f32.mrb[0].mxu0
      %v2643 = vpop.f32.mrb[0].mxu0
      %v2644 = vadd.f32 0.0, %v2643
      %v2645 = vpop.f32.mrb[0].mxu0
      %2646 = vmatprep.mubr.bf16.mxu0 %v1822
      %2647 = vmatmul.mubr.bf16.gmra.mrb[0].mxu0 %v1821
      %v2648 = vpop.f32.mrb[0].mxu0
      %v2649 = vadd.f32 0.0, %v2648
      %v2650 = vpop.f32.mrb[0].mxu0
      %v2651 = vpop.f32.mrb[0].mxu0
      %v2652 = vadd.f32 0.0, %v2651
      %v2653 = vpop.f32.mrb[0].mxu0
      %2654 = vmatprep.mubr.bf16.mxu0 %v1829
      %2655 = vmatmul.mubr.bf16.gmra.mrb[0].mxu0 %v1828
      %v2656 = vpop.f32.mrb[0].mxu0
      %v2657 = vadd.f32 0.0, %v2656
      %v2658 = vpop.f32.mrb[0].mxu0
      %v2659 = vpop.f32.mrb[0].mxu0
      %v2660 = vadd.f32 0.0, %v2659
      %v2661 = vpop.f32.mrb[0].mxu0
      %2662 = vmatprep.mubr.bf16.mxu0 %v1836
      %2663 = vmatmul.mubr.bf16.gmra.mrb[0].mxu0 %v1835
      %v2664 = vpop.f32.mrb[0].mxu0
      %v2665 = vadd.f32 0.0, %v2664
      %v2666 = vpop.f32.mrb[0].mxu0
      %v2667 = vpop.f32.mrb[0].mxu0
      %v2668 = vadd.f32 0.0, %v2667
      %v2669 = vpop.f32.mrb[0].mxu0
      %2670 = vmatprep.mubr.bf16.mxu0 %v1843
      %2671 = vmatmul.mubr.bf16.gmra.mrb[0].mxu0 %v1842
      %v2672 = vpop.f32.mrb[0].mxu0
      %v2673 = vadd.f32 0.0, %v2672
      %v2674 = vpop.f32.mrb[0].mxu0
      %v2675 = vpop.f32.mrb[0].mxu0
      %v2676 = vadd.f32 0.0, %v2675
      %v2677 = vpop.f32.mrb[0].mxu0
      %2678 = vmatprep.mubr.bf16.mxu0 %v1850
      %2679 = vmatmul.mubr.bf16.gmra.mrb[0].mxu0 %v1849
      %v2680 = vpop.f32.mrb[0].mxu0
      %v2681 = vadd.f32 0.0, %v2680
      %v2682 = vpop.f32.mrb[0].mxu0
      %v2683 = vpop.f32.mrb[0].mxu0
      %v2684 = vadd.f32 0.0, %v2683
      %v2685 = vpop.f32.mrb[0].mxu0
      %2686 = vmatprep.mubr.bf16.mxu0 %v1857
      %2687 = vmatmul.mubr.bf16.gmra.mrb[0].mxu0 %v1856
      %v2688 = vpop.f32.mrb[0].mxu0
      %v2689 = vadd.f32 0.0, %v2688
      %v2690 = vpop.f32.mrb[0].mxu0
      %v2691 = vpop.f32.mrb[0].mxu0
      %v2692 = vadd.f32 0.0, %v2691
      %v2693 = vpop.f32.mrb[0].mxu0
      %2694 = vmatprep.mubr.bf16.mxu0 %v1864
      %2695 = vmatmul.mubr.bf16.gmra.mrb[0].mxu0 %v1863
      %v2696 = vpop.f32.mrb[0].mxu0
      %v2697 = vadd.f32 0.0, %v2696
      %v2698 = vpop.f32.mrb[0].mxu0
      %v2699 = vpop.f32.mrb[0].mxu0
      %v2700 = vadd.f32 0.0, %v2699
      %v2701 = vpop.f32.mrb[0].mxu0
      %2702 = vmatprep.mubr.bf16.mxu0 %v1871
      %2703 = vmatmul.mubr.bf16.gmra.mrb[0].mxu0 %v1870
      %v2704 = vpop.f32.mrb[0].mxu0
      %v2705 = vadd.f32 0.0, %v2704
      %v2706 = vpop.f32.mrb[0].mxu0
      %v2707 = vpop.f32.mrb[0].mxu0
      %v2708 = vadd.f32 0.0, %v2707
      %v2709 = vpop.f32.mrb[0].mxu0
      %2710 = vmatprep.mubr.bf16.mxu0 %v1878
      %2711 = vmatmul.mubr.bf16.gmra.mrb[0].mxu0 %v1877
      %v2712 = vpop.f32.mrb[0].mxu0
      %v2713 = vadd.f32 0.0, %v2712
      %v2714 = vpop.f32.mrb[0].mxu0
      %v2715 = vpop.f32.mrb[0].mxu0
      %v2716 = vadd.f32 0.0, %v2715
      %v2717 = vpop.f32.mrb[0].mxu0
      %2718 = vmatprep.mubr.bf16.mxu0 %v1885
      %2719 = vmatmul.mubr.bf16.gmra.mrb[0].mxu0 %v1884
      %v2720 = vpop.f32.mrb[0].mxu0
      %v2721 = vadd.f32 0.0, %v2720
      %v2722 = vpop.f32.mrb[0].mxu0
      %v2723 = vpop.f32.mrb[0].mxu0
      %v2724 = vadd.f32 0.0, %v2723
      %v2725 = vpop.f32.mrb[0].mxu0
      %2726 = vmatprep.mubr.bf16.mxu0 %v1892
      %2727 = vmatmul.mubr.bf16.gmra.mrb[0].mxu0 %v1891
      %v2728 = vpop.f32.mrb[0].mxu0
      %v2729 = vadd.f32 0.0, %v2728
      %v2730 = vpop.f32.mrb[0].mxu0
      %v2731 = vpop.f32.mrb[0].mxu0
      %v2732 = vadd.f32 0.0, %v2731
      %v2733 = vpop.f32.mrb[0].mxu0
      %2734 = vmatprep.mubr.bf16.mxu0 %v1899
      %2735 = vmatmul.mubr.bf16.gmra.mrb[0].mxu0 %v1898
      %v2736 = vpop.f32.mrb[0].mxu0
      %v2737 = vadd.f32 0.0, %v2736
      %v2738 = vpop.f32.mrb[0].mxu0
      %v2739 = vpop.f32.mrb[0].mxu0
      %v2740 = vadd.f32 0.0, %v2739
      %v2741 = vpop.f32.mrb[0].mxu0
      %2742 = vmatprep.mubr.bf16.mxu0 %v1906
      %2743 = vmatmul.mubr.bf16.gmra.mrb[0].mxu0 %v1905
      %v2744 = vpop.f32.mrb[0].mxu0
      %v2745 = vadd.f32 0.0, %v2744
      %v2746 = vpop.f32.mrb[0].mxu0
      %v2747 = vpop.f32.mrb[0].mxu0
      %v2748 = vadd.f32 0.0, %v2747
      %v2749 = vpop.f32.mrb[0].mxu0
      %2750 = vmatprep.mubr.bf16.mxu0 %v1913
      %2751 = vmatmul.mubr.bf16.gmra.mrb[0].mxu0 %v1912
      %v2752 = vpop.f32.mrb[0].mxu0
      %v2753 = vadd.f32 0.0, %v2752
      %v2754 = vpop.f32.mrb[0].mxu0
      %v2755 = vpop.f32.mrb[0].mxu0
      %v2756 = vadd.f32 0.0, %v2755
      %v2757 = vpop.f32.mrb[0].mxu0
      %2758 = vmatprep.mubr.bf16.mxu0 %v1920
      %2759 = vmatmul.mubr.bf16.gmra.mrb[0].mxu0 %v1919
      %v2760 = vpop.f32.mrb[0].mxu0
      %v2761 = vadd.f32 0.0, %v2760
      %v2762 = vpop.f32.mrb[0].mxu0
      %v2763 = vpop.f32.mrb[0].mxu0
      %v2764 = vadd.f32 0.0, %v2763
      %v2765 = vpop.f32.mrb[0].mxu0
      %2766 = vmatprep.mubr.bf16.mxu0 %v1927
      %2767 = vmatmul.mubr.bf16.gmra.mrb[0].mxu0 %v1926
      %v2768 = vpop.f32.mrb[0].mxu0
      %v2769 = vadd.f32 0.0, %v2768
      %v2770 = vpop.f32.mrb[0].mxu0
      %v2771 = vpop.f32.mrb[0].mxu0
      %v2772 = vadd.f32 0.0, %v2771
      %v2773 = vpop.f32.mrb[0].mxu0
      %2774 = vmatprep.mubr.bf16.mxu0 %v1934
      %2775 = vmatmul.mubr.bf16.gmra.mrb[0].mxu0 %v1933
      %v2776 = vpop.f32.mrb[0].mxu0
      %v2777 = vadd.f32 0.0, %v2776
      %v2778 = vpop.f32.mrb[0].mxu0
      %v2779 = vpop.f32.mrb[0].mxu0
      %v2780 = vadd.f32 0.0, %v2779
      %v2781 = vpop.f32.mrb[0].mxu0
      %2782 = vmatprep.mubr.bf16.mxu0 %v1941
      %2783 = vmatmul.mubr.bf16.gmra.mrb[0].mxu0 %v1940
      %v2784 = vpop.f32.mrb[0].mxu0
      %v2785 = vadd.f32 0.0, %v2784
      %v2786 = vpop.f32.mrb[0].mxu0
      %v2787 = vpop.f32.mrb[0].mxu0
      %v2788 = vadd.f32 0.0, %v2787
      %v2789 = vpop.f32.mrb[0].mxu0
      %2790 = vmatprep.mubr.bf16.mxu0 %v1948
      %2791 = vmatmul.mubr.bf16.gmra.mrb[0].mxu0 %v1947
      %v2792 = vpop.f32.mrb[0].mxu0
      %v2793 = vadd.f32 0.0, %v2792
      %v2794 = vpop.f32.mrb[0].mxu0
      %v2795 = vpop.f32.mrb[0].mxu0
      %v2796 = vadd.f32 0.0, %v2795
      %v2797 = vpop.f32.mrb[0].mxu0
      %2798 = vmatprep.mubr.bf16.mxu0 %v1955
      %2799 = vmatmul.mubr.bf16.gmra.mrb[0].mxu0 %v1954
      %v2800 = vpop.f32.mrb[0].mxu0
      %v2801 = vadd.f32 0.0, %v2800
      %v2802 = vpop.f32.mrb[0].mxu0
      %v2803 = vpop.f32.mrb[0].mxu0
      %v2804 = vadd.f32 0.0, %v2803
      %v2805 = vpop.f32.mrb[0].mxu0
      %2806 = vmatprep.mubr.bf16.mxu0 %v1962
      %2807 = vmatmul.mubr.bf16.gmra.mrb[0].mxu0 %v1961
      %v2808 = vpop.f32.mrb[0].mxu0
      %v2809 = vadd.f32 0.0, %v2808
      %v2810 = vpop.f32.mrb[0].mxu0
      %v2811 = vpop.f32.mrb[0].mxu0
      %v2812 = vadd.f32 0.0, %v2811
      %v2813 = vpop.f32.mrb[0].mxu0
      %2814 = vmatprep.mubr.bf16.mxu0 %v1969
      %2815 = vmatmul.mubr.bf16.gmra.mrb[0].mxu0 %v1968
      %v2816 = vpop.f32.mrb[0].mxu0
      %v2817 = vadd.f32 0.0, %v2816
      %v2818 = vpop.f32.mrb[0].mxu0
      %v2819 = vpop.f32.mrb[0].mxu0
      %v2820 = vadd.f32 0.0, %v2819
      %v2821 = vpop.f32.mrb[0].mxu0
      %2822 = vmatprep.mubr.bf16.mxu0 %v1976
      %2823 = vmatmul.mubr.bf16.gmra.mrb[0].mxu0 %v1975
      %v2824 = vpop.f32.mrb[0].mxu0
      %v2825 = vadd.f32 0.0, %v2824
      %v2826 = vpop.f32.mrb[0].mxu0
      %v2827 = vpop.f32.mrb[0].mxu0
      %v2828 = vadd.f32 0.0, %v2827
      %v2829 = vpop.f32.mrb[0].mxu0
      %2830 = vmatprep.mubr.bf16.mxu0 %v1983
      %2831 = vmatmul.mubr.bf16.gmra.mrb[0].mxu0 %v1982
      %v2832 = vpop.f32.mrb[0].mxu0
      %v2833 = vadd.f32 0.0, %v2832
      %v2834 = vpop.f32.mrb[0].mxu0
      %v2835 = vpop.f32.mrb[0].mxu0
      %v2836 = vadd.f32 0.0, %v2835
      %v2837 = vpop.f32.mrb[0].mxu0
      %2838 = vmatprep.mubr.bf16.mxu0 %v1990
      %2839 = vmatmul.mubr.bf16.gmra.mrb[0].mxu0 %v1989
      %v2840 = vpop.f32.mrb[0].mxu0
      %v2841 = vadd.f32 0.0, %v2840
      %v2842 = vpop.f32.mrb[0].mxu0
      %v2843 = vpop.f32.mrb[0].mxu0
      %v2844 = vadd.f32 0.0, %v2843
      %v2845 = vpop.f32.mrb[0].mxu0
      %2846 = vmatprep.mubr.bf16.mxu0 %v1997
      %2847 = vmatmul.mubr.bf16.gmra.mrb[0].mxu0 %v1996
      %v2848 = vpop.f32.mrb[0].mxu0
      %v2849 = vadd.f32 0.0, %v2848
      %v2850 = vpop.f32.mrb[0].mxu0
      %v2851 = vpop.f32.mrb[0].mxu0
      %v2852 = vadd.f32 0.0, %v2851
      %v2853 = vpop.f32.mrb[0].mxu0
      %2854 = vmatprep.mubr.bf16.mxu0 %v2004
      %2855 = vmatmul.mubr.bf16.gmra.mrb[0].mxu0 %v2003
      %v2856 = vpop.f32.mrb[0].mxu0
      %v2857 = vadd.f32 0.0, %v2856
      %v2858 = vpop.f32.mrb[0].mxu0
      %v2859 = vpop.f32.mrb[0].mxu0
      %v2860 = vadd.f32 0.0, %v2859
      %v2861 = vpop.f32.mrb[0].mxu0
      %2862 = vmatprep.mubr.bf16.mxu0 %v2011
      %2863 = vmatmul.mubr.bf16.gmra.mrb[0].mxu0 %v2010
      %v2864 = vpop.f32.mrb[0].mxu0
      %v2865 = vadd.f32 0.0, %v2864
      %v2866 = vpop.f32.mrb[0].mxu0
      %v2867 = vpop.f32.mrb[0].mxu0
      %v2868 = vadd.f32 0.0, %v2867
      %v2869 = vpop.f32.mrb[0].mxu0
      %2870 = vmatprep.mubr.bf16.mxu0 %v2018
      %2871 = vmatmul.mubr.bf16.gmra.mrb[0].mxu0 %v2017
      %v2872 = vpop.f32.mrb[0].mxu0
      %v2873 = vadd.f32 0.0, %v2872
      %v2874 = vpop.f32.mrb[0].mxu0
      %v2875 = vpop.f32.mrb[0].mxu0
      %v2876 = vadd.f32 0.0, %v2875
      %v2877 = vpop.f32.mrb[0].mxu0
      %2878 = vmatprep.mubr.bf16.mxu0 %v2025
      %2879 = vmatmul.mubr.bf16.gmra.mrb[0].mxu0 %v2024
      %v2880 = vpop.f32.mrb[0].mxu0
      %v2881 = vadd.f32 0.0, %v2880
      %v2882 = vpop.f32.mrb[0].mxu0
      %v2883 = vpop.f32.mrb[0].mxu0
      %v2884 = vadd.f32 0.0, %v2883
      %v2885 = vpop.f32.mrb[0].mxu0
      %2886 = vmatprep.mubr.bf16.mxu0 %v2032
      %2887 = vmatmul.mubr.bf16.gmra.mrb[0].mxu0 %v2031
      %v2888 = vpop.f32.mrb[0].mxu0
      %v2889 = vadd.f32 0.0, %v2888
      %v2890 = vpop.f32.mrb[0].mxu0
      %v2891 = vpop.f32.mrb[0].mxu0
      %v2892 = vadd.f32 0.0, %v2891
      %v2893 = vpop.f32.mrb[0].mxu0
      %2894 = vmatprep.mubr.bf16.mxu0 %v2039
      %2895 = vmatmul.mubr.bf16.gmra.mrb[0].mxu0 %v2038
      %v2896 = vpop.f32.mrb[0].mxu0
      %v2897 = vadd.f32 0.0, %v2896
      %v2898 = vpop.f32.mrb[0].mxu0
      %v2899 = vpop.f32.mrb[0].mxu0
      %v2900 = vadd.f32 0.0, %v2899
      %v2901 = vpop.f32.mrb[0].mxu0
      %2902 = vmatprep.mubr.bf16.mxu0 %v2046
      %2903 = vmatmul.mubr.bf16.gmra.mrb[0].mxu0 %v2045
      %v2904 = vpop.f32.mrb[0].mxu0
      %v2905 = vadd.f32 0.0, %v2904
      %v2906 = vpop.f32.mrb[0].mxu0
      %v2907 = vpop.f32.mrb[0].mxu0
      %v2908 = vadd.f32 0.0, %v2907
      %v2909 = vpop.f32.mrb[0].mxu0
      %2910 = vmatprep.mubr.bf16.mxu0 %v2053
      %2911 = vmatmul.mubr.bf16.gmra.mrb[0].mxu0 %v2052
      %v2912 = vpop.f32.mrb[0].mxu0
      %v2913 = vadd.f32 0.0, %v2912
      %v2914 = vpop.f32.mrb[0].mxu0
      %v2915 = vpop.f32.mrb[0].mxu0
      %v2916 = vadd.f32 0.0, %v2915
      %v2917 = vpop.f32.mrb[0].mxu0
      %2918 = vmatprep.mubr.bf16.mxu0 %v2060
      %2919 = vmatmul.mubr.bf16.gmra.mrb[0].mxu0 %v2059
      %v2920 = vpop.f32.mrb[0].mxu0
      %v2921 = vadd.f32 0.0, %v2920
      %v2922 = vpop.f32.mrb[0].mxu0
      %v2923 = vpop.f32.mrb[0].mxu0
      %v2924 = vadd.f32 0.0, %v2923
      %v2925 = vpop.f32.mrb[0].mxu0
      %2926 = vmatprep.mubr.bf16.mxu0 %v2067
      %2927 = vmatmul.mubr.bf16.gmra.mrb[0].mxu0 %v2066
      %v2928 = vpop.f32.mrb[0].mxu0
      %v2929 = vadd.f32 0.0, %v2928
      %v2930 = vpop.f32.mrb[0].mxu0
      %v2931 = vpop.f32.mrb[0].mxu0
      %v2932 = vadd.f32 0.0, %v2931
      %v2933 = vpop.f32.mrb[0].mxu0
      %2934 = vmatprep.mubr.bf16.mxu0 %v2074
      %2935 = vmatmul.mubr.bf16.gmra.mrb[0].mxu0 %v2073
      %v2936 = vpop.f32.mrb[0].mxu0
      %v2937 = vadd.f32 0.0, %v2936
      %v2938 = vpop.f32.mrb[0].mxu0
      %v2939 = vpop.f32.mrb[0].mxu0
      %v2940 = vadd.f32 0.0, %v2939
      %v2941 = vpop.f32.mrb[0].mxu0
      %2942 = vmatprep.mubr.bf16.mxu0 %v2081
      %2943 = vmatmul.mubr.bf16.gmra.mrb[0].mxu0 %v2080
      %v2944 = vpop.f32.mrb[0].mxu0
      %v2945 = vadd.f32 0.0, %v2944
      %v2946 = vpop.f32.mrb[0].mxu0
      %v2947 = vpop.f32.mrb[0].mxu0
      %v2948 = vadd.f32 0.0, %v2947
      %v2949 = vpop.f32.mrb[0].mxu0
      %2950 = vmatprep.mubr.bf16.mxu0 %v2088
      %2951 = vmatmul.mubr.bf16.gmra.mrb[0].mxu0 %v2087
      %v2952 = vpop.f32.mrb[0].mxu0
      %v2953 = vadd.f32 0.0, %v2952
      %v2954 = vpop.f32.mrb[0].mxu0
      %v2955 = vpop.f32.mrb[0].mxu0
      %v2956 = vadd.f32 0.0, %v2955
      %v2957 = vpop.f32.mrb[0].mxu0
      %2958 = vmatprep.mubr.bf16.mxu0 %v2095
      %2959 = vmatmul.mubr.bf16.gmra.mrb[0].mxu0 %v2094
      %v2960 = vpop.f32.mrb[0].mxu0
      %v2961 = vadd.f32 0.0, %v2960
      %v2962 = vpop.f32.mrb[0].mxu0
      %v2963 = vpop.f32.mrb[0].mxu0
      %v2964 = vadd.f32 0.0, %v2963
      %v2965 = vpop.f32.mrb[0].mxu0
      %2966 = vmatprep.mubr.bf16.mxu0 %v2102
      %2967 = vmatmul.mubr.bf16.gmra.mrb[0].mxu0 %v2101
      %v2968 = vpop.f32.mrb[0].mxu0
      %v2969 = vadd.f32 0.0, %v2968
      %v2970 = vpop.f32.mrb[0].mxu0
      %v2971 = vpop.f32.mrb[0].mxu0
      %v2972 = vadd.f32 0.0, %v2971
      %v2973 = vpop.f32.mrb[0].mxu0
      %2974 = vdwg.mxu0
      %2975 = vmatprep.subr.bf16.mxu0 0
      %2976 = vmatpush1.bf16.msra.mxu0 %v654
      %2977 = vmatprep.subr.bf16.mxu0 0
      %2978 = vmatpush1.bf16.msra.mxu0 %v655
      %2979 = vmatprep.subr.bf16.mxu0 0
      %2980 = vmatpush1.bf16.msra.mxu0 %v656
      %2981 = vmatprep.subr.bf16.mxu0 0
      %2982 = vmatpush1.bf16.msra.mxu0 %v657
      %2983 = vmatprep.subr.bf16.mxu0 0
      %2984 = vmatpush1.bf16.msra.mxu0 %v658
      %2985 = vmatprep.subr.bf16.mxu0 0
      %2986 = vmatpush1.bf16.msra.mxu0 %v659
      %2987 = vmatprep.subr.bf16.mxu0 0
      %2988 = vmatpush1.bf16.msra.mxu0 %v660
      %2989 = vmatprep.subr.bf16.mxu0 0
      %2990 = vmatpush1.bf16.msra.mxu0 %v661
      %2991 = vmatprep.subr.bf16.mxu0 0
      %2992 = vmatpush1.bf16.msra.mxu0 %v662
      %2993 = vmatprep.subr.bf16.mxu0 0
      %2994 = vmatpush1.bf16.msra.mxu0 %v663
      %2995 = vmatprep.subr.bf16.mxu0 0
      %2996 = vmatpush1.bf16.msra.mxu0 %v664
      %2997 = vmatprep.subr.bf16.mxu0 0
      %2998 = vmatpush1.bf16.msra.mxu0 %v665
      %2999 = vmatprep.subr.bf16.mxu0 0
      %3000 = vmatpush1.bf16.msra.mxu0 %v666
      %3001 = vmatprep.subr.bf16.mxu0 0
      %3002 = vmatpush1.bf16.msra.mxu0 %v667
      %3003 = vmatprep.subr.bf16.mxu0 0
      %3004 = vmatpush1.bf16.msra.mxu0 %v668
      %3005 = vmatprep.subr.bf16.mxu0 0
      %3006 = vmatpush1.bf16.msra.mxu0 %v669
      %3007 = vmatprep.mubr.bf16.mxu0 %v1768
      %3008 = vmatmul.mubr.bf16.gmra.mrb[0].mxu0 %v1767
      %v3009 = vpop.f32.mrb[0].mxu0
      %v3010 = vadd.f32 %v2585, %v3009
      %v3011 = vpop.f32.mrb[0].mxu0
      %v3012 = vpop.f32.mrb[0].mxu0
      %v3013 = vadd.f32 %v2588, %v3012
      %v3014 = vpop.f32.mrb[0].mxu0
      %3015 = vmatprep.mubr.bf16.mxu0 %v1775
      %3016 = vmatmul.mubr.bf16.gmra.mrb[0].mxu0 %v1774
      %v3017 = vpop.f32.mrb[0].mxu0
      %v3018 = vadd.f32 %v2593, %v3017
      %v3019 = vpop.f32.mrb[0].mxu0
      %v3020 = vpop.f32.mrb[0].mxu0
      %v3021 = vadd.f32 %v2596, %v3020
      %v3022 = vpop.f32.mrb[0].mxu0
      %3023 = vmatprep.mubr.bf16.mxu0 %v1782
      %3024 = vmatmul.mubr.bf16.gmra.mrb[0].mxu0 %v1781
      %v3025 = vpop.f32.mrb[0].mxu0
      %v3026 = vadd.f32 %v2601, %v3025
      %v3027 = vpop.f32.mrb[0].mxu0
      %v3028 = vpop.f32.mrb[0].mxu0
      %v3029 = vadd.f32 %v2604, %v3028
      %v3030 = vpop.f32.mrb[0].mxu0
      %3031 = vmatprep.mubr.bf16.mxu0 %v1789
      %3032 = vmatmul.mubr.bf16.gmra.mrb[0].mxu0 %v1788
      %v3033 = vpop.f32.mrb[0].mxu0
      %v3034 = vadd.f32 %v2609, %v3033
      %v3035 = vpop.f32.mrb[0].mxu0
      %v3036 = vpop.f32.mrb[0].mxu0
      %v3037 = vadd.f32 %v2612, %v3036
      %v3038 = vpop.f32.mrb[0].mxu0
      %3039 = vmatprep.mubr.bf16.mxu0 %v1796
      %3040 = vmatmul.mubr.bf16.gmra.mrb[0].mxu0 %v1795
      %v3041 = vpop.f32.mrb[0].mxu0
      %v3042 = vadd.f32 %v2617, %v3041
      %v3043 = vpop.f32.mrb[0].mxu0
      %v3044 = vpop.f32.mrb[0].mxu0
      %v3045 = vadd.f32 %v2620, %v3044
      %v3046 = vpop.f32.mrb[0].mxu0
      %3047 = vmatprep.mubr.bf16.mxu0 %v1803
      %3048 = vmatmul.mubr.bf16.gmra.mrb[0].mxu0 %v1802
      %v3049 = vpop.f32.mrb[0].mxu0
      %v3050 = vadd.f32 %v2625, %v3049
      %v3051 = vpop.f32.mrb[0].mxu0
      %v3052 = vpop.f32.mrb[0].mxu0
      %v3053 = vadd.f32 %v2628, %v3052
      %v3054 = vpop.f32.mrb[0].mxu0
      %3055 = vmatprep.mubr.bf16.mxu0 %v1810
      %3056 = vmatmul.mubr.bf16.gmra.mrb[0].mxu0 %v1809
      %v3057 = vpop.f32.mrb[0].mxu0
      %v3058 = vadd.f32 %v2633, %v3057
      %v3059 = vpop.f32.mrb[0].mxu0
      %v3060 = vpop.f32.mrb[0].mxu0
      %v3061 = vadd.f32 %v2636, %v3060
      %v3062 = vpop.f32.mrb[0].mxu0
      %3063 = vmatprep.mubr.bf16.mxu0 %v1817
      %3064 = vmatmul.mubr.bf16.gmra.mrb[0].mxu0 %v1816
      %v3065 = vpop.f32.mrb[0].mxu0
      %v3066 = vadd.f32 %v2641, %v3065
      %v3067 = vpop.f32.mrb[0].mxu0
      %v3068 = vpop.f32.mrb[0].mxu0
      %v3069 = vadd.f32 %v2644, %v3068
      %v3070 = vpop.f32.mrb[0].mxu0
      %3071 = vmatprep.mubr.bf16.mxu0 %v1824
      %3072 = vmatmul.mubr.bf16.gmra.mrb[0].mxu0 %v1823
      %v3073 = vpop.f32.mrb[0].mxu0
      %v3074 = vadd.f32 %v2649, %v3073
      %v3075 = vpop.f32.mrb[0].mxu0
      %v3076 = vpop.f32.mrb[0].mxu0
      %v3077 = vadd.f32 %v2652, %v3076
      %v3078 = vpop.f32.mrb[0].mxu0
      %3079 = vmatprep.mubr.bf16.mxu0 %v1831
      %3080 = vmatmul.mubr.bf16.gmra.mrb[0].mxu0 %v1830
      %v3081 = vpop.f32.mrb[0].mxu0
      %v3082 = vadd.f32 %v2657, %v3081
      %v3083 = vpop.f32.mrb[0].mxu0
      %v3084 = vpop.f32.mrb[0].mxu0
      %v3085 = vadd.f32 %v2660, %v3084
      %v3086 = vpop.f32.mrb[0].mxu0
      %3087 = vmatprep.mubr.bf16.mxu0 %v1838
      %3088 = vmatmul.mubr.bf16.gmra.mrb[0].mxu0 %v1837
      %v3089 = vpop.f32.mrb[0].mxu0
      %v3090 = vadd.f32 %v2665, %v3089
      %v3091 = vpop.f32.mrb[0].mxu0
      %v3092 = vpop.f32.mrb[0].mxu0
      %v3093 = vadd.f32 %v2668, %v3092
      %v3094 = vpop.f32.mrb[0].mxu0
      %3095 = vmatprep.mubr.bf16.mxu0 %v1845
      %3096 = vmatmul.mubr.bf16.gmra.mrb[0].mxu0 %v1844
      %v3097 = vpop.f32.mrb[0].mxu0
      %v3098 = vadd.f32 %v2673, %v3097
      %v3099 = vpop.f32.mrb[0].mxu0
      %v3100 = vpop.f32.mrb[0].mxu0
      %v3101 = vadd.f32 %v2676, %v3100
      %v3102 = vpop.f32.mrb[0].mxu0
      %3103 = vmatprep.mubr.bf16.mxu0 %v1852
      %3104 = vmatmul.mubr.bf16.gmra.mrb[0].mxu0 %v1851
      %v3105 = vpop.f32.mrb[0].mxu0
      %v3106 = vadd.f32 %v2681, %v3105
      %v3107 = vpop.f32.mrb[0].mxu0
      %v3108 = vpop.f32.mrb[0].mxu0
      %v3109 = vadd.f32 %v2684, %v3108
      %v3110 = vpop.f32.mrb[0].mxu0
      %3111 = vmatprep.mubr.bf16.mxu0 %v1859
      %3112 = vmatmul.mubr.bf16.gmra.mrb[0].mxu0 %v1858
      %v3113 = vpop.f32.mrb[0].mxu0
      %v3114 = vadd.f32 %v2689, %v3113
      %v3115 = vpop.f32.mrb[0].mxu0
      %v3116 = vpop.f32.mrb[0].mxu0
      %v3117 = vadd.f32 %v2692, %v3116
      %v3118 = vpop.f32.mrb[0].mxu0
      %3119 = vmatprep.mubr.bf16.mxu0 %v1866
      %3120 = vmatmul.mubr.bf16.gmra.mrb[0].mxu0 %v1865
      %v3121 = vpop.f32.mrb[0].mxu0
      %v3122 = vadd.f32 %v2697, %v3121
      %v3123 = vpop.f32.mrb[0].mxu0
      %v3124 = vpop.f32.mrb[0].mxu0
      %v3125 = vadd.f32 %v2700, %v3124
      %v3126 = vpop.f32.mrb[0].mxu0
      %3127 = vmatprep.mubr.bf16.mxu0 %v1873
      %3128 = vmatmul.mubr.bf16.gmra.mrb[0].mxu0 %v1872
      %v3129 = vpop.f32.mrb[0].mxu0
      %v3130 = vadd.f32 %v2705, %v3129
      %v3131 = vpop.f32.mrb[0].mxu0
      %v3132 = vpop.f32.mrb[0].mxu0
      %v3133 = vadd.f32 %v2708, %v3132
      %v3134 = vpop.f32.mrb[0].mxu0
      %3135 = vmatprep.mubr.bf16.mxu0 %v1880
      %3136 = vmatmul.mubr.bf16.gmra.mrb[0].mxu0 %v1879
      %v3137 = vpop.f32.mrb[0].mxu0
      %v3138 = vadd.f32 %v2713, %v3137
      %v3139 = vpop.f32.mrb[0].mxu0
      %v3140 = vpop.f32.mrb[0].mxu0
      %v3141 = vadd.f32 %v2716, %v3140
      %v3142 = vpop.f32.mrb[0].mxu0
      %3143 = vmatprep.mubr.bf16.mxu0 %v1887
      %3144 = vmatmul.mubr.bf16.gmra.mrb[0].mxu0 %v1886
      %v3145 = vpop.f32.mrb[0].mxu0
      %v3146 = vadd.f32 %v2721, %v3145
      %v3147 = vpop.f32.mrb[0].mxu0
      %v3148 = vpop.f32.mrb[0].mxu0
      %v3149 = vadd.f32 %v2724, %v3148
      %v3150 = vpop.f32.mrb[0].mxu0
      %3151 = vmatprep.mubr.bf16.mxu0 %v1894
      %3152 = vmatmul.mubr.bf16.gmra.mrb[0].mxu0 %v1893
      %v3153 = vpop.f32.mrb[0].mxu0
      %v3154 = vadd.f32 %v2729, %v3153
      %v3155 = vpop.f32.mrb[0].mxu0
      %v3156 = vpop.f32.mrb[0].mxu0
      %v3157 = vadd.f32 %v2732, %v3156
      %v3158 = vpop.f32.mrb[0].mxu0
      %3159 = vmatprep.mubr.bf16.mxu0 %v1901
      %3160 = vmatmul.mubr.bf16.gmra.mrb[0].mxu0 %v1900
      %v3161 = vpop.f32.mrb[0].mxu0
      %v3162 = vadd.f32 %v2737, %v3161
      %v3163 = vpop.f32.mrb[0].mxu0
      %v3164 = vpop.f32.mrb[0].mxu0
      %v3165 = vadd.f32 %v2740, %v3164
      %v3166 = vpop.f32.mrb[0].mxu0
      %3167 = vmatprep.mubr.bf16.mxu0 %v1908
      %3168 = vmatmul.mubr.bf16.gmra.mrb[0].mxu0 %v1907
      %v3169 = vpop.f32.mrb[0].mxu0
      %v3170 = vadd.f32 %v2745, %v3169
      %v3171 = vpop.f32.mrb[0].mxu0
      %v3172 = vpop.f32.mrb[0].mxu0
      %v3173 = vadd.f32 %v2748, %v3172
      %v3174 = vpop.f32.mrb[0].mxu0
      %3175 = vmatprep.mubr.bf16.mxu0 %v1915
      %3176 = vmatmul.mubr.bf16.gmra.mrb[0].mxu0 %v1914
      %v3177 = vpop.f32.mrb[0].mxu0
      %v3178 = vadd.f32 %v2753, %v3177
      %v3179 = vpop.f32.mrb[0].mxu0
      %v3180 = vpop.f32.mrb[0].mxu0
      %v3181 = vadd.f32 %v2756, %v3180
      %v3182 = vpop.f32.mrb[0].mxu0
      %3183 = vmatprep.mubr.bf16.mxu0 %v1922
      %3184 = vmatmul.mubr.bf16.gmra.mrb[0].mxu0 %v1921
      %v3185 = vpop.f32.mrb[0].mxu0
      %v3186 = vadd.f32 %v2761, %v3185
      %v3187 = vpop.f32.mrb[0].mxu0
      %v3188 = vpop.f32.mrb[0].mxu0
      %v3189 = vadd.f32 %v2764, %v3188
      %v3190 = vpop.f32.mrb[0].mxu0
      %3191 = vmatprep.mubr.bf16.mxu0 %v1929
      %3192 = vmatmul.mubr.bf16.gmra.mrb[0].mxu0 %v1928
      %v3193 = vpop.f32.mrb[0].mxu0
      %v3194 = vadd.f32 %v2769, %v3193
      %v3195 = vpop.f32.mrb[0].mxu0
      %v3196 = vpop.f32.mrb[0].mxu0
      %v3197 = vadd.f32 %v2772, %v3196
      %v3198 = vpop.f32.mrb[0].mxu0
      %3199 = vmatprep.mubr.bf16.mxu0 %v1936
      %3200 = vmatmul.mubr.bf16.gmra.mrb[0].mxu0 %v1935
      %v3201 = vpop.f32.mrb[0].mxu0
      %v3202 = vadd.f32 %v2777, %v3201
      %v3203 = vpop.f32.mrb[0].mxu0
      %v3204 = vpop.f32.mrb[0].mxu0
      %v3205 = vadd.f32 %v2780, %v3204
      %v3206 = vpop.f32.mrb[0].mxu0
      %3207 = vmatprep.mubr.bf16.mxu0 %v1943
      %3208 = vmatmul.mubr.bf16.gmra.mrb[0].mxu0 %v1942
      %v3209 = vpop.f32.mrb[0].mxu0
      %v3210 = vadd.f32 %v2785, %v3209
      %v3211 = vpop.f32.mrb[0].mxu0
      %v3212 = vpop.f32.mrb[0].mxu0
      %v3213 = vadd.f32 %v2788, %v3212
      %v3214 = vpop.f32.mrb[0].mxu0
      %3215 = vmatprep.mubr.bf16.mxu0 %v1950
      %3216 = vmatmul.mubr.bf16.gmra.mrb[0].mxu0 %v1949
      %v3217 = vpop.f32.mrb[0].mxu0
      %v3218 = vadd.f32 %v2793, %v3217
      %v3219 = vpop.f32.mrb[0].mxu0
      %v3220 = vpop.f32.mrb[0].mxu0
      %v3221 = vadd.f32 %v2796, %v3220
      %v3222 = vpop.f32.mrb[0].mxu0
      %3223 = vmatprep.mubr.bf16.mxu0 %v1957
      %3224 = vmatmul.mubr.bf16.gmra.mrb[0].mxu0 %v1956
      %v3225 = vpop.f32.mrb[0].mxu0
      %v3226 = vadd.f32 %v2801, %v3225
      %v3227 = vpop.f32.mrb[0].mxu0
      %v3228 = vpop.f32.mrb[0].mxu0
      %v3229 = vadd.f32 %v2804, %v3228
      %v3230 = vpop.f32.mrb[0].mxu0
      %3231 = vmatprep.mubr.bf16.mxu0 %v1964
      %3232 = vmatmul.mubr.bf16.gmra.mrb[0].mxu0 %v1963
      %v3233 = vpop.f32.mrb[0].mxu0
      %v3234 = vadd.f32 %v2809, %v3233
      %v3235 = vpop.f32.mrb[0].mxu0
      %v3236 = vpop.f32.mrb[0].mxu0
      %v3237 = vadd.f32 %v2812, %v3236
      %v3238 = vpop.f32.mrb[0].mxu0
      %3239 = vmatprep.mubr.bf16.mxu0 %v1971
      %3240 = vmatmul.mubr.bf16.gmra.mrb[0].mxu0 %v1970
      %v3241 = vpop.f32.mrb[0].mxu0
      %v3242 = vadd.f32 %v2817, %v3241
      %v3243 = vpop.f32.mrb[0].mxu0
      %v3244 = vpop.f32.mrb[0].mxu0
      %v3245 = vadd.f32 %v2820, %v3244
      %v3246 = vpop.f32.mrb[0].mxu0
      %3247 = vmatprep.mubr.bf16.mxu0 %v1978
      %3248 = vmatmul.mubr.bf16.gmra.mrb[0].mxu0 %v1977
      %v3249 = vpop.f32.mrb[0].mxu0
      %v3250 = vadd.f32 %v2825, %v3249
      %v3251 = vpop.f32.mrb[0].mxu0
      %v3252 = vpop.f32.mrb[0].mxu0
      %v3253 = vadd.f32 %v2828, %v3252
      %v3254 = vpop.f32.mrb[0].mxu0
      %3255 = vmatprep.mubr.bf16.mxu0 %v1985
      %3256 = vmatmul.mubr.bf16.gmra.mrb[0].mxu0 %v1984
      %v3257 = vpop.f32.mrb[0].mxu0
      %v3258 = vadd.f32 %v2833, %v3257
      %v3259 = vpop.f32.mrb[0].mxu0
      %v3260 = vpop.f32.mrb[0].mxu0
      %v3261 = vadd.f32 %v2836, %v3260
      %v3262 = vpop.f32.mrb[0].mxu0
      %3263 = vmatprep.mubr.bf16.mxu0 %v1992
      %3264 = vmatmul.mubr.bf16.gmra.mrb[0].mxu0 %v1991
      %v3265 = vpop.f32.mrb[0].mxu0
      %v3266 = vadd.f32 %v2841, %v3265
      %v3267 = vpop.f32.mrb[0].mxu0
      %v3268 = vpop.f32.mrb[0].mxu0
      %v3269 = vadd.f32 %v2844, %v3268
      %v3270 = vpop.f32.mrb[0].mxu0
      %3271 = vmatprep.mubr.bf16.mxu0 %v1999
      %3272 = vmatmul.mubr.bf16.gmra.mrb[0].mxu0 %v1998
      %v3273 = vpop.f32.mrb[0].mxu0
      %v3274 = vadd.f32 %v2849, %v3273
      %v3275 = vpop.f32.mrb[0].mxu0
      %v3276 = vpop.f32.mrb[0].mxu0
      %v3277 = vadd.f32 %v2852, %v3276
      %v3278 = vpop.f32.mrb[0].mxu0
      %3279 = vmatprep.mubr.bf16.mxu0 %v2006
      %3280 = vmatmul.mubr.bf16.gmra.mrb[0].mxu0 %v2005
      %v3281 = vpop.f32.mrb[0].mxu0
      %v3282 = vadd.f32 %v2857, %v3281
      %v3283 = vpop.f32.mrb[0].mxu0
      %v3284 = vpop.f32.mrb[0].mxu0
      %v3285 = vadd.f32 %v2860, %v3284
      %v3286 = vpop.f32.mrb[0].mxu0
      %3287 = vmatprep.mubr.bf16.mxu0 %v2013
      %3288 = vmatmul.mubr.bf16.gmra.mrb[0].mxu0 %v2012
      %v3289 = vpop.f32.mrb[0].mxu0
      %v3290 = vadd.f32 %v2865, %v3289
      %v3291 = vpop.f32.mrb[0].mxu0
      %v3292 = vpop.f32.mrb[0].mxu0
      %v3293 = vadd.f32 %v2868, %v3292
      %v3294 = vpop.f32.mrb[0].mxu0
      %3295 = vmatprep.mubr.bf16.mxu0 %v2020
      %3296 = vmatmul.mubr.bf16.gmra.mrb[0].mxu0 %v2019
      %v3297 = vpop.f32.mrb[0].mxu0
      %v3298 = vadd.f32 %v2873, %v3297
      %v3299 = vpop.f32.mrb[0].mxu0
      %v3300 = vpop.f32.mrb[0].mxu0
      %v3301 = vadd.f32 %v2876, %v3300
      %v3302 = vpop.f32.mrb[0].mxu0
      %3303 = vmatprep.mubr.bf16.mxu0 %v2027
      %3304 = vmatmul.mubr.bf16.gmra.mrb[0].mxu0 %v2026
      %v3305 = vpop.f32.mrb[0].mxu0
      %v3306 = vadd.f32 %v2881, %v3305
      %v3307 = vpop.f32.mrb[0].mxu0
      %v3308 = vpop.f32.mrb[0].mxu0
      %v3309 = vadd.f32 %v2884, %v3308
      %v3310 = vpop.f32.mrb[0].mxu0
      %3311 = vmatprep.mubr.bf16.mxu0 %v2034
      %3312 = vmatmul.mubr.bf16.gmra.mrb[0].mxu0 %v2033
      %v3313 = vpop.f32.mrb[0].mxu0
      %v3314 = vadd.f32 %v2889, %v3313
      %v3315 = vpop.f32.mrb[0].mxu0
      %v3316 = vpop.f32.mrb[0].mxu0
      %v3317 = vadd.f32 %v2892, %v3316
      %v3318 = vpop.f32.mrb[0].mxu0
      %3319 = vmatprep.mubr.bf16.mxu0 %v2041
      %3320 = vmatmul.mubr.bf16.gmra.mrb[0].mxu0 %v2040
      %v3321 = vpop.f32.mrb[0].mxu0
      %v3322 = vadd.f32 %v2897, %v3321
      %v3323 = vpop.f32.mrb[0].mxu0
      %v3324 = vpop.f32.mrb[0].mxu0
      %v3325 = vadd.f32 %v2900, %v3324
      %v3326 = vpop.f32.mrb[0].mxu0
      %3327 = vmatprep.mubr.bf16.mxu0 %v2048
      %3328 = vmatmul.mubr.bf16.gmra.mrb[0].mxu0 %v2047
      %v3329 = vpop.f32.mrb[0].mxu0
      %v3330 = vadd.f32 %v2905, %v3329
      %v3331 = vpop.f32.mrb[0].mxu0
      %v3332 = vpop.f32.mrb[0].mxu0
      %v3333 = vadd.f32 %v2908, %v3332
      %v3334 = vpop.f32.mrb[0].mxu0
      %3335 = vmatprep.mubr.bf16.mxu0 %v2055
      %3336 = vmatmul.mubr.bf16.gmra.mrb[0].mxu0 %v2054
      %v3337 = vpop.f32.mrb[0].mxu0
      %v3338 = vadd.f32 %v2913, %v3337
      %v3339 = vpop.f32.mrb[0].mxu0
      %v3340 = vpop.f32.mrb[0].mxu0
      %v3341 = vadd.f32 %v2916, %v3340
      %v3342 = vpop.f32.mrb[0].mxu0
      %3343 = vmatprep.mubr.bf16.mxu0 %v2062
      %3344 = vmatmul.mubr.bf16.gmra.mrb[0].mxu0 %v2061
      %v3345 = vpop.f32.mrb[0].mxu0
      %v3346 = vadd.f32 %v2921, %v3345
      %v3347 = vpop.f32.mrb[0].mxu0
      %v3348 = vpop.f32.mrb[0].mxu0
      %v3349 = vadd.f32 %v2924, %v3348
      %v3350 = vpop.f32.mrb[0].mxu0
      %3351 = vmatprep.mubr.bf16.mxu0 %v2069
      %3352 = vmatmul.mubr.bf16.gmra.mrb[0].mxu0 %v2068
      %v3353 = vpop.f32.mrb[0].mxu0
      %v3354 = vadd.f32 %v2929, %v3353
      %v3355 = vpop.f32.mrb[0].mxu0
      %v3356 = vpop.f32.mrb[0].mxu0
      %v3357 = vadd.f32 %v2932, %v3356
      %v3358 = vpop.f32.mrb[0].mxu0
      %3359 = vmatprep.mubr.bf16.mxu0 %v2076
      %3360 = vmatmul.mubr.bf16.gmra.mrb[0].mxu0 %v2075
      %v3361 = vpop.f32.mrb[0].mxu0
      %v3362 = vadd.f32 %v2937, %v3361
      %v3363 = vpop.f32.mrb[0].mxu0
      %v3364 = vpop.f32.mrb[0].mxu0
      %v3365 = vadd.f32 %v2940, %v3364
      %v3366 = vpop.f32.mrb[0].mxu0
      %3367 = vmatprep.mubr.bf16.mxu0 %v2083
      %3368 = vmatmul.mubr.bf16.gmra.mrb[0].mxu0 %v2082
      %v3369 = vpop.f32.mrb[0].mxu0
      %v3370 = vadd.f32 %v2945, %v3369
      %v3371 = vpop.f32.mrb[0].mxu0
      %v3372 = vpop.f32.mrb[0].mxu0
      %v3373 = vadd.f32 %v2948, %v3372
      %v3374 = vpop.f32.mrb[0].mxu0
      %3375 = vmatprep.mubr.bf16.mxu0 %v2090
      %3376 = vmatmul.mubr.bf16.gmra.mrb[0].mxu0 %v2089
      %v3377 = vpop.f32.mrb[0].mxu0
      %v3378 = vadd.f32 %v2953, %v3377
      %v3379 = vpop.f32.mrb[0].mxu0
      %v3380 = vpop.f32.mrb[0].mxu0
      %v3381 = vadd.f32 %v2956, %v3380
      %v3382 = vpop.f32.mrb[0].mxu0
      %3383 = vmatprep.mubr.bf16.mxu0 %v2097
      %3384 = vmatmul.mubr.bf16.gmra.mrb[0].mxu0 %v2096
      %v3385 = vpop.f32.mrb[0].mxu0
      %v3386 = vadd.f32 %v2961, %v3385
      %v3387 = vpop.f32.mrb[0].mxu0
      %v3388 = vpop.f32.mrb[0].mxu0
      %v3389 = vadd.f32 %v2964, %v3388
      %v3390 = vpop.f32.mrb[0].mxu0
      %3391 = vmatprep.mubr.bf16.mxu0 %v2104
      %3392 = vmatmul.mubr.bf16.gmra.mrb[0].mxu0 %v2103
      %v3393 = vpop.f32.mrb[0].mxu0
      %v3394 = vadd.f32 %v2969, %v3393
      %v3395 = vpop.f32.mrb[0].mxu0
      %v3396 = vpop.f32.mrb[0].mxu0
      %v3397 = vadd.f32 %v2972, %v3396
      %v3398 = vpop.f32.mrb[0].mxu0
      %3399 = vdwg.mxu0
      %3400 = vmatprep.subr.bf16.mxu0 0
      %3401 = vmatpush1.bf16.msra.mxu0 %v670
      %3402 = vmatprep.subr.bf16.mxu0 0
      %3403 = vmatpush1.bf16.msra.mxu0 %v671
      %3404 = vmatprep.subr.bf16.mxu0 0
      %3405 = vmatpush1.bf16.msra.mxu0 %v672
      %3406 = vmatprep.subr.bf16.mxu0 0
      %3407 = vmatpush1.bf16.msra.mxu0 %v673
      %3408 = vmatprep.subr.bf16.mxu0 0
      %3409 = vmatpush1.bf16.msra.mxu0 %v674
      %3410 = vmatprep.subr.bf16.mxu0 0
      %3411 = vmatpush1.bf16.msra.mxu0 %v675
      %3412 = vmatprep.subr.bf16.mxu0 0
      %3413 = vmatpush1.bf16.msra.mxu0 %v676
      %3414 = vmatprep.subr.bf16.mxu0 0
      %3415 = vmatpush1.bf16.msra.mxu0 %v677
      %3416 = vmatprep.subr.bf16.mxu0 0
      %3417 = vmatpush1.bf16.msra.mxu0 %v678
      %3418 = vmatprep.subr.bf16.mxu0 0
      %3419 = vmatpush1.bf16.msra.mxu0 %v679
      %3420 = vmatprep.subr.bf16.mxu0 0
      %3421 = vmatpush1.bf16.msra.mxu0 %v680
      %3422 = vmatprep.subr.bf16.mxu0 0
      %3423 = vmatpush1.bf16.msra.mxu0 %v681
      %3424 = vmatprep.subr.bf16.mxu0 0
      %3425 = vmatpush1.bf16.msra.mxu0 %v682
      %3426 = vmatprep.subr.bf16.mxu0 0
      %3427 = vmatpush1.bf16.msra.mxu0 %v683
      %3428 = vmatprep.subr.bf16.mxu0 0
      %3429 = vmatpush1.bf16.msra.mxu0 %v684
      %3430 = vmatprep.subr.bf16.mxu0 0
      %3431 = vmatpush1.bf16.msra.mxu0 %v685
      %3432 = vmatprep.mubr.bf16.mxu0 %v1770
      %3433 = vmatmul.mubr.bf16.gmra.mrb[0].mxu0 %v1769
      %v3434 = vpop.f32.mrb[0].mxu0
      %v3435 = vadd.f32 %v3010, %v3434
      %v3436 = vpop.f32.mrb[0].mxu0
      %v3437 = vpop.f32.mrb[0].mxu0
      %v3438 = vadd.f32 %v3013, %v3437
      %v3439 = vpop.f32.mrb[0].mxu0
      %3440 = vmatprep.mubr.bf16.mxu0 %v1777
      %3441 = vmatmul.mubr.bf16.gmra.mrb[0].mxu0 %v1776
      %v3442 = vpop.f32.mrb[0].mxu0
      %v3443 = vadd.f32 %v3018, %v3442
      %v3444 = vpop.f32.mrb[0].mxu0
      %v3445 = vpop.f32.mrb[0].mxu0
      %v3446 = vadd.f32 %v3021, %v3445
      %v3447 = vpop.f32.mrb[0].mxu0
      %3448 = vmatprep.mubr.bf16.mxu0 %v1784
      %3449 = vmatmul.mubr.bf16.gmra.mrb[0].mxu0 %v1783
      %v3450 = vpop.f32.mrb[0].mxu0
      %v3451 = vadd.f32 %v3026, %v3450
      %v3452 = vpop.f32.mrb[0].mxu0
      %v3453 = vpop.f32.mrb[0].mxu0
      %v3454 = vadd.f32 %v3029, %v3453
      %v3455 = vpop.f32.mrb[0].mxu0
      %3456 = vmatprep.mubr.bf16.mxu0 %v1791
      %3457 = vmatmul.mubr.bf16.gmra.mrb[0].mxu0 %v1790
      %v3458 = vpop.f32.mrb[0].mxu0
      %v3459 = vadd.f32 %v3034, %v3458
      %v3460 = vpop.f32.mrb[0].mxu0
      %v3461 = vpop.f32.mrb[0].mxu0
      %v3462 = vadd.f32 %v3037, %v3461
      %v3463 = vpop.f32.mrb[0].mxu0
      %3464 = vmatprep.mubr.bf16.mxu0 %v1798
      %3465 = vmatmul.mubr.bf16.gmra.mrb[0].mxu0 %v1797
      %v3466 = vpop.f32.mrb[0].mxu0
      %v3467 = vadd.f32 %v3042, %v3466
      %v3468 = vpop.f32.mrb[0].mxu0
      %v3469 = vpop.f32.mrb[0].mxu0
      %v3470 = vadd.f32 %v3045, %v3469
      %v3471 = vpop.f32.mrb[0].mxu0
      %3472 = vmatprep.mubr.bf16.mxu0 %v1805
      %3473 = vmatmul.mubr.bf16.gmra.mrb[0].mxu0 %v1804
      %v3474 = vpop.f32.mrb[0].mxu0
      %v3475 = vadd.f32 %v3050, %v3474
      %v3476 = vpop.f32.mrb[0].mxu0
      %v3477 = vpop.f32.mrb[0].mxu0
      %v3478 = vadd.f32 %v3053, %v3477
      %v3479 = vpop.f32.mrb[0].mxu0
      %3480 = vmatprep.mubr.bf16.mxu0 %v1812
      %3481 = vmatmul.mubr.bf16.gmra.mrb[0].mxu0 %v1811
      %v3482 = vpop.f32.mrb[0].mxu0
      %v3483 = vadd.f32 %v3058, %v3482
      %v3484 = vpop.f32.mrb[0].mxu0
      %v3485 = vpop.f32.mrb[0].mxu0
      %v3486 = vadd.f32 %v3061, %v3485
      %v3487 = vpop.f32.mrb[0].mxu0
      %3488 = vmatprep.mubr.bf16.mxu0 %v1819
      %3489 = vmatmul.mubr.bf16.gmra.mrb[0].mxu0 %v1818
      %v3490 = vpop.f32.mrb[0].mxu0
      %v3491 = vadd.f32 %v3066, %v3490
      %v3492 = vpop.f32.mrb[0].mxu0
      %v3493 = vpop.f32.mrb[0].mxu0
      %v3494 = vadd.f32 %v3069, %v3493
      %v3495 = vpop.f32.mrb[0].mxu0
      %3496 = vmatprep.mubr.bf16.mxu0 %v1826
      %3497 = vmatmul.mubr.bf16.gmra.mrb[0].mxu0 %v1825
      %v3498 = vpop.f32.mrb[0].mxu0
      %v3499 = vadd.f32 %v3074, %v3498
      %v3500 = vpop.f32.mrb[0].mxu0
      %v3501 = vpop.f32.mrb[0].mxu0
      %v3502 = vadd.f32 %v3077, %v3501
      %v3503 = vpop.f32.mrb[0].mxu0
      %3504 = vmatprep.mubr.bf16.mxu0 %v1833
      %3505 = vmatmul.mubr.bf16.gmra.mrb[0].mxu0 %v1832
      %v3506 = vpop.f32.mrb[0].mxu0
      %v3507 = vadd.f32 %v3082, %v3506
      %v3508 = vpop.f32.mrb[0].mxu0
      %v3509 = vpop.f32.mrb[0].mxu0
      %v3510 = vadd.f32 %v3085, %v3509
      %v3511 = vpop.f32.mrb[0].mxu0
      %3512 = vmatprep.mubr.bf16.mxu0 %v1840
      %3513 = vmatmul.mubr.bf16.gmra.mrb[0].mxu0 %v1839
      %v3514 = vpop.f32.mrb[0].mxu0
      %v3515 = vadd.f32 %v3090, %v3514
      %v3516 = vpop.f32.mrb[0].mxu0
      %v3517 = vpop.f32.mrb[0].mxu0
      %v3518 = vadd.f32 %v3093, %v3517
      %v3519 = vpop.f32.mrb[0].mxu0
      %3520 = vmatprep.mubr.bf16.mxu0 %v1847
      %3521 = vmatmul.mubr.bf16.gmra.mrb[0].mxu0 %v1846
      %v3522 = vpop.f32.mrb[0].mxu0
      %v3523 = vadd.f32 %v3098, %v3522
      %v3524 = vpop.f32.mrb[0].mxu0
      %v3525 = vpop.f32.mrb[0].mxu0
      %v3526 = vadd.f32 %v3101, %v3525
      %v3527 = vpop.f32.mrb[0].mxu0
      %3528 = vmatprep.mubr.bf16.mxu0 %v1854
      %3529 = vmatmul.mubr.bf16.gmra.mrb[0].mxu0 %v1853
      %v3530 = vpop.f32.mrb[0].mxu0
      %v3531 = vadd.f32 %v3106, %v3530
      %v3532 = vpop.f32.mrb[0].mxu0
      %v3533 = vpop.f32.mrb[0].mxu0
      %v3534 = vadd.f32 %v3109, %v3533
      %v3535 = vpop.f32.mrb[0].mxu0
      %3536 = vmatprep.mubr.bf16.mxu0 %v1861
      %3537 = vmatmul.mubr.bf16.gmra.mrb[0].mxu0 %v1860
      %v3538 = vpop.f32.mrb[0].mxu0
      %v3539 = vadd.f32 %v3114, %v3538
      %v3540 = vpop.f32.mrb[0].mxu0
      %v3541 = vpop.f32.mrb[0].mxu0
      %v3542 = vadd.f32 %v3117, %v3541
      %v3543 = vpop.f32.mrb[0].mxu0
      %3544 = vmatprep.mubr.bf16.mxu0 %v1868
      %3545 = vmatmul.mubr.bf16.gmra.mrb[0].mxu0 %v1867
      %v3546 = vpop.f32.mrb[0].mxu0
      %v3547 = vadd.f32 %v3122, %v3546
      %v3548 = vpop.f32.mrb[0].mxu0
      %v3549 = vpop.f32.mrb[0].mxu0
      %v3550 = vadd.f32 %v3125, %v3549
      %v3551 = vpop.f32.mrb[0].mxu0
      %3552 = vmatprep.mubr.bf16.mxu0 %v1875
      %3553 = vmatmul.mubr.bf16.gmra.mrb[0].mxu0 %v1874
      %v3554 = vpop.f32.mrb[0].mxu0
      %v3555 = vadd.f32 %v3130, %v3554
      %v3556 = vpop.f32.mrb[0].mxu0
      %v3557 = vpop.f32.mrb[0].mxu0
      %v3558 = vadd.f32 %v3133, %v3557
      %v3559 = vpop.f32.mrb[0].mxu0
      %3560 = vmatprep.mubr.bf16.mxu0 %v1882
      %3561 = vmatmul.mubr.bf16.gmra.mrb[0].mxu0 %v1881
      %v3562 = vpop.f32.mrb[0].mxu0
      %v3563 = vadd.f32 %v3138, %v3562
      %v3564 = vpop.f32.mrb[0].mxu0
      %v3565 = vpop.f32.mrb[0].mxu0
      %v3566 = vadd.f32 %v3141, %v3565
      %v3567 = vpop.f32.mrb[0].mxu0
      %3568 = vmatprep.mubr.bf16.mxu0 %v1889
      %3569 = vmatmul.mubr.bf16.gmra.mrb[0].mxu0 %v1888
      %v3570 = vpop.f32.mrb[0].mxu0
      %v3571 = vadd.f32 %v3146, %v3570
      %v3572 = vpop.f32.mrb[0].mxu0
      %v3573 = vpop.f32.mrb[0].mxu0
      %v3574 = vadd.f32 %v3149, %v3573
      %v3575 = vpop.f32.mrb[0].mxu0
      %3576 = vmatprep.mubr.bf16.mxu0 %v1896
      %3577 = vmatmul.mubr.bf16.gmra.mrb[0].mxu0 %v1895
      %v3578 = vpop.f32.mrb[0].mxu0
      %v3579 = vadd.f32 %v3154, %v3578
      %v3580 = vpop.f32.mrb[0].mxu0
      %v3581 = vpop.f32.mrb[0].mxu0
      %v3582 = vadd.f32 %v3157, %v3581
      %v3583 = vpop.f32.mrb[0].mxu0
      %3584 = vmatprep.mubr.bf16.mxu0 %v1903
      %3585 = vmatmul.mubr.bf16.gmra.mrb[0].mxu0 %v1902
      %v3586 = vpop.f32.mrb[0].mxu0
      %v3587 = vadd.f32 %v3162, %v3586
      %v3588 = vpop.f32.mrb[0].mxu0
      %v3589 = vpop.f32.mrb[0].mxu0
      %v3590 = vadd.f32 %v3165, %v3589
      %v3591 = vpop.f32.mrb[0].mxu0
      %3592 = vmatprep.mubr.bf16.mxu0 %v1910
      %3593 = vmatmul.mubr.bf16.gmra.mrb[0].mxu0 %v1909
      %v3594 = vpop.f32.mrb[0].mxu0
      %v3595 = vadd.f32 %v3170, %v3594
      %v3596 = vpop.f32.mrb[0].mxu0
      %v3597 = vpop.f32.mrb[0].mxu0
      %v3598 = vadd.f32 %v3173, %v3597
      %v3599 = vpop.f32.mrb[0].mxu0
      %3600 = vmatprep.mubr.bf16.mxu0 %v1917
      %3601 = vmatmul.mubr.bf16.gmra.mrb[0].mxu0 %v1916
      %v3602 = vpop.f32.mrb[0].mxu0
      %v3603 = vadd.f32 %v3178, %v3602
      %v3604 = vpop.f32.mrb[0].mxu0
      %v3605 = vpop.f32.mrb[0].mxu0
      %v3606 = vadd.f32 %v3181, %v3605
      %v3607 = vpop.f32.mrb[0].mxu0
      %3608 = vmatprep.mubr.bf16.mxu0 %v1924
      %3609 = vmatmul.mubr.bf16.gmra.mrb[0].mxu0 %v1923
      %v3610 = vpop.f32.mrb[0].mxu0
      %v3611 = vadd.f32 %v3186, %v3610
      %v3612 = vpop.f32.mrb[0].mxu0
      %v3613 = vpop.f32.mrb[0].mxu0
      %v3614 = vadd.f32 %v3189, %v3613
      %v3615 = vpop.f32.mrb[0].mxu0
      %3616 = vmatprep.mubr.bf16.mxu0 %v1931
      %3617 = vmatmul.mubr.bf16.gmra.mrb[0].mxu0 %v1930
      %v3618 = vpop.f32.mrb[0].mxu0
      %v3619 = vadd.f32 %v3194, %v3618
      %v3620 = vpop.f32.mrb[0].mxu0
      %v3621 = vpop.f32.mrb[0].mxu0
      %v3622 = vadd.f32 %v3197, %v3621
      %v3623 = vpop.f32.mrb[0].mxu0
      %3624 = vmatprep.mubr.bf16.mxu0 %v1938
      %3625 = vmatmul.mubr.bf16.gmra.mrb[0].mxu0 %v1937
      %v3626 = vpop.f32.mrb[0].mxu0
      %v3627 = vadd.f32 %v3202, %v3626
      %v3628 = vpop.f32.mrb[0].mxu0
      %v3629 = vpop.f32.mrb[0].mxu0
      %v3630 = vadd.f32 %v3205, %v3629
      %v3631 = vpop.f32.mrb[0].mxu0
      %3632 = vmatprep.mubr.bf16.mxu0 %v1945
      %3633 = vmatmul.mubr.bf16.gmra.mrb[0].mxu0 %v1944
      %v3634 = vpop.f32.mrb[0].mxu0
      %v3635 = vadd.f32 %v3210, %v3634
      %v3636 = vpop.f32.mrb[0].mxu0
      %v3637 = vpop.f32.mrb[0].mxu0
      %v3638 = vadd.f32 %v3213, %v3637
      %v3639 = vpop.f32.mrb[0].mxu0
      %3640 = vmatprep.mubr.bf16.mxu0 %v1952
      %3641 = vmatmul.mubr.bf16.gmra.mrb[0].mxu0 %v1951
      %v3642 = vpop.f32.mrb[0].mxu0
      %v3643 = vadd.f32 %v3218, %v3642
      %v3644 = vpop.f32.mrb[0].mxu0
      %v3645 = vpop.f32.mrb[0].mxu0
      %v3646 = vadd.f32 %v3221, %v3645
      %v3647 = vpop.f32.mrb[0].mxu0
      %3648 = vmatprep.mubr.bf16.mxu0 %v1959
      %3649 = vmatmul.mubr.bf16.gmra.mrb[0].mxu0 %v1958
      %v3650 = vpop.f32.mrb[0].mxu0
      %v3651 = vadd.f32 %v3226, %v3650
      %v3652 = vpop.f32.mrb[0].mxu0
      %v3653 = vpop.f32.mrb[0].mxu0
      %v3654 = vadd.f32 %v3229, %v3653
      %v3655 = vpop.f32.mrb[0].mxu0
      %3656 = vmatprep.mubr.bf16.mxu0 %v1966
      %3657 = vmatmul.mubr.bf16.gmra.mrb[0].mxu0 %v1965
      %v3658 = vpop.f32.mrb[0].mxu0
      %v3659 = vadd.f32 %v3234, %v3658
      %v3660 = vpop.f32.mrb[0].mxu0
      %v3661 = vpop.f32.mrb[0].mxu0
      %v3662 = vadd.f32 %v3237, %v3661
      %v3663 = vpop.f32.mrb[0].mxu0
      %3664 = vmatprep.mubr.bf16.mxu0 %v1973
      %3665 = vmatmul.mubr.bf16.gmra.mrb[0].mxu0 %v1972
      %v3666 = vpop.f32.mrb[0].mxu0
      %v3667 = vadd.f32 %v3242, %v3666
      %v3668 = vpop.f32.mrb[0].mxu0
      %v3669 = vpop.f32.mrb[0].mxu0
      %v3670 = vadd.f32 %v3245, %v3669
      %v3671 = vpop.f32.mrb[0].mxu0
      %3672 = vmatprep.mubr.bf16.mxu0 %v1980
      %3673 = vmatmul.mubr.bf16.gmra.mrb[0].mxu0 %v1979
      %v3674 = vpop.f32.mrb[0].mxu0
      %v3675 = vadd.f32 %v3250, %v3674
      %v3676 = vpop.f32.mrb[0].mxu0
      %v3677 = vpop.f32.mrb[0].mxu0
      %v3678 = vadd.f32 %v3253, %v3677
      %v3679 = vpop.f32.mrb[0].mxu0
      %3680 = vmatprep.mubr.bf16.mxu0 %v1987
      %3681 = vmatmul.mubr.bf16.gmra.mrb[0].mxu0 %v1986
      %v3682 = vpop.f32.mrb[0].mxu0
      %v3683 = vadd.f32 %v3258, %v3682
      %v3684 = vpop.f32.mrb[0].mxu0
      %v3685 = vpop.f32.mrb[0].mxu0
      %v3686 = vadd.f32 %v3261, %v3685
      %v3687 = vpop.f32.mrb[0].mxu0
      %3688 = vmatprep.mubr.bf16.mxu0 %v1994
      %3689 = vmatmul.mubr.bf16.gmra.mrb[0].mxu0 %v1993
      %v3690 = vpop.f32.mrb[0].mxu0
      %v3691 = vadd.f32 %v3266, %v3690
      %v3692 = vpop.f32.mrb[0].mxu0
      %v3693 = vpop.f32.mrb[0].mxu0
      %v3694 = vadd.f32 %v3269, %v3693
      %v3695 = vpop.f32.mrb[0].mxu0
      %3696 = vmatprep.mubr.bf16.mxu0 %v2001
      %3697 = vmatmul.mubr.bf16.gmra.mrb[0].mxu0 %v2000
      %v3698 = vpop.f32.mrb[0].mxu0
      %v3699 = vadd.f32 %v3274, %v3698
      %v3700 = vpop.f32.mrb[0].mxu0
      %v3701 = vpop.f32.mrb[0].mxu0
      %v3702 = vadd.f32 %v3277, %v3701
      %v3703 = vpop.f32.mrb[0].mxu0
      %3704 = vmatprep.mubr.bf16.mxu0 %v2008
      %3705 = vmatmul.mubr.bf16.gmra.mrb[0].mxu0 %v2007
      %v3706 = vpop.f32.mrb[0].mxu0
      %v3707 = vadd.f32 %v3282, %v3706
      %v3708 = vpop.f32.mrb[0].mxu0
      %v3709 = vpop.f32.mrb[0].mxu0
      %v3710 = vadd.f32 %v3285, %v3709
      %v3711 = vpop.f32.mrb[0].mxu0
      %3712 = vmatprep.mubr.bf16.mxu0 %v2015
      %3713 = vmatmul.mubr.bf16.gmra.mrb[0].mxu0 %v2014
      %v3714 = vpop.f32.mrb[0].mxu0
      %v3715 = vadd.f32 %v3290, %v3714
      %v3716 = vpop.f32.mrb[0].mxu0
      %v3717 = vpop.f32.mrb[0].mxu0
      %v3718 = vadd.f32 %v3293, %v3717
      %v3719 = vpop.f32.mrb[0].mxu0
      %3720 = vmatprep.mubr.bf16.mxu0 %v2022
      %3721 = vmatmul.mubr.bf16.gmra.mrb[0].mxu0 %v2021
      %v3722 = vpop.f32.mrb[0].mxu0
      %v3723 = vadd.f32 %v3298, %v3722
      %v3724 = vpop.f32.mrb[0].mxu0
      %v3725 = vpop.f32.mrb[0].mxu0
      %v3726 = vadd.f32 %v3301, %v3725
      %v3727 = vpop.f32.mrb[0].mxu0
      %3728 = vmatprep.mubr.bf16.mxu0 %v2029
      %3729 = vmatmul.mubr.bf16.gmra.mrb[0].mxu0 %v2028
      %v3730 = vpop.f32.mrb[0].mxu0
      %v3731 = vadd.f32 %v3306, %v3730
      %v3732 = vpop.f32.mrb[0].mxu0
      %v3733 = vpop.f32.mrb[0].mxu0
      %v3734 = vadd.f32 %v3309, %v3733
      %v3735 = vpop.f32.mrb[0].mxu0
      %3736 = vmatprep.mubr.bf16.mxu0 %v2036
      %3737 = vmatmul.mubr.bf16.gmra.mrb[0].mxu0 %v2035
      %v3738 = vpop.f32.mrb[0].mxu0
      %v3739 = vadd.f32 %v3314, %v3738
      %v3740 = vpop.f32.mrb[0].mxu0
      %v3741 = vpop.f32.mrb[0].mxu0
      %v3742 = vadd.f32 %v3317, %v3741
      %v3743 = vpop.f32.mrb[0].mxu0
      %3744 = vmatprep.mubr.bf16.mxu0 %v2043
      %3745 = vmatmul.mubr.bf16.gmra.mrb[0].mxu0 %v2042
      %v3746 = vpop.f32.mrb[0].mxu0
      %v3747 = vadd.f32 %v3322, %v3746
      %v3748 = vpop.f32.mrb[0].mxu0
      %v3749 = vpop.f32.mrb[0].mxu0
      %v3750 = vadd.f32 %v3325, %v3749
      %v3751 = vpop.f32.mrb[0].mxu0
      %3752 = vmatprep.mubr.bf16.mxu0 %v2050
      %3753 = vmatmul.mubr.bf16.gmra.mrb[0].mxu0 %v2049
      %v3754 = vpop.f32.mrb[0].mxu0
      %v3755 = vadd.f32 %v3330, %v3754
      %v3756 = vpop.f32.mrb[0].mxu0
      %v3757 = vpop.f32.mrb[0].mxu0
      %v3758 = vadd.f32 %v3333, %v3757
      %v3759 = vpop.f32.mrb[0].mxu0
      %3760 = vmatprep.mubr.bf16.mxu0 %v2057
      %3761 = vmatmul.mubr.bf16.gmra.mrb[0].mxu0 %v2056
      %v3762 = vpop.f32.mrb[0].mxu0
      %v3763 = vadd.f32 %v3338, %v3762
      %v3764 = vpop.f32.mrb[0].mxu0
      %v3765 = vpop.f32.mrb[0].mxu0
      %v3766 = vadd.f32 %v3341, %v3765
      %v3767 = vpop.f32.mrb[0].mxu0
      %3768 = vmatprep.mubr.bf16.mxu0 %v2064
      %3769 = vmatmul.mubr.bf16.gmra.mrb[0].mxu0 %v2063
      %v3770 = vpop.f32.mrb[0].mxu0
      %v3771 = vadd.f32 %v3346, %v3770
      %v3772 = vpop.f32.mrb[0].mxu0
      %v3773 = vpop.f32.mrb[0].mxu0
      %v3774 = vadd.f32 %v3349, %v3773
      %v3775 = vpop.f32.mrb[0].mxu0
      %3776 = vmatprep.mubr.bf16.mxu0 %v2071
      %3777 = vmatmul.mubr.bf16.gmra.mrb[0].mxu0 %v2070
      %v3778 = vpop.f32.mrb[0].mxu0
      %v3779 = vadd.f32 %v3354, %v3778
      %v3780 = vpop.f32.mrb[0].mxu0
      %v3781 = vpop.f32.mrb[0].mxu0
      %v3782 = vadd.f32 %v3357, %v3781
      %v3783 = vpop.f32.mrb[0].mxu0
      %3784 = vmatprep.mubr.bf16.mxu0 %v2078
      %3785 = vmatmul.mubr.bf16.gmra.mrb[0].mxu0 %v2077
      %v3786 = vpop.f32.mrb[0].mxu0
      %v3787 = vadd.f32 %v3362, %v3786
      %v3788 = vpop.f32.mrb[0].mxu0
      %v3789 = vpop.f32.mrb[0].mxu0
      %v3790 = vadd.f32 %v3365, %v3789
      %v3791 = vpop.f32.mrb[0].mxu0
      %3792 = vmatprep.mubr.bf16.mxu0 %v2085
      %3793 = vmatmul.mubr.bf16.gmra.mrb[0].mxu0 %v2084
      %v3794 = vpop.f32.mrb[0].mxu0
      %v3795 = vadd.f32 %v3370, %v3794
      %v3796 = vpop.f32.mrb[0].mxu0
      %v3797 = vpop.f32.mrb[0].mxu0
      %v3798 = vadd.f32 %v3373, %v3797
      %v3799 = vpop.f32.mrb[0].mxu0
      %3800 = vmatprep.mubr.bf16.mxu0 %v2092
      %3801 = vmatmul.mubr.bf16.gmra.mrb[0].mxu0 %v2091
      %v3802 = vpop.f32.mrb[0].mxu0
      %v3803 = vadd.f32 %v3378, %v3802
      %v3804 = vpop.f32.mrb[0].mxu0
      %v3805 = vpop.f32.mrb[0].mxu0
      %v3806 = vadd.f32 %v3381, %v3805
      %v3807 = vpop.f32.mrb[0].mxu0
      %3808 = vmatprep.mubr.bf16.mxu0 %v2099
      %3809 = vmatmul.mubr.bf16.gmra.mrb[0].mxu0 %v2098
      %v3810 = vpop.f32.mrb[0].mxu0
      %v3811 = vadd.f32 %v3386, %v3810
      %v3812 = vpop.f32.mrb[0].mxu0
      %v3813 = vpop.f32.mrb[0].mxu0
      %v3814 = vadd.f32 %v3389, %v3813
      %v3815 = vpop.f32.mrb[0].mxu0
      %3816 = vmatprep.mubr.bf16.mxu0 %v2106
      %3817 = vmatmul.mubr.bf16.gmra.mrb[0].mxu0 %v2105
      %v3818 = vpop.f32.mrb[0].mxu0
      %v3819 = vadd.f32 %v3394, %v3818
      %v3820 = vpop.f32.mrb[0].mxu0
      %v3821 = vpop.f32.mrb[0].mxu0
      %v3822 = vadd.f32 %v3397, %v3821
      %v3823 = vpop.f32.mrb[0].mxu0
      %3824 = vdwg.mxu0
      %3825 = vmatprep.subr.bf16.mxu0 0
      %3826 = vmatpush1.bf16.msra.mxu0 %v686
      %3827 = vmatprep.subr.bf16.mxu0 0
      %3828 = vmatpush1.bf16.msra.mxu0 0
      %3829 = vmatprep.subr.bf16.mxu0 0
      %3830 = vmatpush1.bf16.msra.mxu0 0
      %3831 = vmatprep.subr.bf16.mxu0 0
      %3832 = vmatpush1.bf16.msra.mxu0 0
      %3833 = vmatprep.subr.bf16.mxu0 0
      %3834 = vmatpush1.bf16.msra.mxu0 0
      %3835 = vmatprep.subr.bf16.mxu0 0
      %3836 = vmatpush1.bf16.msra.mxu0 0
      %3837 = vmatprep.subr.bf16.mxu0 0
      %3838 = vmatpush1.bf16.msra.mxu0 0
      %3839 = vmatprep.subr.bf16.mxu0 0
      %3840 = vmatpush1.bf16.msra.mxu0 0
      %3841 = vmatprep.subr.bf16.mxu0 0
      %3842 = vmatpush1.bf16.msra.mxu0 0
      %3843 = vmatprep.subr.bf16.mxu0 0
      %3844 = vmatpush1.bf16.msra.mxu0 0
      %3845 = vmatprep.subr.bf16.mxu0 0
      %3846 = vmatpush1.bf16.msra.mxu0 0
      %3847 = vmatprep.subr.bf16.mxu0 0
      %3848 = vmatpush1.bf16.msra.mxu0 0
      %3849 = vmatprep.subr.bf16.mxu0 0
      %3850 = vmatpush1.bf16.msra.mxu0 0
      %3851 = vmatprep.subr.bf16.mxu0 0
      %3852 = vmatpush1.bf16.msra.mxu0 0
      %3853 = vmatprep.subr.bf16.mxu0 0
      %3854 = vmatpush1.bf16.msra.mxu0 0
      %3855 = vmatprep.subr.bf16.mxu0 0
      %3856 = vmatpush1.bf16.msra.mxu0 0
      %3857 = vmatprep.mubr.bf16.mxu0 0
      %3858 = vmatmul.mubr.bf16.gmra.mrb[0].mxu0 %v2404
      %v3859 = vpop.f32.mrb[0].mxu0
      %v3860 = vadd.f32 %v3435, %v3859
      %v3861 = vpop.f32.mrb[0].mxu0
      %v3862 = vpop.f32.mrb[0].mxu0
      %v3863 = vadd.f32 %v3438, %v3862
      %v3864 = vpop.f32.mrb[0].mxu0
      %3865 = vmatprep.mubr.bf16.mxu0 0
      %3866 = vmatmul.mubr.bf16.gmra.mrb[0].mxu0 %v2407
      %v3867 = vpop.f32.mrb[0].mxu0
      %v3868 = vadd.f32 %v3443, %v3867
      %v3869 = vpop.f32.mrb[0].mxu0
      %v3870 = vpop.f32.mrb[0].mxu0
      %v3871 = vadd.f32 %v3446, %v3870
      %v3872 = vpop.f32.mrb[0].mxu0
      %3873 = vmatprep.mubr.bf16.mxu0 0
      %3874 = vmatmul.mubr.bf16.gmra.mrb[0].mxu0 %v2410
      %v3875 = vpop.f32.mrb[0].mxu0
      %v3876 = vadd.f32 %v3451, %v3875
      %v3877 = vpop.f32.mrb[0].mxu0
      %v3878 = vpop.f32.mrb[0].mxu0
      %v3879 = vadd.f32 %v3454, %v3878
      %v3880 = vpop.f32.mrb[0].mxu0
      %3881 = vmatprep.mubr.bf16.mxu0 0
      %3882 = vmatmul.mubr.bf16.gmra.mrb[0].mxu0 %v2413
      %v3883 = vpop.f32.mrb[0].mxu0
      %v3884 = vadd.f32 %v3459, %v3883
      %v3885 = vpop.f32.mrb[0].mxu0
      %v3886 = vpop.f32.mrb[0].mxu0
      %v3887 = vadd.f32 %v3462, %v3886
      %v3888 = vpop.f32.mrb[0].mxu0
      %3889 = vmatprep.mubr.bf16.mxu0 0
      %3890 = vmatmul.mubr.bf16.gmra.mrb[0].mxu0 %v2416
      %v3891 = vpop.f32.mrb[0].mxu0
      %v3892 = vadd.f32 %v3467, %v3891
      %v3893 = vpop.f32.mrb[0].mxu0
      %v3894 = vpop.f32.mrb[0].mxu0
      %v3895 = vadd.f32 %v3470, %v3894
      %v3896 = vpop.f32.mrb[0].mxu0
      %3897 = vmatprep.mubr.bf16.mxu0 0
      %3898 = vmatmul.mubr.bf16.gmra.mrb[0].mxu0 %v2419
      %v3899 = vpop.f32.mrb[0].mxu0
      %v3900 = vadd.f32 %v3475, %v3899
      %v3901 = vpop.f32.mrb[0].mxu0
      %v3902 = vpop.f32.mrb[0].mxu0
      %v3903 = vadd.f32 %v3478, %v3902
      %v3904 = vpop.f32.mrb[0].mxu0
      %3905 = vmatprep.mubr.bf16.mxu0 0
      %3906 = vmatmul.mubr.bf16.gmra.mrb[0].mxu0 %v2422
      %v3907 = vpop.f32.mrb[0].mxu0
      %v3908 = vadd.f32 %v3483, %v3907
      %v3909 = vpop.f32.mrb[0].mxu0
      %v3910 = vpop.f32.mrb[0].mxu0
      %v3911 = vadd.f32 %v3486, %v3910
      %v3912 = vpop.f32.mrb[0].mxu0
      %3913 = vmatprep.mubr.bf16.mxu0 0
      %3914 = vmatmul.mubr.bf16.gmra.mrb[0].mxu0 %v2425
      %v3915 = vpop.f32.mrb[0].mxu0
      %v3916 = vadd.f32 %v3491, %v3915
      %v3917 = vpop.f32.mrb[0].mxu0
      %v3918 = vpop.f32.mrb[0].mxu0
      %v3919 = vadd.f32 %v3494, %v3918
      %v3920 = vpop.f32.mrb[0].mxu0
      %3921 = vmatprep.mubr.bf16.mxu0 0
      %3922 = vmatmul.mubr.bf16.gmra.mrb[0].mxu0 %v2428
      %v3923 = vpop.f32.mrb[0].mxu0
      %v3924 = vadd.f32 %v3499, %v3923
      %v3925 = vpop.f32.mrb[0].mxu0
      %v3926 = vpop.f32.mrb[0].mxu0
      %v3927 = vadd.f32 %v3502, %v3926
      %v3928 = vpop.f32.mrb[0].mxu0
      %3929 = vmatprep.mubr.bf16.mxu0 0
      %3930 = vmatmul.mubr.bf16.gmra.mrb[0].mxu0 %v2431
      %v3931 = vpop.f32.mrb[0].mxu0
      %v3932 = vadd.f32 %v3507, %v3931
      %v3933 = vpop.f32.mrb[0].mxu0
      %v3934 = vpop.f32.mrb[0].mxu0
      %v3935 = vadd.f32 %v3510, %v3934
      %v3936 = vpop.f32.mrb[0].mxu0
      %3937 = vmatprep.mubr.bf16.mxu0 0
      %3938 = vmatmul.mubr.bf16.gmra.mrb[0].mxu0 %v2434
      %v3939 = vpop.f32.mrb[0].mxu0
      %v3940 = vadd.f32 %v3515, %v3939
      %v3941 = vpop.f32.mrb[0].mxu0
      %v3942 = vpop.f32.mrb[0].mxu0
      %v3943 = vadd.f32 %v3518, %v3942
      %v3944 = vpop.f32.mrb[0].mxu0
      %3945 = vmatprep.mubr.bf16.mxu0 0
      %3946 = vmatmul.mubr.bf16.gmra.mrb[0].mxu0 %v2437
      %v3947 = vpop.f32.mrb[0].mxu0
      %v3948 = vadd.f32 %v3523, %v3947
      %v3949 = vpop.f32.mrb[0].mxu0
      %v3950 = vpop.f32.mrb[0].mxu0
      %v3951 = vadd.f32 %v3526, %v3950
      %v3952 = vpop.f32.mrb[0].mxu0
      %3953 = vmatprep.mubr.bf16.mxu0 0
      %3954 = vmatmul.mubr.bf16.gmra.mrb[0].mxu0 %v2440
      %v3955 = vpop.f32.mrb[0].mxu0
      %v3956 = vadd.f32 %v3531, %v3955
      %v3957 = vpop.f32.mrb[0].mxu0
      %v3958 = vpop.f32.mrb[0].mxu0
      %v3959 = vadd.f32 %v3534, %v3958
      %v3960 = vpop.f32.mrb[0].mxu0
      %3961 = vmatprep.mubr.bf16.mxu0 0
      %3962 = vmatmul.mubr.bf16.gmra.mrb[0].mxu0 %v2443
      %v3963 = vpop.f32.mrb[0].mxu0
      %v3964 = vadd.f32 %v3539, %v3963
      %v3965 = vpop.f32.mrb[0].mxu0
      %v3966 = vpop.f32.mrb[0].mxu0
      %v3967 = vadd.f32 %v3542, %v3966
      %v3968 = vpop.f32.mrb[0].mxu0
      %3969 = vmatprep.mubr.bf16.mxu0 0
      %3970 = vmatmul.mubr.bf16.gmra.mrb[0].mxu0 %v2446
      %v3971 = vpop.f32.mrb[0].mxu0
      %v3972 = vadd.f32 %v3547, %v3971
      %v3973 = vpop.f32.mrb[0].mxu0
      %v3974 = vpop.f32.mrb[0].mxu0
      %v3975 = vadd.f32 %v3550, %v3974
      %v3976 = vpop.f32.mrb[0].mxu0
      %3977 = vmatprep.mubr.bf16.mxu0 0
      %3978 = vmatmul.mubr.bf16.gmra.mrb[0].mxu0 %v2449
      %v3979 = vpop.f32.mrb[0].mxu0
      %v3980 = vadd.f32 %v3555, %v3979
      %v3981 = vpop.f32.mrb[0].mxu0
      %v3982 = vpop.f32.mrb[0].mxu0
      %v3983 = vadd.f32 %v3558, %v3982
      %v3984 = vpop.f32.mrb[0].mxu0
      %3985 = vmatprep.mubr.bf16.mxu0 0
      %3986 = vmatmul.mubr.bf16.gmra.mrb[0].mxu0 %v2452
      %v3987 = vpop.f32.mrb[0].mxu0
      %v3988 = vadd.f32 %v3563, %v3987
      %v3989 = vpop.f32.mrb[0].mxu0
      %v3990 = vpop.f32.mrb[0].mxu0
      %v3991 = vadd.f32 %v3566, %v3990
      %v3992 = vpop.f32.mrb[0].mxu0
      %3993 = vmatprep.mubr.bf16.mxu0 0
      %3994 = vmatmul.mubr.bf16.gmra.mrb[0].mxu0 %v2455
      %v3995 = vpop.f32.mrb[0].mxu0
      %v3996 = vadd.f32 %v3571, %v3995
      %v3997 = vpop.f32.mrb[0].mxu0
      %v3998 = vpop.f32.mrb[0].mxu0
      %v3999 = vadd.f32 %v3574, %v3998
      %v4000 = vpop.f32.mrb[0].mxu0
      %4001 = vmatprep.mubr.bf16.mxu0 0
      %4002 = vmatmul.mubr.bf16.gmra.mrb[0].mxu0 %v2458
      %v4003 = vpop.f32.mrb[0].mxu0
      %v4004 = vadd.f32 %v3579, %v4003
      %v4005 = vpop.f32.mrb[0].mxu0
      %v4006 = vpop.f32.mrb[0].mxu0
      %v4007 = vadd.f32 %v3582, %v4006
      %v4008 = vpop.f32.mrb[0].mxu0
      %4009 = vmatprep.mubr.bf16.mxu0 0
      %4010 = vmatmul.mubr.bf16.gmra.mrb[0].mxu0 %v2461
      %v4011 = vpop.f32.mrb[0].mxu0
      %v4012 = vadd.f32 %v3587, %v4011
      %v4013 = vpop.f32.mrb[0].mxu0
      %v4014 = vpop.f32.mrb[0].mxu0
      %v4015 = vadd.f32 %v3590, %v4014
      %v4016 = vpop.f32.mrb[0].mxu0
      %4017 = vmatprep.mubr.bf16.mxu0 0
      %4018 = vmatmul.mubr.bf16.gmra.mrb[0].mxu0 %v2464
      %v4019 = vpop.f32.mrb[0].mxu0
      %v4020 = vadd.f32 %v3595, %v4019
      %v4021 = vpop.f32.mrb[0].mxu0
      %v4022 = vpop.f32.mrb[0].mxu0
      %v4023 = vadd.f32 %v3598, %v4022
      %v4024 = vpop.f32.mrb[0].mxu0
      %4025 = vmatprep.mubr.bf16.mxu0 0
      %4026 = vmatmul.mubr.bf16.gmra.mrb[0].mxu0 %v2467
      %v4027 = vpop.f32.mrb[0].mxu0
      %v4028 = vadd.f32 %v3603, %v4027
      %v4029 = vpop.f32.mrb[0].mxu0
      %v4030 = vpop.f32.mrb[0].mxu0
      %v4031 = vadd.f32 %v3606, %v4030
      %v4032 = vpop.f32.mrb[0].mxu0
      %4033 = vmatprep.mubr.bf16.mxu0 0
      %4034 = vmatmul.mubr.bf16.gmra.mrb[0].mxu0 %v2470
      %v4035 = vpop.f32.mrb[0].mxu0
      %v4036 = vadd.f32 %v3611, %v4035
      %v4037 = vpop.f32.mrb[0].mxu0
      %v4038 = vpop.f32.mrb[0].mxu0
      %v4039 = vadd.f32 %v3614, %v4038
      %v4040 = vpop.f32.mrb[0].mxu0
      %4041 = vmatprep.mubr.bf16.mxu0 0
      %4042 = vmatmul.mubr.bf16.gmra.mrb[0].mxu0 %v2473
      %v4043 = vpop.f32.mrb[0].mxu0
      %v4044 = vadd.f32 %v3619, %v4043
      %v4045 = vpop.f32.mrb[0].mxu0
      %v4046 = vpop.f32.mrb[0].mxu0
      %v4047 = vadd.f32 %v3622, %v4046
      %v4048 = vpop.f32.mrb[0].mxu0
      %4049 = vmatprep.mubr.bf16.mxu0 0
      %4050 = vmatmul.mubr.bf16.gmra.mrb[0].mxu0 %v2476
      %v4051 = vpop.f32.mrb[0].mxu0
      %v4052 = vadd.f32 %v3627, %v4051
      %v4053 = vpop.f32.mrb[0].mxu0
      %v4054 = vpop.f32.mrb[0].mxu0
      %v4055 = vadd.f32 %v3630, %v4054
      %v4056 = vpop.f32.mrb[0].mxu0
      %4057 = vmatprep.mubr.bf16.mxu0 0
      %4058 = vmatmul.mubr.bf16.gmra.mrb[0].mxu0 %v2479
      %v4059 = vpop.f32.mrb[0].mxu0
      %v4060 = vadd.f32 %v3635, %v4059
      %v4061 = vpop.f32.mrb[0].mxu0
      %v4062 = vpop.f32.mrb[0].mxu0
      %v4063 = vadd.f32 %v3638, %v4062
      %v4064 = vpop.f32.mrb[0].mxu0
      %4065 = vmatprep.mubr.bf16.mxu0 0
      %4066 = vmatmul.mubr.bf16.gmra.mrb[0].mxu0 %v2482
      %v4067 = vpop.f32.mrb[0].mxu0
      %v4068 = vadd.f32 %v3643, %v4067
      %v4069 = vpop.f32.mrb[0].mxu0
      %v4070 = vpop.f32.mrb[0].mxu0
      %v4071 = vadd.f32 %v3646, %v4070
      %v4072 = vpop.f32.mrb[0].mxu0
      %4073 = vmatprep.mubr.bf16.mxu0 0
      %4074 = vmatmul.mubr.bf16.gmra.mrb[0].mxu0 %v2485
      %v4075 = vpop.f32.mrb[0].mxu0
      %v4076 = vadd.f32 %v3651, %v4075
      %v4077 = vpop.f32.mrb[0].mxu0
      %v4078 = vpop.f32.mrb[0].mxu0
      %v4079 = vadd.f32 %v3654, %v4078
      %v4080 = vpop.f32.mrb[0].mxu0
      %4081 = vmatprep.mubr.bf16.mxu0 0
      %4082 = vmatmul.mubr.bf16.gmra.mrb[0].mxu0 %v2488
      %v4083 = vpop.f32.mrb[0].mxu0
      %v4084 = vadd.f32 %v3659, %v4083
      %v4085 = vpop.f32.mrb[0].mxu0
      %v4086 = vpop.f32.mrb[0].mxu0
      %v4087 = vadd.f32 %v3662, %v4086
      %v4088 = vpop.f32.mrb[0].mxu0
      %4089 = vmatprep.mubr.bf16.mxu0 0
      %4090 = vmatmul.mubr.bf16.gmra.mrb[0].mxu0 %v2491
      %v4091 = vpop.f32.mrb[0].mxu0
      %v4092 = vadd.f32 %v3667, %v4091
      %v4093 = vpop.f32.mrb[0].mxu0
      %v4094 = vpop.f32.mrb[0].mxu0
      %v4095 = vadd.f32 %v3670, %v4094
      %v4096 = vpop.f32.mrb[0].mxu0
      %4097 = vmatprep.mubr.bf16.mxu0 0
      %4098 = vmatmul.mubr.bf16.gmra.mrb[0].mxu0 %v2494
      %v4099 = vpop.f32.mrb[0].mxu0
      %v4100 = vadd.f32 %v3675, %v4099
      %v4101 = vpop.f32.mrb[0].mxu0
      %v4102 = vpop.f32.mrb[0].mxu0
      %v4103 = vadd.f32 %v3678, %v4102
      %v4104 = vpop.f32.mrb[0].mxu0
      %4105 = vmatprep.mubr.bf16.mxu0 0
      %4106 = vmatmul.mubr.bf16.gmra.mrb[0].mxu0 %v2497
      %v4107 = vpop.f32.mrb[0].mxu0
      %v4108 = vadd.f32 %v3683, %v4107
      %v4109 = vpop.f32.mrb[0].mxu0
      %v4110 = vpop.f32.mrb[0].mxu0
      %v4111 = vadd.f32 %v3686, %v4110
      %v4112 = vpop.f32.mrb[0].mxu0
      %4113 = vmatprep.mubr.bf16.mxu0 0
      %4114 = vmatmul.mubr.bf16.gmra.mrb[0].mxu0 %v2500
      %v4115 = vpop.f32.mrb[0].mxu0
      %v4116 = vadd.f32 %v3691, %v4115
      %v4117 = vpop.f32.mrb[0].mxu0
      %v4118 = vpop.f32.mrb[0].mxu0
      %v4119 = vadd.f32 %v3694, %v4118
      %v4120 = vpop.f32.mrb[0].mxu0
      %4121 = vmatprep.mubr.bf16.mxu0 0
      %4122 = vmatmul.mubr.bf16.gmra.mrb[0].mxu0 %v2503
      %v4123 = vpop.f32.mrb[0].mxu0
      %v4124 = vadd.f32 %v3699, %v4123
      %v4125 = vpop.f32.mrb[0].mxu0
      %v4126 = vpop.f32.mrb[0].mxu0
      %v4127 = vadd.f32 %v3702, %v4126
      %v4128 = vpop.f32.mrb[0].mxu0
      %4129 = vmatprep.mubr.bf16.mxu0 0
      %4130 = vmatmul.mubr.bf16.gmra.mrb[0].mxu0 %v2506
      %v4131 = vpop.f32.mrb[0].mxu0
      %v4132 = vadd.f32 %v3707, %v4131
      %v4133 = vpop.f32.mrb[0].mxu0
      %v4134 = vpop.f32.mrb[0].mxu0
      %v4135 = vadd.f32 %v3710, %v4134
      %v4136 = vpop.f32.mrb[0].mxu0
      %4137 = vmatprep.mubr.bf16.mxu0 0
      %4138 = vmatmul.mubr.bf16.gmra.mrb[0].mxu0 %v2509
      %v4139 = vpop.f32.mrb[0].mxu0
      %v4140 = vadd.f32 %v3715, %v4139
      %v4141 = vpop.f32.mrb[0].mxu0
      %v4142 = vpop.f32.mrb[0].mxu0
      %v4143 = vadd.f32 %v3718, %v4142
      %v4144 = vpop.f32.mrb[0].mxu0
      %4145 = vmatprep.mubr.bf16.mxu0 0
      %4146 = vmatmul.mubr.bf16.gmra.mrb[0].mxu0 %v2512
      %v4147 = vpop.f32.mrb[0].mxu0
      %v4148 = vadd.f32 %v3723, %v4147
      %v4149 = vpop.f32.mrb[0].mxu0
      %v4150 = vpop.f32.mrb[0].mxu0
      %v4151 = vadd.f32 %v3726, %v4150
      %v4152 = vpop.f32.mrb[0].mxu0
      %4153 = vmatprep.mubr.bf16.mxu0 0
      %4154 = vmatmul.mubr.bf16.gmra.mrb[0].mxu0 %v2515
      %v4155 = vpop.f32.mrb[0].mxu0
      %v4156 = vadd.f32 %v3731, %v4155
      %v4157 = vpop.f32.mrb[0].mxu0
      %v4158 = vpop.f32.mrb[0].mxu0
      %v4159 = vadd.f32 %v3734, %v4158
      %v4160 = vpop.f32.mrb[0].mxu0
      %4161 = vmatprep.mubr.bf16.mxu0 0
      %4162 = vmatmul.mubr.bf16.gmra.mrb[0].mxu0 %v2518
      %v4163 = vpop.f32.mrb[0].mxu0
      %v4164 = vadd.f32 %v3739, %v4163
      %v4165 = vpop.f32.mrb[0].mxu0
      %v4166 = vpop.f32.mrb[0].mxu0
      %v4167 = vadd.f32 %v3742, %v4166
      %v4168 = vpop.f32.mrb[0].mxu0
      %4169 = vmatprep.mubr.bf16.mxu0 0
      %4170 = vmatmul.mubr.bf16.gmra.mrb[0].mxu0 %v2521
      %v4171 = vpop.f32.mrb[0].mxu0
      %v4172 = vadd.f32 %v3747, %v4171
      %v4173 = vpop.f32.mrb[0].mxu0
      %v4174 = vpop.f32.mrb[0].mxu0
      %v4175 = vadd.f32 %v3750, %v4174
      %v4176 = vpop.f32.mrb[0].mxu0
      %4177 = vmatprep.mubr.bf16.mxu0 0
      %4178 = vmatmul.mubr.bf16.gmra.mrb[0].mxu0 %v2524
      %v4179 = vpop.f32.mrb[0].mxu0
      %v4180 = vadd.f32 %v3755, %v4179
      %v4181 = vpop.f32.mrb[0].mxu0
      %v4182 = vpop.f32.mrb[0].mxu0
      %v4183 = vadd.f32 %v3758, %v4182
      %v4184 = vpop.f32.mrb[0].mxu0
      %4185 = vmatprep.mubr.bf16.mxu0 0
      %4186 = vmatmul.mubr.bf16.gmra.mrb[0].mxu0 %v2527
      %v4187 = vpop.f32.mrb[0].mxu0
      %v4188 = vadd.f32 %v3763, %v4187
      %v4189 = vpop.f32.mrb[0].mxu0
      %v4190 = vpop.f32.mrb[0].mxu0
      %v4191 = vadd.f32 %v3766, %v4190
      %v4192 = vpop.f32.mrb[0].mxu0
      %4193 = vmatprep.mubr.bf16.mxu0 0
      %4194 = vmatmul.mubr.bf16.gmra.mrb[0].mxu0 %v2530
      %v4195 = vpop.f32.mrb[0].mxu0
      %v4196 = vadd.f32 %v3771, %v4195
      %v4197 = vpop.f32.mrb[0].mxu0
      %v4198 = vpop.f32.mrb[0].mxu0
      %v4199 = vadd.f32 %v3774, %v4198
      %v4200 = vpop.f32.mrb[0].mxu0
      %4201 = vmatprep.mubr.bf16.mxu0 0
      %4202 = vmatmul.mubr.bf16.gmra.mrb[0].mxu0 %v2533
      %v4203 = vpop.f32.mrb[0].mxu0
      %v4204 = vadd.f32 %v3779, %v4203
      %v4205 = vpop.f32.mrb[0].mxu0
      %v4206 = vpop.f32.mrb[0].mxu0
      %v4207 = vadd.f32 %v3782, %v4206
      %v4208 = vpop.f32.mrb[0].mxu0
      %4209 = vmatprep.mubr.bf16.mxu0 0
      %4210 = vmatmul.mubr.bf16.gmra.mrb[0].mxu0 %v2536
      %v4211 = vpop.f32.mrb[0].mxu0
      %v4212 = vadd.f32 %v3787, %v4211
      %v4213 = vpop.f32.mrb[0].mxu0
      %v4214 = vpop.f32.mrb[0].mxu0
      %v4215 = vadd.f32 %v3790, %v4214
      %v4216 = vpop.f32.mrb[0].mxu0
      %4217 = vmatprep.mubr.bf16.mxu0 0
      %4218 = vmatmul.mubr.bf16.gmra.mrb[0].mxu0 %v2539
      %v4219 = vpop.f32.mrb[0].mxu0
      %v4220 = vadd.f32 %v3795, %v4219
      %v4221 = vpop.f32.mrb[0].mxu0
      %v4222 = vpop.f32.mrb[0].mxu0
      %v4223 = vadd.f32 %v3798, %v4222
      %v4224 = vpop.f32.mrb[0].mxu0
      %4225 = vmatprep.mubr.bf16.mxu0 0
      %4226 = vmatmul.mubr.bf16.gmra.mrb[0].mxu0 %v2542
      %v4227 = vpop.f32.mrb[0].mxu0
      %v4228 = vadd.f32 %v3803, %v4227
      %v4229 = vpop.f32.mrb[0].mxu0
      %v4230 = vpop.f32.mrb[0].mxu0
      %v4231 = vadd.f32 %v3806, %v4230
      %v4232 = vpop.f32.mrb[0].mxu0
      %4233 = vmatprep.mubr.bf16.mxu0 0
      %4234 = vmatmul.mubr.bf16.gmra.mrb[0].mxu0 %v2545
      %v4235 = vpop.f32.mrb[0].mxu0
      %v4236 = vadd.f32 %v3811, %v4235
      %v4237 = vpop.f32.mrb[0].mxu0
      %v4238 = vpop.f32.mrb[0].mxu0
      %v4239 = vadd.f32 %v3814, %v4238
      %v4240 = vpop.f32.mrb[0].mxu0
      %4241 = vmatprep.mubr.bf16.mxu0 0
      %4242 = vmatmul.mubr.bf16.gmra.mrb[0].mxu0 %v2548
      %v4243 = vpop.f32.mrb[0].mxu0
      %v4244 = vadd.f32 %v3819, %v4243
      %v4245 = vpop.f32.mrb[0].mxu0
      %v4246 = vpop.f32.mrb[0].mxu0
      %v4247 = vadd.f32 %v3822, %v4246
      %v4248 = vpop.f32.mrb[0].mxu0
      %4249 = vdwg.mxu0
      %vm4250 = vcmask 326656
      %4251 = vst.msk [vmem:[%s145] sm:$0xff] %vm4250, %v3860
      %4252 = vst.msk [vmem:[%s145 + $0x8] sm:$0xff] %vm4250, %v3863
      %4253 = vst.msk [vmem:[%s145 + $0x10] sm:$0xff] %vm4250, %v3868
      %4254 = vst.msk [vmem:[%s145 + $0x18] sm:$0xff] %vm4250, %v3871
      %4255 = vst.msk [vmem:[%s145 + $0x20] sm:$0xff] %vm4250, %v3876
      %4256 = vst.msk [vmem:[%s145 + $0x28] sm:$0xff] %vm4250, %v3879
      %4257 = vst.msk [vmem:[%s145 + $0x30] sm:$0xff] %vm4250, %v3884
      %4258 = vst.msk [vmem:[%s145 + $0x38] sm:$0xff] %vm4250, %v3887
      %4259 = vst.msk [vmem:[%s145 + $0x40] sm:$0xff] %vm4250, %v3892
      %4260 = vst.msk [vmem:[%s145 + $0x48] sm:$0xff] %vm4250, %v3895
      %4261 = vst.msk [vmem:[%s145 + $0x50] sm:$0xff] %vm4250, %v3900
      %4262 = vst.msk [vmem:[%s145 + $0x58] sm:$0xff] %vm4250, %v3903
      %4263 = vst.msk [vmem:[%s145 + $0x60] sm:$0xff] %vm4250, %v3908
      %4264 = vst.msk [vmem:[%s145 + $0x68] sm:$0xff] %vm4250, %v3911
      %4265 = vst.msk [vmem:[%s145 + $0x70] sm:$0xff] %vm4250, %v3916
      %4266 = vst.msk [vmem:[%s145 + $0x78] sm:$0xff] %vm4250, %v3919
      %4267 = vst.msk [vmem:[%s145 + $0x80] sm:$0xff] %vm4250, %v3924
      %4268 = vst.msk [vmem:[%s145 + $0x88] sm:$0xff] %vm4250, %v3927
      %4269 = vst.msk [vmem:[%s145 + $0x90] sm:$0xff] %vm4250, %v3932
      %4270 = vst.msk [vmem:[%s145 + $0x98] sm:$0xff] %vm4250, %v3935
      %4271 = vst.msk [vmem:[%s145 + $0xa0] sm:$0xff] %vm4250, %v3940
      %4272 = vst.msk [vmem:[%s145 + $0xa8] sm:$0xff] %vm4250, %v3943
      %4273 = vst.msk [vmem:[%s145 + $0xb0] sm:$0xff] %vm4250, %v3948
      %4274 = vst.msk [vmem:[%s145 + $0xb8] sm:$0xff] %vm4250, %v3951
      %4275 = vst.msk [vmem:[%s145 + $0xc0] sm:$0xff] %vm4250, %v3956
      %4276 = vst.msk [vmem:[%s145 + $0xc8] sm:$0xff] %vm4250, %v3959
      %4277 = vst.msk [vmem:[%s145 + $0xd0] sm:$0xff] %vm4250, %v3964
      %4278 = vst.msk [vmem:[%s145 + $0xd8] sm:$0xff] %vm4250, %v3967
      %4279 = vst.msk [vmem:[%s145 + $0xe0] sm:$0xff] %vm4250, %v3972
      %4280 = vst.msk [vmem:[%s145 + $0xe8] sm:$0xff] %vm4250, %v3975
      %4281 = vst.msk [vmem:[%s145 + $0xf0] sm:$0xff] %vm4250, %v3980
      %4282 = vst.msk [vmem:[%s145 + $0xf8] sm:$0xff] %vm4250, %v3983
      %4283 = vst.msk [vmem:[%s145 + $0x100] sm:$0xff] %vm4250, %v3988
      %4284 = vst.msk [vmem:[%s145 + $0x108] sm:$0xff] %vm4250, %v3991
      %4285 = vst.msk [vmem:[%s145 + $0x110] sm:$0xff] %vm4250, %v3996
      %4286 = vst.msk [vmem:[%s145 + $0x118] sm:$0xff] %vm4250, %v3999
      %4287 = vst.msk [vmem:[%s145 + $0x120] sm:$0xff] %vm4250, %v4004
      %4288 = vst.msk [vmem:[%s145 + $0x128] sm:$0xff] %vm4250, %v4007
      %4289 = vst.msk [vmem:[%s145 + $0x130] sm:$0xff] %vm4250, %v4012
      %4290 = vst.msk [vmem:[%s145 + $0x138] sm:$0xff] %vm4250, %v4015
      %4291 = vst.msk [vmem:[%s145 + $0x140] sm:$0xff] %vm4250, %v4020
      %4292 = vst.msk [vmem:[%s145 + $0x148] sm:$0xff] %vm4250, %v4023
      %4293 = vst.msk [vmem:[%s145 + $0x150] sm:$0xff] %vm4250, %v4028
      %4294 = vst.msk [vmem:[%s145 + $0x158] sm:$0xff] %vm4250, %v4031
      %4295 = vst.msk [vmem:[%s145 + $0x160] sm:$0xff] %vm4250, %v4036
      %4296 = vst.msk [vmem:[%s145 + $0x168] sm:$0xff] %vm4250, %v4039
      %4297 = vst.msk [vmem:[%s145 + $0x170] sm:$0xff] %vm4250, %v4044
      %4298 = vst.msk [vmem:[%s145 + $0x178] sm:$0xff] %vm4250, %v4047
      %4299 = vst.msk [vmem:[%s145 + $0x180] sm:$0xff] %vm4250, %v4052
      %4300 = vst.msk [vmem:[%s145 + $0x188] sm:$0xff] %vm4250, %v4055
      %4301 = vst.msk [vmem:[%s145 + $0x190] sm:$0xff] %vm4250, %v4060
      %4302 = vst.msk [vmem:[%s145 + $0x198] sm:$0xff] %vm4250, %v4063
      %4303 = vst.msk [vmem:[%s145 + $0x1a0] sm:$0xff] %vm4250, %v4068
      %4304 = vst.msk [vmem:[%s145 + $0x1a8] sm:$0xff] %vm4250, %v4071
      %4305 = vst.msk [vmem:[%s145 + $0x1b0] sm:$0xff] %vm4250, %v4076
      %4306 = vst.msk [vmem:[%s145 + $0x1b8] sm:$0xff] %vm4250, %v4079
      %4307 = vst.msk [vmem:[%s145 + $0x1c0] sm:$0xff] %vm4250, %v4084
      %4308 = vst.msk [vmem:[%s145 + $0x1c8] sm:$0xff] %vm4250, %v4087
      %4309 = vst.msk [vmem:[%s145 + $0x1d0] sm:$0xff] %vm4250, %v4092
      %4310 = vst.msk [vmem:[%s145 + $0x1d8] sm:$0xff] %vm4250, %v4095
      %4311 = vst.msk [vmem:[%s145 + $0x1e0] sm:$0xff] %vm4250, %v4100
      %4312 = vst.msk [vmem:[%s145 + $0x1e8] sm:$0xff] %vm4250, %v4103
      %4313 = vst.msk [vmem:[%s145 + $0x1f0] sm:$0xff] %vm4250, %v4108
      %4314 = vst.msk [vmem:[%s145 + $0x1f8] sm:$0xff] %vm4250, %v4111
      %4315 = vst.msk [vmem:[%s145 + $0x200] sm:$0xff] %vm4250, %v4116
      %4316 = vst.msk [vmem:[%s145 + $0x208] sm:$0xff] %vm4250, %v4119
      %4317 = vst.msk [vmem:[%s145 + $0x210] sm:$0xff] %vm4250, %v4124
      %4318 = vst.msk [vmem:[%s145 + $0x218] sm:$0xff] %vm4250, %v4127
      %4319 = vst.msk [vmem:[%s145 + $0x220] sm:$0xff] %vm4250, %v4132
      %4320 = vst.msk [vmem:[%s145 + $0x228] sm:$0xff] %vm4250, %v4135
      %4321 = vst.msk [vmem:[%s145 + $0x230] sm:$0xff] %vm4250, %v4140
      %4322 = vst.msk [vmem:[%s145 + $0x238] sm:$0xff] %vm4250, %v4143
      %4323 = vst.msk [vmem:[%s145 + $0x240] sm:$0xff] %vm4250, %v4148
      %4324 = vst.msk [vmem:[%s145 + $0x248] sm:$0xff] %vm4250, %v4151
      %4325 = vst.msk [vmem:[%s145 + $0x250] sm:$0xff] %vm4250, %v4156
      %4326 = vst.msk [vmem:[%s145 + $0x258] sm:$0xff] %vm4250, %v4159
      %4327 = vst.msk [vmem:[%s145 + $0x260] sm:$0xff] %vm4250, %v4164
      %4328 = vst.msk [vmem:[%s145 + $0x268] sm:$0xff] %vm4250, %v4167
      %4329 = vst.msk [vmem:[%s145 + $0x270] sm:$0xff] %vm4250, %v4172
      %4330 = vst.msk [vmem:[%s145 + $0x278] sm:$0xff] %vm4250, %v4175
      %4331 = vst.msk [vmem:[%s145 + $0x280] sm:$0xff] %vm4250, %v4180
      %4332 = vst.msk [vmem:[%s145 + $0x288] sm:$0xff] %vm4250, %v4183
      %4333 = vst.msk [vmem:[%s145 + $0x290] sm:$0xff] %vm4250, %v4188
      %4334 = vst.msk [vmem:[%s145 + $0x298] sm:$0xff] %vm4250, %v4191
      %4335 = vst.msk [vmem:[%s145 + $0x2a0] sm:$0xff] %vm4250, %v4196
      %4336 = vst.msk [vmem:[%s145 + $0x2a8] sm:$0xff] %vm4250, %v4199
      %4337 = vst.msk [vmem:[%s145 + $0x2b0] sm:$0xff] %vm4250, %v4204
      %4338 = vst.msk [vmem:[%s145 + $0x2b8] sm:$0xff] %vm4250, %v4207
      %4339 = vst.msk [vmem:[%s145 + $0x2c0] sm:$0xff] %vm4250, %v4212
      %4340 = vst.msk [vmem:[%s145 + $0x2c8] sm:$0xff] %vm4250, %v4215
      %4341 = vst.msk [vmem:[%s145 + $0x2d0] sm:$0xff] %vm4250, %v4220
      %4342 = vst.msk [vmem:[%s145 + $0x2d8] sm:$0xff] %vm4250, %v4223
      %4343 = vst.msk [vmem:[%s145 + $0x2e0] sm:$0xff] %vm4250, %v4228
      %4344 = vst.msk [vmem:[%s145 + $0x2e8] sm:$0xff] %vm4250, %v4231
      %4345 = vst.msk [vmem:[%s145 + $0x2f0] sm:$0xff] %vm4250, %v4236
      %4346 = vst.msk [vmem:[%s145 + $0x2f8] sm:$0xff] %vm4250, %v4239
      %4347 = vst.msk [vmem:[%s145 + $0x300] sm:$0xff] %vm4250, %v4244
      %4348 = vst.msk [vmem:[%s145 + $0x308] sm:$0xff] %vm4250, %v4247
      %s4349 = smul.u32 98, %s13
      %p4350 = scmp.lt.s32.totalorder %s4349, 195
      %s4351 = scalar_select %p4350, %s4349, 195
      %s4352 = smul.addr %s4351, 8
      %s4353 = scalar_lea.vmem %s2, %s4352
      // Predicated region
      $region29: #{transformer_block.10} parent=27 // pred_check
        %p4354 = pneg %p78
      $region30: #{transformer_block.10} parent=27 // pred_check_branch
        %4356 = sbr.rel (%p4354) target = $region32
      $region31: #{transformer_block.10} parent=27 // pred_region
        %s4357 = smul.u32 98, %s13
      $region32: #{transformer_block.10} parent=27 // pred_fallthru
        _
    $region28: #{transformer_block.10} parent=5 // pred_fallthru
      _
    %p4358 = scmp.le.s32.totalorder 2, %s8
    // Predicated region
    $region33: #{transformer_block.10} parent=5 // pred_check
      %p4359 = pneg %p4358
    $region34: #{transformer_block.10} parent=5 // pred_check_branch
      %4361 = sbr.rel (%p4359) target = $region36
    $region35: #{transformer_block.10} parent=5 // pred_region
      %s4362 = ssub.s32 %s8, 2
      // Predicated region
      $region37: #{transformer_block.10} parent=35 // pred_check
        %p4363 = pneg %p84
      $region38: #{transformer_block.10} parent=35 // pred_check_branch
        %4365 = sbr.rel (%p4363) target = $region40
      $region39: #{transformer_block.10} parent=35 // pred_region
        %s4366 = smul.u32 98, %s14
        %p4367 = scmp.lt.s32.totalorder %s4366, 195
        %s4368 = scalar_select %p4367, %s4366, 195
        %s4369 = smul.addr %s4368, 8
        %s4370 = scalar_lea.vmem %s2, %s4369
      $region40: #{transformer_block.10} parent=35 // pred_fallthru
        _
    $region36: #{transformer_block.10} parent=5 // pred_fallthru
      _
  $region6: #{transformer_block.10} parent=0 // loop_footer
    %s12 = sadd.s32 1, %s8
  $region7: #{transformer_block.10} parent=0 // loop_footer_branch
    %7 = sbr.rel target = $region3
  $region8: #{transformer_block.10} parent=0 // loop_exit
    _

// kernel: transformer_block.11
$region0: #{transformer_block.11}
  #allocation0 [shape = 'u32[]', space=smem, size = 0x4, offset = 0x4, fixed_abs, tag = 'smem constant byte address 0x4 - core index']
  #allocation1 [shape = 'u32[144,128]{1,0:T(1,128)}', space=vmem, size = 0x12000, scoped, tag = 'internal scratch']
  %s0 = inlined_call_operand.vmem [shape: f32[32,1960], index: 0, kind: input, shape index: {}]
  %s1 = inlined_call_operand.vmem [shape: bf16[1960,128], index: 1, kind: input, shape index: {}]
  %s2 = inlined_call_operand.vmem [shape: f32[1,128], index: 2, kind: input, shape index: {}]
  %s3 = inlined_call_operand.vmem [shape: f32[32,128], index: 3, kind: input, shape index: {}]
  %s4 = inlined_call_operand.hbm [shape: f32[32,128], index: 4, kind: output, shape index: {}]
  %s5 = sld [smem:[#allocation0]]
  $region26: #{transformer_block.11} parent=0
    _
  %s7 = ssub.s32 1, %s5
  %s8 = scalar_select 0, %s7, %s5
  $region1: #{transformer_block.11} parent=0
    #allocation2 [shape = 'u8[16384]{0}', space=vmem, size = 0x4000, scoped, tag = 'output window, operand 0, single buffered']
    #allocation3 [shape = 's32[1]{0}', space=sflag, size = 0x4, scoped, tag = 'scoped memory for transformer_block.11']
    %9 = vsyncpa [#allocation3], 0
    // Predicated region
    $region2: #{transformer_block.11} parent=1 // pred_check
      _
    $region3: #{transformer_block.11} parent=1 // pred_check_branch
      %11 = sbr.rel (0) target = $region5
    $region4: #{transformer_block.11} parent=1 // pred_region
      _
    $region5: #{transformer_block.11} parent=1 // pred_fallthru
      _
    // Predicated region
    $region6: #{transformer_block.11} parent=1 // pred_check
      _
    $region7: #{transformer_block.11} parent=1 // pred_check_branch
      %13 = sbr.rel (0) target = $region9
    $region8: #{transformer_block.11} parent=1 // pred_region
      _
    $region9: #{transformer_block.11} parent=1 // pred_fallthru
      _
    // Predicated region
    $region10: #{transformer_block.11} parent=1 // pred_check
      _
    $region11: #{transformer_block.11} parent=1 // pred_check_branch
      %15 = sbr.rel (0) target = $region13
    $region12: #{transformer_block.11} parent=1 // pred_region
      _
    $region13: #{transformer_block.11} parent=1 // pred_fallthru
      _
    // Predicated region
    $region14: #{transformer_block.11} parent=1 // pred_check
      _
    $region15: #{transformer_block.11} parent=1 // pred_check_branch
      %17 = sbr.rel (0) target = $region17
    $region16: #{transformer_block.11} parent=1 // pred_region
      _
    $region17: #{transformer_block.11} parent=1 // pred_fallthru
      _
    %v19 = vld [vmem:[%s0] sm:$0xff]
    %v20 = vld [vmem:[%s0 + $0x8] sm:$0xff]
    %v21 = vld [vmem:[%s0 + $0x10] sm:$0xff]
    %v22 = vld [vmem:[%s0 + $0x18] sm:$0xff]
    %v23 = vld [vmem:[%s0 + $0x20] sm:$0xff]
    %v24 = vld [vmem:[%s0 + $0x28] sm:$0xff]
    %v25 = vld [vmem:[%s0 + $0x30] sm:$0xff]
    %v26 = vld [vmem:[%s0 + $0x38] sm:$0xff]
    %v27 = vld [vmem:[%s0 + $0x40] sm:$0xff]
    %v28 = vld [vmem:[%s0 + $0x48] sm:$0xff]
    %v29 = vld [vmem:[%s0 + $0x50] sm:$0xff]
    %v30 = vld [vmem:[%s0 + $0x58] sm:$0xff]
    %v31 = vld [vmem:[%s0 + $0x60] sm:$0xff]
    %v32 = vld [vmem:[%s0 + $0x68] sm:$0xff]
    %v33 = vld [vmem:[%s0 + $0x70] sm:$0xff]
    %v34 = vld [vmem:[%s0 + $0x78] sm:$0xff]
    %v35 = vld [vmem:[%s0 + $0x80] sm:$0xff]
    %v36 = vld [vmem:[%s0 + $0x88] sm:$0xff]
    %v37 = vld [vmem:[%s0 + $0x90] sm:$0xff]
    %v38 = vld [vmem:[%s0 + $0x98] sm:$0xff]
    %v39 = vld [vmem:[%s0 + $0xa0] sm:$0xff]
    %v40 = vld [vmem:[%s0 + $0xa8] sm:$0xff]
    %v41 = vld [vmem:[%s0 + $0xb0] sm:$0xff]
    %v42 = vld [vmem:[%s0 + $0xb8] sm:$0xff]
    %v43 = vld [vmem:[%s0 + $0xc0] sm:$0xff]
    %v44 = vld [vmem:[%s0 + $0xc8] sm:$0xff]
    %v45 = vld [vmem:[%s0 + $0xd0] sm:$0xff]
    %v46 = vld [vmem:[%s0 + $0xd8] sm:$0xff]
    %v47 = vld [vmem:[%s0 + $0xe0] sm:$0xff]
    %v48 = vld [vmem:[%s0 + $0xe8] sm:$0xff]
    %v49 = vld [vmem:[%s0 + $0xf0] sm:$0xff]
    %v50 = vld [vmem:[%s0 + $0xf8] sm:$0xff]
    %v51 = vld [vmem:[%s0 + $0x100] sm:$0xff]
    %v52 = vld [vmem:[%s0 + $0x108] sm:$0xff]
    %v53 = vld [vmem:[%s0 + $0x110] sm:$0xff]
    %v54 = vld [vmem:[%s0 + $0x118] sm:$0xff]
    %v55 = vld [vmem:[%s0 + $0x120] sm:$0xff]
    %v56 = vld [vmem:[%s0 + $0x128] sm:$0xff]
    %v57 = vld [vmem:[%s0 + $0x130] sm:$0xff]
    %v58 = vld [vmem:[%s0 + $0x138] sm:$0xff]
    %v59 = vld [vmem:[%s0 + $0x140] sm:$0xff]
    %v60 = vld [vmem:[%s0 + $0x148] sm:$0xff]
    %v61 = vld [vmem:[%s0 + $0x150] sm:$0xff]
    %v62 = vld [vmem:[%s0 + $0x158] sm:$0xff]
    %v63 = vld [vmem:[%s0 + $0x160] sm:$0xff]
    %v64 = vld [vmem:[%s0 + $0x168] sm:$0xff]
    %v65 = vld [vmem:[%s0 + $0x170] sm:$0xff]
    %v66 = vld [vmem:[%s0 + $0x178] sm:$0xff]
    %v67 = vld [vmem:[%s0 + $0x180] sm:$0xff]
    %v68 = vld [vmem:[%s0 + $0x188] sm:$0xff]
    %v69 = vld [vmem:[%s0 + $0x190] sm:$0xff]
    %v70 = vld [vmem:[%s0 + $0x198] sm:$0xff]
    %v71 = vld [vmem:[%s0 + $0x1a0] sm:$0xff]
    %v72 = vld [vmem:[%s0 + $0x1a8] sm:$0xff]
    %v73 = vld [vmem:[%s0 + $0x1b0] sm:$0xff]
    %v74 = vld [vmem:[%s0 + $0x1b8] sm:$0xff]
    %v75 = vld [vmem:[%s0 + $0x1c0] sm:$0xff]
    %v76 = vld [vmem:[%s0 + $0x1c8] sm:$0xff]
    %v77 = vld [vmem:[%s0 + $0x1d0] sm:$0xff]
    %v78 = vld [vmem:[%s0 + $0x1d8] sm:$0xff]
    %v79 = vld [vmem:[%s0 + $0x1e0] sm:$0xff]
    %v80 = vld [vmem:[%s0 + $0x1e8] sm:$0xff]
    %v81 = vld [vmem:[%s0 + $0x1f0] sm:$0xff]
    %v82 = vld [vmem:[%s0 + $0x1f8] sm:$0xff]
    %v83 = vmax.f32 %v19, 0.0
    %v84 = vmax.f32 %v20, 0.0
    %v85 = vmax.f32 %v21, 0.0
    %v86 = vmax.f32 %v22, 0.0
    %v87 = vmax.f32 %v23, 0.0
    %v88 = vmax.f32 %v24, 0.0
    %v89 = vmax.f32 %v25, 0.0
    %v90 = vmax.f32 %v26, 0.0
    %v91 = vmax.f32 %v27, 0.0
    %v92 = vmax.f32 %v28, 0.0
    %v93 = vmax.f32 %v29, 0.0
    %v94 = vmax.f32 %v30, 0.0
    %v95 = vmax.f32 %v31, 0.0
    %v96 = vmax.f32 %v32, 0.0
    %v97 = vmax.f32 %v33, 0.0
    %v98 = vmax.f32 %v34, 0.0
    %v99 = vmax.f32 %v35, 0.0
    %v100 = vmax.f32 %v36, 0.0
    %v101 = vmax.f32 %v37, 0.0
    %v102 = vmax.f32 %v38, 0.0
    %v103 = vmax.f32 %v39, 0.0
    %v104 = vmax.f32 %v40, 0.0
    %v105 = vmax.f32 %v41, 0.0
    %v106 = vmax.f32 %v42, 0.0
    %v107 = vmax.f32 %v43, 0.0
    %v108 = vmax.f32 %v44, 0.0
    %v109 = vmax.f32 %v45, 0.0
    %v110 = vmax.f32 %v46, 0.0
    %v111 = vmax.f32 %v47, 0.0
    %v112 = vmax.f32 %v48, 0.0
    %v113 = vmax.f32 %v49, 0.0
    %v114 = vmax.f32 %v50, 0.0
    %v115 = vmax.f32 %v51, 0.0
    %v116 = vmax.f32 %v52, 0.0
    %v117 = vmax.f32 %v53, 0.0
    %v118 = vmax.f32 %v54, 0.0
    %v119 = vmax.f32 %v55, 0.0
    %v120 = vmax.f32 %v56, 0.0
    %v121 = vmax.f32 %v57, 0.0
    %v122 = vmax.f32 %v58, 0.0
    %v123 = vmax.f32 %v59, 0.0
    %v124 = vmax.f32 %v60, 0.0
    %v125 = vmax.f32 %v61, 0.0
    %v126 = vmax.f32 %v62, 0.0
    %v127 = vmax.f32 %v63, 0.0
    %v128 = vmax.f32 %v64, 0.0
    %v129 = vmax.f32 %v65, 0.0
    %v130 = vmax.f32 %v66, 0.0
    %v131 = vmax.f32 %v67, 0.0
    %v132 = vmax.f32 %v68, 0.0
    %v133 = vmax.f32 %v69, 0.0
    %v134 = vmax.f32 %v70, 0.0
    %v135 = vmax.f32 %v71, 0.0
    %v136 = vmax.f32 %v72, 0.0
    %v137 = vmax.f32 %v73, 0.0
    %v138 = vmax.f32 %v74, 0.0
    %v139 = vmax.f32 %v75, 0.0
    %v140 = vmax.f32 %v76, 0.0
    %v141 = vmax.f32 %v77, 0.0
    %v142 = vmax.f32 %v78, 0.0
    %v143 = vmax.f32 %v79, 0.0
    %v144 = vmax.f32 %v80, 0.0
    %v145 = vmax.f32 %v81, 0.0
    %v146 = vmax.f32 %v82, 0.0
    %v147 = vld [vmem:[%s1] sm:$0xf]
    %v148 = vld [vmem:[%s1 + $0x4] sm:$0xf]
    %v149 = vld [vmem:[%s1 + $0x8] sm:$0xf]
    %v150 = vld [vmem:[%s1 + $0xc] sm:$0xf]
    %v151 = vld [vmem:[%s1 + $0x10] sm:$0xf]
    %v152 = vld [vmem:[%s1 + $0x14] sm:$0xf]
    %v153 = vld [vmem:[%s1 + $0x18] sm:$0xf]
    %v154 = vld [vmem:[%s1 + $0x1c] sm:$0xf]
    %v155 = vld [vmem:[%s1 + $0x20] sm:$0xf]
    %v156 = vld [vmem:[%s1 + $0x24] sm:$0xf]
    %v157 = vld [vmem:[%s1 + $0x28] sm:$0xf]
    %v158 = vld [vmem:[%s1 + $0x2c] sm:$0xf]
    %v159 = vld [vmem:[%s1 + $0x30] sm:$0xf]
    %v160 = vld [vmem:[%s1 + $0x34] sm:$0xf]
    %v161 = vld [vmem:[%s1 + $0x38] sm:$0xf]
    %v162 = vld [vmem:[%s1 + $0x3c] sm:$0xf]
    %v163 = vld [vmem:[%s1 + $0x40] sm:$0xf]
    %v164 = vld [vmem:[%s1 + $0x44] sm:$0xf]
    %v165 = vld [vmem:[%s1 + $0x48] sm:$0xf]
    %v166 = vld [vmem:[%s1 + $0x4c] sm:$0xf]
    %v167 = vld [vmem:[%s1 + $0x50] sm:$0xf]
    %v168 = vld [vmem:[%s1 + $0x54] sm:$0xf]
    %v169 = vld [vmem:[%s1 + $0x58] sm:$0xf]
    %v170 = vld [vmem:[%s1 + $0x5c] sm:$0xf]
    %v171 = vld [vmem:[%s1 + $0x60] sm:$0xf]
    %v172 = vld [vmem:[%s1 + $0x64] sm:$0xf]
    %v173 = vld [vmem:[%s1 + $0x68] sm:$0xf]
    %v174 = vld [vmem:[%s1 + $0x6c] sm:$0xf]
    %v175 = vld [vmem:[%s1 + $0x70] sm:$0xf]
    %v176 = vld [vmem:[%s1 + $0x74] sm:$0xf]
    %v177 = vld [vmem:[%s1 + $0x78] sm:$0xf]
    %v178 = vld [vmem:[%s1 + $0x7c] sm:$0xf]
    %v179 = vld [vmem:[%s1 + $0x80] sm:$0xf]
    %v180 = vld [vmem:[%s1 + $0x84] sm:$0xf]
    %v181 = vld [vmem:[%s1 + $0x88] sm:$0xf]
    %v182 = vld [vmem:[%s1 + $0x8c] sm:$0xf]
    %v183 = vld [vmem:[%s1 + $0x90] sm:$0xf]
    %v184 = vld [vmem:[%s1 + $0x94] sm:$0xf]
    %v185 = vld [vmem:[%s1 + $0x98] sm:$0xf]
    %v186 = vld [vmem:[%s1 + $0x9c] sm:$0xf]
    %v187 = vld [vmem:[%s1 + $0xa0] sm:$0xf]
    %v188 = vld [vmem:[%s1 + $0xa4] sm:$0xf]
    %v189 = vld [vmem:[%s1 + $0xa8] sm:$0xf]
    %v190 = vld [vmem:[%s1 + $0xac] sm:$0xf]
    %v191 = vld [vmem:[%s1 + $0xb0] sm:$0xf]
    %v192 = vld [vmem:[%s1 + $0xb4] sm:$0xf]
    %v193 = vld [vmem:[%s1 + $0xb8] sm:$0xf]
    %v194 = vld [vmem:[%s1 + $0xbc] sm:$0xf]
    %v195 = vld [vmem:[%s1 + $0xc0] sm:$0xf]
    %v196 = vld [vmem:[%s1 + $0xc4] sm:$0xf]
    %v197 = vld [vmem:[%s1 + $0xc8] sm:$0xf]
    %v198 = vld [vmem:[%s1 + $0xcc] sm:$0xf]
    %v199 = vld [vmem:[%s1 + $0xd0] sm:$0xf]
    %v200 = vld [vmem:[%s1 + $0xd4] sm:$0xf]
    %v201 = vld [vmem:[%s1 + $0xd8] sm:$0xf]
    %v202 = vld [vmem:[%s1 + $0xdc] sm:$0xf]
    %v203 = vld [vmem:[%s1 + $0xe0] sm:$0xf]
    %v204 = vld [vmem:[%s1 + $0xe4] sm:$0xf]
    %v205 = vld [vmem:[%s1 + $0xe8] sm:$0xf]
    %v206 = vld [vmem:[%s1 + $0xec] sm:$0xf]
    %v207 = vld [vmem:[%s1 + $0xf0] sm:$0xf]
    %v208 = vld [vmem:[%s1 + $0xf4] sm:$0xf]
    %v209 = vld [vmem:[%s1 + $0xf8] sm:$0xf]
    %v210 = vld [vmem:[%s1 + $0xfc] sm:$0xf]
    %v211 = vld [vmem:[%s1 + $0x100] sm:$0xf]
    %v212 = vld [vmem:[%s1 + $0x104] sm:$0xf]
    %v213 = vld [vmem:[%s1 + $0x108] sm:$0xf]
    %v214 = vld [vmem:[%s1 + $0x10c] sm:$0xf]
    %v215 = vld [vmem:[%s1 + $0x110] sm:$0xf]
    %v216 = vld [vmem:[%s1 + $0x114] sm:$0xf]
    %v217 = vld [vmem:[%s1 + $0x118] sm:$0xf]
    %v218 = vld [vmem:[%s1 + $0x11c] sm:$0xf]
    %v219 = vld [vmem:[%s1 + $0x120] sm:$0xf]
    %v220 = vld [vmem:[%s1 + $0x124] sm:$0xf]
    %v221 = vld [vmem:[%s1 + $0x128] sm:$0xf]
    %v222 = vld [vmem:[%s1 + $0x12c] sm:$0xf]
    %v223 = vld [vmem:[%s1 + $0x130] sm:$0xf]
    %v224 = vld [vmem:[%s1 + $0x134] sm:$0xf]
    %v225 = vld [vmem:[%s1 + $0x138] sm:$0xf]
    %v226 = vld [vmem:[%s1 + $0x13c] sm:$0xf]
    %v227 = vld [vmem:[%s1 + $0x140] sm:$0xf]
    %v228 = vld [vmem:[%s1 + $0x144] sm:$0xf]
    %v229 = vld [vmem:[%s1 + $0x148] sm:$0xf]
    %v230 = vld [vmem:[%s1 + $0x14c] sm:$0xf]
    %v231 = vld [vmem:[%s1 + $0x150] sm:$0xf]
    %v232 = vld [vmem:[%s1 + $0x154] sm:$0xf]
    %v233 = vld [vmem:[%s1 + $0x158] sm:$0xf]
    %v234 = vld [vmem:[%s1 + $0x15c] sm:$0xf]
    %v235 = vld [vmem:[%s1 + $0x160] sm:$0xf]
    %v236 = vld [vmem:[%s1 + $0x164] sm:$0xf]
    %v237 = vld [vmem:[%s1 + $0x168] sm:$0xf]
    %v238 = vld [vmem:[%s1 + $0x16c] sm:$0xf]
    %v239 = vld [vmem:[%s1 + $0x170] sm:$0xf]
    %v240 = vld [vmem:[%s1 + $0x174] sm:$0xf]
    %v241 = vld [vmem:[%s1 + $0x178] sm:$0xf]
    %v242 = vld [vmem:[%s1 + $0x17c] sm:$0xf]
    %v243 = vld [vmem:[%s1 + $0x180] sm:$0xf]
    %v244 = vld [vmem:[%s1 + $0x184] sm:$0xf]
    %v245 = vld [vmem:[%s1 + $0x188] sm:$0xf]
    %v246 = vld [vmem:[%s1 + $0x18c] sm:$0xf]
    %v247 = vld [vmem:[%s1 + $0x190] sm:$0xf]
    %v248 = vld [vmem:[%s1 + $0x194] sm:$0xf]
    %v249 = vld [vmem:[%s1 + $0x198] sm:$0xf]
    %v250 = vld [vmem:[%s1 + $0x19c] sm:$0xf]
    %v251 = vld [vmem:[%s1 + $0x1a0] sm:$0xf]
    %v252 = vld [vmem:[%s1 + $0x1a4] sm:$0xf]
    %v253 = vld [vmem:[%s1 + $0x1a8] sm:$0xf]
    %v254 = vld [vmem:[%s1 + $0x1ac] sm:$0xf]
    %v255 = vld [vmem:[%s1 + $0x1b0] sm:$0xf]
    %v256 = vld [vmem:[%s1 + $0x1b4] sm:$0xf]
    %v257 = vld [vmem:[%s1 + $0x1b8] sm:$0xf]
    %v258 = vld [vmem:[%s1 + $0x1bc] sm:$0xf]
    %v259 = vld [vmem:[%s1 + $0x1c0] sm:$0xf]
    %v260 = vld [vmem:[%s1 + $0x1c4] sm:$0xf]
    %v261 = vld [vmem:[%s1 + $0x1c8] sm:$0xf]
    %v262 = vld [vmem:[%s1 + $0x1cc] sm:$0xf]
    %v263 = vld [vmem:[%s1 + $0x1d0] sm:$0xf]
    %v264 = vld [vmem:[%s1 + $0x1d4] sm:$0xf]
    %v265 = vld [vmem:[%s1 + $0x1d8] sm:$0xf]
    %v266 = vld [vmem:[%s1 + $0x1dc] sm:$0xf]
    %v267 = vld [vmem:[%s1 + $0x1e0] sm:$0xf]
    %v268 = vld [vmem:[%s1 + $0x1e4] sm:$0xf]
    %v269 = vld [vmem:[%s1 + $0x1e8] sm:$0xf]
    %v270 = vld [vmem:[%s1 + $0x1ec] sm:$0xf]
    %v271 = vld [vmem:[%s1 + $0x1f0] sm:$0xf]
    %v272 = vld [vmem:[%s1 + $0x1f4] sm:$0xf]
    %v273 = vld [vmem:[%s1 + $0x1f8] sm:$0xf]
    %v274 = vld [vmem:[%s1 + $0x1fc] sm:$0xf]
    %v275 = vld [vmem:[%s1 + $0x200] sm:$0xf]
    %v276 = vld [vmem:[%s1 + $0x204] sm:$0xf]
    %v277 = vld [vmem:[%s1 + $0x208] sm:$0xf]
    %v278 = vld [vmem:[%s1 + $0x20c] sm:$0xf]
    %v279 = vld [vmem:[%s1 + $0x210] sm:$0xf]
    %v280 = vld [vmem:[%s1 + $0x214] sm:$0xf]
    %v281 = vld [vmem:[%s1 + $0x218] sm:$0xf]
    %v282 = vld [vmem:[%s1 + $0x21c] sm:$0xf]
    %v283 = vld [vmem:[%s1 + $0x220] sm:$0xf]
    %v284 = vld [vmem:[%s1 + $0x224] sm:$0xf]
    %v285 = vld [vmem:[%s1 + $0x228] sm:$0xf]
    %v286 = vld [vmem:[%s1 + $0x22c] sm:$0xf]
    %v287 = vld [vmem:[%s1 + $0x230] sm:$0xf]
    %v288 = vld [vmem:[%s1 + $0x234] sm:$0xf]
    %v289 = vld [vmem:[%s1 + $0x238] sm:$0xf]
    %v290 = vld [vmem:[%s1 + $0x23c] sm:$0xf]
    %v291 = vld [vmem:[%s1 + $0x240] sm:$0xf]
    %v292 = vld [vmem:[%s1 + $0x244] sm:$0xf]
    %v293 = vld [vmem:[%s1 + $0x248] sm:$0xf]
    %v294 = vld [vmem:[%s1 + $0x24c] sm:$0xf]
    %v295 = vld [vmem:[%s1 + $0x250] sm:$0xf]
    %v296 = vld [vmem:[%s1 + $0x254] sm:$0xf]
    %v297 = vld [vmem:[%s1 + $0x258] sm:$0xf]
    %v298 = vld [vmem:[%s1 + $0x25c] sm:$0xf]
    %v299 = vld [vmem:[%s1 + $0x260] sm:$0xf]
    %v300 = vld [vmem:[%s1 + $0x264] sm:$0xf]
    %v301 = vld [vmem:[%s1 + $0x268] sm:$0xf]
    %v302 = vld [vmem:[%s1 + $0x26c] sm:$0xf]
    %v303 = vld [vmem:[%s1 + $0x270] sm:$0xf]
    %v304 = vld [vmem:[%s1 + $0x274] sm:$0xf]
    %v305 = vld [vmem:[%s1 + $0x278] sm:$0xf]
    %v306 = vld [vmem:[%s1 + $0x27c] sm:$0xf]
    %v307 = vld [vmem:[%s1 + $0x280] sm:$0xf]
    %v308 = vld [vmem:[%s1 + $0x284] sm:$0xf]
    %v309 = vld [vmem:[%s1 + $0x288] sm:$0xf]
    %v310 = vld [vmem:[%s1 + $0x28c] sm:$0xf]
    %v311 = vld [vmem:[%s1 + $0x290] sm:$0xf]
    %v312 = vld [vmem:[%s1 + $0x294] sm:$0xf]
    %v313 = vld [vmem:[%s1 + $0x298] sm:$0xf]
    %v314 = vld [vmem:[%s1 + $0x29c] sm:$0xf]
    %v315 = vld [vmem:[%s1 + $0x2a0] sm:$0xf]
    %v316 = vld [vmem:[%s1 + $0x2a4] sm:$0xf]
    %v317 = vld [vmem:[%s1 + $0x2a8] sm:$0xf]
    %v318 = vld [vmem:[%s1 + $0x2ac] sm:$0xf]
    %v319 = vld [vmem:[%s1 + $0x2b0] sm:$0xf]
    %v320 = vld [vmem:[%s1 + $0x2b4] sm:$0xf]
    %v321 = vld [vmem:[%s1 + $0x2b8] sm:$0xf]
    %v322 = vld [vmem:[%s1 + $0x2bc] sm:$0xf]
    %v323 = vld [vmem:[%s1 + $0x2c0] sm:$0xf]
    %v324 = vld [vmem:[%s1 + $0x2c4] sm:$0xf]
    %v325 = vld [vmem:[%s1 + $0x2c8] sm:$0xf]
    %v326 = vld [vmem:[%s1 + $0x2cc] sm:$0xf]
    %v327 = vld [vmem:[%s1 + $0x2d0] sm:$0xf]
    %v328 = vld [vmem:[%s1 + $0x2d4] sm:$0xf]
    %v329 = vld [vmem:[%s1 + $0x2d8] sm:$0xf]
    %v330 = vld [vmem:[%s1 + $0x2dc] sm:$0xf]
    %v331 = vld [vmem:[%s1 + $0x2e0] sm:$0xf]
    %v332 = vld [vmem:[%s1 + $0x2e4] sm:$0xf]
    %v333 = vld [vmem:[%s1 + $0x2e8] sm:$0xf]
    %v334 = vld [vmem:[%s1 + $0x2ec] sm:$0xf]
    %v335 = vld [vmem:[%s1 + $0x2f0] sm:$0xf]
    %v336 = vld [vmem:[%s1 + $0x2f4] sm:$0xf]
    %v337 = vld [vmem:[%s1 + $0x2f8] sm:$0xf]
    %v338 = vld [vmem:[%s1 + $0x2fc] sm:$0xf]
    %v339 = vld [vmem:[%s1 + $0x300] sm:$0xf]
    %v340 = vld [vmem:[%s1 + $0x304] sm:$0xf]
    %v341 = vld [vmem:[%s1 + $0x308] sm:$0xf]
    %v342 = vld [vmem:[%s1 + $0x30c] sm:$0xf]
    %v343 = vld [vmem:[%s1 + $0x310] sm:$0xf]
    %v344 = vld [vmem:[%s1 + $0x314] sm:$0xf]
    %v345 = vld [vmem:[%s1 + $0x318] sm:$0xf]
    %v346 = vld [vmem:[%s1 + $0x31c] sm:$0xf]
    %v347 = vld [vmem:[%s1 + $0x320] sm:$0xf]
    %v348 = vld [vmem:[%s1 + $0x324] sm:$0xf]
    %v349 = vld [vmem:[%s1 + $0x328] sm:$0xf]
    %v350 = vld [vmem:[%s1 + $0x32c] sm:$0xf]
    %v351 = vld [vmem:[%s1 + $0x330] sm:$0xf]
    %v352 = vld [vmem:[%s1 + $0x334] sm:$0xf]
    %v353 = vld [vmem:[%s1 + $0x338] sm:$0xf]
    %v354 = vld [vmem:[%s1 + $0x33c] sm:$0xf]
    %v355 = vld [vmem:[%s1 + $0x340] sm:$0xf]
    %v356 = vld [vmem:[%s1 + $0x344] sm:$0xf]
    %v357 = vld [vmem:[%s1 + $0x348] sm:$0xf]
    %v358 = vld [vmem:[%s1 + $0x34c] sm:$0xf]
    %v359 = vld [vmem:[%s1 + $0x350] sm:$0xf]
    %v360 = vld [vmem:[%s1 + $0x354] sm:$0xf]
    %v361 = vld [vmem:[%s1 + $0x358] sm:$0xf]
    %v362 = vld [vmem:[%s1 + $0x35c] sm:$0xf]
    %v363 = vld [vmem:[%s1 + $0x360] sm:$0xf]
    %v364 = vld [vmem:[%s1 + $0x364] sm:$0xf]
    %v365 = vld [vmem:[%s1 + $0x368] sm:$0xf]
    %v366 = vld [vmem:[%s1 + $0x36c] sm:$0xf]
    %v367 = vld [vmem:[%s1 + $0x370] sm:$0xf]
    %v368 = vld [vmem:[%s1 + $0x374] sm:$0xf]
    %v369 = vld [vmem:[%s1 + $0x378] sm:$0xf]
    %v370 = vld [vmem:[%s1 + $0x37c] sm:$0xf]
    %v371 = vld [vmem:[%s1 + $0x380] sm:$0xf]
    %v372 = vld [vmem:[%s1 + $0x384] sm:$0xf]
    %v373 = vld [vmem:[%s1 + $0x388] sm:$0xf]
    %v374 = vld [vmem:[%s1 + $0x38c] sm:$0xf]
    %v375 = vld [vmem:[%s1 + $0x390] sm:$0xf]
    %v376 = vld [vmem:[%s1 + $0x394] sm:$0xf]
    %v377 = vld [vmem:[%s1 + $0x398] sm:$0xf]
    %v378 = vld [vmem:[%s1 + $0x39c] sm:$0xf]
    %v379 = vld [vmem:[%s1 + $0x3a0] sm:$0xf]
    %v380 = vld [vmem:[%s1 + $0x3a4] sm:$0xf]
    %v381 = vld [vmem:[%s1 + $0x3a8] sm:$0xf]
    %v382 = vld [vmem:[%s1 + $0x3ac] sm:$0xf]
    %v383 = vld [vmem:[%s1 + $0x3b0] sm:$0xf]
    %v384 = vld [vmem:[%s1 + $0x3b4] sm:$0xf]
    %v385 = vld [vmem:[%s1 + $0x3b8] sm:$0xf]
    %v386 = vld [vmem:[%s1 + $0x3bc] sm:$0xf]
    %v387 = vld [vmem:[%s1 + $0x3c0] sm:$0xf]
    %v388 = vld [vmem:[%s1 + $0x3c4] sm:$0xf]
    %v389 = vld [vmem:[%s1 + $0x3c8] sm:$0xf]
    %v390 = vld [vmem:[%s1 + $0x3cc] sm:$0xf]
    %v391 = vld [vmem:[%s1 + $0x3d0] sm:$0xf]
    %v392 = vpack.c.bf16 %v99, %v83
    %v393 = vpack.c.bf16 %v100, %v84
    %v394 = vpack.c.bf16 %v101, %v85
    %v395 = vpack.c.bf16 %v102, %v86
    %v396 = vpack.c.bf16 %v103, %v87
    %v397 = vpack.c.bf16 %v104, %v88
    %v398 = vpack.c.bf16 %v105, %v89
    %v399 = vpack.c.bf16 %v106, %v90
    %v400 = vpack.c.bf16 %v107, %v91
    %v401 = vpack.c.bf16 %v108, %v92
    %v402 = vpack.c.bf16 %v109, %v93
    %v403 = vpack.c.bf16 %v110, %v94
    %v404 = vpack.c.bf16 %v111, %v95
    %v405 = vpack.c.bf16 %v112, %v96
    %v406 = vpack.c.bf16 %v113, %v97
    %v407 = vpack.c.bf16 %v114, %v98
    %v408 = vpack.c.bf16 %v131, %v115
    %v409 = vpack.c.bf16 %v132, %v116
    %v410 = vpack.c.bf16 %v133, %v117
    %v411 = vpack.c.bf16 %v134, %v118
    %v412 = vpack.c.bf16 %v135, %v119
    %v413 = vpack.c.bf16 %v136, %v120
    %v414 = vpack.c.bf16 %v137, %v121
    %v415 = vpack.c.bf16 %v138, %v122
    %v416 = vpack.c.bf16 %v139, %v123
    %v417 = vpack.c.bf16 %v140, %v124
    %v418 = vpack.c.bf16 %v141, %v125
    %v419 = vpack.c.bf16 %v142, %v126
    %v420 = vpack.c.bf16 %v143, %v127
    %v421 = vpack.c.bf16 %v144, %v128
    %v422 = vpack.c.bf16 %v145, %v129
    %v423 = vpack.c.bf16 %v146, %v130
    %v424 = vld [vmem:[%s2] sm:$0x1]
    %v426 = vlaneseq
    %v427 = vshrl.u32 %v426, 7
    %v428 = vsub.s32 0, %v427
    %v429 = vrot.slane %v424, %v428
    %v676 = vunpack.c.l.b16 %v147
    %v677 = vunpack.c.l.b16 %v148
    %v678 = vunpack.c.l.b16 %v149
    %v679 = vunpack.c.l.b16 %v150
    %v680 = vunpack.c.l.b16 %v151
    %v681 = vunpack.c.l.b16 %v152
    %v682 = vunpack.c.l.b16 %v153
    %v683 = vunpack.c.l.b16 %v154
    %v684 = vunpack.c.l.b16 %v155
    %v685 = vunpack.c.l.b16 %v156
    %v686 = vunpack.c.l.b16 %v157
    %v687 = vunpack.c.l.b16 %v158
    %v688 = vunpack.c.l.b16 %v159
    %v689 = vunpack.c.l.b16 %v160
    %v690 = vunpack.c.l.b16 %v161
    %v691 = vunpack.c.l.b16 %v162
    %v692 = vunpack.c.l.b16 %v163
    %v693 = vunpack.c.l.b16 %v164
    %v694 = vunpack.c.l.b16 %v165
    %v695 = vunpack.c.l.b16 %v166
    %v696 = vunpack.c.l.b16 %v167
    %v697 = vunpack.c.l.b16 %v168
    %v698 = vunpack.c.l.b16 %v169
    %v699 = vunpack.c.l.b16 %v170
    %v700 = vunpack.c.l.b16 %v171
    %v701 = vunpack.c.l.b16 %v172
    %v702 = vunpack.c.l.b16 %v173
    %v703 = vunpack.c.l.b16 %v174
    %v704 = vunpack.c.l.b16 %v175
    %v705 = vunpack.c.l.b16 %v176
    %v706 = vunpack.c.l.b16 %v177
    %v707 = vunpack.c.l.b16 %v178
    %v708 = vunpack.c.l.b16 %v179
    %v709 = vunpack.c.l.b16 %v180
    %v710 = vunpack.c.l.b16 %v181
    %v711 = vunpack.c.l.b16 %v182
    %v712 = vunpack.c.l.b16 %v183
    %v713 = vunpack.c.l.b16 %v184
    %v714 = vunpack.c.l.b16 %v185
    %v715 = vunpack.c.l.b16 %v186
    %v716 = vunpack.c.l.b16 %v187
    %v717 = vunpack.c.l.b16 %v188
    %v718 = vunpack.c.l.b16 %v189
    %v719 = vunpack.c.l.b16 %v190
    %v720 = vunpack.c.l.b16 %v191
    %v721 = vunpack.c.l.b16 %v192
    %v722 = vunpack.c.l.b16 %v193
    %v723 = vunpack.c.l.b16 %v194
    %v724 = vunpack.c.l.b16 %v195
    %v725 = vunpack.c.l.b16 %v196
    %v726 = vunpack.c.l.b16 %v197
    %v727 = vunpack.c.l.b16 %v198
    %v728 = vunpack.c.l.b16 %v199
    %v729 = vunpack.c.l.b16 %v200
    %v730 = vunpack.c.l.b16 %v201
    %v731 = vunpack.c.l.b16 %v202
    %v732 = vunpack.c.l.b16 %v203
    %v733 = vunpack.c.l.b16 %v204
    %v734 = vunpack.c.l.b16 %v205
    %v735 = vunpack.c.l.b16 %v206
    %v736 = vunpack.c.l.b16 %v207
    %v737 = vunpack.c.l.b16 %v208
    %v738 = vunpack.c.l.b16 %v209
    %v739 = vunpack.c.l.b16 %v210
    %v740 = vunpack.c.l.b16 %v211
    %v741 = vunpack.c.l.b16 %v212
    %v742 = vunpack.c.l.b16 %v213
    %v743 = vunpack.c.l.b16 %v214
    %v744 = vunpack.c.l.b16 %v215
    %v745 = vunpack.c.l.b16 %v216
    %v746 = vunpack.c.l.b16 %v217
    %v747 = vunpack.c.l.b16 %v218
    %v748 = vunpack.c.l.b16 %v219
    %v749 = vunpack.c.l.b16 %v220
    %v750 = vunpack.c.l.b16 %v221
    %v751 = vunpack.c.l.b16 %v222
    %v752 = vunpack.c.l.b16 %v223
    %v753 = vunpack.c.l.b16 %v224
    %v754 = vunpack.c.l.b16 %v225
    %v755 = vunpack.c.l.b16 %v226
    %v756 = vunpack.c.l.b16 %v227
    %v757 = vunpack.c.l.b16 %v228
    %v758 = vunpack.c.l.b16 %v229
    %v759 = vunpack.c.l.b16 %v230
    %v760 = vunpack.c.l.b16 %v231
    %v761 = vunpack.c.l.b16 %v232
    %v762 = vunpack.c.l.b16 %v233
    %v763 = vunpack.c.l.b16 %v234
    %v764 = vunpack.c.l.b16 %v235
    %v765 = vunpack.c.l.b16 %v236
    %v766 = vunpack.c.l.b16 %v237
    %v767 = vunpack.c.l.b16 %v238
    %v768 = vunpack.c.l.b16 %v239
    %v769 = vunpack.c.l.b16 %v240
    %v770 = vunpack.c.l.b16 %v241
    %v771 = vunpack.c.l.b16 %v242
    %v772 = vunpack.c.l.b16 %v243
    %v773 = vunpack.c.l.b16 %v244
    %v774 = vunpack.c.l.b16 %v245
    %v775 = vunpack.c.l.b16 %v246
    %v776 = vunpack.c.l.b16 %v247
    %v777 = vunpack.c.l.b16 %v248
    %v778 = vunpack.c.l.b16 %v249
    %v779 = vunpack.c.l.b16 %v250
    %v780 = vunpack.c.l.b16 %v251
    %v781 = vunpack.c.l.b16 %v252
    %v782 = vunpack.c.l.b16 %v253
    %v783 = vunpack.c.l.b16 %v254
    %v784 = vunpack.c.l.b16 %v255
    %v785 = vunpack.c.l.b16 %v256
    %v786 = vunpack.c.l.b16 %v257
    %v787 = vunpack.c.l.b16 %v258
    %v788 = vunpack.c.l.b16 %v259
    %v789 = vunpack.c.l.b16 %v260
    %v790 = vunpack.c.l.b16 %v261
    %v791 = vunpack.c.l.b16 %v262
    %v792 = vunpack.c.l.b16 %v263
    %v793 = vunpack.c.l.b16 %v264
    %v794 = vunpack.c.l.b16 %v265
    %v795 = vunpack.c.l.b16 %v266
    %v796 = vunpack.c.l.b16 %v267
    %v797 = vunpack.c.l.b16 %v268
    %v798 = vunpack.c.l.b16 %v269
    %v799 = vunpack.c.l.b16 %v270
    %v800 = vunpack.c.l.b16 %v271
    %v801 = vunpack.c.l.b16 %v272
    %v802 = vunpack.c.l.b16 %v273
    %v803 = vunpack.c.l.b16 %v274
    %v804 = vunpack.c.l.b16 %v275
    %v805 = vunpack.c.l.b16 %v276
    %v806 = vunpack.c.l.b16 %v277
    %v807 = vunpack.c.l.b16 %v278
    %v808 = vunpack.c.l.b16 %v279
    %v809 = vunpack.c.l.b16 %v280
    %v810 = vunpack.c.l.b16 %v281
    %v811 = vunpack.c.l.b16 %v282
    %v812 = vunpack.c.l.b16 %v283
    %v813 = vunpack.c.l.b16 %v284
    %v814 = vunpack.c.l.b16 %v285
    %v815 = vunpack.c.l.b16 %v286
    %v816 = vunpack.c.l.b16 %v287
    %v817 = vunpack.c.l.b16 %v288
    %v818 = vunpack.c.l.b16 %v289
    %v819 = vunpack.c.l.b16 %v290
    %v820 = vunpack.c.l.b16 %v291
    %v821 = vunpack.c.l.b16 %v292
    %v822 = vunpack.c.l.b16 %v293
    %v823 = vunpack.c.l.b16 %v294
    %v824 = vunpack.c.l.b16 %v295
    %v825 = vunpack.c.l.b16 %v296
    %v826 = vunpack.c.l.b16 %v297
    %v827 = vunpack.c.l.b16 %v298
    %v828 = vunpack.c.l.b16 %v299
    %v829 = vunpack.c.l.b16 %v300
    %v830 = vunpack.c.l.b16 %v301
    %v831 = vunpack.c.l.b16 %v302
    %v832 = vunpack.c.l.b16 %v303
    %v833 = vunpack.c.l.b16 %v304
    %v834 = vunpack.c.l.b16 %v305
    %v835 = vunpack.c.l.b16 %v306
    %v836 = vunpack.c.l.b16 %v307
    %v837 = vunpack.c.l.b16 %v308
    %v838 = vunpack.c.l.b16 %v309
    %v839 = vunpack.c.l.b16 %v310
    %v840 = vunpack.c.l.b16 %v311
    %v841 = vunpack.c.l.b16 %v312
    %v842 = vunpack.c.l.b16 %v313
    %v843 = vunpack.c.l.b16 %v314
    %v844 = vunpack.c.l.b16 %v315
    %v845 = vunpack.c.l.b16 %v316
    %v846 = vunpack.c.l.b16 %v317
    %v847 = vunpack.c.l.b16 %v318
    %v848 = vunpack.c.l.b16 %v319
    %v849 = vunpack.c.l.b16 %v320
    %v850 = vunpack.c.l.b16 %v321
    %v851 = vunpack.c.l.b16 %v322
    %v852 = vunpack.c.l.b16 %v323
    %v853 = vunpack.c.l.b16 %v324
    %v854 = vunpack.c.l.b16 %v325
    %v855 = vunpack.c.l.b16 %v326
    %v856 = vunpack.c.l.b16 %v327
    %v857 = vunpack.c.l.b16 %v328
    %v858 = vunpack.c.l.b16 %v329
    %v859 = vunpack.c.l.b16 %v330
    %v860 = vunpack.c.l.b16 %v331
    %v861 = vunpack.c.l.b16 %v332
    %v862 = vunpack.c.l.b16 %v333
    %v863 = vunpack.c.l.b16 %v334
    %v864 = vunpack.c.l.b16 %v335
    %v865 = vunpack.c.l.b16 %v336
    %v866 = vunpack.c.l.b16 %v337
    %v867 = vunpack.c.l.b16 %v338
    %v868 = vunpack.c.l.b16 %v339
    %v869 = vunpack.c.l.b16 %v340
    %v870 = vunpack.c.l.b16 %v341
    %v871 = vunpack.c.l.b16 %v342
    %v872 = vunpack.c.l.b16 %v343
    %v873 = vunpack.c.l.b16 %v344
    %v874 = vunpack.c.l.b16 %v345
    %v875 = vunpack.c.l.b16 %v346
    %v876 = vunpack.c.l.b16 %v347
    %v877 = vunpack.c.l.b16 %v348
    %v878 = vunpack.c.l.b16 %v349
    %v879 = vunpack.c.l.b16 %v350
    %v880 = vunpack.c.l.b16 %v351
    %v881 = vunpack.c.l.b16 %v352
    %v882 = vunpack.c.l.b16 %v353
    %v883 = vunpack.c.l.b16 %v354
    %v884 = vunpack.c.l.b16 %v355
    %v885 = vunpack.c.l.b16 %v356
    %v886 = vunpack.c.l.b16 %v357
    %v887 = vunpack.c.l.b16 %v358
    %v888 = vunpack.c.l.b16 %v359
    %v889 = vunpack.c.l.b16 %v360
    %v890 = vunpack.c.l.b16 %v361
    %v891 = vunpack.c.l.b16 %v362
    %v892 = vunpack.c.l.b16 %v363
    %v893 = vunpack.c.l.b16 %v364
    %v894 = vunpack.c.l.b16 %v365
    %v895 = vunpack.c.l.b16 %v366
    %v896 = vunpack.c.l.b16 %v367
    %v897 = vunpack.c.l.b16 %v368
    %v898 = vunpack.c.l.b16 %v369
    %v899 = vunpack.c.l.b16 %v370
    %v900 = vunpack.c.l.b16 %v371
    %v901 = vunpack.c.l.b16 %v372
    %v902 = vunpack.c.l.b16 %v373
    %v903 = vunpack.c.l.b16 %v374
    %v904 = vunpack.c.l.b16 %v375
    %v905 = vunpack.c.l.b16 %v376
    %v906 = vunpack.c.l.b16 %v377
    %v907 = vunpack.c.l.b16 %v378
    %v908 = vunpack.c.l.b16 %v379
    %v909 = vunpack.c.l.b16 %v380
    %v910 = vunpack.c.l.b16 %v381
    %v911 = vunpack.c.l.b16 %v382
    %v912 = vunpack.c.l.b16 %v383
    %v913 = vunpack.c.l.b16 %v384
    %v914 = vunpack.c.l.b16 %v385
    %v915 = vunpack.c.l.b16 %v386
    %v916 = vunpack.c.l.b16 %v387
    %v917 = vunpack.c.l.b16 %v388
    %v918 = vunpack.c.l.b16 %v389
    %v919 = vunpack.c.l.b16 %v390
    %v920 = vunpack.c.l.b16 %v391
    %v921 = vpack.c.b16 %v677, %v676
    %v922 = vpack.c.b16 %v679, %v678
    %v923 = vpack.c.b16 %v681, %v680
    %v924 = vpack.c.b16 %v683, %v682
    %v925 = vpack.c.b16 %v685, %v684
    %v926 = vpack.c.b16 %v687, %v686
    %v927 = vpack.c.b16 %v689, %v688
    %v928 = vpack.c.b16 %v691, %v690
    %v929 = vpack.c.b16 %v693, %v692
    %v930 = vpack.c.b16 %v695, %v694
    %v931 = vpack.c.b16 %v697, %v696
    %v932 = vpack.c.b16 %v699, %v698
    %v933 = vpack.c.b16 %v701, %v700
    %v934 = vpack.c.b16 %v703, %v702
    %v935 = vpack.c.b16 %v705, %v704
    %v936 = vpack.c.b16 %v707, %v706
    %v937 = vpack.c.b16 %v709, %v708
    %v938 = vpack.c.b16 %v711, %v710
    %v939 = vpack.c.b16 %v713, %v712
    %v940 = vpack.c.b16 %v715, %v714
    %v941 = vpack.c.b16 %v717, %v716
    %v942 = vpack.c.b16 %v719, %v718
    %v943 = vpack.c.b16 %v721, %v720
    %v944 = vpack.c.b16 %v723, %v722
    %v945 = vpack.c.b16 %v725, %v724
    %v946 = vpack.c.b16 %v727, %v726
    %v947 = vpack.c.b16 %v729, %v728
    %v948 = vpack.c.b16 %v731, %v730
    %v949 = vpack.c.b16 %v733, %v732
    %v950 = vpack.c.b16 %v735, %v734
    %v951 = vpack.c.b16 %v737, %v736
    %v952 = vpack.c.b16 %v739, %v738
    %v953 = vpack.c.b16 %v741, %v740
    %v954 = vpack.c.b16 %v743, %v742
    %v955 = vpack.c.b16 %v745, %v744
    %v956 = vpack.c.b16 %v747, %v746
    %v957 = vpack.c.b16 %v749, %v748
    %v958 = vpack.c.b16 %v751, %v750
    %v959 = vpack.c.b16 %v753, %v752
    %v960 = vpack.c.b16 %v755, %v754
    %v961 = vpack.c.b16 %v757, %v756
    %v962 = vpack.c.b16 %v759, %v758
    %v963 = vpack.c.b16 %v761, %v760
    %v964 = vpack.c.b16 %v763, %v762
    %v965 = vpack.c.b16 %v765, %v764
    %v966 = vpack.c.b16 %v767, %v766
    %v967 = vpack.c.b16 %v769, %v768
    %v968 = vpack.c.b16 %v771, %v770
    %v969 = vpack.c.b16 %v773, %v772
    %v970 = vpack.c.b16 %v775, %v774
    %v971 = vpack.c.b16 %v777, %v776
    %v972 = vpack.c.b16 %v779, %v778
    %v973 = vpack.c.b16 %v781, %v780
    %v974 = vpack.c.b16 %v783, %v782
    %v975 = vpack.c.b16 %v785, %v784
    %v976 = vpack.c.b16 %v787, %v786
    %v977 = vpack.c.b16 %v789, %v788
    %v978 = vpack.c.b16 %v791, %v790
    %v979 = vpack.c.b16 %v793, %v792
    %v980 = vpack.c.b16 %v795, %v794
    %v981 = vpack.c.b16 %v797, %v796
    %v982 = vpack.c.b16 %v799, %v798
    %v983 = vpack.c.b16 %v801, %v800
    %v984 = vpack.c.b16 %v803, %v802
    %v985 = vpack.c.b16 %v805, %v804
    %v986 = vpack.c.b16 %v807, %v806
    %v987 = vpack.c.b16 %v809, %v808
    %v988 = vpack.c.b16 %v811, %v810
    %v989 = vpack.c.b16 %v813, %v812
    %v990 = vpack.c.b16 %v815, %v814
    %v991 = vpack.c.b16 %v817, %v816
    %v992 = vpack.c.b16 %v819, %v818
    %v993 = vpack.c.b16 %v821, %v820
    %v994 = vpack.c.b16 %v823, %v822
    %v995 = vpack.c.b16 %v825, %v824
    %v996 = vpack.c.b16 %v827, %v826
    %v997 = vpack.c.b16 %v829, %v828
    %v998 = vpack.c.b16 %v831, %v830
    %v999 = vpack.c.b16 %v833, %v832
    %v1000 = vpack.c.b16 %v835, %v834
    %v1001 = vpack.c.b16 %v837, %v836
    %v1002 = vpack.c.b16 %v839, %v838
    %v1003 = vpack.c.b16 %v841, %v840
    %v1004 = vpack.c.b16 %v843, %v842
    %v1005 = vpack.c.b16 %v845, %v844
    %v1006 = vpack.c.b16 %v847, %v846
    %v1007 = vpack.c.b16 %v849, %v848
    %v1008 = vpack.c.b16 %v851, %v850
    %v1009 = vpack.c.b16 %v853, %v852
    %v1010 = vpack.c.b16 %v855, %v854
    %v1011 = vpack.c.b16 %v857, %v856
    %v1012 = vpack.c.b16 %v859, %v858
    %v1013 = vpack.c.b16 %v861, %v860
    %v1014 = vpack.c.b16 %v863, %v862
    %v1015 = vpack.c.b16 %v865, %v864
    %v1016 = vpack.c.b16 %v867, %v866
    %v1017 = vpack.c.b16 %v869, %v868
    %v1018 = vpack.c.b16 %v871, %v870
    %v1019 = vpack.c.b16 %v873, %v872
    %v1020 = vpack.c.b16 %v875, %v874
    %v1021 = vpack.c.b16 %v877, %v876
    %v1022 = vpack.c.b16 %v879, %v878
    %v1023 = vpack.c.b16 %v881, %v880
    %v1024 = vpack.c.b16 %v883, %v882
    %v1025 = vpack.c.b16 %v885, %v884
    %v1026 = vpack.c.b16 %v887, %v886
    %v1027 = vpack.c.b16 %v889, %v888
    %v1028 = vpack.c.b16 %v891, %v890
    %v1029 = vpack.c.b16 %v893, %v892
    %v1030 = vpack.c.b16 %v895, %v894
    %v1031 = vpack.c.b16 %v897, %v896
    %v1032 = vpack.c.b16 %v899, %v898
    %v1033 = vpack.c.b16 %v901, %v900
    %v1034 = vpack.c.b16 %v903, %v902
    %v1035 = vpack.c.b16 %v905, %v904
    %v1036 = vpack.c.b16 %v907, %v906
    %v1037 = vpack.c.b16 %v909, %v908
    %v1038 = vpack.c.b16 %v911, %v910
    %v1039 = vpack.c.b16 %v913, %v912
    %v1040 = vpack.c.b16 %v915, %v914
    %v1041 = vpack.c.b16 %v917, %v916
    %v1042 = vpack.c.b16 %v919, %v918
    %v1043 = vpack.c.b16 %v920, %v920
    %vm1166 = vcmask 326656
    %v1168 = vsel %vm1166, %v407, 0
    %v1171 = vsel %vm1166, %v423, 0
    %vm1173 = vcmask 1043456
    %v1175 = vsel %vm1173, %v1043, 0
    %1177 = vmatprep.subr.bf16.mxu0 0
    %1178 = vmatpush1.bf16.msra.mxu0 %v921
    %1179 = vmatprep.subr.bf16.mxu0 0
    %1180 = vmatpush1.bf16.msra.mxu0 %v922
    %1181 = vmatprep.subr.bf16.mxu0 0
    %1182 = vmatpush1.bf16.msra.mxu0 %v923
    %1183 = vmatprep.subr.bf16.mxu0 0
    %1184 = vmatpush1.bf16.msra.mxu0 %v924
    %1185 = vmatprep.subr.bf16.mxu0 0
    %1186 = vmatpush1.bf16.msra.mxu0 %v925
    %1187 = vmatprep.subr.bf16.mxu0 0
    %1188 = vmatpush1.bf16.msra.mxu0 %v926
    %1189 = vmatprep.subr.bf16.mxu0 0
    %1190 = vmatpush1.bf16.msra.mxu0 %v927
    %1191 = vmatprep.subr.bf16.mxu0 0
    %1192 = vmatpush1.bf16.msra.mxu0 %v928
    %1193 = vmatprep.subr.bf16.mxu0 0
    %1194 = vmatpush1.bf16.msra.mxu0 %v929
    %1195 = vmatprep.subr.bf16.mxu0 0
    %1196 = vmatpush1.bf16.msra.mxu0 %v930
    %1197 = vmatprep.subr.bf16.mxu0 0
    %1198 = vmatpush1.bf16.msra.mxu0 %v931
    %1199 = vmatprep.subr.bf16.mxu0 0
    %1200 = vmatpush1.bf16.msra.mxu0 %v932
    %1201 = vmatprep.subr.bf16.mxu0 0
    %1202 = vmatpush1.bf16.msra.mxu0 %v933
    %1203 = vmatprep.subr.bf16.mxu0 0
    %1204 = vmatpush1.bf16.msra.mxu0 %v934
    %1205 = vmatprep.subr.bf16.mxu0 0
    %1206 = vmatpush1.bf16.msra.mxu0 %v935
    %1207 = vmatprep.subr.bf16.mxu0 0
    %1208 = vmatpush1.bf16.msra.mxu0 %v936
    %1209 = vmatprep.mubr.bf16.mxu0 %v393
    %1210 = vmatmul.mubr.bf16.gmra.mrb[0].mxu0 %v392
    %v1211 = vpop.f32.mrb[0].mxu0
    %v1212 = vadd.f32 %v429, %v1211
    %v1213 = vpop.f32.mrb[0].mxu0
    %v1214 = vpop.f32.mrb[0].mxu0
    %v1215 = vadd.f32 %v429, %v1214
    %v1216 = vpop.f32.mrb[0].mxu0
    %1217 = vmatprep.mubr.bf16.mxu0 %v409
    %1218 = vmatmul.mubr.bf16.gmra.mrb[0].mxu0 %v408
    %v1219 = vpop.f32.mrb[0].mxu0
    %v1220 = vadd.f32 %v429, %v1219
    %v1221 = vpop.f32.mrb[0].mxu0
    %v1222 = vpop.f32.mrb[0].mxu0
    %v1223 = vadd.f32 %v429, %v1222
    %v1224 = vpop.f32.mrb[0].mxu0
    %1225 = vdwg.mxu0
    %1226 = vmatprep.subr.bf16.mxu0 0
    %1227 = vmatpush1.bf16.msra.mxu0 %v937
    %1228 = vmatprep.subr.bf16.mxu0 0
    %1229 = vmatpush1.bf16.msra.mxu0 %v938
    %1230 = vmatprep.subr.bf16.mxu0 0
    %1231 = vmatpush1.bf16.msra.mxu0 %v939
    %1232 = vmatprep.subr.bf16.mxu0 0
    %1233 = vmatpush1.bf16.msra.mxu0 %v940
    %1234 = vmatprep.subr.bf16.mxu0 0
    %1235 = vmatpush1.bf16.msra.mxu0 %v941
    %1236 = vmatprep.subr.bf16.mxu0 0
    %1237 = vmatpush1.bf16.msra.mxu0 %v942
    %1238 = vmatprep.subr.bf16.mxu0 0
    %1239 = vmatpush1.bf16.msra.mxu0 %v943
    %1240 = vmatprep.subr.bf16.mxu0 0
    %1241 = vmatpush1.bf16.msra.mxu0 %v944
    %1242 = vmatprep.subr.bf16.mxu0 0
    %1243 = vmatpush1.bf16.msra.mxu0 %v945
    %1244 = vmatprep.subr.bf16.mxu0 0
    %1245 = vmatpush1.bf16.msra.mxu0 %v946
    %1246 = vmatprep.subr.bf16.mxu0 0
    %1247 = vmatpush1.bf16.msra.mxu0 %v947
    %1248 = vmatprep.subr.bf16.mxu0 0
    %1249 = vmatpush1.bf16.msra.mxu0 %v948
    %1250 = vmatprep.subr.bf16.mxu0 0
    %1251 = vmatpush1.bf16.msra.mxu0 %v949
    %1252 = vmatprep.subr.bf16.mxu0 0
    %1253 = vmatpush1.bf16.msra.mxu0 %v950
    %1254 = vmatprep.subr.bf16.mxu0 0
    %1255 = vmatpush1.bf16.msra.mxu0 %v951
    %1256 = vmatprep.subr.bf16.mxu0 0
    %1257 = vmatpush1.bf16.msra.mxu0 %v952
    %1258 = vmatprep.mubr.bf16.mxu0 %v395
    %1259 = vmatmul.mubr.bf16.gmra.mrb[0].mxu0 %v394
    %v1260 = vpop.f32.mrb[0].mxu0
    %v1261 = vadd.f32 %v1212, %v1260
    %v1262 = vpop.f32.mrb[0].mxu0
    %v1263 = vpop.f32.mrb[0].mxu0
    %v1264 = vadd.f32 %v1215, %v1263
    %v1265 = vpop.f32.mrb[0].mxu0
    %1266 = vmatprep.mubr.bf16.mxu0 %v411
    %1267 = vmatmul.mubr.bf16.gmra.mrb[0].mxu0 %v410
    %v1268 = vpop.f32.mrb[0].mxu0
    %v1269 = vadd.f32 %v1220, %v1268
    %v1270 = vpop.f32.mrb[0].mxu0
    %v1271 = vpop.f32.mrb[0].mxu0
    %v1272 = vadd.f32 %v1223, %v1271
    %v1273 = vpop.f32.mrb[0].mxu0
    %1274 = vdwg.mxu0
    %1275 = vmatprep.subr.bf16.mxu0 0
    %1276 = vmatpush1.bf16.msra.mxu0 %v953
    %1277 = vmatprep.subr.bf16.mxu0 0
    %1278 = vmatpush1.bf16.msra.mxu0 %v954
    %1279 = vmatprep.subr.bf16.mxu0 0
    %1280 = vmatpush1.bf16.msra.mxu0 %v955
    %1281 = vmatprep.subr.bf16.mxu0 0
    %1282 = vmatpush1.bf16.msra.mxu0 %v956
    %1283 = vmatprep.subr.bf16.mxu0 0
    %1284 = vmatpush1.bf16.msra.mxu0 %v957
    %1285 = vmatprep.subr.bf16.mxu0 0
    %1286 = vmatpush1.bf16.msra.mxu0 %v958
    %1287 = vmatprep.subr.bf16.mxu0 0
    %1288 = vmatpush1.bf16.msra.mxu0 %v959
    %1289 = vmatprep.subr.bf16.mxu0 0
    %1290 = vmatpush1.bf16.msra.mxu0 %v960
    %1291 = vmatprep.subr.bf16.mxu0 0
    %1292 = vmatpush1.bf16.msra.mxu0 %v961
    %1293 = vmatprep.subr.bf16.mxu0 0
    %1294 = vmatpush1.bf16.msra.mxu0 %v962
    %1295 = vmatprep.subr.bf16.mxu0 0
    %1296 = vmatpush1.bf16.msra.mxu0 %v963
    %1297 = vmatprep.subr.bf16.mxu0 0
    %1298 = vmatpush1.bf16.msra.mxu0 %v964
    %1299 = vmatprep.subr.bf16.mxu0 0
    %1300 = vmatpush1.bf16.msra.mxu0 %v965
    %1301 = vmatprep.subr.bf16.mxu0 0
    %1302 = vmatpush1.bf16.msra.mxu0 %v966
    %1303 = vmatprep.subr.bf16.mxu0 0
    %1304 = vmatpush1.bf16.msra.mxu0 %v967
    %1305 = vmatprep.subr.bf16.mxu0 0
    %1306 = vmatpush1.bf16.msra.mxu0 %v968
    %1307 = vmatprep.mubr.bf16.mxu0 %v397
    %1308 = vmatmul.mubr.bf16.gmra.mrb[0].mxu0 %v396
    %v1309 = vpop.f32.mrb[0].mxu0
    %v1310 = vadd.f32 %v1261, %v1309
    %v1311 = vpop.f32.mrb[0].mxu0
    %v1312 = vpop.f32.mrb[0].mxu0
    %v1313 = vadd.f32 %v1264, %v1312
    %v1314 = vpop.f32.mrb[0].mxu0
    %1315 = vmatprep.mubr.bf16.mxu0 %v413
    %1316 = vmatmul.mubr.bf16.gmra.mrb[0].mxu0 %v412
    %v1317 = vpop.f32.mrb[0].mxu0
    %v1318 = vadd.f32 %v1269, %v1317
    %v1319 = vpop.f32.mrb[0].mxu0
    %v1320 = vpop.f32.mrb[0].mxu0
    %v1321 = vadd.f32 %v1272, %v1320
    %v1322 = vpop.f32.mrb[0].mxu0
    %1323 = vdwg.mxu0
    %1324 = vmatprep.subr.bf16.mxu0 0
    %1325 = vmatpush1.bf16.msra.mxu0 %v969
    %1326 = vmatprep.subr.bf16.mxu0 0
    %1327 = vmatpush1.bf16.msra.mxu0 %v970
    %1328 = vmatprep.subr.bf16.mxu0 0
    %1329 = vmatpush1.bf16.msra.mxu0 %v971
    %1330 = vmatprep.subr.bf16.mxu0 0
    %1331 = vmatpush1.bf16.msra.mxu0 %v972
    %1332 = vmatprep.subr.bf16.mxu0 0
    %1333 = vmatpush1.bf16.msra.mxu0 %v973
    %1334 = vmatprep.subr.bf16.mxu0 0
    %1335 = vmatpush1.bf16.msra.mxu0 %v974
    %1336 = vmatprep.subr.bf16.mxu0 0
    %1337 = vmatpush1.bf16.msra.mxu0 %v975
    %1338 = vmatprep.subr.bf16.mxu0 0
    %1339 = vmatpush1.bf16.msra.mxu0 %v976
    %1340 = vmatprep.subr.bf16.mxu0 0
    %1341 = vmatpush1.bf16.msra.mxu0 %v977
    %1342 = vmatprep.subr.bf16.mxu0 0
    %1343 = vmatpush1.bf16.msra.mxu0 %v978
    %1344 = vmatprep.subr.bf16.mxu0 0
    %1345 = vmatpush1.bf16.msra.mxu0 %v979
    %1346 = vmatprep.subr.bf16.mxu0 0
    %1347 = vmatpush1.bf16.msra.mxu0 %v980
    %1348 = vmatprep.subr.bf16.mxu0 0
    %1349 = vmatpush1.bf16.msra.mxu0 %v981
    %1350 = vmatprep.subr.bf16.mxu0 0
    %1351 = vmatpush1.bf16.msra.mxu0 %v982
    %1352 = vmatprep.subr.bf16.mxu0 0
    %1353 = vmatpush1.bf16.msra.mxu0 %v983
    %1354 = vmatprep.subr.bf16.mxu0 0
    %1355 = vmatpush1.bf16.msra.mxu0 %v984
    %1356 = vmatprep.mubr.bf16.mxu0 %v399
    %1357 = vmatmul.mubr.bf16.gmra.mrb[0].mxu0 %v398
    %v1358 = vpop.f32.mrb[0].mxu0
    %v1359 = vadd.f32 %v1310, %v1358
    %v1360 = vpop.f32.mrb[0].mxu0
    %v1361 = vpop.f32.mrb[0].mxu0
    %v1362 = vadd.f32 %v1313, %v1361
    %v1363 = vpop.f32.mrb[0].mxu0
    %1364 = vmatprep.mubr.bf16.mxu0 %v415
    %1365 = vmatmul.mubr.bf16.gmra.mrb[0].mxu0 %v414
    %v1366 = vpop.f32.mrb[0].mxu0
    %v1367 = vadd.f32 %v1318, %v1366
    %v1368 = vpop.f32.mrb[0].mxu0
    %v1369 = vpop.f32.mrb[0].mxu0
    %v1370 = vadd.f32 %v1321, %v1369
    %v1371 = vpop.f32.mrb[0].mxu0
    %1372 = vdwg.mxu0
    %1373 = vmatprep.subr.bf16.mxu0 0
    %1374 = vmatpush1.bf16.msra.mxu0 %v985
    %1375 = vmatprep.subr.bf16.mxu0 0
    %1376 = vmatpush1.bf16.msra.mxu0 %v986
    %1377 = vmatprep.subr.bf16.mxu0 0
    %1378 = vmatpush1.bf16.msra.mxu0 %v987
    %1379 = vmatprep.subr.bf16.mxu0 0
    %1380 = vmatpush1.bf16.msra.mxu0 %v988
    %1381 = vmatprep.subr.bf16.mxu0 0
    %1382 = vmatpush1.bf16.msra.mxu0 %v989
    %1383 = vmatprep.subr.bf16.mxu0 0
    %1384 = vmatpush1.bf16.msra.mxu0 %v990
    %1385 = vmatprep.subr.bf16.mxu0 0
    %1386 = vmatpush1.bf16.msra.mxu0 %v991
    %1387 = vmatprep.subr.bf16.mxu0 0
    %1388 = vmatpush1.bf16.msra.mxu0 %v992
    %1389 = vmatprep.subr.bf16.mxu0 0
    %1390 = vmatpush1.bf16.msra.mxu0 %v993
    %1391 = vmatprep.subr.bf16.mxu0 0
    %1392 = vmatpush1.bf16.msra.mxu0 %v994
    %1393 = vmatprep.subr.bf16.mxu0 0
    %1394 = vmatpush1.bf16.msra.mxu0 %v995
    %1395 = vmatprep.subr.bf16.mxu0 0
    %1396 = vmatpush1.bf16.msra.mxu0 %v996
    %1397 = vmatprep.subr.bf16.mxu0 0
    %1398 = vmatpush1.bf16.msra.mxu0 %v997
    %1399 = vmatprep.subr.bf16.mxu0 0
    %1400 = vmatpush1.bf16.msra.mxu0 %v998
    %1401 = vmatprep.subr.bf16.mxu0 0
    %1402 = vmatpush1.bf16.msra.mxu0 %v999
    %1403 = vmatprep.subr.bf16.mxu0 0
    %1404 = vmatpush1.bf16.msra.mxu0 %v1000
    %1405 = vmatprep.mubr.bf16.mxu0 %v401
    %1406 = vmatmul.mubr.bf16.gmra.mrb[0].mxu0 %v400
    %v1407 = vpop.f32.mrb[0].mxu0
    %v1408 = vadd.f32 %v1359, %v1407
    %v1409 = vpop.f32.mrb[0].mxu0
    %v1410 = vpop.f32.mrb[0].mxu0
    %v1411 = vadd.f32 %v1362, %v1410
    %v1412 = vpop.f32.mrb[0].mxu0
    %1413 = vmatprep.mubr.bf16.mxu0 %v417
    %1414 = vmatmul.mubr.bf16.gmra.mrb[0].mxu0 %v416
    %v1415 = vpop.f32.mrb[0].mxu0
    %v1416 = vadd.f32 %v1367, %v1415
    %v1417 = vpop.f32.mrb[0].mxu0
    %v1418 = vpop.f32.mrb[0].mxu0
    %v1419 = vadd.f32 %v1370, %v1418
    %v1420 = vpop.f32.mrb[0].mxu0
    %1421 = vdwg.mxu0
    %1422 = vmatprep.subr.bf16.mxu0 0
    %1423 = vmatpush1.bf16.msra.mxu0 %v1001
    %1424 = vmatprep.subr.bf16.mxu0 0
    %1425 = vmatpush1.bf16.msra.mxu0 %v1002
    %1426 = vmatprep.subr.bf16.mxu0 0
    %1427 = vmatpush1.bf16.msra.mxu0 %v1003
    %1428 = vmatprep.subr.bf16.mxu0 0
    %1429 = vmatpush1.bf16.msra.mxu0 %v1004
    %1430 = vmatprep.subr.bf16.mxu0 0
    %1431 = vmatpush1.bf16.msra.mxu0 %v1005
    %1432 = vmatprep.subr.bf16.mxu0 0
    %1433 = vmatpush1.bf16.msra.mxu0 %v1006
    %1434 = vmatprep.subr.bf16.mxu0 0
    %1435 = vmatpush1.bf16.msra.mxu0 %v1007
    %1436 = vmatprep.subr.bf16.mxu0 0
    %1437 = vmatpush1.bf16.msra.mxu0 %v1008
    %1438 = vmatprep.subr.bf16.mxu0 0
    %1439 = vmatpush1.bf16.msra.mxu0 %v1009
    %1440 = vmatprep.subr.bf16.mxu0 0
    %1441 = vmatpush1.bf16.msra.mxu0 %v1010
    %1442 = vmatprep.subr.bf16.mxu0 0
    %1443 = vmatpush1.bf16.msra.mxu0 %v1011
    %1444 = vmatprep.subr.bf16.mxu0 0
    %1445 = vmatpush1.bf16.msra.mxu0 %v1012
    %1446 = vmatprep.subr.bf16.mxu0 0
    %1447 = vmatpush1.bf16.msra.mxu0 %v1013
    %1448 = vmatprep.subr.bf16.mxu0 0
    %1449 = vmatpush1.bf16.msra.mxu0 %v1014
    %1450 = vmatprep.subr.bf16.mxu0 0
    %1451 = vmatpush1.bf16.msra.mxu0 %v1015
    %1452 = vmatprep.subr.bf16.mxu0 0
    %1453 = vmatpush1.bf16.msra.mxu0 %v1016
    %1454 = vmatprep.mubr.bf16.mxu0 %v403
    %1455 = vmatmul.mubr.bf16.gmra.mrb[0].mxu0 %v402
    %v1456 = vpop.f32.mrb[0].mxu0
    %v1457 = vadd.f32 %v1408, %v1456
    %v1458 = vpop.f32.mrb[0].mxu0
    %v1459 = vpop.f32.mrb[0].mxu0
    %v1460 = vadd.f32 %v1411, %v1459
    %v1461 = vpop.f32.mrb[0].mxu0
    %1462 = vmatprep.mubr.bf16.mxu0 %v419
    %1463 = vmatmul.mubr.bf16.gmra.mrb[0].mxu0 %v418
    %v1464 = vpop.f32.mrb[0].mxu0
    %v1465 = vadd.f32 %v1416, %v1464
    %v1466 = vpop.f32.mrb[0].mxu0
    %v1467 = vpop.f32.mrb[0].mxu0
    %v1468 = vadd.f32 %v1419, %v1467
    %v1469 = vpop.f32.mrb[0].mxu0
    %1470 = vdwg.mxu0
    %1471 = vmatprep.subr.bf16.mxu0 0
    %1472 = vmatpush1.bf16.msra.mxu0 %v1017
    %1473 = vmatprep.subr.bf16.mxu0 0
    %1474 = vmatpush1.bf16.msra.mxu0 %v1018
    %1475 = vmatprep.subr.bf16.mxu0 0
    %1476 = vmatpush1.bf16.msra.mxu0 %v1019
    %1477 = vmatprep.subr.bf16.mxu0 0
    %1478 = vmatpush1.bf16.msra.mxu0 %v1020
    %1479 = vmatprep.subr.bf16.mxu0 0
    %1480 = vmatpush1.bf16.msra.mxu0 %v1021
    %1481 = vmatprep.subr.bf16.mxu0 0
    %1482 = vmatpush1.bf16.msra.mxu0 %v1022
    %1483 = vmatprep.subr.bf16.mxu0 0
    %1484 = vmatpush1.bf16.msra.mxu0 %v1023
    %1485 = vmatprep.subr.bf16.mxu0 0
    %1486 = vmatpush1.bf16.msra.mxu0 %v1024
    %1487 = vmatprep.subr.bf16.mxu0 0
    %1488 = vmatpush1.bf16.msra.mxu0 %v1025
    %1489 = vmatprep.subr.bf16.mxu0 0
    %1490 = vmatpush1.bf16.msra.mxu0 %v1026
    %1491 = vmatprep.subr.bf16.mxu0 0
    %1492 = vmatpush1.bf16.msra.mxu0 %v1027
    %1493 = vmatprep.subr.bf16.mxu0 0
    %1494 = vmatpush1.bf16.msra.mxu0 %v1028
    %1495 = vmatprep.subr.bf16.mxu0 0
    %1496 = vmatpush1.bf16.msra.mxu0 %v1029
    %1497 = vmatprep.subr.bf16.mxu0 0
    %1498 = vmatpush1.bf16.msra.mxu0 %v1030
    %1499 = vmatprep.subr.bf16.mxu0 0
    %1500 = vmatpush1.bf16.msra.mxu0 %v1031
    %1501 = vmatprep.subr.bf16.mxu0 0
    %1502 = vmatpush1.bf16.msra.mxu0 %v1032
    %1503 = vmatprep.mubr.bf16.mxu0 %v405
    %1504 = vmatmul.mubr.bf16.gmra.mrb[0].mxu0 %v404
    %v1505 = vpop.f32.mrb[0].mxu0
    %v1506 = vadd.f32 %v1457, %v1505
    %v1507 = vpop.f32.mrb[0].mxu0
    %v1508 = vpop.f32.mrb[0].mxu0
    %v1509 = vadd.f32 %v1460, %v1508
    %v1510 = vpop.f32.mrb[0].mxu0
    %1511 = vmatprep.mubr.bf16.mxu0 %v421
    %1512 = vmatmul.mubr.bf16.gmra.mrb[0].mxu0 %v420
    %v1513 = vpop.f32.mrb[0].mxu0
    %v1514 = vadd.f32 %v1465, %v1513
    %v1515 = vpop.f32.mrb[0].mxu0
    %v1516 = vpop.f32.mrb[0].mxu0
    %v1517 = vadd.f32 %v1468, %v1516
    %v1518 = vpop.f32.mrb[0].mxu0
    %1519 = vdwg.mxu0
    %1520 = vmatprep.subr.bf16.mxu0 0
    %1521 = vmatpush1.bf16.msra.mxu0 %v1033
    %1522 = vmatprep.subr.bf16.mxu0 0
    %1523 = vmatpush1.bf16.msra.mxu0 %v1034
    %1524 = vmatprep.subr.bf16.mxu0 0
    %1525 = vmatpush1.bf16.msra.mxu0 %v1035
    %1526 = vmatprep.subr.bf16.mxu0 0
    %1527 = vmatpush1.bf16.msra.mxu0 %v1036
    %1528 = vmatprep.subr.bf16.mxu0 0
    %1529 = vmatpush1.bf16.msra.mxu0 %v1037
    %1530 = vmatprep.subr.bf16.mxu0 0
    %1531 = vmatpush1.bf16.msra.mxu0 %v1038
    %1532 = vmatprep.subr.bf16.mxu0 0
    %1533 = vmatpush1.bf16.msra.mxu0 %v1039
    %1534 = vmatprep.subr.bf16.mxu0 0
    %1535 = vmatpush1.bf16.msra.mxu0 %v1040
    %1536 = vmatprep.subr.bf16.mxu0 0
    %1537 = vmatpush1.bf16.msra.mxu0 %v1041
    %1538 = vmatprep.subr.bf16.mxu0 0
    %1539 = vmatpush1.bf16.msra.mxu0 %v1042
    %1540 = vmatprep.subr.bf16.mxu0 0
    %1541 = vmatpush1.bf16.msra.mxu0 %v1175
    %1542 = vmatprep.subr.bf16.mxu0 0
    %1543 = vmatpush1.bf16.msra.mxu0 0
    %1544 = vmatprep.subr.bf16.mxu0 0
    %1545 = vmatpush1.bf16.msra.mxu0 0
    %1546 = vmatprep.subr.bf16.mxu0 0
    %1547 = vmatpush1.bf16.msra.mxu0 0
    %1548 = vmatprep.subr.bf16.mxu0 0
    %1549 = vmatpush1.bf16.msra.mxu0 0
    %1550 = vmatprep.subr.bf16.mxu0 0
    %1551 = vmatpush1.bf16.msra.mxu0 0
    %1552 = vmatprep.mubr.bf16.mxu0 %v1168
    %1553 = vmatmul.mubr.bf16.gmra.mrb[0].mxu0 %v406
    %v1554 = vpop.f32.mrb[0].mxu0
    %v1555 = vadd.f32 %v1506, %v1554
    %v1556 = vpop.f32.mrb[0].mxu0
    %v1557 = vpop.f32.mrb[0].mxu0
    %v1558 = vadd.f32 %v1509, %v1557
    %v1559 = vpop.f32.mrb[0].mxu0
    %1560 = vmatprep.mubr.bf16.mxu0 %v1171
    %1561 = vmatmul.mubr.bf16.gmra.mrb[0].mxu0 %v422
    %v1562 = vpop.f32.mrb[0].mxu0
    %v1563 = vadd.f32 %v1514, %v1562
    %v1564 = vpop.f32.mrb[0].mxu0
    %v1565 = vpop.f32.mrb[0].mxu0
    %v1566 = vadd.f32 %v1517, %v1565
    %v1567 = vpop.f32.mrb[0].mxu0
    %1568 = vdwg.mxu0
    %v1569 = vld [vmem:[%s3] sm:$0xff]
    %v1570 = vld [vmem:[%s3 + $0x8] sm:$0xff]
    %v1571 = vld [vmem:[%s3 + $0x10] sm:$0xff]
    %v1572 = vld [vmem:[%s3 + $0x18] sm:$0xff]
    %v1573 = vadd.f32 %v1555, %v1569
    %v1574 = vadd.f32 %v1558, %v1570
    %v1575 = vadd.f32 %v1563, %v1571
    %v1576 = vadd.f32 %v1566, %v1572
    %1577 = vst [vmem:[#allocation2] sm:$0xff] %v1573
    %1578 = vst [vmem:[#allocation2 + $0x8] sm:$0xff] %v1574
    %1579 = vst [vmem:[#allocation2 + $0x10] sm:$0xff] %v1575
    %1580 = vst [vmem:[#allocation2 + $0x18] sm:$0xff] %v1576
    // Predicated region
    $region18: #{transformer_block.11} parent=1 // pred_check
      _
    $region19: #{transformer_block.11} parent=1 // pred_check_branch
      %1582 = sbr.rel (0) target = $region21
    $region20: #{transformer_block.11} parent=1 // pred_region
      %s1584 = ssub.s32 512, 512
      %1585 = vsyncadd [#allocation3], %s1584
      %s1586 = sshll.u32 [#allocation2], 4
      %s1587 = int_to_ptr.vmem [resolvable:$true] %s1586
      %1592 = dma.vmem_to_hbm [thread:$0]  %s1587, 512, %s4, [#allocation3], 128, 128, 8
    $region21: #{transformer_block.11} parent=1 // pred_fallthru
      _
    // Predicated region
    $region22: #{transformer_block.11} parent=1 // pred_check
      _
    $region23: #{transformer_block.11} parent=1 // pred_check_branch
      %1594 = sbr.rel (0) target = $region25
    $region24: #{transformer_block.11} parent=1 // pred_region
      %1595 = dma.done [#allocation3], 512
    $region25: #{transformer_block.11} parent=1 // pred_fallthru
      _
    %1596 = vsyncpa [#allocation3], 1

</llo_original>
